<compile_context>
chip_gen: v6e
topology: v6e:2x2x1
jax: 0.10.0
libtpu: 0.0.40
codegen_flags: <defaults>
</compile_context>

<pallas_src>
import numpy as np

import jax
import jax.numpy as jnp
from jax import lax
from jax.experimental import pallas as pl
from jax.experimental.pallas import tpu as pltpu

# ----------------------------- configuration --------------------------------
N_FFT = 32
HOP = 16
INP_DIM = N_FFT // 2 + 1          # 17 freq bins (ChannelNorm num_channels)
DIM = 32                          # conv_kwargs['dim']
EXPANSION = 2                     # conv_expansion_factor
INNER = DIM * EXPANSION           # 64
KSIZE = 3                         # conv_kernel_size (causal pad = K-1 left)
NUM_GROUPS = 16                   # GroupChanNorm(16, inner_dim)
ENCODER_DIM = DIM * 2             # LSTM hidden size (= 2*DIM, the LSTM input size)
NUM_LAYERS = 2
OUT_DIM = INP_DIM                 # mask over freq bins
EPS = 1e-5

BATCH = 2
WAVE_LEN = 272                    # -> 16 STFT frames
N_FRAMES = 1 + (WAVE_LEN - N_FFT) // HOP   # 16
assert WAVE_LEN == (N_FRAMES + 1) * HOP    # framing uses the (T+1, HOP) reshape


# ------------------------------ fused Pallas kernel --------------------------
def fused_kernel(far_ref, mix_ref, dft_ref, idft_ref, invw_ref,
                 cng_ref, cnb_ref, w1_ref, b1_ref, dww_ref, dwb_ref,
                 gng_ref, gnb_ref, w2_ref, b2_ref, G_ref, GT_ref,
                 wih_ref, whh_ref, lb_ref, wf_ref, bf_ref,
                 o_ref, gx_scratch, y_scratch):
    """Whole ConvLSTM forward for one batch element.

    far_ref / mix_ref: (T+1, HOP) reshaped waveforms;   o_ref: (T+1, HOP).
    Frame t of the STFT is wave[t*HOP : t*HOP + N_FFT] = rows (t, t+1).
    """
    T = N_FRAMES
    H = ENCODER_DIM
    f32 = jnp.float32

    # ---------------- STFT: windowed DFT as MXU matmuls ----------------------
    cw = dft_ref[0]                       # (N_FFT, F)  hann * cos
    sw = dft_ref[1]                       # (N_FFT, F)  hann * (-sin)

    def stft(w_ref):
        head = w_ref[0:T, :]              # first  HOP samples of every frame
        tail = w_ref[1:T + 1, :]          # second HOP samples of every frame
        re = (jnp.dot(head, cw[:HOP, :], preferred_element_type=f32)
              + jnp.dot(tail, cw[HOP:, :], preferred_element_type=f32))
        im = (jnp.dot(head, sw[:HOP, :], preferred_element_type=f32)
              + jnp.dot(tail, sw[HOP:, :], preferred_element_type=f32))
        return re, im                     # (T, F) each

    far_re, far_im = stft(far_ref)
    mix_re, mix_im = stft(mix_ref)
    far_mag = jnp.sqrt(far_re * far_re + far_im * far_im)
    mix_mag = jnp.sqrt(mix_re * mix_re + mix_im * mix_im)

    # ---------------- conv encoder (branch 0 = farend, 1 = mixture) ----------
    t_idx = lax.broadcasted_iota(jnp.int32, (T, INNER), 0)     # hoisted
    Gm = G_ref[...]                       # (INNER, NUM_GROUPS) one-hot groups
    GTm = GT_ref[...]                     # (NUM_GROUPS, INNER)
    cnt = float(T * (INNER // NUM_GROUPS))

    def encode(mag, i):
        # ChannelNorm: per-time norm over channels, affine.
        mu = jnp.mean(mag, axis=-1, keepdims=True)
        var = jnp.mean(jnp.square(mag - mu), axis=-1, keepdims=True)
        xn = (mag - mu) * lax.rsqrt(var + EPS) * cng_ref[i] + cnb_ref[i]
        # 1x1 conv -> 2*INNER, then GLU along channels.
        y = jnp.dot(xn, w1_ref[i], preferred_element_type=f32) + b1_ref[i]
        h = y[:, :INNER] * jax.nn.sigmoid(y[:, INNER:])
        # Depthwise causal conv1d (left pad K-1); rolls land on the XLU.
        dww = dww_ref[i]                  # (KSIZE, INNER)
        acc = dwb_ref[i] + dww[KSIZE - 1:KSIZE, :] * h
        for k in range(KSIZE - 1):
            shift = KSIZE - 1 - k
            shifted = pltpu.roll(h, shift=shift, axis=0)
            shifted = jnp.where(t_idx >= shift, shifted, 0.0)
            acc = acc + dww[k:k + 1, :] * shifted
        # GroupNorm(16, INNER): stats over (time, channels-in-group) via MXU.
        s1 = jnp.dot(jnp.sum(acc, axis=0, keepdims=True), Gm,
                     preferred_element_type=f32)
        s2 = jnp.dot(jnp.sum(acc * acc, axis=0, keepdims=True), Gm,
                     preferred_element_type=f32)
        mean_g = s1 / cnt
        var_g = jnp.maximum(s2 / cnt - jnp.square(mean_g), 0.0)
        mean_c = jnp.dot(mean_g, GTm, preferred_element_type=f32)
        var_c = jnp.dot(var_g, GTm, preferred_element_type=f32)
        z = (acc - mean_c) * lax.rsqrt(var_c + EPS) * gng_ref[i] + gnb_ref[i]
        z = z * jax.nn.sigmoid(z)         # Swish
        # 1x1 conv -> DIM  (Dropout = eval identity; 'b c n -> b n c' is this layout).
        return jnp.dot(z, w2_ref[i], preferred_element_type=f32) + b2_ref[i]

    far_enc = encode(far_mag, 0)          # (T, DIM)
    mix_enc = encode(mix_mag, 1)          # (T, DIM)

    # ---------------- 2-layer unidirectional LSTM (skewed interleave) --------
    # Layer 0: input = concat([far_enc, mix_enc]) realized via split Wih rows;
    # the whole input projection is hoisted out of the recurrence.
    wih0 = wih_ref[0]                     # (2*DIM, 4H)
    gx_scratch[...] = (
        jnp.dot(far_enc, wih0[:DIM, :], preferred_element_type=f32)
        + jnp.dot(mix_enc, wih0[DIM:, :], preferred_element_type=f32)
        + lb_ref[0])                      # (T, 4H)

    whh0 = whh_ref[0]                     # (H, 4H) hoisted weight loads
    whh1 = whh_ref[1]
    wih1 = wih_ref[1]
    lb1 = lb_ref[1]

    def lstm_step(gates, c):
        sg = jax.nn.sigmoid(gates[:, :3 * H])      # [i | f | o] in one slab
        gg = jnp.tanh(gates[:, 3 * H:])            # g
        c_new = sg[:, H:2 * H] * c + sg[:, :H] * gg
        h_new = sg[:, 2 * H:3 * H] * jnp.tanh(c_new)
        return h_new, c_new

    h0 = jnp.zeros((1, H), f32)
    c0 = jnp.zeros((1, H), f32)
    h1 = jnp.zeros((1, H), f32)
    c1 = jnp.zeros((1, H), f32)
    # Skewed loop: iteration t advances layer-0 step t and layer-1 step t-1.
    # The two updates are data-independent within an iteration, so the serial
    # chain is ~T+1 recurrent steps instead of 2*T.  Short static loop, fully
    # unrolled and visible to the LLO scheduler.
    for t in range(T + 1):
        y0_prev = h0                      # layer-0 output at step t-1
        if t < T:                         # ---- layer-0, step t
            gates0 = gx_scratch[t:t + 1, :]
            if t > 0:                     # h0 == 0 at t == 0: skip the matmul
                gates0 = gates0 + jnp.dot(h0, whh0, preferred_element_type=f32)
            h0, c0 = lstm_step(gates0, c0)
        if t >= 1:                        # ---- layer-1, step t-1 (uses y0[t-1])
            gates1 = jnp.dot(y0_prev, wih1, preferred_element_type=f32) + lb1
            if t > 1:                     # h1 == 0 at its first step
                gates1 = gates1 + jnp.dot(h1, whh1, preferred_element_type=f32)
            h1, c1 = lstm_step(gates1, c1)
            y_scratch[t - 1:t, :] = h1

    y2 = y_scratch[...]                   # (T, H) layer-1 outputs

    # ---------------- final linear -> mask, apply to mixture spectrum --------
    mask = jnp.dot(y2, wf_ref[...], preferred_element_type=f32) + bf_ref[...]
    est_re = mix_re * mask
    est_im = mix_im * mask

    # ---------------- ISTFT: windowed inverse DFT + overlap-add --------------
    fr = (jnp.dot(est_re, idft_ref[0], preferred_element_type=f32)
          + jnp.dot(est_im, idft_ref[1], preferred_element_type=f32))  # (T, N_FFT)
    zrow = jnp.zeros((1, HOP), f32)
    ola = (jnp.concatenate([fr[:, :HOP], zrow], axis=0)
           + jnp.concatenate([zrow, fr[:, HOP:]], axis=0))              # (T+1, HOP)
    o_ref[...] = ola * invw_ref[...]      # window^2 normalization


# ------------------------------ wrapper ---------------------------------------
def _full_spec(shape):
    n = len(shape)
    return pl.BlockSpec(tuple(shape), lambda b, n=n: (0,) * n)


def conv_lstm_forward(farend, mixture, params):
    B = farend.shape[0]
    far2d = farend.reshape(B, N_FRAMES + 1, HOP)
    mix2d = mixture.reshape(B, N_FRAMES + 1, HOP)

    tensors = [far2d, mix2d,
               params['dft'], params['idft'], params['invw'],
               *params['enc'], params['G'], params['GT'],
               params['wih'], params['whh'], params['lb'],
               params['final_w'], params['final_b']]

    wave_spec = pl.BlockSpec((None, N_FRAMES + 1, HOP), lambda b: (b, 0, 0))
    in_specs = [wave_spec, wave_spec] + [_full_spec(t.shape) for t in tensors[2:]]

    out2d = pl.pallas_call(
        fused_kernel,
        grid=(B,),
        in_specs=in_specs,
        out_specs=pl.BlockSpec((None, N_FRAMES + 1, HOP), lambda b: (b, 0, 0)),
        out_shape=jax.ShapeDtypeStruct((B, N_FRAMES + 1, HOP), jnp.float32),
        scratch_shapes=[pltpu.VMEM((N_FRAMES, 4 * ENCODER_DIM), jnp.float32),
                        pltpu.VMEM((N_FRAMES, ENCODER_DIM), jnp.float32)],
        compiler_params=pltpu.CompilerParams(dimension_semantics=("parallel",)),
    )(*tensors)
    return out2d.reshape(B, WAVE_LEN)


# ------------------------------ constants / parameters -----------------------
def make_constants():
    n = np.arange(N_FFT, dtype=np.float64)
    k = np.arange(INP_DIM, dtype=np.float64)
    win = 0.5 - 0.5 * np.cos(2.0 * np.pi * n / N_FFT)             # Hann
    ang = 2.0 * np.pi * np.outer(n, k) / N_FFT                    # (N_FFT, F)
    # Forward DFT matrices with the analysis window folded in.
    dft = np.stack([np.cos(ang) * win[:, None],
                    -np.sin(ang) * win[:, None]]).astype(np.float32)   # (2, 32, 17)
    # Inverse (real) DFT matrices with the synthesis window folded in.
    wk = np.full((INP_DIM,), 2.0)
    wk[0] = 1.0
    wk[-1] = 1.0
    idft = np.stack([(wk[:, None] * np.cos(ang.T) / N_FFT) * win[None, :],
                     (-wk[:, None] * np.sin(ang.T) / N_FFT) * win[None, :]]
                    ).astype(np.float32)                               # (2, 17, 32)
    # Overlap-add window^2 normalization.
    wsum = np.zeros((WAVE_LEN,), np.float64)
    for t in range(N_FRAMES):
        wsum[t * HOP:t * HOP + N_FFT] += win * win
    invw = (1.0 / np.maximum(wsum, 1e-8)).reshape(N_FRAMES + 1, HOP).astype(np.float32)
    # One-hot group-assignment matrices for GroupNorm stats on the MXU.
    gid = np.arange(INNER) // (INNER // NUM_GROUPS)
    G = (gid[:, None] == np.arange(NUM_GROUPS)[None, :]).astype(np.float32)
    return {'dft': jnp.asarray(dft), 'idft': jnp.asarray(idft),
            'invw': jnp.asarray(invw),
            'G': jnp.asarray(G), 'GT': jnp.asarray(G.T)}


def init_encoder_branch(key):
    ks = jax.random.split(key, 6)
    cng = jnp.ones((1, INP_DIM), jnp.float32)
    cnb = jnp.zeros((1, INP_DIM), jnp.float32)
    w1 = 0.1 * jax.random.normal(ks[0], (INP_DIM, 2 * INNER), jnp.float32)
    b1 = 0.01 * jax.random.normal(ks[1], (1, 2 * INNER), jnp.float32)
    dww = 0.1 * jax.random.normal(ks[2], (KSIZE, INNER), jnp.float32)
    dwb = 0.01 * jax.random.normal(ks[3], (1, INNER), jnp.float32)
    gng = jnp.ones((1, INNER), jnp.float32)
    gnb = jnp.zeros((1, INNER), jnp.float32)
    w2 = 0.1 * jax.random.normal(ks[4], (INNER, DIM), jnp.float32)
    b2 = 0.01 * jax.random.normal(ks[5], (1, DIM), jnp.float32)
    return [cng, cnb, w1, b1, dww, dwb, gng, gnb, w2, b2]


def init_lstm(key):
    # Layer-0 input size (2*DIM) == ENCODER_DIM, so both layers stack cleanly.
    wihs, whhs, bs = [], [], []
    for _ in range(NUM_LAYERS):
        k1, k2, k3, key = jax.random.split(key, 4)
        wihs.append(0.1 * jax.random.normal(k1, (ENCODER_DIM, 4 * ENCODER_DIM), jnp.float32))
        whhs.append(0.1 * jax.random.normal(k2, (ENCODER_DIM, 4 * ENCODER_DIM), jnp.float32))
        bs.append(0.01 * jax.random.normal(k3, (1, 4 * ENCODER_DIM), jnp.float32))  # b_ih+b_hh
    return jnp.stack(wihs), jnp.stack(whhs), jnp.stack(bs)


def init_params(key):
    kf, km, kl, kw, kb = jax.random.split(key, 5)
    enc_far = init_encoder_branch(kf)
    enc_mix = init_encoder_branch(km)
    enc = [jnp.stack([a, b]) for a, b in zip(enc_far, enc_mix)]   # stacked branches
    wih, whh, lb = init_lstm(kl)
    consts = make_constants()
    return {
        'enc': enc, 'G': consts['G'], 'GT': consts['GT'],
        'wih': wih, 'whh': whh, 'lb': lb,
        'final_w': 0.1 * jax.random.normal(kw, (ENCODER_DIM, OUT_DIM), jnp.float32),
        'final_b': 0.01 * jax.random.normal(kb, (1, OUT_DIM), jnp.float32),
        'dft': consts['dft'], 'idft': consts['idft'], 'invw': consts['invw'],
    }


# ------------------------------ main ------------------------------------------
if __name__ == "__main__":
    key = jax.random.PRNGKey(0)
    k_far, k_mix, k_par = jax.random.split(key, 3)
    farend = jax.random.normal(k_far, (BATCH, WAVE_LEN), jnp.float32)
    mixture = jax.random.normal(k_mix, (BATCH, WAVE_LEN), jnp.float32)
    params = init_params(k_par)

    wave_estimate = jax.jit(conv_lstm_forward)(farend, mixture, params)
    jax.block_until_ready(wave_estimate)
    assert wave_estimate.shape == (BATCH, WAVE_LEN)
    assert bool(jnp.all(jnp.isfinite(wave_estimate)))
    print("KERNEL_OK")
</pallas_src>

<mosaic_0001>
module attributes {stable_mosaic.version = 11 : i64} {
  func.func @fused_kernel(%arg0: i32, %arg1: memref<1x17x16xf32, #tpu.memory_space<vmem>>, %arg2: memref<1x17x16xf32, #tpu.memory_space<vmem>>, %arg3: memref<2x32x17xf32, #tpu.memory_space<vmem>>, %arg4: memref<2x17x32xf32, #tpu.memory_space<vmem>>, %arg5: memref<17x16xf32, #tpu.memory_space<vmem>>, %arg6: memref<2x1x17xf32, #tpu.memory_space<vmem>>, %arg7: memref<2x1x17xf32, #tpu.memory_space<vmem>>, %arg8: memref<2x17x128xf32, #tpu.memory_space<vmem>>, %arg9: memref<2x1x128xf32, #tpu.memory_space<vmem>>, %arg10: memref<2x3x64xf32, #tpu.memory_space<vmem>>, %arg11: memref<2x1x64xf32, #tpu.memory_space<vmem>>, %arg12: memref<2x1x64xf32, #tpu.memory_space<vmem>>, %arg13: memref<2x1x64xf32, #tpu.memory_space<vmem>>, %arg14: memref<2x64x32xf32, #tpu.memory_space<vmem>>, %arg15: memref<2x1x32xf32, #tpu.memory_space<vmem>>, %arg16: memref<64x16xf32, #tpu.memory_space<vmem>>, %arg17: memref<16x64xf32, #tpu.memory_space<vmem>>, %arg18: memref<2x64x256xf32, #tpu.memory_space<vmem>>, %arg19: memref<2x64x256xf32, #tpu.memory_space<vmem>>, %arg20: memref<2x1x256xf32, #tpu.memory_space<vmem>>, %arg21: memref<64x17xf32, #tpu.memory_space<vmem>>, %arg22: memref<1x17xf32, #tpu.memory_space<vmem>>, %arg23: memref<1x17x16xf32, #tpu.memory_space<vmem>>, %arg24: memref<16x256xf32, #tpu.memory_space<vmem>>, %arg25: memref<16x64xf32, #tpu.memory_space<vmem>>) attributes {dimension_semantics = [#tpu.dimension_semantics<parallel>], iteration_bounds = array<i64: 2>, scalar_prefetch = 0 : i64, scratch_operands = 2 : i64, tpu.core_type = #tpu.core_type<tc>, window_params = [{transform_indices = @transform_0, window_bounds = array<i64: 1, 17, 16>}, {transform_indices = @transform_1, window_bounds = array<i64: 1, 17, 16>}, {pipeline_mode = #tpu.pipeline_mode<synchronous>, transform_indices = @transform_2, window_bounds = array<i64: 2, 32, 17>}, {pipeline_mode = #tpu.pipeline_mode<synchronous>, transform_indices = @transform_3, window_bounds = array<i64: 2, 17, 32>}, {pipeline_mode = #tpu.pipeline_mode<synchronous>, transform_indices = @transform_4, window_bounds = array<i64: 17, 16>}, {pipeline_mode = #tpu.pipeline_mode<synchronous>, transform_indices = @transform_5, window_bounds = array<i64: 2, 1, 17>}, {pipeline_mode = #tpu.pipeline_mode<synchronous>, transform_indices = @transform_6, window_bounds = array<i64: 2, 1, 17>}, {pipeline_mode = #tpu.pipeline_mode<synchronous>, transform_indices = @transform_7, window_bounds = array<i64: 2, 17, 128>}, {pipeline_mode = #tpu.pipeline_mode<synchronous>, transform_indices = @transform_8, window_bounds = array<i64: 2, 1, 128>}, {pipeline_mode = #tpu.pipeline_mode<synchronous>, transform_indices = @transform_9, window_bounds = array<i64: 2, 3, 64>}, {pipeline_mode = #tpu.pipeline_mode<synchronous>, transform_indices = @transform_10, window_bounds = array<i64: 2, 1, 64>}, {pipeline_mode = #tpu.pipeline_mode<synchronous>, transform_indices = @transform_11, window_bounds = array<i64: 2, 1, 64>}, {pipeline_mode = #tpu.pipeline_mode<synchronous>, transform_indices = @transform_12, window_bounds = array<i64: 2, 1, 64>}, {pipeline_mode = #tpu.pipeline_mode<synchronous>, transform_indices = @transform_13, window_bounds = array<i64: 2, 64, 32>}, {pipeline_mode = #tpu.pipeline_mode<synchronous>, transform_indices = @transform_14, window_bounds = array<i64: 2, 1, 32>}, {pipeline_mode = #tpu.pipeline_mode<synchronous>, transform_indices = @transform_15, window_bounds = array<i64: 64, 16>}, {pipeline_mode = #tpu.pipeline_mode<synchronous>, transform_indices = @transform_16, window_bounds = array<i64: 16, 64>}, {pipeline_mode = #tpu.pipeline_mode<synchronous>, transform_indices = @transform_17, window_bounds = array<i64: 2, 64, 256>}, {pipeline_mode = #tpu.pipeline_mode<synchronous>, transform_indices = @transform_18, window_bounds = array<i64: 2, 64, 256>}, {pipeline_mode = #tpu.pipeline_mode<synchronous>, transform_indices = @transform_19, window_bounds = array<i64: 2, 1, 256>}, {pipeline_mode = #tpu.pipeline_mode<synchronous>, transform_indices = @transform_20, window_bounds = array<i64: 64, 17>}, {pipeline_mode = #tpu.pipeline_mode<synchronous>, transform_indices = @transform_21, window_bounds = array<i64: 1, 17>}, {transform_indices = @transform_22, window_bounds = array<i64: 1, 17, 16>}]} {
    %c0 = arith.constant 0 : index
    %c0_0 = arith.constant 0 : index
    %c0_1 = arith.constant 0 : index
    %0 = vector.load %arg3[%c0, %c0_0, %c0_1] : memref<2x32x17xf32, #tpu.memory_space<vmem>>, vector<1x32x17xf32>
    %1 = vector.shape_cast %0 : vector<1x32x17xf32> to vector<32x17xf32>
    %c1 = arith.constant 1 : index
    %c0_2 = arith.constant 0 : index
    %c0_3 = arith.constant 0 : index
    %2 = vector.load %arg3[%c1, %c0_2, %c0_3] : memref<2x32x17xf32, #tpu.memory_space<vmem>>, vector<1x32x17xf32>
    %3 = vector.shape_cast %2 : vector<1x32x17xf32> to vector<32x17xf32>
    %c0_4 = arith.constant 0 : index
    %c0_5 = arith.constant 0 : index
    %c0_6 = arith.constant 0 : index
    %4 = vector.load %arg1[%c0_4, %c0_5, %c0_6] : memref<1x17x16xf32, #tpu.memory_space<vmem>>, vector<1x16x16xf32>
    %5 = vector.shape_cast %4 : vector<1x16x16xf32> to vector<16x16xf32>
    %c0_7 = arith.constant 0 : index
    %c1_8 = arith.constant 1 : index
    %c0_9 = arith.constant 0 : index
    %6 = vector.load %arg1[%c0_7, %c1_8, %c0_9] : memref<1x17x16xf32, #tpu.memory_space<vmem>>, vector<1x16x16xf32>
    %7 = vector.shape_cast %6 : vector<1x16x16xf32> to vector<16x16xf32>
    %8 = vector.extract_strided_slice %1 {offsets = [0, 0], sizes = [16, 17], strides = [1, 1]} : vector<32x17xf32> to vector<16x17xf32>
    %cst = arith.constant dense<0.000000e+00> : vector<16x17xf32>
    %9 = tpu.matmul %5, %8, %cst {dimension_numbers = #tpu.dot_dimension_numbers<[1], [0], [0], [1], [0, 0, 1, 1], [], []>} : vector<16x16xf32>, vector<16x17xf32>, vector<16x17xf32> -> vector<16x17xf32>
    %10 = vector.extract_strided_slice %1 {offsets = [16, 0], sizes = [16, 17], strides = [1, 1]} : vector<32x17xf32> to vector<16x17xf32>
    %cst_10 = arith.constant dense<0.000000e+00> : vector<16x17xf32>
    %11 = tpu.matmul %7, %10, %cst_10 {dimension_numbers = #tpu.dot_dimension_numbers<[1], [0], [0], [1], [0, 0, 1, 1], [], []>} : vector<16x16xf32>, vector<16x17xf32>, vector<16x17xf32> -> vector<16x17xf32>
    %12 = arith.addf %9, %11 : vector<16x17xf32>
    %13 = vector.extract_strided_slice %3 {offsets = [0, 0], sizes = [16, 17], strides = [1, 1]} : vector<32x17xf32> to vector<16x17xf32>
    %cst_11 = arith.constant dense<0.000000e+00> : vector<16x17xf32>
    %14 = tpu.matmul %5, %13, %cst_11 {dimension_numbers = #tpu.dot_dimension_numbers<[1], [0], [0], [1], [0, 0, 1, 1], [], []>} : vector<16x16xf32>, vector<16x17xf32>, vector<16x17xf32> -> vector<16x17xf32>
    %15 = vector.extract_strided_slice %3 {offsets = [16, 0], sizes = [16, 17], strides = [1, 1]} : vector<32x17xf32> to vector<16x17xf32>
    %cst_12 = arith.constant dense<0.000000e+00> : vector<16x17xf32>
    %16 = tpu.matmul %7, %15, %cst_12 {dimension_numbers = #tpu.dot_dimension_numbers<[1], [0], [0], [1], [0, 0, 1, 1], [], []>} : vector<16x16xf32>, vector<16x17xf32>, vector<16x17xf32> -> vector<16x17xf32>
    %17 = arith.addf %14, %16 : vector<16x17xf32>
    %c0_13 = arith.constant 0 : index
    %c0_14 = arith.constant 0 : index
    %c0_15 = arith.constant 0 : index
    %18 = vector.load %arg2[%c0_13, %c0_14, %c0_15] : memref<1x17x16xf32, #tpu.memory_space<vmem>>, vector<1x16x16xf32>
    %19 = vector.shape_cast %18 : vector<1x16x16xf32> to vector<16x16xf32>
    %c0_16 = arith.constant 0 : index
    %c1_17 = arith.constant 1 : index
    %c0_18 = arith.constant 0 : index
    %20 = vector.load %arg2[%c0_16, %c1_17, %c0_18] : memref<1x17x16xf32, #tpu.memory_space<vmem>>, vector<1x16x16xf32>
    %21 = vector.shape_cast %20 : vector<1x16x16xf32> to vector<16x16xf32>
    %22 = vector.extract_strided_slice %1 {offsets = [0, 0], sizes = [16, 17], strides = [1, 1]} : vector<32x17xf32> to vector<16x17xf32>
    %cst_19 = arith.constant dense<0.000000e+00> : vector<16x17xf32>
    %23 = tpu.matmul %19, %22, %cst_19 {dimension_numbers = #tpu.dot_dimension_numbers<[1], [0], [0], [1], [0, 0, 1, 1], [], []>} : vector<16x16xf32>, vector<16x17xf32>, vector<16x17xf32> -> vector<16x17xf32>
    %24 = vector.extract_strided_slice %1 {offsets = [16, 0], sizes = [16, 17], strides = [1, 1]} : vector<32x17xf32> to vector<16x17xf32>
    %cst_20 = arith.constant dense<0.000000e+00> : vector<16x17xf32>
    %25 = tpu.matmul %21, %24, %cst_20 {dimension_numbers = #tpu.dot_dimension_numbers<[1], [0], [0], [1], [0, 0, 1, 1], [], []>} : vector<16x16xf32>, vector<16x17xf32>, vector<16x17xf32> -> vector<16x17xf32>
    %26 = arith.addf %23, %25 : vector<16x17xf32>
    %27 = vector.extract_strided_slice %3 {offsets = [0, 0], sizes = [16, 17], strides = [1, 1]} : vector<32x17xf32> to vector<16x17xf32>
    %cst_21 = arith.constant dense<0.000000e+00> : vector<16x17xf32>
    %28 = tpu.matmul %19, %27, %cst_21 {dimension_numbers = #tpu.dot_dimension_numbers<[1], [0], [0], [1], [0, 0, 1, 1], [], []>} : vector<16x16xf32>, vector<16x17xf32>, vector<16x17xf32> -> vector<16x17xf32>
    %29 = vector.extract_strided_slice %3 {offsets = [16, 0], sizes = [16, 17], strides = [1, 1]} : vector<32x17xf32> to vector<16x17xf32>
    %cst_22 = arith.constant dense<0.000000e+00> : vector<16x17xf32>
    %30 = tpu.matmul %21, %29, %cst_22 {dimension_numbers = #tpu.dot_dimension_numbers<[1], [0], [0], [1], [0, 0, 1, 1], [], []>} : vector<16x16xf32>, vector<16x17xf32>, vector<16x17xf32> -> vector<16x17xf32>
    %31 = arith.addf %28, %30 : vector<16x17xf32>
    %32 = arith.mulf %12, %12 : vector<16x17xf32>
    %33 = arith.mulf %17, %17 : vector<16x17xf32>
    %34 = arith.addf %32, %33 : vector<16x17xf32>
    %35 = math.sqrt %34 : vector<16x17xf32>
    %36 = arith.mulf %26, %26 : vector<16x17xf32>
    %37 = arith.mulf %31, %31 : vector<16x17xf32>
    %38 = arith.addf %36, %37 : vector<16x17xf32>
    %39 = math.sqrt %38 : vector<16x17xf32>
    %40 = tpu.iota {dimensions = array<i32: 0>} : vector<16x64xi32>
    %c0_23 = arith.constant 0 : index
    %c0_24 = arith.constant 0 : index
    %41 = vector.load %arg16[%c0_23, %c0_24] : memref<64x16xf32, #tpu.memory_space<vmem>>, vector<64x16xf32>
    %c0_25 = arith.constant 0 : index
    %c0_26 = arith.constant 0 : index
    %42 = vector.load %arg17[%c0_25, %c0_26] : memref<16x64xf32, #tpu.memory_space<vmem>>, vector<16x64xf32>
    %cst_27 = arith.constant dense<0.000000e+00> : vector<16xf32>
    %43 = vector.multi_reduction <add>, %35, %cst_27 [1] : vector<16x17xf32> to vector<16xf32>
    %44 = vector.shape_cast %43 : vector<16xf32> to vector<16x1xf32>
    %cst_28 = arith.constant 1.700000e+01 : f32
    %45 = vector.broadcast %cst_28 : f32 to vector<16x1xf32>
    %46 = arith.divf %44, %45 : vector<16x1xf32>
    %47 = vector.broadcast %46 : vector<16x1xf32> to vector<16x17xf32>
    %48 = arith.subf %35, %47 : vector<16x17xf32>
    %49 = arith.mulf %48, %48 : vector<16x17xf32>
    %cst_29 = arith.constant dense<0.000000e+00> : vector<16xf32>
    %50 = vector.multi_reduction <add>, %49, %cst_29 [1] : vector<16x17xf32> to vector<16xf32>
    %51 = vector.shape_cast %50 : vector<16xf32> to vector<16x1xf32>
    %cst_30 = arith.constant 1.700000e+01 : f32
    %52 = vector.broadcast %cst_30 : f32 to vector<16x1xf32>
    %53 = arith.divf %51, %52 : vector<16x1xf32>
    %54 = vector.broadcast %46 : vector<16x1xf32> to vector<16x17xf32>
    %55 = arith.subf %35, %54 : vector<16x17xf32>
    %cst_31 = arith.constant 9.99999974E-6 : f32
    %56 = vector.broadcast %cst_31 : f32 to vector<16x1xf32>
    %57 = arith.addf %53, %56 : vector<16x1xf32>
    %58 = math.rsqrt %57 : vector<16x1xf32>
    %59 = vector.broadcast %58 : vector<16x1xf32> to vector<16x17xf32>
    %60 = arith.mulf %55, %59 : vector<16x17xf32>
    %c0_32 = arith.constant 0 : index
    %c0_33 = arith.constant 0 : index
    %c0_34 = arith.constant 0 : index
    %61 = vector.load %arg6[%c0_32, %c0_33, %c0_34] : memref<2x1x17xf32, #tpu.memory_space<vmem>>, vector<1x1x17xf32>
    %62 = vector.shape_cast %61 : vector<1x1x17xf32> to vector<1x17xf32>
    %63 = vector.broadcast %62 : vector<1x17xf32> to vector<16x17xf32>
    %64 = arith.mulf %60, %63 : vector<16x17xf32>
    %c0_35 = arith.constant 0 : index
    %c0_36 = arith.constant 0 : index
    %c0_37 = arith.constant 0 : index
    %65 = vector.load %arg7[%c0_35, %c0_36, %c0_37] : memref<2x1x17xf32, #tpu.memory_space<vmem>>, vector<1x1x17xf32>
    %66 = vector.shape_cast %65 : vector<1x1x17xf32> to vector<1x17xf32>
    %67 = vector.broadcast %66 : vector<1x17xf32> to vector<16x17xf32>
    %68 = arith.addf %64, %67 : vector<16x17xf32>
    %c0_38 = arith.constant 0 : index
    %c0_39 = arith.constant 0 : index
    %c0_40 = arith.constant 0 : index
    %69 = vector.load %arg8[%c0_38, %c0_39, %c0_40] : memref<2x17x128xf32, #tpu.memory_space<vmem>>, vector<1x17x128xf32>
    %70 = vector.shape_cast %69 : vector<1x17x128xf32> to vector<17x128xf32>
    %cst_41 = arith.constant dense<0.000000e+00> : vector<16x128xf32>
    %71 = tpu.matmul %68, %70, %cst_41 {dimension_numbers = #tpu.dot_dimension_numbers<[1], [0], [0], [1], [0, 0, 1, 1], [], []>} : vector<16x17xf32>, vector<17x128xf32>, vector<16x128xf32> -> vector<16x128xf32>
    %c0_42 = arith.constant 0 : index
    %c0_43 = arith.constant 0 : index
    %c0_44 = arith.constant 0 : index
    %72 = vector.load %arg9[%c0_42, %c0_43, %c0_44] : memref<2x1x128xf32, #tpu.memory_space<vmem>>, vector<1x1x128xf32>
    %73 = vector.shape_cast %72 : vector<1x1x128xf32> to vector<1x128xf32>
    %74 = vector.broadcast %73 : vector<1x128xf32> to vector<16x128xf32>
    %75 = arith.addf %71, %74 : vector<16x128xf32>
    %76 = vector.extract_strided_slice %75 {offsets = [0, 0], sizes = [16, 64], strides = [1, 1]} : vector<16x128xf32> to vector<16x64xf32>
    %77 = vector.extract_strided_slice %75 {offsets = [0, 64], sizes = [16, 64], strides = [1, 1]} : vector<16x128xf32> to vector<16x64xf32>
    %78 = arith.negf %77 : vector<16x64xf32>
    %79 = math.exp %78 : vector<16x64xf32>
    %cst_45 = arith.constant 1.000000e+00 : f32
    %80 = vector.broadcast %cst_45 : f32 to vector<16x64xf32>
    %81 = arith.addf %80, %79 : vector<16x64xf32>
    %82 = arith.divf %80, %81 : vector<16x64xf32>
    %83 = arith.mulf %76, %82 : vector<16x64xf32>
    %c0_46 = arith.constant 0 : index
    %c0_47 = arith.constant 0 : index
    %c0_48 = arith.constant 0 : index
    %84 = vector.load %arg10[%c0_46, %c0_47, %c0_48] : memref<2x3x64xf32, #tpu.memory_space<vmem>>, vector<1x3x64xf32>
    %85 = vector.shape_cast %84 : vector<1x3x64xf32> to vector<3x64xf32>
    %c0_49 = arith.constant 0 : index
    %c0_50 = arith.constant 0 : index
    %c0_51 = arith.constant 0 : index
    %86 = vector.load %arg11[%c0_49, %c0_50, %c0_51] : memref<2x1x64xf32, #tpu.memory_space<vmem>>, vector<1x1x64xf32>
    %87 = vector.shape_cast %86 : vector<1x1x64xf32> to vector<1x64xf32>
    %88 = vector.extract_strided_slice %85 {offsets = [2, 0], sizes = [1, 64], strides = [1, 1]} : vector<3x64xf32> to vector<1x64xf32>
    %89 = vector.broadcast %88 : vector<1x64xf32> to vector<16x64xf32>
    %90 = arith.mulf %89, %83 : vector<16x64xf32>
    %91 = vector.broadcast %87 : vector<1x64xf32> to vector<16x64xf32>
    %92 = arith.addf %91, %90 : vector<16x64xf32>
    %c2_i32 = arith.constant 2 : i32
    %93 = tpu.dynamic_rotate %83 by %c2_i32 dim 0 : vector<16x64xf32>, i32 -> vector<16x64xf32>
    %c2_i32_52 = arith.constant 2 : i32
    %94 = vector.broadcast %c2_i32_52 : i32 to vector<16x64xi32>
    %95 = arith.cmpi sge, %40, %94 : vector<16x64xi32>
    %cst_53 = arith.constant 0.000000e+00 : f32
    %96 = vector.broadcast %cst_53 : f32 to vector<16x64xf32>
    %97 = arith.select %95, %93, %96 : vector<16x64xi1>, vector<16x64xf32>
    %98 = vector.extract_strided_slice %85 {offsets = [0, 0], sizes = [1, 64], strides = [1, 1]} : vector<3x64xf32> to vector<1x64xf32>
    %99 = vector.broadcast %98 : vector<1x64xf32> to vector<16x64xf32>
    %100 = arith.mulf %99, %97 : vector<16x64xf32>
    %101 = arith.addf %92, %100 : vector<16x64xf32>
    %c1_i32 = arith.constant 1 : i32
    %102 = tpu.dynamic_rotate %83 by %c1_i32 dim 0 : vector<16x64xf32>, i32 -> vector<16x64xf32>
    %c1_i32_54 = arith.constant 1 : i32
    %103 = vector.broadcast %c1_i32_54 : i32 to vector<16x64xi32>
    %104 = arith.cmpi sge, %40, %103 : vector<16x64xi32>
    %cst_55 = arith.constant 0.000000e+00 : f32
    %105 = vector.broadcast %cst_55 : f32 to vector<16x64xf32>
    %106 = arith.select %104, %102, %105 : vector<16x64xi1>, vector<16x64xf32>
    %107 = vector.extract_strided_slice %85 {offsets = [1, 0], sizes = [1, 64], strides = [1, 1]} : vector<3x64xf32> to vector<1x64xf32>
    %108 = vector.broadcast %107 : vector<1x64xf32> to vector<16x64xf32>
    %109 = arith.mulf %108, %106 : vector<16x64xf32>
    %110 = arith.addf %101, %109 : vector<16x64xf32>
    %cst_56 = arith.constant dense<0.000000e+00> : vector<64xf32>
    %111 = vector.multi_reduction <add>, %110, %cst_56 [0] : vector<16x64xf32> to vector<64xf32>
    %112 = vector.shape_cast %111 : vector<64xf32> to vector<1x64xf32>
    %cst_57 = arith.constant dense<0.000000e+00> : vector<1x16xf32>
    %113 = tpu.matmul %112, %41, %cst_57 {dimension_numbers = #tpu.dot_dimension_numbers<[1], [0], [0], [1], [0, 0, 1, 1], [], []>} : vector<1x64xf32>, vector<64x16xf32>, vector<1x16xf32> -> vector<1x16xf32>
    %114 = arith.mulf %110, %110 : vector<16x64xf32>
    %cst_58 = arith.constant dense<0.000000e+00> : vector<64xf32>
    %115 = vector.multi_reduction <add>, %114, %cst_58 [0] : vector<16x64xf32> to vector<64xf32>
    %116 = vector.shape_cast %115 : vector<64xf32> to vector<1x64xf32>
    %cst_59 = arith.constant dense<0.000000e+00> : vector<1x16xf32>
    %117 = tpu.matmul %116, %41, %cst_59 {dimension_numbers = #tpu.dot_dimension_numbers<[1], [0], [0], [1], [0, 0, 1, 1], [], []>} : vector<1x64xf32>, vector<64x16xf32>, vector<1x16xf32> -> vector<1x16xf32>
    %cst_60 = arith.constant 6.400000e+01 : f32
    %118 = vector.broadcast %cst_60 : f32 to vector<1x16xf32>
    %119 = arith.divf %113, %118 : vector<1x16xf32>
    %cst_61 = arith.constant 6.400000e+01 : f32
    %120 = vector.broadcast %cst_61 : f32 to vector<1x16xf32>
    %121 = arith.divf %117, %120 : vector<1x16xf32>
    %122 = arith.mulf %119, %119 : vector<1x16xf32>
    %123 = arith.subf %121, %122 : vector<1x16xf32>
    %cst_62 = arith.constant 0.000000e+00 : f32
    %124 = vector.broadcast %cst_62 : f32 to vector<1x16xf32>
    %125 = arith.maximumf %123, %124 : vector<1x16xf32>
    %cst_63 = arith.constant dense<0.000000e+00> : vector<1x64xf32>
    %126 = tpu.matmul %119, %42, %cst_63 {dimension_numbers = #tpu.dot_dimension_numbers<[1], [0], [0], [1], [0, 0, 1, 1], [], []>} : vector<1x16xf32>, vector<16x64xf32>, vector<1x64xf32> -> vector<1x64xf32>
    %cst_64 = arith.constant dense<0.000000e+00> : vector<1x64xf32>
    %127 = tpu.matmul %125, %42, %cst_64 {dimension_numbers = #tpu.dot_dimension_numbers<[1], [0], [0], [1], [0, 0, 1, 1], [], []>} : vector<1x16xf32>, vector<16x64xf32>, vector<1x64xf32> -> vector<1x64xf32>
    %128 = vector.broadcast %126 : vector<1x64xf32> to vector<16x64xf32>
    %129 = arith.subf %110, %128 : vector<16x64xf32>
    %cst_65 = arith.constant 9.99999974E-6 : f32
    %130 = vector.broadcast %cst_65 : f32 to vector<1x64xf32>
    %131 = arith.addf %127, %130 : vector<1x64xf32>
    %132 = math.rsqrt %131 : vector<1x64xf32>
    %133 = vector.broadcast %132 : vector<1x64xf32> to vector<16x64xf32>
    %134 = arith.mulf %129, %133 : vector<16x64xf32>
    %c0_66 = arith.constant 0 : index
    %c0_67 = arith.constant 0 : index
    %c0_68 = arith.constant 0 : index
    %135 = vector.load %arg12[%c0_66, %c0_67, %c0_68] : memref<2x1x64xf32, #tpu.memory_space<vmem>>, vector<1x1x64xf32>
    %136 = vector.shape_cast %135 : vector<1x1x64xf32> to vector<1x64xf32>
    %137 = vector.broadcast %136 : vector<1x64xf32> to vector<16x64xf32>
    %138 = arith.mulf %134, %137 : vector<16x64xf32>
    %c0_69 = arith.constant 0 : index
    %c0_70 = arith.constant 0 : index
    %c0_71 = arith.constant 0 : index
    %139 = vector.load %arg13[%c0_69, %c0_70, %c0_71] : memref<2x1x64xf32, #tpu.memory_space<vmem>>, vector<1x1x64xf32>
    %140 = vector.shape_cast %139 : vector<1x1x64xf32> to vector<1x64xf32>
    %141 = vector.broadcast %140 : vector<1x64xf32> to vector<16x64xf32>
    %142 = arith.addf %138, %141 : vector<16x64xf32>
    %143 = arith.negf %142 : vector<16x64xf32>
    %144 = math.exp %143 : vector<16x64xf32>
    %cst_72 = arith.constant 1.000000e+00 : f32
    %145 = vector.broadcast %cst_72 : f32 to vector<16x64xf32>
    %146 = arith.addf %145, %144 : vector<16x64xf32>
    %147 = arith.divf %145, %146 : vector<16x64xf32>
    %148 = arith.mulf %142, %147 : vector<16x64xf32>
    %c0_73 = arith.constant 0 : index
    %c0_74 = arith.constant 0 : index
    %c0_75 = arith.constant 0 : index
    %149 = vector.load %arg14[%c0_73, %c0_74, %c0_75] : memref<2x64x32xf32, #tpu.memory_space<vmem>>, vector<1x64x32xf32>
    %150 = vector.shape_cast %149 : vector<1x64x32xf32> to vector<64x32xf32>
    %cst_76 = arith.constant dense<0.000000e+00> : vector<16x32xf32>
    %151 = tpu.matmul %148, %150, %cst_76 {dimension_numbers = #tpu.dot_dimension_numbers<[1], [0], [0], [1], [0, 0, 1, 1], [], []>} : vector<16x64xf32>, vector<64x32xf32>, vector<16x32xf32> -> vector<16x32xf32>
    %c0_77 = arith.constant 0 : index
    %c0_78 = arith.constant 0 : index
    %c0_79 = arith.constant 0 : index
    %152 = vector.load %arg15[%c0_77, %c0_78, %c0_79] : memref<2x1x32xf32, #tpu.memory_space<vmem>>, vector<1x1x32xf32>
    %153 = vector.shape_cast %152 : vector<1x1x32xf32> to vector<1x32xf32>
    %154 = vector.broadcast %153 : vector<1x32xf32> to vector<16x32xf32>
    %155 = arith.addf %151, %154 : vector<16x32xf32>
    %cst_80 = arith.constant dense<0.000000e+00> : vector<16xf32>
    %156 = vector.multi_reduction <add>, %39, %cst_80 [1] : vector<16x17xf32> to vector<16xf32>
    %157 = vector.shape_cast %156 : vector<16xf32> to vector<16x1xf32>
    %cst_81 = arith.constant 1.700000e+01 : f32
    %158 = vector.broadcast %cst_81 : f32 to vector<16x1xf32>
    %159 = arith.divf %157, %158 : vector<16x1xf32>
    %160 = vector.broadcast %159 : vector<16x1xf32> to vector<16x17xf32>
    %161 = arith.subf %39, %160 : vector<16x17xf32>
    %162 = arith.mulf %161, %161 : vector<16x17xf32>
    %cst_82 = arith.constant dense<0.000000e+00> : vector<16xf32>
    %163 = vector.multi_reduction <add>, %162, %cst_82 [1] : vector<16x17xf32> to vector<16xf32>
    %164 = vector.shape_cast %163 : vector<16xf32> to vector<16x1xf32>
    %cst_83 = arith.constant 1.700000e+01 : f32
    %165 = vector.broadcast %cst_83 : f32 to vector<16x1xf32>
    %166 = arith.divf %164, %165 : vector<16x1xf32>
    %167 = vector.broadcast %159 : vector<16x1xf32> to vector<16x17xf32>
    %168 = arith.subf %39, %167 : vector<16x17xf32>
    %cst_84 = arith.constant 9.99999974E-6 : f32
    %169 = vector.broadcast %cst_84 : f32 to vector<16x1xf32>
    %170 = arith.addf %166, %169 : vector<16x1xf32>
    %171 = math.rsqrt %170 : vector<16x1xf32>
    %172 = vector.broadcast %171 : vector<16x1xf32> to vector<16x17xf32>
    %173 = arith.mulf %168, %172 : vector<16x17xf32>
    %c1_85 = arith.constant 1 : index
    %c0_86 = arith.constant 0 : index
    %c0_87 = arith.constant 0 : index
    %174 = vector.load %arg6[%c1_85, %c0_86, %c0_87] : memref<2x1x17xf32, #tpu.memory_space<vmem>>, vector<1x1x17xf32>
    %175 = vector.shape_cast %174 : vector<1x1x17xf32> to vector<1x17xf32>
    %176 = vector.broadcast %175 : vector<1x17xf32> to vector<16x17xf32>
    %177 = arith.mulf %173, %176 : vector<16x17xf32>
    %c1_88 = arith.constant 1 : index
    %c0_89 = arith.constant 0 : index
    %c0_90 = arith.constant 0 : index
    %178 = vector.load %arg7[%c1_88, %c0_89, %c0_90] : memref<2x1x17xf32, #tpu.memory_space<vmem>>, vector<1x1x17xf32>
    %179 = vector.shape_cast %178 : vector<1x1x17xf32> to vector<1x17xf32>
    %180 = vector.broadcast %179 : vector<1x17xf32> to vector<16x17xf32>
    %181 = arith.addf %177, %180 : vector<16x17xf32>
    %c1_91 = arith.constant 1 : index
    %c0_92 = arith.constant 0 : index
    %c0_93 = arith.constant 0 : index
    %182 = vector.load %arg8[%c1_91, %c0_92, %c0_93] : memref<2x17x128xf32, #tpu.memory_space<vmem>>, vector<1x17x128xf32>
    %183 = vector.shape_cast %182 : vector<1x17x128xf32> to vector<17x128xf32>
    %cst_94 = arith.constant dense<0.000000e+00> : vector<16x128xf32>
    %184 = tpu.matmul %181, %183, %cst_94 {dimension_numbers = #tpu.dot_dimension_numbers<[1], [0], [0], [1], [0, 0, 1, 1], [], []>} : vector<16x17xf32>, vector<17x128xf32>, vector<16x128xf32> -> vector<16x128xf32>
    %c1_95 = arith.constant 1 : index
    %c0_96 = arith.constant 0 : index
    %c0_97 = arith.constant 0 : index
    %185 = vector.load %arg9[%c1_95, %c0_96, %c0_97] : memref<2x1x128xf32, #tpu.memory_space<vmem>>, vector<1x1x128xf32>
    %186 = vector.shape_cast %185 : vector<1x1x128xf32> to vector<1x128xf32>
    %187 = vector.broadcast %186 : vector<1x128xf32> to vector<16x128xf32>
    %188 = arith.addf %184, %187 : vector<16x128xf32>
    %189 = vector.extract_strided_slice %188 {offsets = [0, 0], sizes = [16, 64], strides = [1, 1]} : vector<16x128xf32> to vector<16x64xf32>
    %190 = vector.extract_strided_slice %188 {offsets = [0, 64], sizes = [16, 64], strides = [1, 1]} : vector<16x128xf32> to vector<16x64xf32>
    %191 = arith.negf %190 : vector<16x64xf32>
    %192 = math.exp %191 : vector<16x64xf32>
    %cst_98 = arith.constant 1.000000e+00 : f32
    %193 = vector.broadcast %cst_98 : f32 to vector<16x64xf32>
    %194 = arith.addf %193, %192 : vector<16x64xf32>
    %195 = arith.divf %193, %194 : vector<16x64xf32>
    %196 = arith.mulf %189, %195 : vector<16x64xf32>
    %c1_99 = arith.constant 1 : index
    %c0_100 = arith.constant 0 : index
    %c0_101 = arith.constant 0 : index
    %197 = vector.load %arg10[%c1_99, %c0_100, %c0_101] : memref<2x3x64xf32, #tpu.memory_space<vmem>>, vector<1x3x64xf32>
    %198 = vector.shape_cast %197 : vector<1x3x64xf32> to vector<3x64xf32>
    %c1_102 = arith.constant 1 : index
    %c0_103 = arith.constant 0 : index
    %c0_104 = arith.constant 0 : index
    %199 = vector.load %arg11[%c1_102, %c0_103, %c0_104] : memref<2x1x64xf32, #tpu.memory_space<vmem>>, vector<1x1x64xf32>
    %200 = vector.shape_cast %199 : vector<1x1x64xf32> to vector<1x64xf32>
    %201 = vector.extract_strided_slice %198 {offsets = [2, 0], sizes = [1, 64], strides = [1, 1]} : vector<3x64xf32> to vector<1x64xf32>
    %202 = vector.broadcast %201 : vector<1x64xf32> to vector<16x64xf32>
    %203 = arith.mulf %202, %196 : vector<16x64xf32>
    %204 = vector.broadcast %200 : vector<1x64xf32> to vector<16x64xf32>
    %205 = arith.addf %204, %203 : vector<16x64xf32>
    %c2_i32_105 = arith.constant 2 : i32
    %206 = tpu.dynamic_rotate %196 by %c2_i32_105 dim 0 : vector<16x64xf32>, i32 -> vector<16x64xf32>
    %c2_i32_106 = arith.constant 2 : i32
    %207 = vector.broadcast %c2_i32_106 : i32 to vector<16x64xi32>
    %208 = arith.cmpi sge, %40, %207 : vector<16x64xi32>
    %cst_107 = arith.constant 0.000000e+00 : f32
    %209 = vector.broadcast %cst_107 : f32 to vector<16x64xf32>
    %210 = arith.select %208, %206, %209 : vector<16x64xi1>, vector<16x64xf32>
    %211 = vector.extract_strided_slice %198 {offsets = [0, 0], sizes = [1, 64], strides = [1, 1]} : vector<3x64xf32> to vector<1x64xf32>
    %212 = vector.broadcast %211 : vector<1x64xf32> to vector<16x64xf32>
    %213 = arith.mulf %212, %210 : vector<16x64xf32>
    %214 = arith.addf %205, %213 : vector<16x64xf32>
    %c1_i32_108 = arith.constant 1 : i32
    %215 = tpu.dynamic_rotate %196 by %c1_i32_108 dim 0 : vector<16x64xf32>, i32 -> vector<16x64xf32>
    %c1_i32_109 = arith.constant 1 : i32
    %216 = vector.broadcast %c1_i32_109 : i32 to vector<16x64xi32>
    %217 = arith.cmpi sge, %40, %216 : vector<16x64xi32>
    %cst_110 = arith.constant 0.000000e+00 : f32
    %218 = vector.broadcast %cst_110 : f32 to vector<16x64xf32>
    %219 = arith.select %217, %215, %218 : vector<16x64xi1>, vector<16x64xf32>
    %220 = vector.extract_strided_slice %198 {offsets = [1, 0], sizes = [1, 64], strides = [1, 1]} : vector<3x64xf32> to vector<1x64xf32>
    %221 = vector.broadcast %220 : vector<1x64xf32> to vector<16x64xf32>
    %222 = arith.mulf %221, %219 : vector<16x64xf32>
    %223 = arith.addf %214, %222 : vector<16x64xf32>
    %cst_111 = arith.constant dense<0.000000e+00> : vector<64xf32>
    %224 = vector.multi_reduction <add>, %223, %cst_111 [0] : vector<16x64xf32> to vector<64xf32>
    %225 = vector.shape_cast %224 : vector<64xf32> to vector<1x64xf32>
    %cst_112 = arith.constant dense<0.000000e+00> : vector<1x16xf32>
    %226 = tpu.matmul %225, %41, %cst_112 {dimension_numbers = #tpu.dot_dimension_numbers<[1], [0], [0], [1], [0, 0, 1, 1], [], []>} : vector<1x64xf32>, vector<64x16xf32>, vector<1x16xf32> -> vector<1x16xf32>
    %227 = arith.mulf %223, %223 : vector<16x64xf32>
    %cst_113 = arith.constant dense<0.000000e+00> : vector<64xf32>
    %228 = vector.multi_reduction <add>, %227, %cst_113 [0] : vector<16x64xf32> to vector<64xf32>
    %229 = vector.shape_cast %228 : vector<64xf32> to vector<1x64xf32>
    %cst_114 = arith.constant dense<0.000000e+00> : vector<1x16xf32>
    %230 = tpu.matmul %229, %41, %cst_114 {dimension_numbers = #tpu.dot_dimension_numbers<[1], [0], [0], [1], [0, 0, 1, 1], [], []>} : vector<1x64xf32>, vector<64x16xf32>, vector<1x16xf32> -> vector<1x16xf32>
    %cst_115 = arith.constant 6.400000e+01 : f32
    %231 = vector.broadcast %cst_115 : f32 to vector<1x16xf32>
    %232 = arith.divf %226, %231 : vector<1x16xf32>
    %cst_116 = arith.constant 6.400000e+01 : f32
    %233 = vector.broadcast %cst_116 : f32 to vector<1x16xf32>
    %234 = arith.divf %230, %233 : vector<1x16xf32>
    %235 = arith.mulf %232, %232 : vector<1x16xf32>
    %236 = arith.subf %234, %235 : vector<1x16xf32>
    %cst_117 = arith.constant 0.000000e+00 : f32
    %237 = vector.broadcast %cst_117 : f32 to vector<1x16xf32>
    %238 = arith.maximumf %236, %237 : vector<1x16xf32>
    %cst_118 = arith.constant dense<0.000000e+00> : vector<1x64xf32>
    %239 = tpu.matmul %232, %42, %cst_118 {dimension_numbers = #tpu.dot_dimension_numbers<[1], [0], [0], [1], [0, 0, 1, 1], [], []>} : vector<1x16xf32>, vector<16x64xf32>, vector<1x64xf32> -> vector<1x64xf32>
    %cst_119 = arith.constant dense<0.000000e+00> : vector<1x64xf32>
    %240 = tpu.matmul %238, %42, %cst_119 {dimension_numbers = #tpu.dot_dimension_numbers<[1], [0], [0], [1], [0, 0, 1, 1], [], []>} : vector<1x16xf32>, vector<16x64xf32>, vector<1x64xf32> -> vector<1x64xf32>
    %241 = vector.broadcast %239 : vector<1x64xf32> to vector<16x64xf32>
    %242 = arith.subf %223, %241 : vector<16x64xf32>
    %cst_120 = arith.constant 9.99999974E-6 : f32
    %243 = vector.broadcast %cst_120 : f32 to vector<1x64xf32>
    %244 = arith.addf %240, %243 : vector<1x64xf32>
    %245 = math.rsqrt %244 : vector<1x64xf32>
    %246 = vector.broadcast %245 : vector<1x64xf32> to vector<16x64xf32>
    %247 = arith.mulf %242, %246 : vector<16x64xf32>
    %c1_121 = arith.constant 1 : index
    %c0_122 = arith.constant 0 : index
    %c0_123 = arith.constant 0 : index
    %248 = vector.load %arg12[%c1_121, %c0_122, %c0_123] : memref<2x1x64xf32, #tpu.memory_space<vmem>>, vector<1x1x64xf32>
    %249 = vector.shape_cast %248 : vector<1x1x64xf32> to vector<1x64xf32>
    %250 = vector.broadcast %249 : vector<1x64xf32> to vector<16x64xf32>
    %251 = arith.mulf %247, %250 : vector<16x64xf32>
    %c1_124 = arith.constant 1 : index
    %c0_125 = arith.constant 0 : index
    %c0_126 = arith.constant 0 : index
    %252 = vector.load %arg13[%c1_124, %c0_125, %c0_126] : memref<2x1x64xf32, #tpu.memory_space<vmem>>, vector<1x1x64xf32>
    %253 = vector.shape_cast %252 : vector<1x1x64xf32> to vector<1x64xf32>
    %254 = vector.broadcast %253 : vector<1x64xf32> to vector<16x64xf32>
    %255 = arith.addf %251, %254 : vector<16x64xf32>
    %256 = arith.negf %255 : vector<16x64xf32>
    %257 = math.exp %256 : vector<16x64xf32>
    %cst_127 = arith.constant 1.000000e+00 : f32
    %258 = vector.broadcast %cst_127 : f32 to vector<16x64xf32>
    %259 = arith.addf %258, %257 : vector<16x64xf32>
    %260 = arith.divf %258, %259 : vector<16x64xf32>
    %261 = arith.mulf %255, %260 : vector<16x64xf32>
    %c1_128 = arith.constant 1 : index
    %c0_129 = arith.constant 0 : index
    %c0_130 = arith.constant 0 : index
    %262 = vector.load %arg14[%c1_128, %c0_129, %c0_130] : memref<2x64x32xf32, #tpu.memory_space<vmem>>, vector<1x64x32xf32>
    %263 = vector.shape_cast %262 : vector<1x64x32xf32> to vector<64x32xf32>
    %cst_131 = arith.constant dense<0.000000e+00> : vector<16x32xf32>
    %264 = tpu.matmul %261, %263, %cst_131 {dimension_numbers = #tpu.dot_dimension_numbers<[1], [0], [0], [1], [0, 0, 1, 1], [], []>} : vector<16x64xf32>, vector<64x32xf32>, vector<16x32xf32> -> vector<16x32xf32>
    %c1_132 = arith.constant 1 : index
    %c0_133 = arith.constant 0 : index
    %c0_134 = arith.constant 0 : index
    %265 = vector.load %arg15[%c1_132, %c0_133, %c0_134] : memref<2x1x32xf32, #tpu.memory_space<vmem>>, vector<1x1x32xf32>
    %266 = vector.shape_cast %265 : vector<1x1x32xf32> to vector<1x32xf32>
    %267 = vector.broadcast %266 : vector<1x32xf32> to vector<16x32xf32>
    %268 = arith.addf %264, %267 : vector<16x32xf32>
    %c0_135 = arith.constant 0 : index
    %c0_136 = arith.constant 0 : index
    %c0_137 = arith.constant 0 : index
    %269 = vector.load %arg18[%c0_135, %c0_136, %c0_137] : memref<2x64x256xf32, #tpu.memory_space<vmem>>, vector<1x64x256xf32>
    %270 = vector.shape_cast %269 : vector<1x64x256xf32> to vector<64x256xf32>
    %271 = vector.extract_strided_slice %270 {offsets = [0, 0], sizes = [32, 256], strides = [1, 1]} : vector<64x256xf32> to vector<32x256xf32>
    %cst_138 = arith.constant dense<0.000000e+00> : vector<16x256xf32>
    %272 = tpu.matmul %155, %271, %cst_138 {dimension_numbers = #tpu.dot_dimension_numbers<[1], [0], [0], [1], [0, 0, 1, 1], [], []>} : vector<16x32xf32>, vector<32x256xf32>, vector<16x256xf32> -> vector<16x256xf32>
    %273 = vector.extract_strided_slice %270 {offsets = [32, 0], sizes = [32, 256], strides = [1, 1]} : vector<64x256xf32> to vector<32x256xf32>
    %cst_139 = arith.constant dense<0.000000e+00> : vector<16x256xf32>
    %274 = tpu.matmul %268, %273, %cst_139 {dimension_numbers = #tpu.dot_dimension_numbers<[1], [0], [0], [1], [0, 0, 1, 1], [], []>} : vector<16x32xf32>, vector<32x256xf32>, vector<16x256xf32> -> vector<16x256xf32>
    %275 = arith.addf %272, %274 : vector<16x256xf32>
    %c0_140 = arith.constant 0 : index
    %c0_141 = arith.constant 0 : index
    %c0_142 = arith.constant 0 : index
    %276 = vector.load %arg20[%c0_140, %c0_141, %c0_142] : memref<2x1x256xf32, #tpu.memory_space<vmem>>, vector<1x1x256xf32>
    %277 = vector.shape_cast %276 : vector<1x1x256xf32> to vector<1x256xf32>
    %278 = vector.broadcast %277 : vector<1x256xf32> to vector<16x256xf32>
    %279 = arith.addf %275, %278 : vector<16x256xf32>
    %c0_143 = arith.constant 0 : index
    %c0_144 = arith.constant 0 : index
    %280 = vector.load %arg24[%c0_143, %c0_144] : memref<16x256xf32, #tpu.memory_space<vmem>>, vector<16x256xf32>
    tpu.vector_store %arg24[%c0_143, %c0_144], %279 {strides = array<i32>} : memref<16x256xf32, #tpu.memory_space<vmem>>, vector<16x256xf32>,
    %c0_145 = arith.constant 0 : index
    %c0_146 = arith.constant 0 : index
    %c0_147 = arith.constant 0 : index
    %281 = vector.load %arg19[%c0_145, %c0_146, %c0_147] : memref<2x64x256xf32, #tpu.memory_space<vmem>>, vector<1x64x256xf32>
    %282 = vector.shape_cast %281 : vector<1x64x256xf32> to vector<64x256xf32>
    %c1_148 = arith.constant 1 : index
    %c0_149 = arith.constant 0 : index
    %c0_150 = arith.constant 0 : index
    %283 = vector.load %arg19[%c1_148, %c0_149, %c0_150] : memref<2x64x256xf32, #tpu.memory_space<vmem>>, vector<1x64x256xf32>
    %284 = vector.shape_cast %283 : vector<1x64x256xf32> to vector<64x256xf32>
    %c1_151 = arith.constant 1 : index
    %c0_152 = arith.constant 0 : index
    %c0_153 = arith.constant 0 : index
    %285 = vector.load %arg18[%c1_151, %c0_152, %c0_153] : memref<2x64x256xf32, #tpu.memory_space<vmem>>, vector<1x64x256xf32>
    %286 = vector.shape_cast %285 : vector<1x64x256xf32> to vector<64x256xf32>
    %c1_154 = arith.constant 1 : index
    %c0_155 = arith.constant 0 : index
    %c0_156 = arith.constant 0 : index
    %287 = vector.load %arg20[%c1_154, %c0_155, %c0_156] : memref<2x1x256xf32, #tpu.memory_space<vmem>>, vector<1x1x256xf32>
    %288 = vector.shape_cast %287 : vector<1x1x256xf32> to vector<1x256xf32>
    %cst_157 = arith.constant 0.000000e+00 : f32
    %289 = vector.broadcast %cst_157 : f32 to vector<1x64xf32>
    %cst_158 = arith.constant 0.000000e+00 : f32
    %290 = vector.broadcast %cst_158 : f32 to vector<1x64xf32>
    %c0_159 = arith.constant 0 : index
    %c0_160 = arith.constant 0 : index
    %291 = vector.load %arg24[%c0_159, %c0_160] : memref<16x256xf32, #tpu.memory_space<vmem>>, vector<1x256xf32>
    %292 = vector.extract_strided_slice %291 {offsets = [0, 0], sizes = [1, 192], strides = [1, 1]} : vector<1x256xf32> to vector<1x192xf32>
    %293 = arith.negf %292 : vector<1x192xf32>
    %294 = math.exp %293 : vector<1x192xf32>
    %cst_161 = arith.constant 1.000000e+00 : f32
    %295 = vector.broadcast %cst_161 : f32 to vector<1x192xf32>
    %296 = arith.addf %295, %294 : vector<1x192xf32>
    %297 = arith.divf %295, %296 : vector<1x192xf32>
    %298 = vector.extract_strided_slice %291 {offsets = [0, 192], sizes = [1, 64], strides = [1, 1]} : vector<1x256xf32> to vector<1x64xf32>
    %299 = math.tanh %298 : vector<1x64xf32>
    %300 = vector.extract_strided_slice %297 {offsets = [0, 64], sizes = [1, 64], strides = [1, 1]} : vector<1x192xf32> to vector<1x64xf32>
    %301 = arith.mulf %300, %289 : vector<1x64xf32>
    %302 = vector.extract_strided_slice %297 {offsets = [0, 0], sizes = [1, 64], strides = [1, 1]} : vector<1x192xf32> to vector<1x64xf32>
    %303 = arith.mulf %302, %299 : vector<1x64xf32>
    %304 = arith.addf %301, %303 : vector<1x64xf32>
    %305 = vector.extract_strided_slice %297 {offsets = [0, 128], sizes = [1, 64], strides = [1, 1]} : vector<1x192xf32> to vector<1x64xf32>
    %306 = math.tanh %304 : vector<1x64xf32>
    %307 = arith.mulf %305, %306 : vector<1x64xf32>
    %c1_162 = arith.constant 1 : index
    %c0_163 = arith.constant 0 : index
    %308 = vector.load %arg24[%c1_162, %c0_163] : memref<16x256xf32, #tpu.memory_space<vmem>>, vector<1x256xf32>
    %cst_164 = arith.constant dense<0.000000e+00> : vector<1x256xf32>
    %309 = tpu.matmul %307, %282, %cst_164 {dimension_numbers = #tpu.dot_dimension_numbers<[1], [0], [0], [1], [0, 0, 1, 1], [], []>} : vector<1x64xf32>, vector<64x256xf32>, vector<1x256xf32> -> vector<1x256xf32>
    %310 = arith.addf %308, %309 : vector<1x256xf32>
    %311 = vector.extract_strided_slice %310 {offsets = [0, 0], sizes = [1, 192], strides = [1, 1]} : vector<1x256xf32> to vector<1x192xf32>
    %312 = arith.negf %311 : vector<1x192xf32>
    %313 = math.exp %312 : vector<1x192xf32>
    %cst_165 = arith.constant 1.000000e+00 : f32
    %314 = vector.broadcast %cst_165 : f32 to vector<1x192xf32>
    %315 = arith.addf %314, %313 : vector<1x192xf32>
    %316 = arith.divf %314, %315 : vector<1x192xf32>
    %317 = vector.extract_strided_slice %310 {offsets = [0, 192], sizes = [1, 64], strides = [1, 1]} : vector<1x256xf32> to vector<1x64xf32>
    %318 = math.tanh %317 : vector<1x64xf32>
    %319 = vector.extract_strided_slice %316 {offsets = [0, 64], sizes = [1, 64], strides = [1, 1]} : vector<1x192xf32> to vector<1x64xf32>
    %320 = arith.mulf %319, %304 : vector<1x64xf32>
    %321 = vector.extract_strided_slice %316 {offsets = [0, 0], sizes = [1, 64], strides = [1, 1]} : vector<1x192xf32> to vector<1x64xf32>
    %322 = arith.mulf %321, %318 : vector<1x64xf32>
    %323 = arith.addf %320, %322 : vector<1x64xf32>
    %324 = vector.extract_strided_slice %316 {offsets = [0, 128], sizes = [1, 64], strides = [1, 1]} : vector<1x192xf32> to vector<1x64xf32>
    %325 = math.tanh %323 : vector<1x64xf32>
    %326 = arith.mulf %324, %325 : vector<1x64xf32>
    %cst_166 = arith.constant dense<0.000000e+00> : vector<1x256xf32>
    %327 = tpu.matmul %307, %286, %cst_166 {dimension_numbers = #tpu.dot_dimension_numbers<[1], [0], [0], [1], [0, 0, 1, 1], [], []>} : vector<1x64xf32>, vector<64x256xf32>, vector<1x256xf32> -> vector<1x256xf32>
    %328 = arith.addf %327, %288 : vector<1x256xf32>
    %329 = vector.extract_strided_slice %328 {offsets = [0, 0], sizes = [1, 192], strides = [1, 1]} : vector<1x256xf32> to vector<1x192xf32>
    %330 = arith.negf %329 : vector<1x192xf32>
    %331 = math.exp %330 : vector<1x192xf32>
    %cst_167 = arith.constant 1.000000e+00 : f32
    %332 = vector.broadcast %cst_167 : f32 to vector<1x192xf32>
    %333 = arith.addf %332, %331 : vector<1x192xf32>
    %334 = arith.divf %332, %333 : vector<1x192xf32>
    %335 = vector.extract_strided_slice %328 {offsets = [0, 192], sizes = [1, 64], strides = [1, 1]} : vector<1x256xf32> to vector<1x64xf32>
    %336 = math.tanh %335 : vector<1x64xf32>
    %337 = vector.extract_strided_slice %334 {offsets = [0, 64], sizes = [1, 64], strides = [1, 1]} : vector<1x192xf32> to vector<1x64xf32>
    %338 = arith.mulf %337, %290 : vector<1x64xf32>
    %339 = vector.extract_strided_slice %334 {offsets = [0, 0], sizes = [1, 64], strides = [1, 1]} : vector<1x192xf32> to vector<1x64xf32>
    %340 = arith.mulf %339, %336 : vector<1x64xf32>
    %341 = arith.addf %338, %340 : vector<1x64xf32>
    %342 = vector.extract_strided_slice %334 {offsets = [0, 128], sizes = [1, 64], strides = [1, 1]} : vector<1x192xf32> to vector<1x64xf32>
    %343 = math.tanh %341 : vector<1x64xf32>
    %344 = arith.mulf %342, %343 : vector<1x64xf32>
    %c0_168 = arith.constant 0 : index
    %c0_169 = arith.constant 0 : index
    %345 = vector.load %arg25[%c0_168, %c0_169] : memref<16x64xf32, #tpu.memory_space<vmem>>, vector<1x64xf32>
    tpu.vector_store %arg25[%c0_168, %c0_169], %344 {strides = array<i32>} : memref<16x64xf32, #tpu.memory_space<vmem>>, vector<1x64xf32>,
    %c2 = arith.constant 2 : index
    %c0_170 = arith.constant 0 : index
    %346 = vector.load %arg24[%c2, %c0_170] : memref<16x256xf32, #tpu.memory_space<vmem>>, vector<1x256xf32>
    %cst_171 = arith.constant dense<0.000000e+00> : vector<1x256xf32>
    %347 = tpu.matmul %326, %282, %cst_171 {dimension_numbers = #tpu.dot_dimension_numbers<[1], [0], [0], [1], [0, 0, 1, 1], [], []>} : vector<1x64xf32>, vector<64x256xf32>, vector<1x256xf32> -> vector<1x256xf32>
    %348 = arith.addf %346, %347 : vector<1x256xf32>
    %349 = vector.extract_strided_slice %348 {offsets = [0, 0], sizes = [1, 192], strides = [1, 1]} : vector<1x256xf32> to vector<1x192xf32>
    %350 = arith.negf %349 : vector<1x192xf32>
    %351 = math.exp %350 : vector<1x192xf32>
    %cst_172 = arith.constant 1.000000e+00 : f32
    %352 = vector.broadcast %cst_172 : f32 to vector<1x192xf32>
    %353 = arith.addf %352, %351 : vector<1x192xf32>
    %354 = arith.divf %352, %353 : vector<1x192xf32>
    %355 = vector.extract_strided_slice %348 {offsets = [0, 192], sizes = [1, 64], strides = [1, 1]} : vector<1x256xf32> to vector<1x64xf32>
    %356 = math.tanh %355 : vector<1x64xf32>
    %357 = vector.extract_strided_slice %354 {offsets = [0, 64], sizes = [1, 64], strides = [1, 1]} : vector<1x192xf32> to vector<1x64xf32>
    %358 = arith.mulf %357, %323 : vector<1x64xf32>
    %359 = vector.extract_strided_slice %354 {offsets = [0, 0], sizes = [1, 64], strides = [1, 1]} : vector<1x192xf32> to vector<1x64xf32>
    %360 = arith.mulf %359, %356 : vector<1x64xf32>
    %361 = arith.addf %358, %360 : vector<1x64xf32>
    %362 = vector.extract_strided_slice %354 {offsets = [0, 128], sizes = [1, 64], strides = [1, 1]} : vector<1x192xf32> to vector<1x64xf32>
    %363 = math.tanh %361 : vector<1x64xf32>
    %364 = arith.mulf %362, %363 : vector<1x64xf32>
    %cst_173 = arith.constant dense<0.000000e+00> : vector<1x256xf32>
    %365 = tpu.matmul %326, %286, %cst_173 {dimension_numbers = #tpu.dot_dimension_numbers<[1], [0], [0], [1], [0, 0, 1, 1], [], []>} : vector<1x64xf32>, vector<64x256xf32>, vector<1x256xf32> -> vector<1x256xf32>
    %366 = arith.addf %365, %288 : vector<1x256xf32>
    %cst_174 = arith.constant dense<0.000000e+00> : vector<1x256xf32>
    %367 = tpu.matmul %344, %284, %cst_174 {dimension_numbers = #tpu.dot_dimension_numbers<[1], [0], [0], [1], [0, 0, 1, 1], [], []>} : vector<1x64xf32>, vector<64x256xf32>, vector<1x256xf32> -> vector<1x256xf32>
    %368 = arith.addf %366, %367 : vector<1x256xf32>
    %369 = vector.extract_strided_slice %368 {offsets = [0, 0], sizes = [1, 192], strides = [1, 1]} : vector<1x256xf32> to vector<1x192xf32>
    %370 = arith.negf %369 : vector<1x192xf32>
    %371 = math.exp %370 : vector<1x192xf32>
    %cst_175 = arith.constant 1.000000e+00 : f32
    %372 = vector.broadcast %cst_175 : f32 to vector<1x192xf32>
    %373 = arith.addf %372, %371 : vector<1x192xf32>
    %374 = arith.divf %372, %373 : vector<1x192xf32>
    %375 = vector.extract_strided_slice %368 {offsets = [0, 192], sizes = [1, 64], strides = [1, 1]} : vector<1x256xf32> to vector<1x64xf32>
    %376 = math.tanh %375 : vector<1x64xf32>
    %377 = vector.extract_strided_slice %374 {offsets = [0, 64], sizes = [1, 64], strides = [1, 1]} : vector<1x192xf32> to vector<1x64xf32>
    %378 = arith.mulf %377, %341 : vector<1x64xf32>
    %379 = vector.extract_strided_slice %374 {offsets = [0, 0], sizes = [1, 64], strides = [1, 1]} : vector<1x192xf32> to vector<1x64xf32>
    %380 = arith.mulf %379, %376 : vector<1x64xf32>
    %381 = arith.addf %378, %380 : vector<1x64xf32>
    %382 = vector.extract_strided_slice %374 {offsets = [0, 128], sizes = [1, 64], strides = [1, 1]} : vector<1x192xf32> to vector<1x64xf32>
    %383 = math.tanh %381 : vector<1x64xf32>
    %384 = arith.mulf %382, %383 : vector<1x64xf32>
    %c1_176 = arith.constant 1 : index
    %c0_177 = arith.constant 0 : index
    %385 = vector.load %arg25[%c1_176, %c0_177] : memref<16x64xf32, #tpu.memory_space<vmem>>, vector<1x64xf32>
    tpu.vector_store %arg25[%c1_176, %c0_177], %384 {strides = array<i32>} : memref<16x64xf32, #tpu.memory_space<vmem>>, vector<1x64xf32>,
    %c3 = arith.constant 3 : index
    %c0_178 = arith.constant 0 : index
    %386 = vector.load %arg24[%c3, %c0_178] : memref<16x256xf32, #tpu.memory_space<vmem>>, vector<1x256xf32>
    %cst_179 = arith.constant dense<0.000000e+00> : vector<1x256xf32>
    %387 = tpu.matmul %364, %282, %cst_179 {dimension_numbers = #tpu.dot_dimension_numbers<[1], [0], [0], [1], [0, 0, 1, 1], [], []>} : vector<1x64xf32>, vector<64x256xf32>, vector<1x256xf32> -> vector<1x256xf32>
    %388 = arith.addf %386, %387 : vector<1x256xf32>
    %389 = vector.extract_strided_slice %388 {offsets = [0, 0], sizes = [1, 192], strides = [1, 1]} : vector<1x256xf32> to vector<1x192xf32>
    %390 = arith.negf %389 : vector<1x192xf32>
    %391 = math.exp %390 : vector<1x192xf32>
    %cst_180 = arith.constant 1.000000e+00 : f32
    %392 = vector.broadcast %cst_180 : f32 to vector<1x192xf32>
    %393 = arith.addf %392, %391 : vector<1x192xf32>
    %394 = arith.divf %392, %393 : vector<1x192xf32>
    %395 = vector.extract_strided_slice %388 {offsets = [0, 192], sizes = [1, 64], strides = [1, 1]} : vector<1x256xf32> to vector<1x64xf32>
    %396 = math.tanh %395 : vector<1x64xf32>
    %397 = vector.extract_strided_slice %394 {offsets = [0, 64], sizes = [1, 64], strides = [1, 1]} : vector<1x192xf32> to vector<1x64xf32>
    %398 = arith.mulf %397, %361 : vector<1x64xf32>
    %399 = vector.extract_strided_slice %394 {offsets = [0, 0], sizes = [1, 64], strides = [1, 1]} : vector<1x192xf32> to vector<1x64xf32>
    %400 = arith.mulf %399, %396 : vector<1x64xf32>
    %401 = arith.addf %398, %400 : vector<1x64xf32>
    %402 = vector.extract_strided_slice %394 {offsets = [0, 128], sizes = [1, 64], strides = [1, 1]} : vector<1x192xf32> to vector<1x64xf32>
    %403 = math.tanh %401 : vector<1x64xf32>
    %404 = arith.mulf %402, %403 : vector<1x64xf32>
    %cst_181 = arith.constant dense<0.000000e+00> : vector<1x256xf32>
    %405 = tpu.matmul %364, %286, %cst_181 {dimension_numbers = #tpu.dot_dimension_numbers<[1], [0], [0], [1], [0, 0, 1, 1], [], []>} : vector<1x64xf32>, vector<64x256xf32>, vector<1x256xf32> -> vector<1x256xf32>
    %406 = arith.addf %405, %288 : vector<1x256xf32>
    %cst_182 = arith.constant dense<0.000000e+00> : vector<1x256xf32>
    %407 = tpu.matmul %384, %284, %cst_182 {dimension_numbers = #tpu.dot_dimension_numbers<[1], [0], [0], [1], [0, 0, 1, 1], [], []>} : vector<1x64xf32>, vector<64x256xf32>, vector<1x256xf32> -> vector<1x256xf32>
    %408 = arith.addf %406, %407 : vector<1x256xf32>
    %409 = vector.extract_strided_slice %408 {offsets = [0, 0], sizes = [1, 192], strides = [1, 1]} : vector<1x256xf32> to vector<1x192xf32>
    %410 = arith.negf %409 : vector<1x192xf32>
    %411 = math.exp %410 : vector<1x192xf32>
    %cst_183 = arith.constant 1.000000e+00 : f32
    %412 = vector.broadcast %cst_183 : f32 to vector<1x192xf32>
    %413 = arith.addf %412, %411 : vector<1x192xf32>
    %414 = arith.divf %412, %413 : vector<1x192xf32>
    %415 = vector.extract_strided_slice %408 {offsets = [0, 192], sizes = [1, 64], strides = [1, 1]} : vector<1x256xf32> to vector<1x64xf32>
    %416 = math.tanh %415 : vector<1x64xf32>
    %417 = vector.extract_strided_slice %414 {offsets = [0, 64], sizes = [1, 64], strides = [1, 1]} : vector<1x192xf32> to vector<1x64xf32>
    %418 = arith.mulf %417, %381 : vector<1x64xf32>
    %419 = vector.extract_strided_slice %414 {offsets = [0, 0], sizes = [1, 64], strides = [1, 1]} : vector<1x192xf32> to vector<1x64xf32>
    %420 = arith.mulf %419, %416 : vector<1x64xf32>
    %421 = arith.addf %418, %420 : vector<1x64xf32>
    %422 = vector.extract_strided_slice %414 {offsets = [0, 128], sizes = [1, 64], strides = [1, 1]} : vector<1x192xf32> to vector<1x64xf32>
    %423 = math.tanh %421 : vector<1x64xf32>
    %424 = arith.mulf %422, %423 : vector<1x64xf32>
    %c2_184 = arith.constant 2 : index
    %c0_185 = arith.constant 0 : index
    %425 = vector.load %arg25[%c2_184, %c0_185] : memref<16x64xf32, #tpu.memory_space<vmem>>, vector<1x64xf32>
    tpu.vector_store %arg25[%c2_184, %c0_185], %424 {strides = array<i32>} : memref<16x64xf32, #tpu.memory_space<vmem>>, vector<1x64xf32>,
    %c4 = arith.constant 4 : index
    %c0_186 = arith.constant 0 : index
    %426 = vector.load %arg24[%c4, %c0_186] : memref<16x256xf32, #tpu.memory_space<vmem>>, vector<1x256xf32>
    %cst_187 = arith.constant dense<0.000000e+00> : vector<1x256xf32>
    %427 = tpu.matmul %404, %282, %cst_187 {dimension_numbers = #tpu.dot_dimension_numbers<[1], [0], [0], [1], [0, 0, 1, 1], [], []>} : vector<1x64xf32>, vector<64x256xf32>, vector<1x256xf32> -> vector<1x256xf32>
    %428 = arith.addf %426, %427 : vector<1x256xf32>
    %429 = vector.extract_strided_slice %428 {offsets = [0, 0], sizes = [1, 192], strides = [1, 1]} : vector<1x256xf32> to vector<1x192xf32>
    %430 = arith.negf %429 : vector<1x192xf32>
    %431 = math.exp %430 : vector<1x192xf32>
    %cst_188 = arith.constant 1.000000e+00 : f32
    %432 = vector.broadcast %cst_188 : f32 to vector<1x192xf32>
    %433 = arith.addf %432, %431 : vector<1x192xf32>
    %434 = arith.divf %432, %433 : vector<1x192xf32>
    %435 = vector.extract_strided_slice %428 {offsets = [0, 192], sizes = [1, 64], strides = [1, 1]} : vector<1x256xf32> to vector<1x64xf32>
    %436 = math.tanh %435 : vector<1x64xf32>
    %437 = vector.extract_strided_slice %434 {offsets = [0, 64], sizes = [1, 64], strides = [1, 1]} : vector<1x192xf32> to vector<1x64xf32>
    %438 = arith.mulf %437, %401 : vector<1x64xf32>
    %439 = vector.extract_strided_slice %434 {offsets = [0, 0], sizes = [1, 64], strides = [1, 1]} : vector<1x192xf32> to vector<1x64xf32>
    %440 = arith.mulf %439, %436 : vector<1x64xf32>
    %441 = arith.addf %438, %440 : vector<1x64xf32>
    %442 = vector.extract_strided_slice %434 {offsets = [0, 128], sizes = [1, 64], strides = [1, 1]} : vector<1x192xf32> to vector<1x64xf32>
    %443 = math.tanh %441 : vector<1x64xf32>
    %444 = arith.mulf %442, %443 : vector<1x64xf32>
    %cst_189 = arith.constant dense<0.000000e+00> : vector<1x256xf32>
    %445 = tpu.matmul %404, %286, %cst_189 {dimension_numbers = #tpu.dot_dimension_numbers<[1], [0], [0], [1], [0, 0, 1, 1], [], []>} : vector<1x64xf32>, vector<64x256xf32>, vector<1x256xf32> -> vector<1x256xf32>
    %446 = arith.addf %445, %288 : vector<1x256xf32>
    %cst_190 = arith.constant dense<0.000000e+00> : vector<1x256xf32>
    %447 = tpu.matmul %424, %284, %cst_190 {dimension_numbers = #tpu.dot_dimension_numbers<[1], [0], [0], [1], [0, 0, 1, 1], [], []>} : vector<1x64xf32>, vector<64x256xf32>, vector<1x256xf32> -> vector<1x256xf32>
    %448 = arith.addf %446, %447 : vector<1x256xf32>
    %449 = vector.extract_strided_slice %448 {offsets = [0, 0], sizes = [1, 192], strides = [1, 1]} : vector<1x256xf32> to vector<1x192xf32>
    %450 = arith.negf %449 : vector<1x192xf32>
    %451 = math.exp %450 : vector<1x192xf32>
    %cst_191 = arith.constant 1.000000e+00 : f32
    %452 = vector.broadcast %cst_191 : f32 to vector<1x192xf32>
    %453 = arith.addf %452, %451 : vector<1x192xf32>
    %454 = arith.divf %452, %453 : vector<1x192xf32>
    %455 = vector.extract_strided_slice %448 {offsets = [0, 192], sizes = [1, 64], strides = [1, 1]} : vector<1x256xf32> to vector<1x64xf32>
    %456 = math.tanh %455 : vector<1x64xf32>
    %457 = vector.extract_strided_slice %454 {offsets = [0, 64], sizes = [1, 64], strides = [1, 1]} : vector<1x192xf32> to vector<1x64xf32>
    %458 = arith.mulf %457, %421 : vector<1x64xf32>
    %459 = vector.extract_strided_slice %454 {offsets = [0, 0], sizes = [1, 64], strides = [1, 1]} : vector<1x192xf32> to vector<1x64xf32>
    %460 = arith.mulf %459, %456 : vector<1x64xf32>
    %461 = arith.addf %458, %460 : vector<1x64xf32>
    %462 = vector.extract_strided_slice %454 {offsets = [0, 128], sizes = [1, 64], strides = [1, 1]} : vector<1x192xf32> to vector<1x64xf32>
    %463 = math.tanh %461 : vector<1x64xf32>
    %464 = arith.mulf %462, %463 : vector<1x64xf32>
    %c3_192 = arith.constant 3 : index
    %c0_193 = arith.constant 0 : index
    %465 = vector.load %arg25[%c3_192, %c0_193] : memref<16x64xf32, #tpu.memory_space<vmem>>, vector<1x64xf32>
    tpu.vector_store %arg25[%c3_192, %c0_193], %464 {strides = array<i32>} : memref<16x64xf32, #tpu.memory_space<vmem>>, vector<1x64xf32>,
    %c5 = arith.constant 5 : index
    %c0_194 = arith.constant 0 : index
    %466 = vector.load %arg24[%c5, %c0_194] : memref<16x256xf32, #tpu.memory_space<vmem>>, vector<1x256xf32>
    %cst_195 = arith.constant dense<0.000000e+00> : vector<1x256xf32>
    %467 = tpu.matmul %444, %282, %cst_195 {dimension_numbers = #tpu.dot_dimension_numbers<[1], [0], [0], [1], [0, 0, 1, 1], [], []>} : vector<1x64xf32>, vector<64x256xf32>, vector<1x256xf32> -> vector<1x256xf32>
    %468 = arith.addf %466, %467 : vector<1x256xf32>
    %469 = vector.extract_strided_slice %468 {offsets = [0, 0], sizes = [1, 192], strides = [1, 1]} : vector<1x256xf32> to vector<1x192xf32>
    %470 = arith.negf %469 : vector<1x192xf32>
    %471 = math.exp %470 : vector<1x192xf32>
    %cst_196 = arith.constant 1.000000e+00 : f32
    %472 = vector.broadcast %cst_196 : f32 to vector<1x192xf32>
    %473 = arith.addf %472, %471 : vector<1x192xf32>
    %474 = arith.divf %472, %473 : vector<1x192xf32>
    %475 = vector.extract_strided_slice %468 {offsets = [0, 192], sizes = [1, 64], strides = [1, 1]} : vector<1x256xf32> to vector<1x64xf32>
    %476 = math.tanh %475 : vector<1x64xf32>
    %477 = vector.extract_strided_slice %474 {offsets = [0, 64], sizes = [1, 64], strides = [1, 1]} : vector<1x192xf32> to vector<1x64xf32>
    %478 = arith.mulf %477, %441 : vector<1x64xf32>
    %479 = vector.extract_strided_slice %474 {offsets = [0, 0], sizes = [1, 64], strides = [1, 1]} : vector<1x192xf32> to vector<1x64xf32>
    %480 = arith.mulf %479, %476 : vector<1x64xf32>
    %481 = arith.addf %478, %480 : vector<1x64xf32>
    %482 = vector.extract_strided_slice %474 {offsets = [0, 128], sizes = [1, 64], strides = [1, 1]} : vector<1x192xf32> to vector<1x64xf32>
    %483 = math.tanh %481 : vector<1x64xf32>
    %484 = arith.mulf %482, %483 : vector<1x64xf32>
    %cst_197 = arith.constant dense<0.000000e+00> : vector<1x256xf32>
    %485 = tpu.matmul %444, %286, %cst_197 {dimension_numbers = #tpu.dot_dimension_numbers<[1], [0], [0], [1], [0, 0, 1, 1], [], []>} : vector<1x64xf32>, vector<64x256xf32>, vector<1x256xf32> -> vector<1x256xf32>
    %486 = arith.addf %485, %288 : vector<1x256xf32>
    %cst_198 = arith.constant dense<0.000000e+00> : vector<1x256xf32>
    %487 = tpu.matmul %464, %284, %cst_198 {dimension_numbers = #tpu.dot_dimension_numbers<[1], [0], [0], [1], [0, 0, 1, 1], [], []>} : vector<1x64xf32>, vector<64x256xf32>, vector<1x256xf32> -> vector<1x256xf32>
    %488 = arith.addf %486, %487 : vector<1x256xf32>
    %489 = vector.extract_strided_slice %488 {offsets = [0, 0], sizes = [1, 192], strides = [1, 1]} : vector<1x256xf32> to vector<1x192xf32>
    %490 = arith.negf %489 : vector<1x192xf32>
    %491 = math.exp %490 : vector<1x192xf32>
    %cst_199 = arith.constant 1.000000e+00 : f32
    %492 = vector.broadcast %cst_199 : f32 to vector<1x192xf32>
    %493 = arith.addf %492, %491 : vector<1x192xf32>
    %494 = arith.divf %492, %493 : vector<1x192xf32>
    %495 = vector.extract_strided_slice %488 {offsets = [0, 192], sizes = [1, 64], strides = [1, 1]} : vector<1x256xf32> to vector<1x64xf32>
    %496 = math.tanh %495 : vector<1x64xf32>
    %497 = vector.extract_strided_slice %494 {offsets = [0, 64], sizes = [1, 64], strides = [1, 1]} : vector<1x192xf32> to vector<1x64xf32>
    %498 = arith.mulf %497, %461 : vector<1x64xf32>
    %499 = vector.extract_strided_slice %494 {offsets = [0, 0], sizes = [1, 64], strides = [1, 1]} : vector<1x192xf32> to vector<1x64xf32>
    %500 = arith.mulf %499, %496 : vector<1x64xf32>
    %501 = arith.addf %498, %500 : vector<1x64xf32>
    %502 = vector.extract_strided_slice %494 {offsets = [0, 128], sizes = [1, 64], strides = [1, 1]} : vector<1x192xf32> to vector<1x64xf32>
    %503 = math.tanh %501 : vector<1x64xf32>
    %504 = arith.mulf %502, %503 : vector<1x64xf32>
    %c4_200 = arith.constant 4 : index
    %c0_201 = arith.constant 0 : index
    %505 = vector.load %arg25[%c4_200, %c0_201] : memref<16x64xf32, #tpu.memory_space<vmem>>, vector<1x64xf32>
    tpu.vector_store %arg25[%c4_200, %c0_201], %504 {strides = array<i32>} : memref<16x64xf32, #tpu.memory_space<vmem>>, vector<1x64xf32>,
    %c6 = arith.constant 6 : index
    %c0_202 = arith.constant 0 : index
    %506 = vector.load %arg24[%c6, %c0_202] : memref<16x256xf32, #tpu.memory_space<vmem>>, vector<1x256xf32>
    %cst_203 = arith.constant dense<0.000000e+00> : vector<1x256xf32>
    %507 = tpu.matmul %484, %282, %cst_203 {dimension_numbers = #tpu.dot_dimension_numbers<[1], [0], [0], [1], [0, 0, 1, 1], [], []>} : vector<1x64xf32>, vector<64x256xf32>, vector<1x256xf32> -> vector<1x256xf32>
    %508 = arith.addf %506, %507 : vector<1x256xf32>
    %509 = vector.extract_strided_slice %508 {offsets = [0, 0], sizes = [1, 192], strides = [1, 1]} : vector<1x256xf32> to vector<1x192xf32>
    %510 = arith.negf %509 : vector<1x192xf32>
    %511 = math.exp %510 : vector<1x192xf32>
    %cst_204 = arith.constant 1.000000e+00 : f32
    %512 = vector.broadcast %cst_204 : f32 to vector<1x192xf32>
    %513 = arith.addf %512, %511 : vector<1x192xf32>
    %514 = arith.divf %512, %513 : vector<1x192xf32>
    %515 = vector.extract_strided_slice %508 {offsets = [0, 192], sizes = [1, 64], strides = [1, 1]} : vector<1x256xf32> to vector<1x64xf32>
    %516 = math.tanh %515 : vector<1x64xf32>
    %517 = vector.extract_strided_slice %514 {offsets = [0, 64], sizes = [1, 64], strides = [1, 1]} : vector<1x192xf32> to vector<1x64xf32>
    %518 = arith.mulf %517, %481 : vector<1x64xf32>
    %519 = vector.extract_strided_slice %514 {offsets = [0, 0], sizes = [1, 64], strides = [1, 1]} : vector<1x192xf32> to vector<1x64xf32>
    %520 = arith.mulf %519, %516 : vector<1x64xf32>
    %521 = arith.addf %518, %520 : vector<1x64xf32>
    %522 = vector.extract_strided_slice %514 {offsets = [0, 128], sizes = [1, 64], strides = [1, 1]} : vector<1x192xf32> to vector<1x64xf32>
    %523 = math.tanh %521 : vector<1x64xf32>
    %524 = arith.mulf %522, %523 : vector<1x64xf32>
    %cst_205 = arith.constant dense<0.000000e+00> : vector<1x256xf32>
    %525 = tpu.matmul %484, %286, %cst_205 {dimension_numbers = #tpu.dot_dimension_numbers<[1], [0], [0], [1], [0, 0, 1, 1], [], []>} : vector<1x64xf32>, vector<64x256xf32>, vector<1x256xf32> -> vector<1x256xf32>
    %526 = arith.addf %525, %288 : vector<1x256xf32>
    %cst_206 = arith.constant dense<0.000000e+00> : vector<1x256xf32>
    %527 = tpu.matmul %504, %284, %cst_206 {dimension_numbers = #tpu.dot_dimension_numbers<[1], [0], [0], [1], [0, 0, 1, 1], [], []>} : vector<1x64xf32>, vector<64x256xf32>, vector<1x256xf32> -> vector<1x256xf32>
    %528 = arith.addf %526, %527 : vector<1x256xf32>
    %529 = vector.extract_strided_slice %528 {offsets = [0, 0], sizes = [1, 192], strides = [1, 1]} : vector<1x256xf32> to vector<1x192xf32>
    %530 = arith.negf %529 : vector<1x192xf32>
    %531 = math.exp %530 : vector<1x192xf32>
    %cst_207 = arith.constant 1.000000e+00 : f32
    %532 = vector.broadcast %cst_207 : f32 to vector<1x192xf32>
    %533 = arith.addf %532, %531 : vector<1x192xf32>
    %534 = arith.divf %532, %533 : vector<1x192xf32>
    %535 = vector.extract_strided_slice %528 {offsets = [0, 192], sizes = [1, 64], strides = [1, 1]} : vector<1x256xf32> to vector<1x64xf32>
    %536 = math.tanh %535 : vector<1x64xf32>
    %537 = vector.extract_strided_slice %534 {offsets = [0, 64], sizes = [1, 64], strides = [1, 1]} : vector<1x192xf32> to vector<1x64xf32>
    %538 = arith.mulf %537, %501 : vector<1x64xf32>
    %539 = vector.extract_strided_slice %534 {offsets = [0, 0], sizes = [1, 64], strides = [1, 1]} : vector<1x192xf32> to vector<1x64xf32>
    %540 = arith.mulf %539, %536 : vector<1x64xf32>
    %541 = arith.addf %538, %540 : vector<1x64xf32>
    %542 = vector.extract_strided_slice %534 {offsets = [0, 128], sizes = [1, 64], strides = [1, 1]} : vector<1x192xf32> to vector<1x64xf32>
    %543 = math.tanh %541 : vector<1x64xf32>
    %544 = arith.mulf %542, %543 : vector<1x64xf32>
    %c5_208 = arith.constant 5 : index
    %c0_209 = arith.constant 0 : index
    %545 = vector.load %arg25[%c5_208, %c0_209] : memref<16x64xf32, #tpu.memory_space<vmem>>, vector<1x64xf32>
    tpu.vector_store %arg25[%c5_208, %c0_209], %544 {strides = array<i32>} : memref<16x64xf32, #tpu.memory_space<vmem>>, vector<1x64xf32>,
    %c7 = arith.constant 7 : index
    %c0_210 = arith.constant 0 : index
    %546 = vector.load %arg24[%c7, %c0_210] : memref<16x256xf32, #tpu.memory_space<vmem>>, vector<1x256xf32>
    %cst_211 = arith.constant dense<0.000000e+00> : vector<1x256xf32>
    %547 = tpu.matmul %524, %282, %cst_211 {dimension_numbers = #tpu.dot_dimension_numbers<[1], [0], [0], [1], [0, 0, 1, 1], [], []>} : vector<1x64xf32>, vector<64x256xf32>, vector<1x256xf32> -> vector<1x256xf32>
    %548 = arith.addf %546, %547 : vector<1x256xf32>
    %549 = vector.extract_strided_slice %548 {offsets = [0, 0], sizes = [1, 192], strides = [1, 1]} : vector<1x256xf32> to vector<1x192xf32>
    %550 = arith.negf %549 : vector<1x192xf32>
    %551 = math.exp %550 : vector<1x192xf32>
    %cst_212 = arith.constant 1.000000e+00 : f32
    %552 = vector.broadcast %cst_212 : f32 to vector<1x192xf32>
    %553 = arith.addf %552, %551 : vector<1x192xf32>
    %554 = arith.divf %552, %553 : vector<1x192xf32>
    %555 = vector.extract_strided_slice %548 {offsets = [0, 192], sizes = [1, 64], strides = [1, 1]} : vector<1x256xf32> to vector<1x64xf32>
    %556 = math.tanh %555 : vector<1x64xf32>
    %557 = vector.extract_strided_slice %554 {offsets = [0, 64], sizes = [1, 64], strides = [1, 1]} : vector<1x192xf32> to vector<1x64xf32>
    %558 = arith.mulf %557, %521 : vector<1x64xf32>
    %559 = vector.extract_strided_slice %554 {offsets = [0, 0], sizes = [1, 64], strides = [1, 1]} : vector<1x192xf32> to vector<1x64xf32>
    %560 = arith.mulf %559, %556 : vector<1x64xf32>
    %561 = arith.addf %558, %560 : vector<1x64xf32>
    %562 = vector.extract_strided_slice %554 {offsets = [0, 128], sizes = [1, 64], strides = [1, 1]} : vector<1x192xf32> to vector<1x64xf32>
    %563 = math.tanh %561 : vector<1x64xf32>
    %564 = arith.mulf %562, %563 : vector<1x64xf32>
    %cst_213 = arith.constant dense<0.000000e+00> : vector<1x256xf32>
    %565 = tpu.matmul %524, %286, %cst_213 {dimension_numbers = #tpu.dot_dimension_numbers<[1], [0], [0], [1], [0, 0, 1, 1], [], []>} : vector<1x64xf32>, vector<64x256xf32>, vector<1x256xf32> -> vector<1x256xf32>
    %566 = arith.addf %565, %288 : vector<1x256xf32>
    %cst_214 = arith.constant dense<0.000000e+00> : vector<1x256xf32>
    %567 = tpu.matmul %544, %284, %cst_214 {dimension_numbers = #tpu.dot_dimension_numbers<[1], [0], [0], [1], [0, 0, 1, 1], [], []>} : vector<1x64xf32>, vector<64x256xf32>, vector<1x256xf32> -> vector<1x256xf32>
    %568 = arith.addf %566, %567 : vector<1x256xf32>
    %569 = vector.extract_strided_slice %568 {offsets = [0, 0], sizes = [1, 192], strides = [1, 1]} : vector<1x256xf32> to vector<1x192xf32>
    %570 = arith.negf %569 : vector<1x192xf32>
    %571 = math.exp %570 : vector<1x192xf32>
    %cst_215 = arith.constant 1.000000e+00 : f32
    %572 = vector.broadcast %cst_215 : f32 to vector<1x192xf32>
    %573 = arith.addf %572, %571 : vector<1x192xf32>
    %574 = arith.divf %572, %573 : vector<1x192xf32>
    %575 = vector.extract_strided_slice %568 {offsets = [0, 192], sizes = [1, 64], strides = [1, 1]} : vector<1x256xf32> to vector<1x64xf32>
    %576 = math.tanh %575 : vector<1x64xf32>
    %577 = vector.extract_strided_slice %574 {offsets = [0, 64], sizes = [1, 64], strides = [1, 1]} : vector<1x192xf32> to vector<1x64xf32>
    %578 = arith.mulf %577, %541 : vector<1x64xf32>
    %579 = vector.extract_strided_slice %574 {offsets = [0, 0], sizes = [1, 64], strides = [1, 1]} : vector<1x192xf32> to vector<1x64xf32>
    %580 = arith.mulf %579, %576 : vector<1x64xf32>
    %581 = arith.addf %578, %580 : vector<1x64xf32>
    %582 = vector.extract_strided_slice %574 {offsets = [0, 128], sizes = [1, 64], strides = [1, 1]} : vector<1x192xf32> to vector<1x64xf32>
    %583 = math.tanh %581 : vector<1x64xf32>
    %584 = arith.mulf %582, %583 : vector<1x64xf32>
    %c6_216 = arith.constant 6 : index
    %c0_217 = arith.constant 0 : index
    %585 = vector.load %arg25[%c6_216, %c0_217] : memref<16x64xf32, #tpu.memory_space<vmem>>, vector<1x64xf32>
    tpu.vector_store %arg25[%c6_216, %c0_217], %584 {strides = array<i32>} : memref<16x64xf32, #tpu.memory_space<vmem>>, vector<1x64xf32>,
    %c8 = arith.constant 8 : index
    %c0_218 = arith.constant 0 : index
    %586 = vector.load %arg24[%c8, %c0_218] : memref<16x256xf32, #tpu.memory_space<vmem>>, vector<1x256xf32>
    %cst_219 = arith.constant dense<0.000000e+00> : vector<1x256xf32>
    %587 = tpu.matmul %564, %282, %cst_219 {dimension_numbers = #tpu.dot_dimension_numbers<[1], [0], [0], [1], [0, 0, 1, 1], [], []>} : vector<1x64xf32>, vector<64x256xf32>, vector<1x256xf32> -> vector<1x256xf32>
    %588 = arith.addf %586, %587 : vector<1x256xf32>
    %589 = vector.extract_strided_slice %588 {offsets = [0, 0], sizes = [1, 192], strides = [1, 1]} : vector<1x256xf32> to vector<1x192xf32>
    %590 = arith.negf %589 : vector<1x192xf32>
    %591 = math.exp %590 : vector<1x192xf32>
    %cst_220 = arith.constant 1.000000e+00 : f32
    %592 = vector.broadcast %cst_220 : f32 to vector<1x192xf32>
    %593 = arith.addf %592, %591 : vector<1x192xf32>
    %594 = arith.divf %592, %593 : vector<1x192xf32>
    %595 = vector.extract_strided_slice %588 {offsets = [0, 192], sizes = [1, 64], strides = [1, 1]} : vector<1x256xf32> to vector<1x64xf32>
    %596 = math.tanh %595 : vector<1x64xf32>
    %597 = vector.extract_strided_slice %594 {offsets = [0, 64], sizes = [1, 64], strides = [1, 1]} : vector<1x192xf32> to vector<1x64xf32>
    %598 = arith.mulf %597, %561 : vector<1x64xf32>
    %599 = vector.extract_strided_slice %594 {offsets = [0, 0], sizes = [1, 64], strides = [1, 1]} : vector<1x192xf32> to vector<1x64xf32>
    %600 = arith.mulf %599, %596 : vector<1x64xf32>
    %601 = arith.addf %598, %600 : vector<1x64xf32>
    %602 = vector.extract_strided_slice %594 {offsets = [0, 128], sizes = [1, 64], strides = [1, 1]} : vector<1x192xf32> to vector<1x64xf32>
    %603 = math.tanh %601 : vector<1x64xf32>
    %604 = arith.mulf %602, %603 : vector<1x64xf32>
    %cst_221 = arith.constant dense<0.000000e+00> : vector<1x256xf32>
    %605 = tpu.matmul %564, %286, %cst_221 {dimension_numbers = #tpu.dot_dimension_numbers<[1], [0], [0], [1], [0, 0, 1, 1], [], []>} : vector<1x64xf32>, vector<64x256xf32>, vector<1x256xf32> -> vector<1x256xf32>
    %606 = arith.addf %605, %288 : vector<1x256xf32>
    %cst_222 = arith.constant dense<0.000000e+00> : vector<1x256xf32>
    %607 = tpu.matmul %584, %284, %cst_222 {dimension_numbers = #tpu.dot_dimension_numbers<[1], [0], [0], [1], [0, 0, 1, 1], [], []>} : vector<1x64xf32>, vector<64x256xf32>, vector<1x256xf32> -> vector<1x256xf32>
    %608 = arith.addf %606, %607 : vector<1x256xf32>
    %609 = vector.extract_strided_slice %608 {offsets = [0, 0], sizes = [1, 192], strides = [1, 1]} : vector<1x256xf32> to vector<1x192xf32>
    %610 = arith.negf %609 : vector<1x192xf32>
    %611 = math.exp %610 : vector<1x192xf32>
    %cst_223 = arith.constant 1.000000e+00 : f32
    %612 = vector.broadcast %cst_223 : f32 to vector<1x192xf32>
    %613 = arith.addf %612, %611 : vector<1x192xf32>
    %614 = arith.divf %612, %613 : vector<1x192xf32>
    %615 = vector.extract_strided_slice %608 {offsets = [0, 192], sizes = [1, 64], strides = [1, 1]} : vector<1x256xf32> to vector<1x64xf32>
    %616 = math.tanh %615 : vector<1x64xf32>
    %617 = vector.extract_strided_slice %614 {offsets = [0, 64], sizes = [1, 64], strides = [1, 1]} : vector<1x192xf32> to vector<1x64xf32>
    %618 = arith.mulf %617, %581 : vector<1x64xf32>
    %619 = vector.extract_strided_slice %614 {offsets = [0, 0], sizes = [1, 64], strides = [1, 1]} : vector<1x192xf32> to vector<1x64xf32>
    %620 = arith.mulf %619, %616 : vector<1x64xf32>
    %621 = arith.addf %618, %620 : vector<1x64xf32>
    %622 = vector.extract_strided_slice %614 {offsets = [0, 128], sizes = [1, 64], strides = [1, 1]} : vector<1x192xf32> to vector<1x64xf32>
    %623 = math.tanh %621 : vector<1x64xf32>
    %624 = arith.mulf %622, %623 : vector<1x64xf32>
    %c7_224 = arith.constant 7 : index
    %c0_225 = arith.constant 0 : index
    %625 = vector.load %arg25[%c7_224, %c0_225] : memref<16x64xf32, #tpu.memory_space<vmem>>, vector<1x64xf32>
    tpu.vector_store %arg25[%c7_224, %c0_225], %624 {strides = array<i32>} : memref<16x64xf32, #tpu.memory_space<vmem>>, vector<1x64xf32>,
    %c9 = arith.constant 9 : index
    %c0_226 = arith.constant 0 : index
    %626 = vector.load %arg24[%c9, %c0_226] : memref<16x256xf32, #tpu.memory_space<vmem>>, vector<1x256xf32>
    %cst_227 = arith.constant dense<0.000000e+00> : vector<1x256xf32>
    %627 = tpu.matmul %604, %282, %cst_227 {dimension_numbers = #tpu.dot_dimension_numbers<[1], [0], [0], [1], [0, 0, 1, 1], [], []>} : vector<1x64xf32>, vector<64x256xf32>, vector<1x256xf32> -> vector<1x256xf32>
    %628 = arith.addf %626, %627 : vector<1x256xf32>
    %629 = vector.extract_strided_slice %628 {offsets = [0, 0], sizes = [1, 192], strides = [1, 1]} : vector<1x256xf32> to vector<1x192xf32>
    %630 = arith.negf %629 : vector<1x192xf32>
    %631 = math.exp %630 : vector<1x192xf32>
    %cst_228 = arith.constant 1.000000e+00 : f32
    %632 = vector.broadcast %cst_228 : f32 to vector<1x192xf32>
    %633 = arith.addf %632, %631 : vector<1x192xf32>
    %634 = arith.divf %632, %633 : vector<1x192xf32>
    %635 = vector.extract_strided_slice %628 {offsets = [0, 192], sizes = [1, 64], strides = [1, 1]} : vector<1x256xf32> to vector<1x64xf32>
    %636 = math.tanh %635 : vector<1x64xf32>
    %637 = vector.extract_strided_slice %634 {offsets = [0, 64], sizes = [1, 64], strides = [1, 1]} : vector<1x192xf32> to vector<1x64xf32>
    %638 = arith.mulf %637, %601 : vector<1x64xf32>
    %639 = vector.extract_strided_slice %634 {offsets = [0, 0], sizes = [1, 64], strides = [1, 1]} : vector<1x192xf32> to vector<1x64xf32>
    %640 = arith.mulf %639, %636 : vector<1x64xf32>
    %641 = arith.addf %638, %640 : vector<1x64xf32>
    %642 = vector.extract_strided_slice %634 {offsets = [0, 128], sizes = [1, 64], strides = [1, 1]} : vector<1x192xf32> to vector<1x64xf32>
    %643 = math.tanh %641 : vector<1x64xf32>
    %644 = arith.mulf %642, %643 : vector<1x64xf32>
    %cst_229 = arith.constant dense<0.000000e+00> : vector<1x256xf32>
    %645 = tpu.matmul %604, %286, %cst_229 {dimension_numbers = #tpu.dot_dimension_numbers<[1], [0], [0], [1], [0, 0, 1, 1], [], []>} : vector<1x64xf32>, vector<64x256xf32>, vector<1x256xf32> -> vector<1x256xf32>
    %646 = arith.addf %645, %288 : vector<1x256xf32>
    %cst_230 = arith.constant dense<0.000000e+00> : vector<1x256xf32>
    %647 = tpu.matmul %624, %284, %cst_230 {dimension_numbers = #tpu.dot_dimension_numbers<[1], [0], [0], [1], [0, 0, 1, 1], [], []>} : vector<1x64xf32>, vector<64x256xf32>, vector<1x256xf32> -> vector<1x256xf32>
    %648 = arith.addf %646, %647 : vector<1x256xf32>
    %649 = vector.extract_strided_slice %648 {offsets = [0, 0], sizes = [1, 192], strides = [1, 1]} : vector<1x256xf32> to vector<1x192xf32>
    %650 = arith.negf %649 : vector<1x192xf32>
    %651 = math.exp %650 : vector<1x192xf32>
    %cst_231 = arith.constant 1.000000e+00 : f32
    %652 = vector.broadcast %cst_231 : f32 to vector<1x192xf32>
    %653 = arith.addf %652, %651 : vector<1x192xf32>
    %654 = arith.divf %652, %653 : vector<1x192xf32>
    %655 = vector.extract_strided_slice %648 {offsets = [0, 192], sizes = [1, 64], strides = [1, 1]} : vector<1x256xf32> to vector<1x64xf32>
    %656 = math.tanh %655 : vector<1x64xf32>
    %657 = vector.extract_strided_slice %654 {offsets = [0, 64], sizes = [1, 64], strides = [1, 1]} : vector<1x192xf32> to vector<1x64xf32>
    %658 = arith.mulf %657, %621 : vector<1x64xf32>
    %659 = vector.extract_strided_slice %654 {offsets = [0, 0], sizes = [1, 64], strides = [1, 1]} : vector<1x192xf32> to vector<1x64xf32>
    %660 = arith.mulf %659, %656 : vector<1x64xf32>
    %661 = arith.addf %658, %660 : vector<1x64xf32>
    %662 = vector.extract_strided_slice %654 {offsets = [0, 128], sizes = [1, 64], strides = [1, 1]} : vector<1x192xf32> to vector<1x64xf32>
    %663 = math.tanh %661 : vector<1x64xf32>
    %664 = arith.mulf %662, %663 : vector<1x64xf32>
    %c8_232 = arith.constant 8 : index
    %c0_233 = arith.constant 0 : index
    %665 = vector.load %arg25[%c8_232, %c0_233] : memref<16x64xf32, #tpu.memory_space<vmem>>, vector<1x64xf32>
    tpu.vector_store %arg25[%c8_232, %c0_233], %664 {strides = array<i32>} : memref<16x64xf32, #tpu.memory_space<vmem>>, vector<1x64xf32>,
    %c10 = arith.constant 10 : index
    %c0_234 = arith.constant 0 : index
    %666 = vector.load %arg24[%c10, %c0_234] : memref<16x256xf32, #tpu.memory_space<vmem>>, vector<1x256xf32>
    %cst_235 = arith.constant dense<0.000000e+00> : vector<1x256xf32>
    %667 = tpu.matmul %644, %282, %cst_235 {dimension_numbers = #tpu.dot_dimension_numbers<[1], [0], [0], [1], [0, 0, 1, 1], [], []>} : vector<1x64xf32>, vector<64x256xf32>, vector<1x256xf32> -> vector<1x256xf32>
    %668 = arith.addf %666, %667 : vector<1x256xf32>
    %669 = vector.extract_strided_slice %668 {offsets = [0, 0], sizes = [1, 192], strides = [1, 1]} : vector<1x256xf32> to vector<1x192xf32>
    %670 = arith.negf %669 : vector<1x192xf32>
    %671 = math.exp %670 : vector<1x192xf32>
    %cst_236 = arith.constant 1.000000e+00 : f32
    %672 = vector.broadcast %cst_236 : f32 to vector<1x192xf32>
    %673 = arith.addf %672, %671 : vector<1x192xf32>
    %674 = arith.divf %672, %673 : vector<1x192xf32>
    %675 = vector.extract_strided_slice %668 {offsets = [0, 192], sizes = [1, 64], strides = [1, 1]} : vector<1x256xf32> to vector<1x64xf32>
    %676 = math.tanh %675 : vector<1x64xf32>
    %677 = vector.extract_strided_slice %674 {offsets = [0, 64], sizes = [1, 64], strides = [1, 1]} : vector<1x192xf32> to vector<1x64xf32>
    %678 = arith.mulf %677, %641 : vector<1x64xf32>
    %679 = vector.extract_strided_slice %674 {offsets = [0, 0], sizes = [1, 64], strides = [1, 1]} : vector<1x192xf32> to vector<1x64xf32>
    %680 = arith.mulf %679, %676 : vector<1x64xf32>
    %681 = arith.addf %678, %680 : vector<1x64xf32>
    %682 = vector.extract_strided_slice %674 {offsets = [0, 128], sizes = [1, 64], strides = [1, 1]} : vector<1x192xf32> to vector<1x64xf32>
    %683 = math.tanh %681 : vector<1x64xf32>
    %684 = arith.mulf %682, %683 : vector<1x64xf32>
    %cst_237 = arith.constant dense<0.000000e+00> : vector<1x256xf32>
    %685 = tpu.matmul %644, %286, %cst_237 {dimension_numbers = #tpu.dot_dimension_numbers<[1], [0], [0], [1], [0, 0, 1, 1], [], []>} : vector<1x64xf32>, vector<64x256xf32>, vector<1x256xf32> -> vector<1x256xf32>
    %686 = arith.addf %685, %288 : vector<1x256xf32>
    %cst_238 = arith.constant dense<0.000000e+00> : vector<1x256xf32>
    %687 = tpu.matmul %664, %284, %cst_238 {dimension_numbers = #tpu.dot_dimension_numbers<[1], [0], [0], [1], [0, 0, 1, 1], [], []>} : vector<1x64xf32>, vector<64x256xf32>, vector<1x256xf32> -> vector<1x256xf32>
    %688 = arith.addf %686, %687 : vector<1x256xf32>
    %689 = vector.extract_strided_slice %688 {offsets = [0, 0], sizes = [1, 192], strides = [1, 1]} : vector<1x256xf32> to vector<1x192xf32>
    %690 = arith.negf %689 : vector<1x192xf32>
    %691 = math.exp %690 : vector<1x192xf32>
    %cst_239 = arith.constant 1.000000e+00 : f32
    %692 = vector.broadcast %cst_239 : f32 to vector<1x192xf32>
    %693 = arith.addf %692, %691 : vector<1x192xf32>
    %694 = arith.divf %692, %693 : vector<1x192xf32>
    %695 = vector.extract_strided_slice %688 {offsets = [0, 192], sizes = [1, 64], strides = [1, 1]} : vector<1x256xf32> to vector<1x64xf32>
    %696 = math.tanh %695 : vector<1x64xf32>
    %697 = vector.extract_strided_slice %694 {offsets = [0, 64], sizes = [1, 64], strides = [1, 1]} : vector<1x192xf32> to vector<1x64xf32>
    %698 = arith.mulf %697, %661 : vector<1x64xf32>
    %699 = vector.extract_strided_slice %694 {offsets = [0, 0], sizes = [1, 64], strides = [1, 1]} : vector<1x192xf32> to vector<1x64xf32>
    %700 = arith.mulf %699, %696 : vector<1x64xf32>
    %701 = arith.addf %698, %700 : vector<1x64xf32>
    %702 = vector.extract_strided_slice %694 {offsets = [0, 128], sizes = [1, 64], strides = [1, 1]} : vector<1x192xf32> to vector<1x64xf32>
    %703 = math.tanh %701 : vector<1x64xf32>
    %704 = arith.mulf %702, %703 : vector<1x64xf32>
    %c9_240 = arith.constant 9 : index
    %c0_241 = arith.constant 0 : index
    %705 = vector.load %arg25[%c9_240, %c0_241] : memref<16x64xf32, #tpu.memory_space<vmem>>, vector<1x64xf32>
    tpu.vector_store %arg25[%c9_240, %c0_241], %704 {strides = array<i32>} : memref<16x64xf32, #tpu.memory_space<vmem>>, vector<1x64xf32>,
    %c11 = arith.constant 11 : index
    %c0_242 = arith.constant 0 : index
    %706 = vector.load %arg24[%c11, %c0_242] : memref<16x256xf32, #tpu.memory_space<vmem>>, vector<1x256xf32>
    %cst_243 = arith.constant dense<0.000000e+00> : vector<1x256xf32>
    %707 = tpu.matmul %684, %282, %cst_243 {dimension_numbers = #tpu.dot_dimension_numbers<[1], [0], [0], [1], [0, 0, 1, 1], [], []>} : vector<1x64xf32>, vector<64x256xf32>, vector<1x256xf32> -> vector<1x256xf32>
    %708 = arith.addf %706, %707 : vector<1x256xf32>
    %709 = vector.extract_strided_slice %708 {offsets = [0, 0], sizes = [1, 192], strides = [1, 1]} : vector<1x256xf32> to vector<1x192xf32>
    %710 = arith.negf %709 : vector<1x192xf32>
    %711 = math.exp %710 : vector<1x192xf32>
    %cst_244 = arith.constant 1.000000e+00 : f32
    %712 = vector.broadcast %cst_244 : f32 to vector<1x192xf32>
    %713 = arith.addf %712, %711 : vector<1x192xf32>
    %714 = arith.divf %712, %713 : vector<1x192xf32>
    %715 = vector.extract_strided_slice %708 {offsets = [0, 192], sizes = [1, 64], strides = [1, 1]} : vector<1x256xf32> to vector<1x64xf32>
    %716 = math.tanh %715 : vector<1x64xf32>
    %717 = vector.extract_strided_slice %714 {offsets = [0, 64], sizes = [1, 64], strides = [1, 1]} : vector<1x192xf32> to vector<1x64xf32>
    %718 = arith.mulf %717, %681 : vector<1x64xf32>
    %719 = vector.extract_strided_slice %714 {offsets = [0, 0], sizes = [1, 64], strides = [1, 1]} : vector<1x192xf32> to vector<1x64xf32>
    %720 = arith.mulf %719, %716 : vector<1x64xf32>
    %721 = arith.addf %718, %720 : vector<1x64xf32>
    %722 = vector.extract_strided_slice %714 {offsets = [0, 128], sizes = [1, 64], strides = [1, 1]} : vector<1x192xf32> to vector<1x64xf32>
    %723 = math.tanh %721 : vector<1x64xf32>
    %724 = arith.mulf %722, %723 : vector<1x64xf32>
    %cst_245 = arith.constant dense<0.000000e+00> : vector<1x256xf32>
    %725 = tpu.matmul %684, %286, %cst_245 {dimension_numbers = #tpu.dot_dimension_numbers<[1], [0], [0], [1], [0, 0, 1, 1], [], []>} : vector<1x64xf32>, vector<64x256xf32>, vector<1x256xf32> -> vector<1x256xf32>
    %726 = arith.addf %725, %288 : vector<1x256xf32>
    %cst_246 = arith.constant dense<0.000000e+00> : vector<1x256xf32>
    %727 = tpu.matmul %704, %284, %cst_246 {dimension_numbers = #tpu.dot_dimension_numbers<[1], [0], [0], [1], [0, 0, 1, 1], [], []>} : vector<1x64xf32>, vector<64x256xf32>, vector<1x256xf32> -> vector<1x256xf32>
    %728 = arith.addf %726, %727 : vector<1x256xf32>
    %729 = vector.extract_strided_slice %728 {offsets = [0, 0], sizes = [1, 192], strides = [1, 1]} : vector<1x256xf32> to vector<1x192xf32>
    %730 = arith.negf %729 : vector<1x192xf32>
    %731 = math.exp %730 : vector<1x192xf32>
    %cst_247 = arith.constant 1.000000e+00 : f32
    %732 = vector.broadcast %cst_247 : f32 to vector<1x192xf32>
    %733 = arith.addf %732, %731 : vector<1x192xf32>
    %734 = arith.divf %732, %733 : vector<1x192xf32>
    %735 = vector.extract_strided_slice %728 {offsets = [0, 192], sizes = [1, 64], strides = [1, 1]} : vector<1x256xf32> to vector<1x64xf32>
    %736 = math.tanh %735 : vector<1x64xf32>
    %737 = vector.extract_strided_slice %734 {offsets = [0, 64], sizes = [1, 64], strides = [1, 1]} : vector<1x192xf32> to vector<1x64xf32>
    %738 = arith.mulf %737, %701 : vector<1x64xf32>
    %739 = vector.extract_strided_slice %734 {offsets = [0, 0], sizes = [1, 64], strides = [1, 1]} : vector<1x192xf32> to vector<1x64xf32>
    %740 = arith.mulf %739, %736 : vector<1x64xf32>
    %741 = arith.addf %738, %740 : vector<1x64xf32>
    %742 = vector.extract_strided_slice %734 {offsets = [0, 128], sizes = [1, 64], strides = [1, 1]} : vector<1x192xf32> to vector<1x64xf32>
    %743 = math.tanh %741 : vector<1x64xf32>
    %744 = arith.mulf %742, %743 : vector<1x64xf32>
    %c10_248 = arith.constant 10 : index
    %c0_249 = arith.constant 0 : index
    %745 = vector.load %arg25[%c10_248, %c0_249] : memref<16x64xf32, #tpu.memory_space<vmem>>, vector<1x64xf32>
    tpu.vector_store %arg25[%c10_248, %c0_249], %744 {strides = array<i32>} : memref<16x64xf32, #tpu.memory_space<vmem>>, vector<1x64xf32>,
    %c12 = arith.constant 12 : index
    %c0_250 = arith.constant 0 : index
    %746 = vector.load %arg24[%c12, %c0_250] : memref<16x256xf32, #tpu.memory_space<vmem>>, vector<1x256xf32>
    %cst_251 = arith.constant dense<0.000000e+00> : vector<1x256xf32>
    %747 = tpu.matmul %724, %282, %cst_251 {dimension_numbers = #tpu.dot_dimension_numbers<[1], [0], [0], [1], [0, 0, 1, 1], [], []>} : vector<1x64xf32>, vector<64x256xf32>, vector<1x256xf32> -> vector<1x256xf32>
    %748 = arith.addf %746, %747 : vector<1x256xf32>
    %749 = vector.extract_strided_slice %748 {offsets = [0, 0], sizes = [1, 192], strides = [1, 1]} : vector<1x256xf32> to vector<1x192xf32>
    %750 = arith.negf %749 : vector<1x192xf32>
    %751 = math.exp %750 : vector<1x192xf32>
    %cst_252 = arith.constant 1.000000e+00 : f32
    %752 = vector.broadcast %cst_252 : f32 to vector<1x192xf32>
    %753 = arith.addf %752, %751 : vector<1x192xf32>
    %754 = arith.divf %752, %753 : vector<1x192xf32>
    %755 = vector.extract_strided_slice %748 {offsets = [0, 192], sizes = [1, 64], strides = [1, 1]} : vector<1x256xf32> to vector<1x64xf32>
    %756 = math.tanh %755 : vector<1x64xf32>
    %757 = vector.extract_strided_slice %754 {offsets = [0, 64], sizes = [1, 64], strides = [1, 1]} : vector<1x192xf32> to vector<1x64xf32>
    %758 = arith.mulf %757, %721 : vector<1x64xf32>
    %759 = vector.extract_strided_slice %754 {offsets = [0, 0], sizes = [1, 64], strides = [1, 1]} : vector<1x192xf32> to vector<1x64xf32>
    %760 = arith.mulf %759, %756 : vector<1x64xf32>
    %761 = arith.addf %758, %760 : vector<1x64xf32>
    %762 = vector.extract_strided_slice %754 {offsets = [0, 128], sizes = [1, 64], strides = [1, 1]} : vector<1x192xf32> to vector<1x64xf32>
    %763 = math.tanh %761 : vector<1x64xf32>
    %764 = arith.mulf %762, %763 : vector<1x64xf32>
    %cst_253 = arith.constant dense<0.000000e+00> : vector<1x256xf32>
    %765 = tpu.matmul %724, %286, %cst_253 {dimension_numbers = #tpu.dot_dimension_numbers<[1], [0], [0], [1], [0, 0, 1, 1], [], []>} : vector<1x64xf32>, vector<64x256xf32>, vector<1x256xf32> -> vector<1x256xf32>
    %766 = arith.addf %765, %288 : vector<1x256xf32>
    %cst_254 = arith.constant dense<0.000000e+00> : vector<1x256xf32>
    %767 = tpu.matmul %744, %284, %cst_254 {dimension_numbers = #tpu.dot_dimension_numbers<[1], [0], [0], [1], [0, 0, 1, 1], [], []>} : vector<1x64xf32>, vector<64x256xf32>, vector<1x256xf32> -> vector<1x256xf32>
    %768 = arith.addf %766, %767 : vector<1x256xf32>
    %769 = vector.extract_strided_slice %768 {offsets = [0, 0], sizes = [1, 192], strides = [1, 1]} : vector<1x256xf32> to vector<1x192xf32>
    %770 = arith.negf %769 : vector<1x192xf32>
    %771 = math.exp %770 : vector<1x192xf32>
    %cst_255 = arith.constant 1.000000e+00 : f32
    %772 = vector.broadcast %cst_255 : f32 to vector<1x192xf32>
    %773 = arith.addf %772, %771 : vector<1x192xf32>
    %774 = arith.divf %772, %773 : vector<1x192xf32>
    %775 = vector.extract_strided_slice %768 {offsets = [0, 192], sizes = [1, 64], strides = [1, 1]} : vector<1x256xf32> to vector<1x64xf32>
    %776 = math.tanh %775 : vector<1x64xf32>
    %777 = vector.extract_strided_slice %774 {offsets = [0, 64], sizes = [1, 64], strides = [1, 1]} : vector<1x192xf32> to vector<1x64xf32>
    %778 = arith.mulf %777, %741 : vector<1x64xf32>
    %779 = vector.extract_strided_slice %774 {offsets = [0, 0], sizes = [1, 64], strides = [1, 1]} : vector<1x192xf32> to vector<1x64xf32>
    %780 = arith.mulf %779, %776 : vector<1x64xf32>
    %781 = arith.addf %778, %780 : vector<1x64xf32>
    %782 = vector.extract_strided_slice %774 {offsets = [0, 128], sizes = [1, 64], strides = [1, 1]} : vector<1x192xf32> to vector<1x64xf32>
    %783 = math.tanh %781 : vector<1x64xf32>
    %784 = arith.mulf %782, %783 : vector<1x64xf32>
    %c11_256 = arith.constant 11 : index
    %c0_257 = arith.constant 0 : index
    %785 = vector.load %arg25[%c11_256, %c0_257] : memref<16x64xf32, #tpu.memory_space<vmem>>, vector<1x64xf32>
    tpu.vector_store %arg25[%c11_256, %c0_257], %784 {strides = array<i32>} : memref<16x64xf32, #tpu.memory_space<vmem>>, vector<1x64xf32>,
    %c13 = arith.constant 13 : index
    %c0_258 = arith.constant 0 : index
    %786 = vector.load %arg24[%c13, %c0_258] : memref<16x256xf32, #tpu.memory_space<vmem>>, vector<1x256xf32>
    %cst_259 = arith.constant dense<0.000000e+00> : vector<1x256xf32>
    %787 = tpu.matmul %764, %282, %cst_259 {dimension_numbers = #tpu.dot_dimension_numbers<[1], [0], [0], [1], [0, 0, 1, 1], [], []>} : vector<1x64xf32>, vector<64x256xf32>, vector<1x256xf32> -> vector<1x256xf32>
    %788 = arith.addf %786, %787 : vector<1x256xf32>
    %789 = vector.extract_strided_slice %788 {offsets = [0, 0], sizes = [1, 192], strides = [1, 1]} : vector<1x256xf32> to vector<1x192xf32>
    %790 = arith.negf %789 : vector<1x192xf32>
    %791 = math.exp %790 : vector<1x192xf32>
    %cst_260 = arith.constant 1.000000e+00 : f32
    %792 = vector.broadcast %cst_260 : f32 to vector<1x192xf32>
    %793 = arith.addf %792, %791 : vector<1x192xf32>
    %794 = arith.divf %792, %793 : vector<1x192xf32>
    %795 = vector.extract_strided_slice %788 {offsets = [0, 192], sizes = [1, 64], strides = [1, 1]} : vector<1x256xf32> to vector<1x64xf32>
    %796 = math.tanh %795 : vector<1x64xf32>
    %797 = vector.extract_strided_slice %794 {offsets = [0, 64], sizes = [1, 64], strides = [1, 1]} : vector<1x192xf32> to vector<1x64xf32>
    %798 = arith.mulf %797, %761 : vector<1x64xf32>
    %799 = vector.extract_strided_slice %794 {offsets = [0, 0], sizes = [1, 64], strides = [1, 1]} : vector<1x192xf32> to vector<1x64xf32>
    %800 = arith.mulf %799, %796 : vector<1x64xf32>
    %801 = arith.addf %798, %800 : vector<1x64xf32>
    %802 = vector.extract_strided_slice %794 {offsets = [0, 128], sizes = [1, 64], strides = [1, 1]} : vector<1x192xf32> to vector<1x64xf32>
    %803 = math.tanh %801 : vector<1x64xf32>
    %804 = arith.mulf %802, %803 : vector<1x64xf32>
    %cst_261 = arith.constant dense<0.000000e+00> : vector<1x256xf32>
    %805 = tpu.matmul %764, %286, %cst_261 {dimension_numbers = #tpu.dot_dimension_numbers<[1], [0], [0], [1], [0, 0, 1, 1], [], []>} : vector<1x64xf32>, vector<64x256xf32>, vector<1x256xf32> -> vector<1x256xf32>
    %806 = arith.addf %805, %288 : vector<1x256xf32>
    %cst_262 = arith.constant dense<0.000000e+00> : vector<1x256xf32>
    %807 = tpu.matmul %784, %284, %cst_262 {dimension_numbers = #tpu.dot_dimension_numbers<[1], [0], [0], [1], [0, 0, 1, 1], [], []>} : vector<1x64xf32>, vector<64x256xf32>, vector<1x256xf32> -> vector<1x256xf32>
    %808 = arith.addf %806, %807 : vector<1x256xf32>
    %809 = vector.extract_strided_slice %808 {offsets = [0, 0], sizes = [1, 192], strides = [1, 1]} : vector<1x256xf32> to vector<1x192xf32>
    %810 = arith.negf %809 : vector<1x192xf32>
    %811 = math.exp %810 : vector<1x192xf32>
    %cst_263 = arith.constant 1.000000e+00 : f32
    %812 = vector.broadcast %cst_263 : f32 to vector<1x192xf32>
    %813 = arith.addf %812, %811 : vector<1x192xf32>
    %814 = arith.divf %812, %813 : vector<1x192xf32>
    %815 = vector.extract_strided_slice %808 {offsets = [0, 192], sizes = [1, 64], strides = [1, 1]} : vector<1x256xf32> to vector<1x64xf32>
    %816 = math.tanh %815 : vector<1x64xf32>
    %817 = vector.extract_strided_slice %814 {offsets = [0, 64], sizes = [1, 64], strides = [1, 1]} : vector<1x192xf32> to vector<1x64xf32>
    %818 = arith.mulf %817, %781 : vector<1x64xf32>
    %819 = vector.extract_strided_slice %814 {offsets = [0, 0], sizes = [1, 64], strides = [1, 1]} : vector<1x192xf32> to vector<1x64xf32>
    %820 = arith.mulf %819, %816 : vector<1x64xf32>
    %821 = arith.addf %818, %820 : vector<1x64xf32>
    %822 = vector.extract_strided_slice %814 {offsets = [0, 128], sizes = [1, 64], strides = [1, 1]} : vector<1x192xf32> to vector<1x64xf32>
    %823 = math.tanh %821 : vector<1x64xf32>
    %824 = arith.mulf %822, %823 : vector<1x64xf32>
    %c12_264 = arith.constant 12 : index
    %c0_265 = arith.constant 0 : index
    %825 = vector.load %arg25[%c12_264, %c0_265] : memref<16x64xf32, #tpu.memory_space<vmem>>, vector<1x64xf32>
    tpu.vector_store %arg25[%c12_264, %c0_265], %824 {strides = array<i32>} : memref<16x64xf32, #tpu.memory_space<vmem>>, vector<1x64xf32>,
    %c14 = arith.constant 14 : index
    %c0_266 = arith.constant 0 : index
    %826 = vector.load %arg24[%c14, %c0_266] : memref<16x256xf32, #tpu.memory_space<vmem>>, vector<1x256xf32>
    %cst_267 = arith.constant dense<0.000000e+00> : vector<1x256xf32>
    %827 = tpu.matmul %804, %282, %cst_267 {dimension_numbers = #tpu.dot_dimension_numbers<[1], [0], [0], [1], [0, 0, 1, 1], [], []>} : vector<1x64xf32>, vector<64x256xf32>, vector<1x256xf32> -> vector<1x256xf32>
    %828 = arith.addf %826, %827 : vector<1x256xf32>
    %829 = vector.extract_strided_slice %828 {offsets = [0, 0], sizes = [1, 192], strides = [1, 1]} : vector<1x256xf32> to vector<1x192xf32>
    %830 = arith.negf %829 : vector<1x192xf32>
    %831 = math.exp %830 : vector<1x192xf32>
    %cst_268 = arith.constant 1.000000e+00 : f32
    %832 = vector.broadcast %cst_268 : f32 to vector<1x192xf32>
    %833 = arith.addf %832, %831 : vector<1x192xf32>
    %834 = arith.divf %832, %833 : vector<1x192xf32>
    %835 = vector.extract_strided_slice %828 {offsets = [0, 192], sizes = [1, 64], strides = [1, 1]} : vector<1x256xf32> to vector<1x64xf32>
    %836 = math.tanh %835 : vector<1x64xf32>
    %837 = vector.extract_strided_slice %834 {offsets = [0, 64], sizes = [1, 64], strides = [1, 1]} : vector<1x192xf32> to vector<1x64xf32>
    %838 = arith.mulf %837, %801 : vector<1x64xf32>
    %839 = vector.extract_strided_slice %834 {offsets = [0, 0], sizes = [1, 64], strides = [1, 1]} : vector<1x192xf32> to vector<1x64xf32>
    %840 = arith.mulf %839, %836 : vector<1x64xf32>
    %841 = arith.addf %838, %840 : vector<1x64xf32>
    %842 = vector.extract_strided_slice %834 {offsets = [0, 128], sizes = [1, 64], strides = [1, 1]} : vector<1x192xf32> to vector<1x64xf32>
    %843 = math.tanh %841 : vector<1x64xf32>
    %844 = arith.mulf %842, %843 : vector<1x64xf32>
    %cst_269 = arith.constant dense<0.000000e+00> : vector<1x256xf32>
    %845 = tpu.matmul %804, %286, %cst_269 {dimension_numbers = #tpu.dot_dimension_numbers<[1], [0], [0], [1], [0, 0, 1, 1], [], []>} : vector<1x64xf32>, vector<64x256xf32>, vector<1x256xf32> -> vector<1x256xf32>
    %846 = arith.addf %845, %288 : vector<1x256xf32>
    %cst_270 = arith.constant dense<0.000000e+00> : vector<1x256xf32>
    %847 = tpu.matmul %824, %284, %cst_270 {dimension_numbers = #tpu.dot_dimension_numbers<[1], [0], [0], [1], [0, 0, 1, 1], [], []>} : vector<1x64xf32>, vector<64x256xf32>, vector<1x256xf32> -> vector<1x256xf32>
    %848 = arith.addf %846, %847 : vector<1x256xf32>
    %849 = vector.extract_strided_slice %848 {offsets = [0, 0], sizes = [1, 192], strides = [1, 1]} : vector<1x256xf32> to vector<1x192xf32>
    %850 = arith.negf %849 : vector<1x192xf32>
    %851 = math.exp %850 : vector<1x192xf32>
    %cst_271 = arith.constant 1.000000e+00 : f32
    %852 = vector.broadcast %cst_271 : f32 to vector<1x192xf32>
    %853 = arith.addf %852, %851 : vector<1x192xf32>
    %854 = arith.divf %852, %853 : vector<1x192xf32>
    %855 = vector.extract_strided_slice %848 {offsets = [0, 192], sizes = [1, 64], strides = [1, 1]} : vector<1x256xf32> to vector<1x64xf32>
    %856 = math.tanh %855 : vector<1x64xf32>
    %857 = vector.extract_strided_slice %854 {offsets = [0, 64], sizes = [1, 64], strides = [1, 1]} : vector<1x192xf32> to vector<1x64xf32>
    %858 = arith.mulf %857, %821 : vector<1x64xf32>
    %859 = vector.extract_strided_slice %854 {offsets = [0, 0], sizes = [1, 64], strides = [1, 1]} : vector<1x192xf32> to vector<1x64xf32>
    %860 = arith.mulf %859, %856 : vector<1x64xf32>
    %861 = arith.addf %858, %860 : vector<1x64xf32>
    %862 = vector.extract_strided_slice %854 {offsets = [0, 128], sizes = [1, 64], strides = [1, 1]} : vector<1x192xf32> to vector<1x64xf32>
    %863 = math.tanh %861 : vector<1x64xf32>
    %864 = arith.mulf %862, %863 : vector<1x64xf32>
    %c13_272 = arith.constant 13 : index
    %c0_273 = arith.constant 0 : index
    %865 = vector.load %arg25[%c13_272, %c0_273] : memref<16x64xf32, #tpu.memory_space<vmem>>, vector<1x64xf32>
    tpu.vector_store %arg25[%c13_272, %c0_273], %864 {strides = array<i32>} : memref<16x64xf32, #tpu.memory_space<vmem>>, vector<1x64xf32>,
    %c15 = arith.constant 15 : index
    %c0_274 = arith.constant 0 : index
    %866 = vector.load %arg24[%c15, %c0_274] : memref<16x256xf32, #tpu.memory_space<vmem>>, vector<1x256xf32>
    %cst_275 = arith.constant dense<0.000000e+00> : vector<1x256xf32>
    %867 = tpu.matmul %844, %282, %cst_275 {dimension_numbers = #tpu.dot_dimension_numbers<[1], [0], [0], [1], [0, 0, 1, 1], [], []>} : vector<1x64xf32>, vector<64x256xf32>, vector<1x256xf32> -> vector<1x256xf32>
    %868 = arith.addf %866, %867 : vector<1x256xf32>
    %869 = vector.extract_strided_slice %868 {offsets = [0, 0], sizes = [1, 192], strides = [1, 1]} : vector<1x256xf32> to vector<1x192xf32>
    %870 = arith.negf %869 : vector<1x192xf32>
    %871 = math.exp %870 : vector<1x192xf32>
    %cst_276 = arith.constant 1.000000e+00 : f32
    %872 = vector.broadcast %cst_276 : f32 to vector<1x192xf32>
    %873 = arith.addf %872, %871 : vector<1x192xf32>
    %874 = arith.divf %872, %873 : vector<1x192xf32>
    %875 = vector.extract_strided_slice %868 {offsets = [0, 192], sizes = [1, 64], strides = [1, 1]} : vector<1x256xf32> to vector<1x64xf32>
    %876 = math.tanh %875 : vector<1x64xf32>
    %877 = vector.extract_strided_slice %874 {offsets = [0, 64], sizes = [1, 64], strides = [1, 1]} : vector<1x192xf32> to vector<1x64xf32>
    %878 = arith.mulf %877, %841 : vector<1x64xf32>
    %879 = vector.extract_strided_slice %874 {offsets = [0, 0], sizes = [1, 64], strides = [1, 1]} : vector<1x192xf32> to vector<1x64xf32>
    %880 = arith.mulf %879, %876 : vector<1x64xf32>
    %881 = arith.addf %878, %880 : vector<1x64xf32>
    %882 = vector.extract_strided_slice %874 {offsets = [0, 128], sizes = [1, 64], strides = [1, 1]} : vector<1x192xf32> to vector<1x64xf32>
    %883 = math.tanh %881 : vector<1x64xf32>
    %884 = arith.mulf %882, %883 : vector<1x64xf32>
    %cst_277 = arith.constant dense<0.000000e+00> : vector<1x256xf32>
    %885 = tpu.matmul %844, %286, %cst_277 {dimension_numbers = #tpu.dot_dimension_numbers<[1], [0], [0], [1], [0, 0, 1, 1], [], []>} : vector<1x64xf32>, vector<64x256xf32>, vector<1x256xf32> -> vector<1x256xf32>
    %886 = arith.addf %885, %288 : vector<1x256xf32>
    %cst_278 = arith.constant dense<0.000000e+00> : vector<1x256xf32>
    %887 = tpu.matmul %864, %284, %cst_278 {dimension_numbers = #tpu.dot_dimension_numbers<[1], [0], [0], [1], [0, 0, 1, 1], [], []>} : vector<1x64xf32>, vector<64x256xf32>, vector<1x256xf32> -> vector<1x256xf32>
    %888 = arith.addf %886, %887 : vector<1x256xf32>
    %889 = vector.extract_strided_slice %888 {offsets = [0, 0], sizes = [1, 192], strides = [1, 1]} : vector<1x256xf32> to vector<1x192xf32>
    %890 = arith.negf %889 : vector<1x192xf32>
    %891 = math.exp %890 : vector<1x192xf32>
    %cst_279 = arith.constant 1.000000e+00 : f32
    %892 = vector.broadcast %cst_279 : f32 to vector<1x192xf32>
    %893 = arith.addf %892, %891 : vector<1x192xf32>
    %894 = arith.divf %892, %893 : vector<1x192xf32>
    %895 = vector.extract_strided_slice %888 {offsets = [0, 192], sizes = [1, 64], strides = [1, 1]} : vector<1x256xf32> to vector<1x64xf32>
    %896 = math.tanh %895 : vector<1x64xf32>
    %897 = vector.extract_strided_slice %894 {offsets = [0, 64], sizes = [1, 64], strides = [1, 1]} : vector<1x192xf32> to vector<1x64xf32>
    %898 = arith.mulf %897, %861 : vector<1x64xf32>
    %899 = vector.extract_strided_slice %894 {offsets = [0, 0], sizes = [1, 64], strides = [1, 1]} : vector<1x192xf32> to vector<1x64xf32>
    %900 = arith.mulf %899, %896 : vector<1x64xf32>
    %901 = arith.addf %898, %900 : vector<1x64xf32>
    %902 = vector.extract_strided_slice %894 {offsets = [0, 128], sizes = [1, 64], strides = [1, 1]} : vector<1x192xf32> to vector<1x64xf32>
    %903 = math.tanh %901 : vector<1x64xf32>
    %904 = arith.mulf %902, %903 : vector<1x64xf32>
    %c14_280 = arith.constant 14 : index
    %c0_281 = arith.constant 0 : index
    %905 = vector.load %arg25[%c14_280, %c0_281] : memref<16x64xf32, #tpu.memory_space<vmem>>, vector<1x64xf32>
    tpu.vector_store %arg25[%c14_280, %c0_281], %904 {strides = array<i32>} : memref<16x64xf32, #tpu.memory_space<vmem>>, vector<1x64xf32>,
    %cst_282 = arith.constant dense<0.000000e+00> : vector<1x256xf32>
    %906 = tpu.matmul %884, %286, %cst_282 {dimension_numbers = #tpu.dot_dimension_numbers<[1], [0], [0], [1], [0, 0, 1, 1], [], []>} : vector<1x64xf32>, vector<64x256xf32>, vector<1x256xf32> -> vector<1x256xf32>
    %907 = arith.addf %906, %288 : vector<1x256xf32>
    %cst_283 = arith.constant dense<0.000000e+00> : vector<1x256xf32>
    %908 = tpu.matmul %904, %284, %cst_283 {dimension_numbers = #tpu.dot_dimension_numbers<[1], [0], [0], [1], [0, 0, 1, 1], [], []>} : vector<1x64xf32>, vector<64x256xf32>, vector<1x256xf32> -> vector<1x256xf32>
    %909 = arith.addf %907, %908 : vector<1x256xf32>
    %910 = vector.extract_strided_slice %909 {offsets = [0, 0], sizes = [1, 192], strides = [1, 1]} : vector<1x256xf32> to vector<1x192xf32>
    %911 = arith.negf %910 : vector<1x192xf32>
    %912 = math.exp %911 : vector<1x192xf32>
    %cst_284 = arith.constant 1.000000e+00 : f32
    %913 = vector.broadcast %cst_284 : f32 to vector<1x192xf32>
    %914 = arith.addf %913, %912 : vector<1x192xf32>
    %915 = arith.divf %913, %914 : vector<1x192xf32>
    %916 = vector.extract_strided_slice %909 {offsets = [0, 192], sizes = [1, 64], strides = [1, 1]} : vector<1x256xf32> to vector<1x64xf32>
    %917 = math.tanh %916 : vector<1x64xf32>
    %918 = vector.extract_strided_slice %915 {offsets = [0, 64], sizes = [1, 64], strides = [1, 1]} : vector<1x192xf32> to vector<1x64xf32>
    %919 = arith.mulf %918, %901 : vector<1x64xf32>
    %920 = vector.extract_strided_slice %915 {offsets = [0, 0], sizes = [1, 64], strides = [1, 1]} : vector<1x192xf32> to vector<1x64xf32>
    %921 = arith.mulf %920, %917 : vector<1x64xf32>
    %922 = arith.addf %919, %921 : vector<1x64xf32>
    %923 = vector.extract_strided_slice %915 {offsets = [0, 128], sizes = [1, 64], strides = [1, 1]} : vector<1x192xf32> to vector<1x64xf32>
    %924 = math.tanh %922 : vector<1x64xf32>
    %925 = arith.mulf %923, %924 : vector<1x64xf32>
    %c15_285 = arith.constant 15 : index
    %c0_286 = arith.constant 0 : index
    %926 = vector.load %arg25[%c15_285, %c0_286] : memref<16x64xf32, #tpu.memory_space<vmem>>, vector<1x64xf32>
    tpu.vector_store %arg25[%c15_285, %c0_286], %925 {strides = array<i32>} : memref<16x64xf32, #tpu.memory_space<vmem>>, vector<1x64xf32>,
    %c0_287 = arith.constant 0 : index
    %c0_288 = arith.constant 0 : index
    %927 = vector.load %arg25[%c0_287, %c0_288] : memref<16x64xf32, #tpu.memory_space<vmem>>, vector<16x64xf32>
    %c0_289 = arith.constant 0 : index
    %c0_290 = arith.constant 0 : index
    %928 = vector.load %arg21[%c0_289, %c0_290] : memref<64x17xf32, #tpu.memory_space<vmem>>, vector<64x17xf32>
    %cst_291 = arith.constant dense<0.000000e+00> : vector<16x17xf32>
    %929 = tpu.matmul %927, %928, %cst_291 {dimension_numbers = #tpu.dot_dimension_numbers<[1], [0], [0], [1], [0, 0, 1, 1], [], []>} : vector<16x64xf32>, vector<64x17xf32>, vector<16x17xf32> -> vector<16x17xf32>
    %c0_292 = arith.constant 0 : index
    %c0_293 = arith.constant 0 : index
    %930 = vector.load %arg22[%c0_292, %c0_293] : memref<1x17xf32, #tpu.memory_space<vmem>>, vector<1x17xf32>
    %931 = vector.broadcast %930 : vector<1x17xf32> to vector<16x17xf32>
    %932 = arith.addf %929, %931 : vector<16x17xf32>
    %933 = arith.mulf %26, %932 : vector<16x17xf32>
    %934 = arith.mulf %31, %932 : vector<16x17xf32>
    %c0_294 = arith.constant 0 : index
    %c0_295 = arith.constant 0 : index
    %c0_296 = arith.constant 0 : index
    %935 = vector.load %arg4[%c0_294, %c0_295, %c0_296] : memref<2x17x32xf32, #tpu.memory_space<vmem>>, vector<1x17x32xf32>
    %936 = vector.shape_cast %935 : vector<1x17x32xf32> to vector<17x32xf32>
    %cst_297 = arith.constant dense<0.000000e+00> : vector<16x32xf32>
    %937 = tpu.matmul %933, %936, %cst_297 {dimension_numbers = #tpu.dot_dimension_numbers<[1], [0], [0], [1], [0, 0, 1, 1], [], []>} : vector<16x17xf32>, vector<17x32xf32>, vector<16x32xf32> -> vector<16x32xf32>
    %c1_298 = arith.constant 1 : index
    %c0_299 = arith.constant 0 : index
    %c0_300 = arith.constant 0 : index
    %938 = vector.load %arg4[%c1_298, %c0_299, %c0_300] : memref<2x17x32xf32, #tpu.memory_space<vmem>>, vector<1x17x32xf32>
    %939 = vector.shape_cast %938 : vector<1x17x32xf32> to vector<17x32xf32>
    %cst_301 = arith.constant dense<0.000000e+00> : vector<16x32xf32>
    %940 = tpu.matmul %934, %939, %cst_301 {dimension_numbers = #tpu.dot_dimension_numbers<[1], [0], [0], [1], [0, 0, 1, 1], [], []>} : vector<16x17xf32>, vector<17x32xf32>, vector<16x32xf32> -> vector<16x32xf32>
    %941 = arith.addf %937, %940 : vector<16x32xf32>
    %cst_302 = arith.constant 0.000000e+00 : f32
    %942 = vector.broadcast %cst_302 : f32 to vector<1x16xf32>
    %943 = vector.extract_strided_slice %941 {offsets = [0, 0], sizes = [16, 16], strides = [1, 1]} : vector<16x32xf32> to vector<16x16xf32>
    %944 = tpu.concatenate %943, %942 in 0 : vector<16x16xf32>, vector<1x16xf32> -> vector<17x16xf32>
    %945 = vector.extract_strided_slice %941 {offsets = [0, 16], sizes = [16, 16], strides = [1, 1]} : vector<16x32xf32> to vector<16x16xf32>
    %946 = tpu.concatenate %942, %945 in 0 : vector<1x16xf32>, vector<16x16xf32> -> vector<17x16xf32>
    %947 = arith.addf %944, %946 : vector<17x16xf32>
    %c0_303 = arith.constant 0 : index
    %c0_304 = arith.constant 0 : index
    %948 = vector.load %arg5[%c0_303, %c0_304] : memref<17x16xf32, #tpu.memory_space<vmem>>, vector<17x16xf32>
    %949 = arith.mulf %947, %948 : vector<17x16xf32>
    %c0_305 = arith.constant 0 : index
    %c0_306 = arith.constant 0 : index
    %c0_307 = arith.constant 0 : index
    %950 = vector.load %arg23[%c0_305, %c0_306, %c0_307] : memref<1x17x16xf32, #tpu.memory_space<vmem>>, vector<1x17x16xf32>
    %951 = vector.shape_cast %950 : vector<1x17x16xf32> to vector<17x16xf32>
    %952 = vector.shape_cast %949 : vector<17x16xf32> to vector<1x17x16xf32>
    tpu.vector_store %arg23[%c0_305, %c0_306, %c0_307], %952 {strides = array<i32>} : memref<1x17x16xf32, #tpu.memory_space<vmem>>, vector<1x17x16xf32>,
    return
  }
  func.func @transform_0(%arg0: i32) -> (i32, i32, i32) {
    %c0_i32 = arith.constant 0 : i32
    %c0_i32_0 = arith.constant 0 : i32
    %c0_i32_1 = arith.constant 0 : i32
    return %arg0, %c0_i32, %c0_i32_0 : i32, i32, i32
  }
  func.func @transform_1(%arg0: i32) -> (i32, i32, i32) {
    %c0_i32 = arith.constant 0 : i32
    %c0_i32_0 = arith.constant 0 : i32
    %c0_i32_1 = arith.constant 0 : i32
    return %arg0, %c0_i32, %c0_i32_0 : i32, i32, i32
  }
  func.func @transform_2(%arg0: i32) -> (i32, i32, i32) {
    %c0_i32 = arith.constant 0 : i32
    %c0_i32_0 = arith.constant 0 : i32
    %c0_i32_1 = arith.constant 0 : i32
    %c0_i32_2 = arith.constant 0 : i32
    return %c0_i32, %c0_i32_0, %c0_i32_1 : i32, i32, i32
  }
  func.func @transform_3(%arg0: i32) -> (i32, i32, i32) {
    %c0_i32 = arith.constant 0 : i32
    %c0_i32_0 = arith.constant 0 : i32
    %c0_i32_1 = arith.constant 0 : i32
    %c0_i32_2 = arith.constant 0 : i32
    return %c0_i32, %c0_i32_0, %c0_i32_1 : i32, i32, i32
  }
  func.func @transform_4(%arg0: i32) -> (i32, i32) {
    %c0_i32 = arith.constant 0 : i32
    %c0_i32_0 = arith.constant 0 : i32
    %c0_i32_1 = arith.constant 0 : i32
    return %c0_i32, %c0_i32_0 : i32, i32
  }
  func.func @transform_5(%arg0: i32) -> (i32, i32, i32) {
    %c0_i32 = arith.constant 0 : i32
    %c0_i32_0 = arith.constant 0 : i32
    %c0_i32_1 = arith.constant 0 : i32
    %c0_i32_2 = arith.constant 0 : i32
    return %c0_i32, %c0_i32_0, %c0_i32_1 : i32, i32, i32
  }
  func.func @transform_6(%arg0: i32) -> (i32, i32, i32) {
    %c0_i32 = arith.constant 0 : i32
    %c0_i32_0 = arith.constant 0 : i32
    %c0_i32_1 = arith.constant 0 : i32
    %c0_i32_2 = arith.constant 0 : i32
    return %c0_i32, %c0_i32_0, %c0_i32_1 : i32, i32, i32
  }
  func.func @transform_7(%arg0: i32) -> (i32, i32, i32) {
    %c0_i32 = arith.constant 0 : i32
    %c0_i32_0 = arith.constant 0 : i32
    %c0_i32_1 = arith.constant 0 : i32
    %c0_i32_2 = arith.constant 0 : i32
    return %c0_i32, %c0_i32_0, %c0_i32_1 : i32, i32, i32
  }
  func.func @transform_8(%arg0: i32) -> (i32, i32, i32) {
    %c0_i32 = arith.constant 0 : i32
    %c0_i32_0 = arith.constant 0 : i32
    %c0_i32_1 = arith.constant 0 : i32
    %c0_i32_2 = arith.constant 0 : i32
    return %c0_i32, %c0_i32_0, %c0_i32_1 : i32, i32, i32
  }
  func.func @transform_9(%arg0: i32) -> (i32, i32, i32) {
    %c0_i32 = arith.constant 0 : i32
    %c0_i32_0 = arith.constant 0 : i32
    %c0_i32_1 = arith.constant 0 : i32
    %c0_i32_2 = arith.constant 0 : i32
    return %c0_i32, %c0_i32_0, %c0_i32_1 : i32, i32, i32
  }
  func.func @transform_10(%arg0: i32) -> (i32, i32, i32) {
    %c0_i32 = arith.constant 0 : i32
    %c0_i32_0 = arith.constant 0 : i32
    %c0_i32_1 = arith.constant 0 : i32
    %c0_i32_2 = arith.constant 0 : i32
    return %c0_i32, %c0_i32_0, %c0_i32_1 : i32, i32, i32
  }
  func.func @transform_11(%arg0: i32) -> (i32, i32, i32) {
    %c0_i32 = arith.constant 0 : i32
    %c0_i32_0 = arith.constant 0 : i32
    %c0_i32_1 = arith.constant 0 : i32
    %c0_i32_2 = arith.constant 0 : i32
    return %c0_i32, %c0_i32_0, %c0_i32_1 : i32, i32, i32
  }
  func.func @transform_12(%arg0: i32) -> (i32, i32, i32) {
    %c0_i32 = arith.constant 0 : i32
    %c0_i32_0 = arith.constant 0 : i32
    %c0_i32_1 = arith.constant 0 : i32
    %c0_i32_2 = arith.constant 0 : i32
    return %c0_i32, %c0_i32_0, %c0_i32_1 : i32, i32, i32
  }
  func.func @transform_13(%arg0: i32) -> (i32, i32, i32) {
    %c0_i32 = arith.constant 0 : i32
    %c0_i32_0 = arith.constant 0 : i32
    %c0_i32_1 = arith.constant 0 : i32
    %c0_i32_2 = arith.constant 0 : i32
    return %c0_i32, %c0_i32_0, %c0_i32_1 : i32, i32, i32
  }
  func.func @transform_14(%arg0: i32) -> (i32, i32, i32) {
    %c0_i32 = arith.constant 0 : i32
    %c0_i32_0 = arith.constant 0 : i32
    %c0_i32_1 = arith.constant 0 : i32
    %c0_i32_2 = arith.constant 0 : i32
    return %c0_i32, %c0_i32_0, %c0_i32_1 : i32, i32, i32
  }
  func.func @transform_15(%arg0: i32) -> (i32, i32) {
    %c0_i32 = arith.constant 0 : i32
    %c0_i32_0 = arith.constant 0 : i32
    %c0_i32_1 = arith.constant 0 : i32
    return %c0_i32, %c0_i32_0 : i32, i32
  }
  func.func @transform_16(%arg0: i32) -> (i32, i32) {
    %c0_i32 = arith.constant 0 : i32
    %c0_i32_0 = arith.constant 0 : i32
    %c0_i32_1 = arith.constant 0 : i32
    return %c0_i32, %c0_i32_0 : i32, i32
  }
  func.func @transform_17(%arg0: i32) -> (i32, i32, i32) {
    %c0_i32 = arith.constant 0 : i32
    %c0_i32_0 = arith.constant 0 : i32
    %c0_i32_1 = arith.constant 0 : i32
    %c0_i32_2 = arith.constant 0 : i32
    return %c0_i32, %c0_i32_0, %c0_i32_1 : i32, i32, i32
  }
  func.func @transform_18(%arg0: i32) -> (i32, i32, i32) {
    %c0_i32 = arith.constant 0 : i32
    %c0_i32_0 = arith.constant 0 : i32
    %c0_i32_1 = arith.constant 0 : i32
    %c0_i32_2 = arith.constant 0 : i32
    return %c0_i32, %c0_i32_0, %c0_i32_1 : i32, i32, i32
  }
  func.func @transform_19(%arg0: i32) -> (i32, i32, i32) {
    %c0_i32 = arith.constant 0 : i32
    %c0_i32_0 = arith.constant 0 : i32
    %c0_i32_1 = arith.constant 0 : i32
    %c0_i32_2 = arith.constant 0 : i32
    return %c0_i32, %c0_i32_0, %c0_i32_1 : i32, i32, i32
  }
  func.func @transform_20(%arg0: i32) -> (i32, i32) {
    %c0_i32 = arith.constant 0 : i32
    %c0_i32_0 = arith.constant 0 : i32
    %c0_i32_1 = arith.constant 0 : i32
    return %c0_i32, %c0_i32_0 : i32, i32
  }
  func.func @transform_21(%arg0: i32) -> (i32, i32) {
    %c0_i32 = arith.constant 0 : i32
    %c0_i32_0 = arith.constant 0 : i32
    %c0_i32_1 = arith.constant 0 : i32
    return %c0_i32, %c0_i32_0 : i32, i32
  }
  func.func @transform_22(%arg0: i32) -> (i32, i32, i32) {
    %c0_i32 = arith.constant 0 : i32
    %c0_i32_0 = arith.constant 0 : i32
    %c0_i32_1 = arith.constant 0 : i32
    return %arg0, %c0_i32, %c0_i32_0 : i32, i32, i32
  }
}

</mosaic_0001>

<llo_original>
// kernel: conv_lstm_forward.1
$region0: #{conv_lstm_forward.1}
  #allocation0 [shape = 'u32[]', space=smem, size = 0x4, offset = 0x4, fixed_abs, tag = 'smem constant byte address 0x4 - core index']
  #allocation1 [shape = 'u32[144,128]{1,0:T(1,128)}', space=vmem, size = 0x12000, scoped, tag = 'internal scratch']
  #allocation2 [shape = 'f32[16,256]{1,0:T(8,128)}', space=vmem, size = 0x4000, scoped, tag = 'scratch operand']
  #allocation3 [shape = 'f32[16,64]{1,0:T(8,128)}', space=vmem, size = 0x2000, scoped, tag = 'scratch operand']
  %s0 = inlined_call_operand.vmem [shape: f32[2,17,16], index: 0, kind: input, shape index: {}]
  %s1 = inlined_call_operand.vmem [shape: f32[2,17,16], index: 1, kind: input, shape index: {}]
  %s2 = inlined_call_operand.vmem [shape: f32[2,32,17], index: 2, kind: input, shape index: {}]
  %s3 = inlined_call_operand.vmem [shape: f32[2,17,32], index: 3, kind: input, shape index: {}]
  %s4 = inlined_call_operand.vmem [shape: f32[17,16], index: 4, kind: input, shape index: {}]
  %s5 = inlined_call_operand.vmem [shape: f32[2,1,17], index: 5, kind: input, shape index: {}]
  %s6 = inlined_call_operand.vmem [shape: f32[2,1,17], index: 6, kind: input, shape index: {}]
  %s7 = inlined_call_operand.vmem [shape: f32[2,17,128], index: 7, kind: input, shape index: {}]
  %s8 = inlined_call_operand.vmem [shape: f32[2,1,128], index: 8, kind: input, shape index: {}]
  %s9 = inlined_call_operand.vmem [shape: f32[2,3,64], index: 9, kind: input, shape index: {}]
  %s10 = inlined_call_operand.vmem [shape: f32[2,1,64], index: 10, kind: input, shape index: {}]
  %s11 = inlined_call_operand.vmem [shape: f32[2,1,64], index: 11, kind: input, shape index: {}]
  %s12 = inlined_call_operand.vmem [shape: f32[2,1,64], index: 12, kind: input, shape index: {}]
  %s13 = inlined_call_operand.vmem [shape: f32[2,64,32], index: 13, kind: input, shape index: {}]
  %s14 = inlined_call_operand.vmem [shape: f32[2,1,32], index: 14, kind: input, shape index: {}]
  %s15 = inlined_call_operand.vmem [shape: f32[64,16], index: 15, kind: input, shape index: {}]
  %s16 = inlined_call_operand.vmem [shape: f32[16,64], index: 16, kind: input, shape index: {}]
  %s17 = inlined_call_operand.vmem [shape: f32[2,64,256], index: 17, kind: input, shape index: {}]
  %s18 = inlined_call_operand.vmem [shape: f32[2,64,256], index: 18, kind: input, shape index: {}]
  %s19 = inlined_call_operand.vmem [shape: f32[2,1,256], index: 19, kind: input, shape index: {}]
  %s20 = inlined_call_operand.vmem [shape: f32[64,17], index: 20, kind: input, shape index: {}]
  %s21 = inlined_call_operand.vmem [shape: f32[1,17], index: 21, kind: input, shape index: {}]
  %s22 = inlined_call_operand.vmem [shape: f32[2,17,16], index: 22, kind: output, shape index: {}]
  %s23 = sld [smem:[#allocation0]]
  $region121: #{conv_lstm_forward.1} parent=0
    _
  %s25 = ssub.s32 1, %s23
  %s26 = scalar_select 0, %s25, %s23
  loop: start=0, step=1, limit=4
  $region2: #{conv_lstm_forward.1} parent=0 // loop_pre_header
    _
  $region3: #{conv_lstm_forward.1} parent=0 // loop_header
    %s28 = sphi 0, %s32
    %p29 = scmp.ge.s32.totalorder %s28, 4
    %s38 = sphi 0, %s40
    %s41 = sphi 0, %s38
    %s42 = sphi 0, %s41
    %s58 = sphi 0, %s42
    %s64 = sphi 0, %s66
    %s67 = sphi 0, %s64
    %s68 = sphi 0, %s67
    %s84 = sphi 0, %s68
    %s88 = sphi 0, %s88
    %s90 = sphi 0, %s88
    %s91 = sphi 0, %s90
    %s105 = sphi 0, %s91
    %s109 = sphi 0, %s109
    %s111 = sphi 0, %s109
    %s112 = sphi 0, %s111
    %s126 = sphi 0, %s112
    %s130 = sphi 0, %s130
    %s132 = sphi 0, %s130
    %s133 = sphi 0, %s132
    %s147 = sphi 0, %s133
    %s151 = sphi 0, %s151
    %s153 = sphi 0, %s151
    %s154 = sphi 0, %s153
    %s168 = sphi 0, %s154
    %s172 = sphi 0, %s172
    %s174 = sphi 0, %s172
    %s175 = sphi 0, %s174
    %s189 = sphi 0, %s175
    %s193 = sphi 0, %s193
    %s195 = sphi 0, %s193
    %s196 = sphi 0, %s195
    %s210 = sphi 0, %s196
    %s214 = sphi 0, %s214
    %s216 = sphi 0, %s214
    %s217 = sphi 0, %s216
    %s231 = sphi 0, %s217
    %s235 = sphi 0, %s235
    %s237 = sphi 0, %s235
    %s238 = sphi 0, %s237
    %s252 = sphi 0, %s238
    %s256 = sphi 0, %s256
    %s258 = sphi 0, %s256
    %s259 = sphi 0, %s258
    %s273 = sphi 0, %s259
    %s277 = sphi 0, %s277
    %s279 = sphi 0, %s277
    %s280 = sphi 0, %s279
    %s294 = sphi 0, %s280
    %s298 = sphi 0, %s298
    %s300 = sphi 0, %s298
    %s301 = sphi 0, %s300
    %s315 = sphi 0, %s301
    %s319 = sphi 0, %s319
    %s321 = sphi 0, %s319
    %s322 = sphi 0, %s321
    %s336 = sphi 0, %s322
    %s340 = sphi 0, %s340
    %s342 = sphi 0, %s340
    %s343 = sphi 0, %s342
    %s357 = sphi 0, %s343
    %s361 = sphi 0, %s361
    %s363 = sphi 0, %s361
    %s364 = sphi 0, %s363
    %s378 = sphi 0, %s364
    %s382 = sphi 0, %s382
    %s384 = sphi 0, %s382
    %s385 = sphi 0, %s384
    %s399 = sphi 0, %s385
    %s403 = sphi 0, %s403
    %s405 = sphi 0, %s403
    %s406 = sphi 0, %s405
    %s420 = sphi 0, %s406
    %s424 = sphi 0, %s424
    %s426 = sphi 0, %s424
    %s427 = sphi 0, %s426
    %s441 = sphi 0, %s427
    %s445 = sphi 0, %s445
    %s447 = sphi 0, %s445
    %s448 = sphi 0, %s447
    %s462 = sphi 0, %s448
    %s466 = sphi 0, %s466
    %s468 = sphi 0, %s466
    %s469 = sphi 0, %s468
    %s483 = sphi 0, %s469
    %s487 = sphi 0, %s487
    %s489 = sphi 0, %s487
    %s490 = sphi 0, %s489
    %s504 = sphi 0, %s490
    %s510 = sphi 0, %s512
    %s513 = sphi 0, %s510
    %s514 = sphi 0, %s513
    %s530 = sphi 0, %s514
  $region4: #{conv_lstm_forward.1} parent=0 // loop_header_branch
    %31 = sbr.rel (%p29) target = $region8
  $region5: #{conv_lstm_forward.1} parent=0 // loop_body
    %s33 = ssub.s32 %s28, 1
    %s34 = ssub.s32 %s28, 2
    %s35 = sadd.s32 %s28, 1
    %s36 = ssub.s32 %s28, %s35
    %p37 = scmp.eq.s32.totalorder %s36, 0
    %s39 = sadd.s32 %s38, 1
    %s40 = scalar_select %p37, %s38, %s39
    %p43 = pneg %p37
    %p44 = scmp.eq.s32.totalorder %s28, 1
    %p45 = por %p43, %p44
    %p46 = scmp.ne.s32.totalorder %s38, %s41
    %p47 = scmp.eq.s32.totalorder %s28, 0
    %p48 = por %p46, %p47
    %p49 = scmp.ne.s32.totalorder %s38, %s41
    %p50 = scmp.eq.s32.totalorder %s33, 1
    %p51 = por %p49, %p50
    %p52 = scmp.ne.s32.totalorder %s41, %s42
    %p53 = scmp.eq.s32.totalorder %s33, 0
    %p54 = por %p52, %p53
    %p55 = scmp.ne.s32.totalorder %s41, %s42
    %p56 = scmp.eq.s32.totalorder %s34, 1
    %p57 = por %p55, %p56
    %p59 = scmp.ne.s32.totalorder %s42, %s58
    %p60 = scmp.eq.s32.totalorder %s34, 0
    %p61 = por %p59, %p60
    %s62 = ssub.s32 %s28, %s35
    %p63 = scmp.eq.s32.totalorder %s62, 0
    %s65 = sadd.s32 %s64, 1
    %s66 = scalar_select %p63, %s64, %s65
    %p69 = pneg %p63
    %p70 = scmp.eq.s32.totalorder %s28, 1
    %p71 = por %p69, %p70
    %p72 = scmp.ne.s32.totalorder %s64, %s67
    %p73 = scmp.eq.s32.totalorder %s28, 0
    %p74 = por %p72, %p73
    %p75 = scmp.ne.s32.totalorder %s64, %s67
    %p76 = scmp.eq.s32.totalorder %s33, 1
    %p77 = por %p75, %p76
    %p78 = scmp.ne.s32.totalorder %s67, %s68
    %p79 = scmp.eq.s32.totalorder %s33, 0
    %p80 = por %p78, %p79
    %p81 = scmp.ne.s32.totalorder %s67, %s68
    %p82 = scmp.eq.s32.totalorder %s34, 1
    %p83 = por %p81, %p82
    %p85 = scmp.ne.s32.totalorder %s68, %s84
    %p86 = scmp.eq.s32.totalorder %s34, 0
    %p87 = por %p85, %p86
    %s89 = sadd.s32 %s88, 1
    %p92 = scmp.eq.s32.totalorder %s28, 1
    %p93 = scmp.ne.s32.totalorder %s88, %s90
    %p94 = scmp.eq.s32.totalorder %s28, 0
    %p95 = por %p93, %p94
    %p96 = scmp.ne.s32.totalorder %s88, %s90
    %p97 = scmp.eq.s32.totalorder %s33, 1
    %p98 = por %p96, %p97
    %p99 = scmp.ne.s32.totalorder %s90, %s91
    %p100 = scmp.eq.s32.totalorder %s33, 0
    %p101 = por %p99, %p100
    %p102 = scmp.ne.s32.totalorder %s90, %s91
    %p103 = scmp.eq.s32.totalorder %s34, 1
    %p104 = por %p102, %p103
    %p106 = scmp.ne.s32.totalorder %s91, %s105
    %p107 = scmp.eq.s32.totalorder %s34, 0
    %p108 = por %p106, %p107
    %s110 = sadd.s32 %s109, 1
    %p113 = scmp.eq.s32.totalorder %s28, 1
    %p114 = scmp.ne.s32.totalorder %s109, %s111
    %p115 = scmp.eq.s32.totalorder %s28, 0
    %p116 = por %p114, %p115
    %p117 = scmp.ne.s32.totalorder %s109, %s111
    %p118 = scmp.eq.s32.totalorder %s33, 1
    %p119 = por %p117, %p118
    %p120 = scmp.ne.s32.totalorder %s111, %s112
    %p121 = scmp.eq.s32.totalorder %s33, 0
    %p122 = por %p120, %p121
    %p123 = scmp.ne.s32.totalorder %s111, %s112
    %p124 = scmp.eq.s32.totalorder %s34, 1
    %p125 = por %p123, %p124
    %p127 = scmp.ne.s32.totalorder %s112, %s126
    %p128 = scmp.eq.s32.totalorder %s34, 0
    %p129 = por %p127, %p128
    %s131 = sadd.s32 %s130, 1
    %p134 = scmp.eq.s32.totalorder %s28, 1
    %p135 = scmp.ne.s32.totalorder %s130, %s132
    %p136 = scmp.eq.s32.totalorder %s28, 0
    %p137 = por %p135, %p136
    %p138 = scmp.ne.s32.totalorder %s130, %s132
    %p139 = scmp.eq.s32.totalorder %s33, 1
    %p140 = por %p138, %p139
    %p141 = scmp.ne.s32.totalorder %s132, %s133
    %p142 = scmp.eq.s32.totalorder %s33, 0
    %p143 = por %p141, %p142
    %p144 = scmp.ne.s32.totalorder %s132, %s133
    %p145 = scmp.eq.s32.totalorder %s34, 1
    %p146 = por %p144, %p145
    %p148 = scmp.ne.s32.totalorder %s133, %s147
    %p149 = scmp.eq.s32.totalorder %s34, 0
    %p150 = por %p148, %p149
    %s152 = sadd.s32 %s151, 1
    %p155 = scmp.eq.s32.totalorder %s28, 1
    %p156 = scmp.ne.s32.totalorder %s151, %s153
    %p157 = scmp.eq.s32.totalorder %s28, 0
    %p158 = por %p156, %p157
    %p159 = scmp.ne.s32.totalorder %s151, %s153
    %p160 = scmp.eq.s32.totalorder %s33, 1
    %p161 = por %p159, %p160
    %p162 = scmp.ne.s32.totalorder %s153, %s154
    %p163 = scmp.eq.s32.totalorder %s33, 0
    %p164 = por %p162, %p163
    %p165 = scmp.ne.s32.totalorder %s153, %s154
    %p166 = scmp.eq.s32.totalorder %s34, 1
    %p167 = por %p165, %p166
    %p169 = scmp.ne.s32.totalorder %s154, %s168
    %p170 = scmp.eq.s32.totalorder %s34, 0
    %p171 = por %p169, %p170
    %s173 = sadd.s32 %s172, 1
    %p176 = scmp.eq.s32.totalorder %s28, 1
    %p177 = scmp.ne.s32.totalorder %s172, %s174
    %p178 = scmp.eq.s32.totalorder %s28, 0
    %p179 = por %p177, %p178
    %p180 = scmp.ne.s32.totalorder %s172, %s174
    %p181 = scmp.eq.s32.totalorder %s33, 1
    %p182 = por %p180, %p181
    %p183 = scmp.ne.s32.totalorder %s174, %s175
    %p184 = scmp.eq.s32.totalorder %s33, 0
    %p185 = por %p183, %p184
    %p186 = scmp.ne.s32.totalorder %s174, %s175
    %p187 = scmp.eq.s32.totalorder %s34, 1
    %p188 = por %p186, %p187
    %p190 = scmp.ne.s32.totalorder %s175, %s189
    %p191 = scmp.eq.s32.totalorder %s34, 0
    %p192 = por %p190, %p191
    %s194 = sadd.s32 %s193, 1
    %p197 = scmp.eq.s32.totalorder %s28, 1
    %p198 = scmp.ne.s32.totalorder %s193, %s195
    %p199 = scmp.eq.s32.totalorder %s28, 0
    %p200 = por %p198, %p199
    %p201 = scmp.ne.s32.totalorder %s193, %s195
    %p202 = scmp.eq.s32.totalorder %s33, 1
    %p203 = por %p201, %p202
    %p204 = scmp.ne.s32.totalorder %s195, %s196
    %p205 = scmp.eq.s32.totalorder %s33, 0
    %p206 = por %p204, %p205
    %p207 = scmp.ne.s32.totalorder %s195, %s196
    %p208 = scmp.eq.s32.totalorder %s34, 1
    %p209 = por %p207, %p208
    %p211 = scmp.ne.s32.totalorder %s196, %s210
    %p212 = scmp.eq.s32.totalorder %s34, 0
    %p213 = por %p211, %p212
    %s215 = sadd.s32 %s214, 1
    %p218 = scmp.eq.s32.totalorder %s28, 1
    %p219 = scmp.ne.s32.totalorder %s214, %s216
    %p220 = scmp.eq.s32.totalorder %s28, 0
    %p221 = por %p219, %p220
    %p222 = scmp.ne.s32.totalorder %s214, %s216
    %p223 = scmp.eq.s32.totalorder %s33, 1
    %p224 = por %p222, %p223
    %p225 = scmp.ne.s32.totalorder %s216, %s217
    %p226 = scmp.eq.s32.totalorder %s33, 0
    %p227 = por %p225, %p226
    %p228 = scmp.ne.s32.totalorder %s216, %s217
    %p229 = scmp.eq.s32.totalorder %s34, 1
    %p230 = por %p228, %p229
    %p232 = scmp.ne.s32.totalorder %s217, %s231
    %p233 = scmp.eq.s32.totalorder %s34, 0
    %p234 = por %p232, %p233
    %s236 = sadd.s32 %s235, 1
    %p239 = scmp.eq.s32.totalorder %s28, 1
    %p240 = scmp.ne.s32.totalorder %s235, %s237
    %p241 = scmp.eq.s32.totalorder %s28, 0
    %p242 = por %p240, %p241
    %p243 = scmp.ne.s32.totalorder %s235, %s237
    %p244 = scmp.eq.s32.totalorder %s33, 1
    %p245 = por %p243, %p244
    %p246 = scmp.ne.s32.totalorder %s237, %s238
    %p247 = scmp.eq.s32.totalorder %s33, 0
    %p248 = por %p246, %p247
    %p249 = scmp.ne.s32.totalorder %s237, %s238
    %p250 = scmp.eq.s32.totalorder %s34, 1
    %p251 = por %p249, %p250
    %p253 = scmp.ne.s32.totalorder %s238, %s252
    %p254 = scmp.eq.s32.totalorder %s34, 0
    %p255 = por %p253, %p254
    %s257 = sadd.s32 %s256, 1
    %p260 = scmp.eq.s32.totalorder %s28, 1
    %p261 = scmp.ne.s32.totalorder %s256, %s258
    %p262 = scmp.eq.s32.totalorder %s28, 0
    %p263 = por %p261, %p262
    %p264 = scmp.ne.s32.totalorder %s256, %s258
    %p265 = scmp.eq.s32.totalorder %s33, 1
    %p266 = por %p264, %p265
    %p267 = scmp.ne.s32.totalorder %s258, %s259
    %p268 = scmp.eq.s32.totalorder %s33, 0
    %p269 = por %p267, %p268
    %p270 = scmp.ne.s32.totalorder %s258, %s259
    %p271 = scmp.eq.s32.totalorder %s34, 1
    %p272 = por %p270, %p271
    %p274 = scmp.ne.s32.totalorder %s259, %s273
    %p275 = scmp.eq.s32.totalorder %s34, 0
    %p276 = por %p274, %p275
    %s278 = sadd.s32 %s277, 1
    %p281 = scmp.eq.s32.totalorder %s28, 1
    %p282 = scmp.ne.s32.totalorder %s277, %s279
    %p283 = scmp.eq.s32.totalorder %s28, 0
    %p284 = por %p282, %p283
    %p285 = scmp.ne.s32.totalorder %s277, %s279
    %p286 = scmp.eq.s32.totalorder %s33, 1
    %p287 = por %p285, %p286
    %p288 = scmp.ne.s32.totalorder %s279, %s280
    %p289 = scmp.eq.s32.totalorder %s33, 0
    %p290 = por %p288, %p289
    %p291 = scmp.ne.s32.totalorder %s279, %s280
    %p292 = scmp.eq.s32.totalorder %s34, 1
    %p293 = por %p291, %p292
    %p295 = scmp.ne.s32.totalorder %s280, %s294
    %p296 = scmp.eq.s32.totalorder %s34, 0
    %p297 = por %p295, %p296
    %s299 = sadd.s32 %s298, 1
    %p302 = scmp.eq.s32.totalorder %s28, 1
    %p303 = scmp.ne.s32.totalorder %s298, %s300
    %p304 = scmp.eq.s32.totalorder %s28, 0
    %p305 = por %p303, %p304
    %p306 = scmp.ne.s32.totalorder %s298, %s300
    %p307 = scmp.eq.s32.totalorder %s33, 1
    %p308 = por %p306, %p307
    %p309 = scmp.ne.s32.totalorder %s300, %s301
    %p310 = scmp.eq.s32.totalorder %s33, 0
    %p311 = por %p309, %p310
    %p312 = scmp.ne.s32.totalorder %s300, %s301
    %p313 = scmp.eq.s32.totalorder %s34, 1
    %p314 = por %p312, %p313
    %p316 = scmp.ne.s32.totalorder %s301, %s315
    %p317 = scmp.eq.s32.totalorder %s34, 0
    %p318 = por %p316, %p317
    %s320 = sadd.s32 %s319, 1
    %p323 = scmp.eq.s32.totalorder %s28, 1
    %p324 = scmp.ne.s32.totalorder %s319, %s321
    %p325 = scmp.eq.s32.totalorder %s28, 0
    %p326 = por %p324, %p325
    %p327 = scmp.ne.s32.totalorder %s319, %s321
    %p328 = scmp.eq.s32.totalorder %s33, 1
    %p329 = por %p327, %p328
    %p330 = scmp.ne.s32.totalorder %s321, %s322
    %p331 = scmp.eq.s32.totalorder %s33, 0
    %p332 = por %p330, %p331
    %p333 = scmp.ne.s32.totalorder %s321, %s322
    %p334 = scmp.eq.s32.totalorder %s34, 1
    %p335 = por %p333, %p334
    %p337 = scmp.ne.s32.totalorder %s322, %s336
    %p338 = scmp.eq.s32.totalorder %s34, 0
    %p339 = por %p337, %p338
    %s341 = sadd.s32 %s340, 1
    %p344 = scmp.eq.s32.totalorder %s28, 1
    %p345 = scmp.ne.s32.totalorder %s340, %s342
    %p346 = scmp.eq.s32.totalorder %s28, 0
    %p347 = por %p345, %p346
    %p348 = scmp.ne.s32.totalorder %s340, %s342
    %p349 = scmp.eq.s32.totalorder %s33, 1
    %p350 = por %p348, %p349
    %p351 = scmp.ne.s32.totalorder %s342, %s343
    %p352 = scmp.eq.s32.totalorder %s33, 0
    %p353 = por %p351, %p352
    %p354 = scmp.ne.s32.totalorder %s342, %s343
    %p355 = scmp.eq.s32.totalorder %s34, 1
    %p356 = por %p354, %p355
    %p358 = scmp.ne.s32.totalorder %s343, %s357
    %p359 = scmp.eq.s32.totalorder %s34, 0
    %p360 = por %p358, %p359
    %s362 = sadd.s32 %s361, 1
    %p365 = scmp.eq.s32.totalorder %s28, 1
    %p366 = scmp.ne.s32.totalorder %s361, %s363
    %p367 = scmp.eq.s32.totalorder %s28, 0
    %p368 = por %p366, %p367
    %p369 = scmp.ne.s32.totalorder %s361, %s363
    %p370 = scmp.eq.s32.totalorder %s33, 1
    %p371 = por %p369, %p370
    %p372 = scmp.ne.s32.totalorder %s363, %s364
    %p373 = scmp.eq.s32.totalorder %s33, 0
    %p374 = por %p372, %p373
    %p375 = scmp.ne.s32.totalorder %s363, %s364
    %p376 = scmp.eq.s32.totalorder %s34, 1
    %p377 = por %p375, %p376
    %p379 = scmp.ne.s32.totalorder %s364, %s378
    %p380 = scmp.eq.s32.totalorder %s34, 0
    %p381 = por %p379, %p380
    %s383 = sadd.s32 %s382, 1
    %p386 = scmp.eq.s32.totalorder %s28, 1
    %p387 = scmp.ne.s32.totalorder %s382, %s384
    %p388 = scmp.eq.s32.totalorder %s28, 0
    %p389 = por %p387, %p388
    %p390 = scmp.ne.s32.totalorder %s382, %s384
    %p391 = scmp.eq.s32.totalorder %s33, 1
    %p392 = por %p390, %p391
    %p393 = scmp.ne.s32.totalorder %s384, %s385
    %p394 = scmp.eq.s32.totalorder %s33, 0
    %p395 = por %p393, %p394
    %p396 = scmp.ne.s32.totalorder %s384, %s385
    %p397 = scmp.eq.s32.totalorder %s34, 1
    %p398 = por %p396, %p397
    %p400 = scmp.ne.s32.totalorder %s385, %s399
    %p401 = scmp.eq.s32.totalorder %s34, 0
    %p402 = por %p400, %p401
    %s404 = sadd.s32 %s403, 1
    %p407 = scmp.eq.s32.totalorder %s28, 1
    %p408 = scmp.ne.s32.totalorder %s403, %s405
    %p409 = scmp.eq.s32.totalorder %s28, 0
    %p410 = por %p408, %p409
    %p411 = scmp.ne.s32.totalorder %s403, %s405
    %p412 = scmp.eq.s32.totalorder %s33, 1
    %p413 = por %p411, %p412
    %p414 = scmp.ne.s32.totalorder %s405, %s406
    %p415 = scmp.eq.s32.totalorder %s33, 0
    %p416 = por %p414, %p415
    %p417 = scmp.ne.s32.totalorder %s405, %s406
    %p418 = scmp.eq.s32.totalorder %s34, 1
    %p419 = por %p417, %p418
    %p421 = scmp.ne.s32.totalorder %s406, %s420
    %p422 = scmp.eq.s32.totalorder %s34, 0
    %p423 = por %p421, %p422
    %s425 = sadd.s32 %s424, 1
    %p428 = scmp.eq.s32.totalorder %s28, 1
    %p429 = scmp.ne.s32.totalorder %s424, %s426
    %p430 = scmp.eq.s32.totalorder %s28, 0
    %p431 = por %p429, %p430
    %p432 = scmp.ne.s32.totalorder %s424, %s426
    %p433 = scmp.eq.s32.totalorder %s33, 1
    %p434 = por %p432, %p433
    %p435 = scmp.ne.s32.totalorder %s426, %s427
    %p436 = scmp.eq.s32.totalorder %s33, 0
    %p437 = por %p435, %p436
    %p438 = scmp.ne.s32.totalorder %s426, %s427
    %p439 = scmp.eq.s32.totalorder %s34, 1
    %p440 = por %p438, %p439
    %p442 = scmp.ne.s32.totalorder %s427, %s441
    %p443 = scmp.eq.s32.totalorder %s34, 0
    %p444 = por %p442, %p443
    %s446 = sadd.s32 %s445, 1
    %p449 = scmp.eq.s32.totalorder %s28, 1
    %p450 = scmp.ne.s32.totalorder %s445, %s447
    %p451 = scmp.eq.s32.totalorder %s28, 0
    %p452 = por %p450, %p451
    %p453 = scmp.ne.s32.totalorder %s445, %s447
    %p454 = scmp.eq.s32.totalorder %s33, 1
    %p455 = por %p453, %p454
    %p456 = scmp.ne.s32.totalorder %s447, %s448
    %p457 = scmp.eq.s32.totalorder %s33, 0
    %p458 = por %p456, %p457
    %p459 = scmp.ne.s32.totalorder %s447, %s448
    %p460 = scmp.eq.s32.totalorder %s34, 1
    %p461 = por %p459, %p460
    %p463 = scmp.ne.s32.totalorder %s448, %s462
    %p464 = scmp.eq.s32.totalorder %s34, 0
    %p465 = por %p463, %p464
    %s467 = sadd.s32 %s466, 1
    %p470 = scmp.eq.s32.totalorder %s28, 1
    %p471 = scmp.ne.s32.totalorder %s466, %s468
    %p472 = scmp.eq.s32.totalorder %s28, 0
    %p473 = por %p471, %p472
    %p474 = scmp.ne.s32.totalorder %s466, %s468
    %p475 = scmp.eq.s32.totalorder %s33, 1
    %p476 = por %p474, %p475
    %p477 = scmp.ne.s32.totalorder %s468, %s469
    %p478 = scmp.eq.s32.totalorder %s33, 0
    %p479 = por %p477, %p478
    %p480 = scmp.ne.s32.totalorder %s468, %s469
    %p481 = scmp.eq.s32.totalorder %s34, 1
    %p482 = por %p480, %p481
    %p484 = scmp.ne.s32.totalorder %s469, %s483
    %p485 = scmp.eq.s32.totalorder %s34, 0
    %p486 = por %p484, %p485
    %s488 = sadd.s32 %s487, 1
    %p491 = scmp.eq.s32.totalorder %s28, 1
    %p492 = scmp.ne.s32.totalorder %s487, %s489
    %p493 = scmp.eq.s32.totalorder %s28, 0
    %p494 = por %p492, %p493
    %p495 = scmp.ne.s32.totalorder %s487, %s489
    %p496 = scmp.eq.s32.totalorder %s33, 1
    %p497 = por %p495, %p496
    %p498 = scmp.ne.s32.totalorder %s489, %s490
    %p499 = scmp.eq.s32.totalorder %s33, 0
    %p500 = por %p498, %p499
    %p501 = scmp.ne.s32.totalorder %s489, %s490
    %p502 = scmp.eq.s32.totalorder %s34, 1
    %p503 = por %p501, %p502
    %p505 = scmp.ne.s32.totalorder %s490, %s504
    %p506 = scmp.eq.s32.totalorder %s34, 0
    %p507 = por %p505, %p506
    %s508 = ssub.s32 %s28, %s35
    %p509 = scmp.eq.s32.totalorder %s508, 0
    %s511 = sadd.s32 %s510, 1
    %s512 = scalar_select %p509, %s510, %s511
    %p515 = pneg %p509
    %p516 = scmp.eq.s32.totalorder %s28, 1
    %p517 = por %p515, %p516
    %p518 = scmp.ne.s32.totalorder %s510, %s513
    %p519 = scmp.eq.s32.totalorder %s28, 0
    %p520 = por %p518, %p519
    %p521 = scmp.ne.s32.totalorder %s510, %s513
    %p522 = scmp.eq.s32.totalorder %s33, 1
    %p523 = por %p521, %p522
    %p524 = scmp.ne.s32.totalorder %s513, %s514
    %p525 = scmp.eq.s32.totalorder %s33, 0
    %p526 = por %p524, %p525
    %p527 = scmp.ne.s32.totalorder %s513, %s514
    %p528 = scmp.eq.s32.totalorder %s34, 1
    %p529 = por %p527, %p528
    %p531 = scmp.ne.s32.totalorder %s514, %s530
    %p532 = scmp.eq.s32.totalorder %s34, 0
    %p533 = por %p531, %p532
    %p534 = scmp.le.s32.totalorder 1, %s28
    %p535 = scmp.lt.s32.totalorder %s28, 3
    %p536 = pnand %p534, %p535
    %p537 = pneg %p536
    // Predicated region
    $region9: #{conv_lstm_forward.1} parent=5 // pred_check
      _
    $region10: #{conv_lstm_forward.1} parent=5 // pred_check_branch
      %539 = sbr.rel (%p536) target = $region12
    $region11: #{conv_lstm_forward.1} parent=5 // pred_region
      %s540 = ssub.s32 %s28, 1
      // Predicated region
      $region13: #{conv_lstm_forward.1} parent=11 // pred_check
        %p541 = pneg %p101
      $region14: #{conv_lstm_forward.1} parent=11 // pred_check_branch
        %543 = sbr.rel (%p541) target = $region16
      $region15: #{conv_lstm_forward.1} parent=11 // pred_region
        _
      $region16: #{conv_lstm_forward.1} parent=11 // pred_fallthru
        _
      // Predicated region
      $region17: #{conv_lstm_forward.1} parent=11 // pred_check
        %p544 = pneg %p122
      $region18: #{conv_lstm_forward.1} parent=11 // pred_check_branch
        %546 = sbr.rel (%p544) target = $region20
      $region19: #{conv_lstm_forward.1} parent=11 // pred_region
        _
      $region20: #{conv_lstm_forward.1} parent=11 // pred_fallthru
        _
      // Predicated region
      $region21: #{conv_lstm_forward.1} parent=11 // pred_check
        %p547 = pneg %p143
      $region22: #{conv_lstm_forward.1} parent=11 // pred_check_branch
        %549 = sbr.rel (%p547) target = $region24
      $region23: #{conv_lstm_forward.1} parent=11 // pred_region
        _
      $region24: #{conv_lstm_forward.1} parent=11 // pred_fallthru
        _
      // Predicated region
      $region25: #{conv_lstm_forward.1} parent=11 // pred_check
        %p550 = pneg %p164
      $region26: #{conv_lstm_forward.1} parent=11 // pred_check_branch
        %552 = sbr.rel (%p550) target = $region28
      $region27: #{conv_lstm_forward.1} parent=11 // pred_region
        _
      $region28: #{conv_lstm_forward.1} parent=11 // pred_fallthru
        _
      // Predicated region
      $region29: #{conv_lstm_forward.1} parent=11 // pred_check
        %p553 = pneg %p185
      $region30: #{conv_lstm_forward.1} parent=11 // pred_check_branch
        %555 = sbr.rel (%p553) target = $region32
      $region31: #{conv_lstm_forward.1} parent=11 // pred_region
        _
      $region32: #{conv_lstm_forward.1} parent=11 // pred_fallthru
        _
      // Predicated region
      $region33: #{conv_lstm_forward.1} parent=11 // pred_check
        %p556 = pneg %p206
      $region34: #{conv_lstm_forward.1} parent=11 // pred_check_branch
        %558 = sbr.rel (%p556) target = $region36
      $region35: #{conv_lstm_forward.1} parent=11 // pred_region
        _
      $region36: #{conv_lstm_forward.1} parent=11 // pred_fallthru
        _
      // Predicated region
      $region37: #{conv_lstm_forward.1} parent=11 // pred_check
        %p559 = pneg %p227
      $region38: #{conv_lstm_forward.1} parent=11 // pred_check_branch
        %561 = sbr.rel (%p559) target = $region40
      $region39: #{conv_lstm_forward.1} parent=11 // pred_region
        _
      $region40: #{conv_lstm_forward.1} parent=11 // pred_fallthru
        _
      // Predicated region
      $region41: #{conv_lstm_forward.1} parent=11 // pred_check
        %p562 = pneg %p248
      $region42: #{conv_lstm_forward.1} parent=11 // pred_check_branch
        %564 = sbr.rel (%p562) target = $region44
      $region43: #{conv_lstm_forward.1} parent=11 // pred_region
        _
      $region44: #{conv_lstm_forward.1} parent=11 // pred_fallthru
        _
      // Predicated region
      $region45: #{conv_lstm_forward.1} parent=11 // pred_check
        %p565 = pneg %p269
      $region46: #{conv_lstm_forward.1} parent=11 // pred_check_branch
        %567 = sbr.rel (%p565) target = $region48
      $region47: #{conv_lstm_forward.1} parent=11 // pred_region
        _
      $region48: #{conv_lstm_forward.1} parent=11 // pred_fallthru
        _
      // Predicated region
      $region49: #{conv_lstm_forward.1} parent=11 // pred_check
        %p568 = pneg %p290
      $region50: #{conv_lstm_forward.1} parent=11 // pred_check_branch
        %570 = sbr.rel (%p568) target = $region52
      $region51: #{conv_lstm_forward.1} parent=11 // pred_region
        _
      $region52: #{conv_lstm_forward.1} parent=11 // pred_fallthru
        _
      // Predicated region
      $region53: #{conv_lstm_forward.1} parent=11 // pred_check
        %p571 = pneg %p311
      $region54: #{conv_lstm_forward.1} parent=11 // pred_check_branch
        %573 = sbr.rel (%p571) target = $region56
      $region55: #{conv_lstm_forward.1} parent=11 // pred_region
        _
      $region56: #{conv_lstm_forward.1} parent=11 // pred_fallthru
        _
      // Predicated region
      $region57: #{conv_lstm_forward.1} parent=11 // pred_check
        %p574 = pneg %p332
      $region58: #{conv_lstm_forward.1} parent=11 // pred_check_branch
        %576 = sbr.rel (%p574) target = $region60
      $region59: #{conv_lstm_forward.1} parent=11 // pred_region
        _
      $region60: #{conv_lstm_forward.1} parent=11 // pred_fallthru
        _
      // Predicated region
      $region61: #{conv_lstm_forward.1} parent=11 // pred_check
        %p577 = pneg %p353
      $region62: #{conv_lstm_forward.1} parent=11 // pred_check_branch
        %579 = sbr.rel (%p577) target = $region64
      $region63: #{conv_lstm_forward.1} parent=11 // pred_region
        _
      $region64: #{conv_lstm_forward.1} parent=11 // pred_fallthru
        _
      // Predicated region
      $region65: #{conv_lstm_forward.1} parent=11 // pred_check
        %p580 = pneg %p374
      $region66: #{conv_lstm_forward.1} parent=11 // pred_check_branch
        %582 = sbr.rel (%p580) target = $region68
      $region67: #{conv_lstm_forward.1} parent=11 // pred_region
        _
      $region68: #{conv_lstm_forward.1} parent=11 // pred_fallthru
        _
      // Predicated region
      $region69: #{conv_lstm_forward.1} parent=11 // pred_check
        %p583 = pneg %p395
      $region70: #{conv_lstm_forward.1} parent=11 // pred_check_branch
        %585 = sbr.rel (%p583) target = $region72
      $region71: #{conv_lstm_forward.1} parent=11 // pred_region
        _
      $region72: #{conv_lstm_forward.1} parent=11 // pred_fallthru
        _
      // Predicated region
      $region73: #{conv_lstm_forward.1} parent=11 // pred_check
        %p586 = pneg %p416
      $region74: #{conv_lstm_forward.1} parent=11 // pred_check_branch
        %588 = sbr.rel (%p586) target = $region76
      $region75: #{conv_lstm_forward.1} parent=11 // pred_region
        _
      $region76: #{conv_lstm_forward.1} parent=11 // pred_fallthru
        _
      // Predicated region
      $region77: #{conv_lstm_forward.1} parent=11 // pred_check
        %p589 = pneg %p437
      $region78: #{conv_lstm_forward.1} parent=11 // pred_check_branch
        %591 = sbr.rel (%p589) target = $region80
      $region79: #{conv_lstm_forward.1} parent=11 // pred_region
        _
      $region80: #{conv_lstm_forward.1} parent=11 // pred_fallthru
        _
      // Predicated region
      $region81: #{conv_lstm_forward.1} parent=11 // pred_check
        %p592 = pneg %p458
      $region82: #{conv_lstm_forward.1} parent=11 // pred_check_branch
        %594 = sbr.rel (%p592) target = $region84
      $region83: #{conv_lstm_forward.1} parent=11 // pred_region
        _
      $region84: #{conv_lstm_forward.1} parent=11 // pred_fallthru
        _
      // Predicated region
      $region85: #{conv_lstm_forward.1} parent=11 // pred_check
        %p595 = pneg %p479
      $region86: #{conv_lstm_forward.1} parent=11 // pred_check_branch
        %597 = sbr.rel (%p595) target = $region88
      $region87: #{conv_lstm_forward.1} parent=11 // pred_region
        _
      $region88: #{conv_lstm_forward.1} parent=11 // pred_fallthru
        _
      // Predicated region
      $region89: #{conv_lstm_forward.1} parent=11 // pred_check
        %p598 = pneg %p500
      $region90: #{conv_lstm_forward.1} parent=11 // pred_check_branch
        %600 = sbr.rel (%p598) target = $region92
      $region91: #{conv_lstm_forward.1} parent=11 // pred_region
        _
      $region92: #{conv_lstm_forward.1} parent=11 // pred_fallthru
        _
    $region12: #{conv_lstm_forward.1} parent=5 // pred_fallthru
      _
    %p601 = scmp.lt.s32.totalorder %s28, 2
    // Predicated region
    $region93: #{conv_lstm_forward.1} parent=5 // pred_check
      %p602 = pneg %p601
    $region94: #{conv_lstm_forward.1} parent=5 // pred_check_branch
      %604 = sbr.rel (%p602) target = $region96
    $region95: #{conv_lstm_forward.1} parent=5 // pred_region
      // Predicated region
      $region97: #{conv_lstm_forward.1} parent=95 // pred_check
        %p605 = pneg %p48
      $region98: #{conv_lstm_forward.1} parent=95 // pred_check_branch
        %607 = sbr.rel (%p605) target = $region100
      $region99: #{conv_lstm_forward.1} parent=95 // pred_region
        %p608 = scmp.lt.s32.totalorder %s28, 1
        %s609 = scalar_select %p608, %s28, 1
        %s610 = smul.addr %s609, 3
        %s611 = smul.addr %s610, 8
        %s612 = scalar_lea.vmem %s0, %s611
      $region100: #{conv_lstm_forward.1} parent=95 // pred_fallthru
        _
      // Predicated region
      $region101: #{conv_lstm_forward.1} parent=95 // pred_check
        %p613 = pneg %p74
      $region102: #{conv_lstm_forward.1} parent=95 // pred_check_branch
        %615 = sbr.rel (%p613) target = $region104
      $region103: #{conv_lstm_forward.1} parent=95 // pred_region
        %p616 = scmp.lt.s32.totalorder %s28, 1
        %s617 = scalar_select %p616, %s28, 1
        %s618 = smul.addr %s617, 3
        %s619 = smul.addr %s618, 8
        %s620 = scalar_lea.vmem %s1, %s619
      $region104: #{conv_lstm_forward.1} parent=95 // pred_fallthru
        _
    $region96: #{conv_lstm_forward.1} parent=5 // pred_fallthru
      _
    %p621 = scmp.le.s32.totalorder 1, %s28
    %p622 = scmp.lt.s32.totalorder %s28, 3
    %p623 = pnand %p621, %p622
    %p624 = pneg %p623
    // Predicated region
    $region105: #{conv_lstm_forward.1} parent=5 // pred_check
      _
    $region106: #{conv_lstm_forward.1} parent=5 // pred_check_branch
      %626 = sbr.rel (%p623) target = $region108
    $region107: #{conv_lstm_forward.1} parent=5 // pred_region
      %s627 = ssub.s32 %s28, 1
      %p628 = scmp.lt.s32.totalorder %s33, 1
      %s629 = scalar_select %p628, %s33, 1
      %s630 = smul.addr %s629, 3
      %s631 = smul.addr %s630, 8
      %s632 = scalar_lea.vmem %s0, %s631
      %p633 = pneg %p54
      %p634 = pneg %p51
      %p635 = scmp.lt.s32.totalorder %s33, 1
      %s636 = scalar_select %p635, %s33, 1
      %s637 = smul.addr %s636, 3
      %s638 = smul.addr %s637, 8
      %s639 = scalar_lea.vmem %s1, %s638
      %p640 = pneg %p80
      %p641 = pneg %p77
      %p642 = pneg %p101
      %p643 = pneg %p98
      %p644 = pneg %p122
      %p645 = pneg %p119
      %p646 = pneg %p143
      %p647 = pneg %p140
      %p648 = pneg %p164
      %p649 = pneg %p161
      %p650 = pneg %p185
      %p651 = pneg %p182
      %p652 = pneg %p206
      %p653 = pneg %p203
      %p654 = pneg %p227
      %p655 = pneg %p224
      %p656 = pneg %p248
      %p657 = pneg %p245
      %p658 = pneg %p269
      %p659 = pneg %p266
      %p660 = pneg %p290
      %p661 = pneg %p287
      %p662 = pneg %p311
      %p663 = pneg %p308
      %p664 = pneg %p332
      %p665 = pneg %p329
      %p666 = pneg %p353
      %p667 = pneg %p350
      %p668 = pneg %p374
      %p669 = pneg %p371
      %p670 = pneg %p395
      %p671 = pneg %p392
      %p672 = pneg %p416
      %p673 = pneg %p413
      %p674 = pneg %p437
      %p675 = pneg %p434
      %p676 = pneg %p458
      %p677 = pneg %p455
      %p678 = pneg %p479
      %p679 = pneg %p476
      %p680 = pneg %p500
      %p681 = pneg %p497
      %p682 = pneg %p526
      %p683 = pneg %p523
      %p684 = scmp.lt.s32.totalorder %s33, 1
      %s685 = scalar_select %p684, %s33, 1
      %s686 = smul.addr %s685, 3
      %s687 = smul.addr %s686, 8
      %s688 = scalar_lea.vmem %s22, %s687
      %p689 = scmp.lt.s32.totalorder %s33, 1
      %s690 = scalar_select %p689, %s33, 1
      %s691 = smul.addr %s690, 3
      %s692 = smul.addr %s691, 8
      %s693 = scalar_lea.vmem %s0, %s692
      %p694 = scmp.lt.s32.totalorder %s33, 1
      %s695 = scalar_select %p694, %s33, 1
      %s696 = smul.addr %s695, 3
      %s697 = smul.addr %s696, 8
      %s698 = scalar_lea.vmem %s1, %s697
      %p699 = scmp.lt.s32.totalorder %s33, 1
      %s700 = scalar_select %p699, %s33, 1
      %s701 = smul.addr %s700, 3
      %s702 = smul.addr %s701, 8
      %s703 = scalar_lea.vmem %s22, %s702
      %v704 = vld [vmem:[%s2] sm:$0xff]
      %v705 = vld [vmem:[%s2 + $0x8] sm:$0xff]
      %v706 = vld [vmem:[%s2 + $0x10] sm:$0xff]
      %v707 = vld [vmem:[%s2 + $0x18] sm:$0xff]
      %s708 = scalar_lea.vmem %s2, 32
      %v709 = vld [vmem:[%s708] sm:$0xff]
      %v710 = vld [vmem:[%s708 + $0x8] sm:$0xff]
      %v711 = vld [vmem:[%s708 + $0x10] sm:$0xff]
      %v712 = vld [vmem:[%s708 + $0x18] sm:$0xff]
      %v713 = vld [vmem:[%s693] sm:$0xff]
      %v714 = vld [vmem:[%s693 + $0x8] sm:$0xff]
      %v715 = vld [vmem:[%s693 + $0x1] sm:$0xff]
      %v716 = vld [vmem:[%s693 + $0x9] sm:$0xff]
      %vm717 = vcmask 130048
      %v719 = vsel %vm717, %v715, 0
      %v722 = vsel %vm717, %v716, 0
      %724 = vmatprep.subr.mxu0 0.0
      %725 = vmatpush1.msra.mxu0 0.0
      %726 = vmatprep.subr.mxu0 0.0
      %727 = vmatpush1.msra.mxu0 0.0
      %728 = vmatprep.subr.mxu0 0.0
      %729 = vmatpush1.msra.mxu0 0.0
      %730 = vmatprep.subr.mxu0 0.0
      %731 = vmatpush1.msra.mxu0 0.0
      %732 = vmatprep.subr.mxu0 0.0
      %733 = vmatpush1.msra.mxu0 0.0
      %734 = vmatprep.subr.mxu0 0.0
      %735 = vmatpush1.msra.mxu0 0.0
      %736 = vmatprep.subr.mxu0 0.0
      %737 = vmatpush1.msra.mxu0 0.0
      %738 = vmatprep.subr.mxu0 0.0
      %739 = vmatpush1.msra.mxu0 0.0
      %740 = vmatprep.subr.mxu0 0.0
      %741 = vmatpush1.msra.mxu0 0.0
      %742 = vmatprep.subr.mxu0 0.0
      %743 = vmatpush1.msra.mxu0 0.0
      %744 = vmatprep.subr.mxu0 0.0
      %745 = vmatpush1.msra.mxu0 0.0
      %746 = vmatprep.subr.mxu0 0.0
      %747 = vmatpush1.msra.mxu0 0.0
      %748 = vmatprep.subr.mxu0 0.0
      %749 = vmatpush1.msra.mxu0 0.0
      %750 = vmatprep.subr.mxu0 0.0
      %751 = vmatpush1.msra.mxu0 0.0
      %752 = vmatprep.subr.mxu0 0.0
      %753 = vmatpush1.msra.mxu0 %v707
      %754 = vmatprep.subr.mxu0 0.0
      %755 = vmatpush1.msra.mxu0 %v706
      %756 = vmatprep.subr.mxu0 0.0
      %757 = vmatpush2.msra.mxu0 0.0
      %758 = vmatprep.subr.mxu0 0.0
      %759 = vmatpush2.msra.mxu0 0.0
      %760 = vmatprep.subr.mxu0 0.0
      %761 = vmatpush2.msra.mxu0 0.0
      %762 = vmatprep.subr.mxu0 0.0
      %763 = vmatpush2.msra.mxu0 0.0
      %764 = vmatprep.subr.mxu0 0.0
      %765 = vmatpush2.msra.mxu0 0.0
      %766 = vmatprep.subr.mxu0 0.0
      %767 = vmatpush2.msra.mxu0 0.0
      %768 = vmatprep.subr.mxu0 0.0
      %769 = vmatpush2.msra.mxu0 0.0
      %770 = vmatprep.subr.mxu0 0.0
      %771 = vmatpush2.msra.mxu0 0.0
      %772 = vmatprep.subr.mxu0 0.0
      %773 = vmatpush2.msra.mxu0 0.0
      %774 = vmatprep.subr.mxu0 0.0
      %775 = vmatpush2.msra.mxu0 0.0
      %776 = vmatprep.subr.mxu0 0.0
      %777 = vmatpush2.msra.mxu0 0.0
      %778 = vmatprep.subr.mxu0 0.0
      %779 = vmatpush2.msra.mxu0 0.0
      %780 = vmatprep.subr.mxu0 0.0
      %781 = vmatpush2.msra.mxu0 0.0
      %782 = vmatprep.subr.mxu0 0.0
      %783 = vmatpush2.msra.mxu0 0.0
      %784 = vmatprep.subr.mxu0 0.0
      %785 = vmatpush2.msra.mxu0 0.0
      %786 = vmatprep.subr.mxu0 0.0
      %787 = vmatpush2.msra.mxu0 0.0
      %788 = vmatprep.mubr.f32.mxu0 0.0
      %789 = vmatmul.mubr.f32.gmra.mxu0 %v719
      %v790 = vpop.f32.mrf.mxu0
      %v791 = vadd.f32 0.0, %v790
      %v792 = vpop.f32.mrf.mxu0
      %793 = vmatprep.mubr.f32.mxu0 0.0
      %794 = vmatmul.mubr.f32.gmra.mxu0 %v722
      %v795 = vpop.f32.mrf.mxu0
      %v796 = vadd.f32 0.0, %v795
      %v797 = vpop.f32.mrf.mxu0
      %798 = vdwg.mxu0
      %v800 = vsel %vm717, %v713, 0
      %v803 = vsel %vm717, %v714, 0
      %805 = vmatprep.subr.mxu0 0.0
      %806 = vmatpush1.msra.mxu0 0.0
      %807 = vmatprep.subr.mxu0 0.0
      %808 = vmatpush1.msra.mxu0 0.0
      %809 = vmatprep.subr.mxu0 0.0
      %810 = vmatpush1.msra.mxu0 0.0
      %811 = vmatprep.subr.mxu0 0.0
      %812 = vmatpush1.msra.mxu0 0.0
      %813 = vmatprep.subr.mxu0 0.0
      %814 = vmatpush1.msra.mxu0 0.0
      %815 = vmatprep.subr.mxu0 0.0
      %816 = vmatpush1.msra.mxu0 0.0
      %817 = vmatprep.subr.mxu0 0.0
      %818 = vmatpush1.msra.mxu0 0.0
      %819 = vmatprep.subr.mxu0 0.0
      %820 = vmatpush1.msra.mxu0 0.0
      %821 = vmatprep.subr.mxu0 0.0
      %822 = vmatpush1.msra.mxu0 0.0
      %823 = vmatprep.subr.mxu0 0.0
      %824 = vmatpush1.msra.mxu0 0.0
      %825 = vmatprep.subr.mxu0 0.0
      %826 = vmatpush1.msra.mxu0 0.0
      %827 = vmatprep.subr.mxu0 0.0
      %828 = vmatpush1.msra.mxu0 0.0
      %829 = vmatprep.subr.mxu0 0.0
      %830 = vmatpush1.msra.mxu0 0.0
      %831 = vmatprep.subr.mxu0 0.0
      %832 = vmatpush1.msra.mxu0 0.0
      %833 = vmatprep.subr.mxu0 0.0
      %834 = vmatpush1.msra.mxu0 %v705
      %835 = vmatprep.subr.mxu0 0.0
      %836 = vmatpush1.msra.mxu0 %v704
      %837 = vmatprep.subr.mxu0 0.0
      %838 = vmatpush2.msra.mxu0 0.0
      %839 = vmatprep.subr.mxu0 0.0
      %840 = vmatpush2.msra.mxu0 0.0
      %841 = vmatprep.subr.mxu0 0.0
      %842 = vmatpush2.msra.mxu0 0.0
      %843 = vmatprep.subr.mxu0 0.0
      %844 = vmatpush2.msra.mxu0 0.0
      %845 = vmatprep.subr.mxu0 0.0
      %846 = vmatpush2.msra.mxu0 0.0
      %847 = vmatprep.subr.mxu0 0.0
      %848 = vmatpush2.msra.mxu0 0.0
      %849 = vmatprep.subr.mxu0 0.0
      %850 = vmatpush2.msra.mxu0 0.0
      %851 = vmatprep.subr.mxu0 0.0
      %852 = vmatpush2.msra.mxu0 0.0
      %853 = vmatprep.subr.mxu0 0.0
      %854 = vmatpush2.msra.mxu0 0.0
      %855 = vmatprep.subr.mxu0 0.0
      %856 = vmatpush2.msra.mxu0 0.0
      %857 = vmatprep.subr.mxu0 0.0
      %858 = vmatpush2.msra.mxu0 0.0
      %859 = vmatprep.subr.mxu0 0.0
      %860 = vmatpush2.msra.mxu0 0.0
      %861 = vmatprep.subr.mxu0 0.0
      %862 = vmatpush2.msra.mxu0 0.0
      %863 = vmatprep.subr.mxu0 0.0
      %864 = vmatpush2.msra.mxu0 0.0
      %865 = vmatprep.subr.mxu0 0.0
      %866 = vmatpush2.msra.mxu0 0.0
      %867 = vmatprep.subr.mxu0 0.0
      %868 = vmatpush2.msra.mxu0 0.0
      %869 = vmatprep.mubr.f32.mxu0 0.0
      %870 = vmatmul.mubr.f32.gmra.mxu0 %v800
      %v871 = vpop.f32.mrf.mxu0
      %v872 = vadd.f32 %v791, %v871
      %v873 = vpop.f32.mrf.mxu0
      %874 = vmatprep.mubr.f32.mxu0 0.0
      %875 = vmatmul.mubr.f32.gmra.mxu0 %v803
      %v876 = vpop.f32.mrf.mxu0
      %v877 = vadd.f32 %v796, %v876
      %v878 = vpop.f32.mrf.mxu0
      %879 = vdwg.mxu0
      %880 = vmatprep.subr.mxu0 0.0
      %881 = vmatpush1.msra.mxu0 0.0
      %882 = vmatprep.subr.mxu0 0.0
      %883 = vmatpush1.msra.mxu0 0.0
      %884 = vmatprep.subr.mxu0 0.0
      %885 = vmatpush1.msra.mxu0 0.0
      %886 = vmatprep.subr.mxu0 0.0
      %887 = vmatpush1.msra.mxu0 0.0
      %888 = vmatprep.subr.mxu0 0.0
      %889 = vmatpush1.msra.mxu0 0.0
      %890 = vmatprep.subr.mxu0 0.0
      %891 = vmatpush1.msra.mxu0 0.0
      %892 = vmatprep.subr.mxu0 0.0
      %893 = vmatpush1.msra.mxu0 0.0
      %894 = vmatprep.subr.mxu0 0.0
      %895 = vmatpush1.msra.mxu0 0.0
      %896 = vmatprep.subr.mxu0 0.0
      %897 = vmatpush1.msra.mxu0 0.0
      %898 = vmatprep.subr.mxu0 0.0
      %899 = vmatpush1.msra.mxu0 0.0
      %900 = vmatprep.subr.mxu0 0.0
      %901 = vmatpush1.msra.mxu0 0.0
      %902 = vmatprep.subr.mxu0 0.0
      %903 = vmatpush1.msra.mxu0 0.0
      %904 = vmatprep.subr.mxu0 0.0
      %905 = vmatpush1.msra.mxu0 0.0
      %906 = vmatprep.subr.mxu0 0.0
      %907 = vmatpush1.msra.mxu0 0.0
      %908 = vmatprep.subr.mxu0 0.0
      %909 = vmatpush1.msra.mxu0 %v712
      %910 = vmatprep.subr.mxu0 0.0
      %911 = vmatpush1.msra.mxu0 %v711
      %912 = vmatprep.subr.mxu0 0.0
      %913 = vmatpush2.msra.mxu0 0.0
      %914 = vmatprep.subr.mxu0 0.0
      %915 = vmatpush2.msra.mxu0 0.0
      %916 = vmatprep.subr.mxu0 0.0
      %917 = vmatpush2.msra.mxu0 0.0
      %918 = vmatprep.subr.mxu0 0.0
      %919 = vmatpush2.msra.mxu0 0.0
      %920 = vmatprep.subr.mxu0 0.0
      %921 = vmatpush2.msra.mxu0 0.0
      %922 = vmatprep.subr.mxu0 0.0
      %923 = vmatpush2.msra.mxu0 0.0
      %924 = vmatprep.subr.mxu0 0.0
      %925 = vmatpush2.msra.mxu0 0.0
      %926 = vmatprep.subr.mxu0 0.0
      %927 = vmatpush2.msra.mxu0 0.0
      %928 = vmatprep.subr.mxu0 0.0
      %929 = vmatpush2.msra.mxu0 0.0
      %930 = vmatprep.subr.mxu0 0.0
      %931 = vmatpush2.msra.mxu0 0.0
      %932 = vmatprep.subr.mxu0 0.0
      %933 = vmatpush2.msra.mxu0 0.0
      %934 = vmatprep.subr.mxu0 0.0
      %935 = vmatpush2.msra.mxu0 0.0
      %936 = vmatprep.subr.mxu0 0.0
      %937 = vmatpush2.msra.mxu0 0.0
      %938 = vmatprep.subr.mxu0 0.0
      %939 = vmatpush2.msra.mxu0 0.0
      %940 = vmatprep.subr.mxu0 0.0
      %941 = vmatpush2.msra.mxu0 0.0
      %942 = vmatprep.subr.mxu0 0.0
      %943 = vmatpush2.msra.mxu0 0.0
      %944 = vmatprep.mubr.f32.mxu0 0.0
      %945 = vmatmul.mubr.f32.gmra.mxu0 %v719
      %v946 = vpop.f32.mrf.mxu0
      %v947 = vadd.f32 0.0, %v946
      %v948 = vpop.f32.mrf.mxu0
      %949 = vmatprep.mubr.f32.mxu0 0.0
      %950 = vmatmul.mubr.f32.gmra.mxu0 %v722
      %v951 = vpop.f32.mrf.mxu0
      %v952 = vadd.f32 0.0, %v951
      %v953 = vpop.f32.mrf.mxu0
      %954 = vdwg.mxu0
      %955 = vmatprep.subr.mxu0 0.0
      %956 = vmatpush1.msra.mxu0 0.0
      %957 = vmatprep.subr.mxu0 0.0
      %958 = vmatpush1.msra.mxu0 0.0
      %959 = vmatprep.subr.mxu0 0.0
      %960 = vmatpush1.msra.mxu0 0.0
      %961 = vmatprep.subr.mxu0 0.0
      %962 = vmatpush1.msra.mxu0 0.0
      %963 = vmatprep.subr.mxu0 0.0
      %964 = vmatpush1.msra.mxu0 0.0
      %965 = vmatprep.subr.mxu0 0.0
      %966 = vmatpush1.msra.mxu0 0.0
      %967 = vmatprep.subr.mxu0 0.0
      %968 = vmatpush1.msra.mxu0 0.0
      %969 = vmatprep.subr.mxu0 0.0
      %970 = vmatpush1.msra.mxu0 0.0
      %971 = vmatprep.subr.mxu0 0.0
      %972 = vmatpush1.msra.mxu0 0.0
      %973 = vmatprep.subr.mxu0 0.0
      %974 = vmatpush1.msra.mxu0 0.0
      %975 = vmatprep.subr.mxu0 0.0
      %976 = vmatpush1.msra.mxu0 0.0
      %977 = vmatprep.subr.mxu0 0.0
      %978 = vmatpush1.msra.mxu0 0.0
      %979 = vmatprep.subr.mxu0 0.0
      %980 = vmatpush1.msra.mxu0 0.0
      %981 = vmatprep.subr.mxu0 0.0
      %982 = vmatpush1.msra.mxu0 0.0
      %983 = vmatprep.subr.mxu0 0.0
      %984 = vmatpush1.msra.mxu0 %v710
      %985 = vmatprep.subr.mxu0 0.0
      %986 = vmatpush1.msra.mxu0 %v709
      %987 = vmatprep.subr.mxu0 0.0
      %988 = vmatpush2.msra.mxu0 0.0
      %989 = vmatprep.subr.mxu0 0.0
      %990 = vmatpush2.msra.mxu0 0.0
      %991 = vmatprep.subr.mxu0 0.0
      %992 = vmatpush2.msra.mxu0 0.0
      %993 = vmatprep.subr.mxu0 0.0
      %994 = vmatpush2.msra.mxu0 0.0
      %995 = vmatprep.subr.mxu0 0.0
      %996 = vmatpush2.msra.mxu0 0.0
      %997 = vmatprep.subr.mxu0 0.0
      %998 = vmatpush2.msra.mxu0 0.0
      %999 = vmatprep.subr.mxu0 0.0
      %1000 = vmatpush2.msra.mxu0 0.0
      %1001 = vmatprep.subr.mxu0 0.0
      %1002 = vmatpush2.msra.mxu0 0.0
      %1003 = vmatprep.subr.mxu0 0.0
      %1004 = vmatpush2.msra.mxu0 0.0
      %1005 = vmatprep.subr.mxu0 0.0
      %1006 = vmatpush2.msra.mxu0 0.0
      %1007 = vmatprep.subr.mxu0 0.0
      %1008 = vmatpush2.msra.mxu0 0.0
      %1009 = vmatprep.subr.mxu0 0.0
      %1010 = vmatpush2.msra.mxu0 0.0
      %1011 = vmatprep.subr.mxu0 0.0
      %1012 = vmatpush2.msra.mxu0 0.0
      %1013 = vmatprep.subr.mxu0 0.0
      %1014 = vmatpush2.msra.mxu0 0.0
      %1015 = vmatprep.subr.mxu0 0.0
      %1016 = vmatpush2.msra.mxu0 0.0
      %1017 = vmatprep.subr.mxu0 0.0
      %1018 = vmatpush2.msra.mxu0 0.0
      %1019 = vmatprep.mubr.f32.mxu0 0.0
      %1020 = vmatmul.mubr.f32.gmra.mxu0 %v800
      %v1021 = vpop.f32.mrf.mxu0
      %v1022 = vadd.f32 %v947, %v1021
      %v1023 = vpop.f32.mrf.mxu0
      %1024 = vmatprep.mubr.f32.mxu0 0.0
      %1025 = vmatmul.mubr.f32.gmra.mxu0 %v803
      %v1026 = vpop.f32.mrf.mxu0
      %v1027 = vadd.f32 %v952, %v1026
      %v1028 = vpop.f32.mrf.mxu0
      %1029 = vdwg.mxu0
      %v1030 = vld [vmem:[%s698] sm:$0xff]
      %v1031 = vld [vmem:[%s698 + $0x8] sm:$0xff]
      %v1032 = vld [vmem:[%s698 + $0x1] sm:$0xff]
      %v1033 = vld [vmem:[%s698 + $0x9] sm:$0xff]
      %v1035 = vsel %vm717, %v1032, 0
      %v1038 = vsel %vm717, %v1033, 0
      %1040 = vmatprep.subr.mxu0 0.0
      %1041 = vmatpush1.msra.mxu0 0.0
      %1042 = vmatprep.subr.mxu0 0.0
      %1043 = vmatpush1.msra.mxu0 0.0
      %1044 = vmatprep.subr.mxu0 0.0
      %1045 = vmatpush1.msra.mxu0 0.0
      %1046 = vmatprep.subr.mxu0 0.0
      %1047 = vmatpush1.msra.mxu0 0.0
      %1048 = vmatprep.subr.mxu0 0.0
      %1049 = vmatpush1.msra.mxu0 0.0
      %1050 = vmatprep.subr.mxu0 0.0
      %1051 = vmatpush1.msra.mxu0 0.0
      %1052 = vmatprep.subr.mxu0 0.0
      %1053 = vmatpush1.msra.mxu0 0.0
      %1054 = vmatprep.subr.mxu0 0.0
      %1055 = vmatpush1.msra.mxu0 0.0
      %1056 = vmatprep.subr.mxu0 0.0
      %1057 = vmatpush1.msra.mxu0 0.0
      %1058 = vmatprep.subr.mxu0 0.0
      %1059 = vmatpush1.msra.mxu0 0.0
      %1060 = vmatprep.subr.mxu0 0.0
      %1061 = vmatpush1.msra.mxu0 0.0
      %1062 = vmatprep.subr.mxu0 0.0
      %1063 = vmatpush1.msra.mxu0 0.0
      %1064 = vmatprep.subr.mxu0 0.0
      %1065 = vmatpush1.msra.mxu0 0.0
      %1066 = vmatprep.subr.mxu0 0.0
      %1067 = vmatpush1.msra.mxu0 0.0
      %1068 = vmatprep.subr.mxu0 0.0
      %1069 = vmatpush1.msra.mxu0 %v707
      %1070 = vmatprep.subr.mxu0 0.0
      %1071 = vmatpush1.msra.mxu0 %v706
      %1072 = vmatprep.subr.mxu0 0.0
      %1073 = vmatpush2.msra.mxu0 0.0
      %1074 = vmatprep.subr.mxu0 0.0
      %1075 = vmatpush2.msra.mxu0 0.0
      %1076 = vmatprep.subr.mxu0 0.0
      %1077 = vmatpush2.msra.mxu0 0.0
      %1078 = vmatprep.subr.mxu0 0.0
      %1079 = vmatpush2.msra.mxu0 0.0
      %1080 = vmatprep.subr.mxu0 0.0
      %1081 = vmatpush2.msra.mxu0 0.0
      %1082 = vmatprep.subr.mxu0 0.0
      %1083 = vmatpush2.msra.mxu0 0.0
      %1084 = vmatprep.subr.mxu0 0.0
      %1085 = vmatpush2.msra.mxu0 0.0
      %1086 = vmatprep.subr.mxu0 0.0
      %1087 = vmatpush2.msra.mxu0 0.0
      %1088 = vmatprep.subr.mxu0 0.0
      %1089 = vmatpush2.msra.mxu0 0.0
      %1090 = vmatprep.subr.mxu0 0.0
      %1091 = vmatpush2.msra.mxu0 0.0
      %1092 = vmatprep.subr.mxu0 0.0
      %1093 = vmatpush2.msra.mxu0 0.0
      %1094 = vmatprep.subr.mxu0 0.0
      %1095 = vmatpush2.msra.mxu0 0.0
      %1096 = vmatprep.subr.mxu0 0.0
      %1097 = vmatpush2.msra.mxu0 0.0
      %1098 = vmatprep.subr.mxu0 0.0
      %1099 = vmatpush2.msra.mxu0 0.0
      %1100 = vmatprep.subr.mxu0 0.0
      %1101 = vmatpush2.msra.mxu0 0.0
      %1102 = vmatprep.subr.mxu0 0.0
      %1103 = vmatpush2.msra.mxu0 0.0
      %1104 = vmatprep.mubr.f32.mxu0 0.0
      %1105 = vmatmul.mubr.f32.gmra.mxu0 %v1035
      %v1106 = vpop.f32.mrf.mxu0
      %v1107 = vadd.f32 0.0, %v1106
      %v1108 = vpop.f32.mrf.mxu0
      %1109 = vmatprep.mubr.f32.mxu0 0.0
      %1110 = vmatmul.mubr.f32.gmra.mxu0 %v1038
      %v1111 = vpop.f32.mrf.mxu0
      %v1112 = vadd.f32 0.0, %v1111
      %v1113 = vpop.f32.mrf.mxu0
      %1114 = vdwg.mxu0
      %v1116 = vsel %vm717, %v1030, 0
      %v1119 = vsel %vm717, %v1031, 0
      %1121 = vmatprep.subr.mxu0 0.0
      %1122 = vmatpush1.msra.mxu0 0.0
      %1123 = vmatprep.subr.mxu0 0.0
      %1124 = vmatpush1.msra.mxu0 0.0
      %1125 = vmatprep.subr.mxu0 0.0
      %1126 = vmatpush1.msra.mxu0 0.0
      %1127 = vmatprep.subr.mxu0 0.0
      %1128 = vmatpush1.msra.mxu0 0.0
      %1129 = vmatprep.subr.mxu0 0.0
      %1130 = vmatpush1.msra.mxu0 0.0
      %1131 = vmatprep.subr.mxu0 0.0
      %1132 = vmatpush1.msra.mxu0 0.0
      %1133 = vmatprep.subr.mxu0 0.0
      %1134 = vmatpush1.msra.mxu0 0.0
      %1135 = vmatprep.subr.mxu0 0.0
      %1136 = vmatpush1.msra.mxu0 0.0
      %1137 = vmatprep.subr.mxu0 0.0
      %1138 = vmatpush1.msra.mxu0 0.0
      %1139 = vmatprep.subr.mxu0 0.0
      %1140 = vmatpush1.msra.mxu0 0.0
      %1141 = vmatprep.subr.mxu0 0.0
      %1142 = vmatpush1.msra.mxu0 0.0
      %1143 = vmatprep.subr.mxu0 0.0
      %1144 = vmatpush1.msra.mxu0 0.0
      %1145 = vmatprep.subr.mxu0 0.0
      %1146 = vmatpush1.msra.mxu0 0.0
      %1147 = vmatprep.subr.mxu0 0.0
      %1148 = vmatpush1.msra.mxu0 0.0
      %1149 = vmatprep.subr.mxu0 0.0
      %1150 = vmatpush1.msra.mxu0 %v705
      %1151 = vmatprep.subr.mxu0 0.0
      %1152 = vmatpush1.msra.mxu0 %v704
      %1153 = vmatprep.subr.mxu0 0.0
      %1154 = vmatpush2.msra.mxu0 0.0
      %1155 = vmatprep.subr.mxu0 0.0
      %1156 = vmatpush2.msra.mxu0 0.0
      %1157 = vmatprep.subr.mxu0 0.0
      %1158 = vmatpush2.msra.mxu0 0.0
      %1159 = vmatprep.subr.mxu0 0.0
      %1160 = vmatpush2.msra.mxu0 0.0
      %1161 = vmatprep.subr.mxu0 0.0
      %1162 = vmatpush2.msra.mxu0 0.0
      %1163 = vmatprep.subr.mxu0 0.0
      %1164 = vmatpush2.msra.mxu0 0.0
      %1165 = vmatprep.subr.mxu0 0.0
      %1166 = vmatpush2.msra.mxu0 0.0
      %1167 = vmatprep.subr.mxu0 0.0
      %1168 = vmatpush2.msra.mxu0 0.0
      %1169 = vmatprep.subr.mxu0 0.0
      %1170 = vmatpush2.msra.mxu0 0.0
      %1171 = vmatprep.subr.mxu0 0.0
      %1172 = vmatpush2.msra.mxu0 0.0
      %1173 = vmatprep.subr.mxu0 0.0
      %1174 = vmatpush2.msra.mxu0 0.0
      %1175 = vmatprep.subr.mxu0 0.0
      %1176 = vmatpush2.msra.mxu0 0.0
      %1177 = vmatprep.subr.mxu0 0.0
      %1178 = vmatpush2.msra.mxu0 0.0
      %1179 = vmatprep.subr.mxu0 0.0
      %1180 = vmatpush2.msra.mxu0 0.0
      %1181 = vmatprep.subr.mxu0 0.0
      %1182 = vmatpush2.msra.mxu0 0.0
      %1183 = vmatprep.subr.mxu0 0.0
      %1184 = vmatpush2.msra.mxu0 0.0
      %1185 = vmatprep.mubr.f32.mxu0 0.0
      %1186 = vmatmul.mubr.f32.gmra.mxu0 %v1116
      %v1187 = vpop.f32.mrf.mxu0
      %v1188 = vadd.f32 %v1107, %v1187
      %v1189 = vpop.f32.mrf.mxu0
      %1190 = vmatprep.mubr.f32.mxu0 0.0
      %1191 = vmatmul.mubr.f32.gmra.mxu0 %v1119
      %v1192 = vpop.f32.mrf.mxu0
      %v1193 = vadd.f32 %v1112, %v1192
      %v1194 = vpop.f32.mrf.mxu0
      %1195 = vdwg.mxu0
      %1196 = vmatprep.subr.mxu0 0.0
      %1197 = vmatpush1.msra.mxu0 0.0
      %1198 = vmatprep.subr.mxu0 0.0
      %1199 = vmatpush1.msra.mxu0 0.0
      %1200 = vmatprep.subr.mxu0 0.0
      %1201 = vmatpush1.msra.mxu0 0.0
      %1202 = vmatprep.subr.mxu0 0.0
      %1203 = vmatpush1.msra.mxu0 0.0
      %1204 = vmatprep.subr.mxu0 0.0
      %1205 = vmatpush1.msra.mxu0 0.0
      %1206 = vmatprep.subr.mxu0 0.0
      %1207 = vmatpush1.msra.mxu0 0.0
      %1208 = vmatprep.subr.mxu0 0.0
      %1209 = vmatpush1.msra.mxu0 0.0
      %1210 = vmatprep.subr.mxu0 0.0
      %1211 = vmatpush1.msra.mxu0 0.0
      %1212 = vmatprep.subr.mxu0 0.0
      %1213 = vmatpush1.msra.mxu0 0.0
      %1214 = vmatprep.subr.mxu0 0.0
      %1215 = vmatpush1.msra.mxu0 0.0
      %1216 = vmatprep.subr.mxu0 0.0
      %1217 = vmatpush1.msra.mxu0 0.0
      %1218 = vmatprep.subr.mxu0 0.0
      %1219 = vmatpush1.msra.mxu0 0.0
      %1220 = vmatprep.subr.mxu0 0.0
      %1221 = vmatpush1.msra.mxu0 0.0
      %1222 = vmatprep.subr.mxu0 0.0
      %1223 = vmatpush1.msra.mxu0 0.0
      %1224 = vmatprep.subr.mxu0 0.0
      %1225 = vmatpush1.msra.mxu0 %v712
      %1226 = vmatprep.subr.mxu0 0.0
      %1227 = vmatpush1.msra.mxu0 %v711
      %1228 = vmatprep.subr.mxu0 0.0
      %1229 = vmatpush2.msra.mxu0 0.0
      %1230 = vmatprep.subr.mxu0 0.0
      %1231 = vmatpush2.msra.mxu0 0.0
      %1232 = vmatprep.subr.mxu0 0.0
      %1233 = vmatpush2.msra.mxu0 0.0
      %1234 = vmatprep.subr.mxu0 0.0
      %1235 = vmatpush2.msra.mxu0 0.0
      %1236 = vmatprep.subr.mxu0 0.0
      %1237 = vmatpush2.msra.mxu0 0.0
      %1238 = vmatprep.subr.mxu0 0.0
      %1239 = vmatpush2.msra.mxu0 0.0
      %1240 = vmatprep.subr.mxu0 0.0
      %1241 = vmatpush2.msra.mxu0 0.0
      %1242 = vmatprep.subr.mxu0 0.0
      %1243 = vmatpush2.msra.mxu0 0.0
      %1244 = vmatprep.subr.mxu0 0.0
      %1245 = vmatpush2.msra.mxu0 0.0
      %1246 = vmatprep.subr.mxu0 0.0
      %1247 = vmatpush2.msra.mxu0 0.0
      %1248 = vmatprep.subr.mxu0 0.0
      %1249 = vmatpush2.msra.mxu0 0.0
      %1250 = vmatprep.subr.mxu0 0.0
      %1251 = vmatpush2.msra.mxu0 0.0
      %1252 = vmatprep.subr.mxu0 0.0
      %1253 = vmatpush2.msra.mxu0 0.0
      %1254 = vmatprep.subr.mxu0 0.0
      %1255 = vmatpush2.msra.mxu0 0.0
      %1256 = vmatprep.subr.mxu0 0.0
      %1257 = vmatpush2.msra.mxu0 0.0
      %1258 = vmatprep.subr.mxu0 0.0
      %1259 = vmatpush2.msra.mxu0 0.0
      %1260 = vmatprep.mubr.f32.mxu0 0.0
      %1261 = vmatmul.mubr.f32.gmra.mxu0 %v1035
      %v1262 = vpop.f32.mrf.mxu0
      %v1263 = vadd.f32 0.0, %v1262
      %v1264 = vpop.f32.mrf.mxu0
      %1265 = vmatprep.mubr.f32.mxu0 0.0
      %1266 = vmatmul.mubr.f32.gmra.mxu0 %v1038
      %v1267 = vpop.f32.mrf.mxu0
      %v1268 = vadd.f32 0.0, %v1267
      %v1269 = vpop.f32.mrf.mxu0
      %1270 = vdwg.mxu0
      %1271 = vmatprep.subr.mxu0 0.0
      %1272 = vmatpush1.msra.mxu0 0.0
      %1273 = vmatprep.subr.mxu0 0.0
      %1274 = vmatpush1.msra.mxu0 0.0
      %1275 = vmatprep.subr.mxu0 0.0
      %1276 = vmatpush1.msra.mxu0 0.0
      %1277 = vmatprep.subr.mxu0 0.0
      %1278 = vmatpush1.msra.mxu0 0.0
      %1279 = vmatprep.subr.mxu0 0.0
      %1280 = vmatpush1.msra.mxu0 0.0
      %1281 = vmatprep.subr.mxu0 0.0
      %1282 = vmatpush1.msra.mxu0 0.0
      %1283 = vmatprep.subr.mxu0 0.0
      %1284 = vmatpush1.msra.mxu0 0.0
      %1285 = vmatprep.subr.mxu0 0.0
      %1286 = vmatpush1.msra.mxu0 0.0
      %1287 = vmatprep.subr.mxu0 0.0
      %1288 = vmatpush1.msra.mxu0 0.0
      %1289 = vmatprep.subr.mxu0 0.0
      %1290 = vmatpush1.msra.mxu0 0.0
      %1291 = vmatprep.subr.mxu0 0.0
      %1292 = vmatpush1.msra.mxu0 0.0
      %1293 = vmatprep.subr.mxu0 0.0
      %1294 = vmatpush1.msra.mxu0 0.0
      %1295 = vmatprep.subr.mxu0 0.0
      %1296 = vmatpush1.msra.mxu0 0.0
      %1297 = vmatprep.subr.mxu0 0.0
      %1298 = vmatpush1.msra.mxu0 0.0
      %1299 = vmatprep.subr.mxu0 0.0
      %1300 = vmatpush1.msra.mxu0 %v710
      %1301 = vmatprep.subr.mxu0 0.0
      %1302 = vmatpush1.msra.mxu0 %v709
      %1303 = vmatprep.subr.mxu0 0.0
      %1304 = vmatpush2.msra.mxu0 0.0
      %1305 = vmatprep.subr.mxu0 0.0
      %1306 = vmatpush2.msra.mxu0 0.0
      %1307 = vmatprep.subr.mxu0 0.0
      %1308 = vmatpush2.msra.mxu0 0.0
      %1309 = vmatprep.subr.mxu0 0.0
      %1310 = vmatpush2.msra.mxu0 0.0
      %1311 = vmatprep.subr.mxu0 0.0
      %1312 = vmatpush2.msra.mxu0 0.0
      %1313 = vmatprep.subr.mxu0 0.0
      %1314 = vmatpush2.msra.mxu0 0.0
      %1315 = vmatprep.subr.mxu0 0.0
      %1316 = vmatpush2.msra.mxu0 0.0
      %1317 = vmatprep.subr.mxu0 0.0
      %1318 = vmatpush2.msra.mxu0 0.0
      %1319 = vmatprep.subr.mxu0 0.0
      %1320 = vmatpush2.msra.mxu0 0.0
      %1321 = vmatprep.subr.mxu0 0.0
      %1322 = vmatpush2.msra.mxu0 0.0
      %1323 = vmatprep.subr.mxu0 0.0
      %1324 = vmatpush2.msra.mxu0 0.0
      %1325 = vmatprep.subr.mxu0 0.0
      %1326 = vmatpush2.msra.mxu0 0.0
      %1327 = vmatprep.subr.mxu0 0.0
      %1328 = vmatpush2.msra.mxu0 0.0
      %1329 = vmatprep.subr.mxu0 0.0
      %1330 = vmatpush2.msra.mxu0 0.0
      %1331 = vmatprep.subr.mxu0 0.0
      %1332 = vmatpush2.msra.mxu0 0.0
      %1333 = vmatprep.subr.mxu0 0.0
      %1334 = vmatpush2.msra.mxu0 0.0
      %1335 = vmatprep.mubr.f32.mxu0 0.0
      %1336 = vmatmul.mubr.f32.gmra.mxu0 %v1116
      %v1337 = vpop.f32.mrf.mxu0
      %v1338 = vadd.f32 %v1263, %v1337
      %v1339 = vpop.f32.mrf.mxu0
      %1340 = vmatprep.mubr.f32.mxu0 0.0
      %1341 = vmatmul.mubr.f32.gmra.mxu0 %v1119
      %v1342 = vpop.f32.mrf.mxu0
      %v1343 = vadd.f32 %v1268, %v1342
      %v1344 = vpop.f32.mrf.mxu0
      %1345 = vdwg.mxu0
      %v1346 = vmul.f32 %v872, %v872
      %v1347 = vmul.f32 %v877, %v877
      %v1348 = vmul.f32 %v1022, %v1022
      %v1349 = vmul.f32 %v1027, %v1027
      %v1350 = vadd.f32 %v1346, %v1348
      %v1351 = vadd.f32 %v1347, %v1349
      %v1352 = vrsqrt.pop %v1350
      %v1353 = vmul.f32 %v1350, %v1352
      %vm1354 = vcmp.eq.f32.partialorder %v1350, inf
      %v1355 = vsel %vm1354, %v1350, %v1353
      %vm1356 = vcmp.eq.f32.partialorder %v1350, 0.0
      %v1357 = vand.u32 %v1350, 2147483648
      %v1358 = vsel %vm1356, %v1357, %v1355
      %v1359 = vrsqrt.pop %v1351
      %v1360 = vmul.f32 %v1351, %v1359
      %vm1361 = vcmp.eq.f32.partialorder %v1351, inf
      %v1362 = vsel %vm1361, %v1351, %v1360
      %vm1363 = vcmp.eq.f32.partialorder %v1351, 0.0
      %v1364 = vand.u32 %v1351, 2147483648
      %v1365 = vsel %vm1363, %v1364, %v1362
      %v1366 = vmul.f32 %v1188, %v1188
      %v1367 = vmul.f32 %v1193, %v1193
      %v1368 = vmul.f32 %v1338, %v1338
      %v1369 = vmul.f32 %v1343, %v1343
      %v1370 = vadd.f32 %v1366, %v1368
      %v1371 = vadd.f32 %v1367, %v1369
      %v1372 = vrsqrt.pop %v1370
      %v1373 = vmul.f32 %v1370, %v1372
      %vm1374 = vcmp.eq.f32.partialorder %v1370, inf
      %v1375 = vsel %vm1374, %v1370, %v1373
      %vm1376 = vcmp.eq.f32.partialorder %v1370, 0.0
      %v1377 = vand.u32 %v1370, 2147483648
      %v1378 = vsel %vm1376, %v1377, %v1375
      %v1379 = vrsqrt.pop %v1371
      %v1380 = vmul.f32 %v1371, %v1379
      %vm1381 = vcmp.eq.f32.partialorder %v1371, inf
      %v1382 = vsel %vm1381, %v1371, %v1380
      %vm1383 = vcmp.eq.f32.partialorder %v1371, 0.0
      %v1384 = vand.u32 %v1371, 2147483648
      %v1385 = vsel %vm1383, %v1384, %v1382
      %v1386 = vlaneseq
      %v1387 = vshrl.u32 %v1386, 7
      %v1388 = vadd.s32 %v1387, 8
      %v1389 = vld [vmem:[%s15] sm:$0xff]
      %v1390 = vld [vmem:[%s15 + $0x8] sm:$0xff]
      %v1391 = vld [vmem:[%s15 + $0x10] sm:$0xff]
      %v1392 = vld [vmem:[%s15 + $0x18] sm:$0xff]
      %v1393 = vld [vmem:[%s15 + $0x20] sm:$0xff]
      %v1394 = vld [vmem:[%s15 + $0x28] sm:$0xff]
      %v1395 = vld [vmem:[%s15 + $0x30] sm:$0xff]
      %v1396 = vld [vmem:[%s15 + $0x38] sm:$0xff]
      %v1397 = vld [vmem:[%s16] sm:$0xff]
      %v1398 = vld [vmem:[%s16 + $0x8] sm:$0xff]
      %vm1399 = vcmask 138240
      %v1400 = vsel %vm1399, %v1358, 0.0
      %1401 = vadd.xlane.f32.xlu0 %v1400
      %v1402 = vpop.xlane.xlu0 %1401
      %v1403 = vsel %vm1399, %v1365, 0.0
      %1404 = vadd.xlane.f32.xlu0 %v1403
      %v1405 = vpop.xlane.xlu0 %1404
      %v1406 = vrcp.pop 17.0
      %v1407 = vmul.f32 %v1402, %v1406
      %v1408 = vmul.f32 %v1405, %v1406
      %v1409 = vsub.f32 %v1358, %v1407
      %v1410 = vsub.f32 %v1365, %v1408
      %v1411 = vmul.f32 %v1409, %v1409
      %v1412 = vmul.f32 %v1410, %v1410
      %v1413 = vsel %vm1399, %v1411, 0.0
      %1414 = vadd.xlane.f32.xlu0 %v1413
      %v1415 = vpop.xlane.xlu0 %1414
      %v1416 = vsel %vm1399, %v1412, 0.0
      %1417 = vadd.xlane.f32.xlu0 %v1416
      %v1418 = vpop.xlane.xlu0 %1417
      %v1419 = vmul.f32 %v1415, %v1406
      %v1420 = vmul.f32 %v1418, %v1406
      %v1421 = vadd.f32 %v1419, 1e-05
      %v1422 = vadd.f32 %v1420, 1e-05
      %v1423 = vrsqrt.pop %v1421
      %v1424 = vrsqrt.pop %v1422
      %v1425 = vmul.f32 %v1409, %v1423
      %v1426 = vmul.f32 %v1410, %v1424
      %v1427 = vld [vmem:[%s5] sm:$0x1]
      %v1429 = vlaneseq
      %v1430 = vshrl.u32 %v1429, 7
      %v1431 = vsub.s32 0, %v1430
      %v1432 = vrot.slane %v1427, %v1431
      %v1434 = vmul.f32 %v1425, %v1432
      %v1435 = vmul.f32 %v1426, %v1432
      %v1436 = vld [vmem:[%s6] sm:$0x1]
      %v1438 = vlaneseq
      %v1439 = vshrl.u32 %v1438, 7
      %v1440 = vsub.s32 0, %v1439
      %v1441 = vrot.slane %v1436, %v1440
      %v1443 = vadd.f32 %v1434, %v1441
      %v1444 = vadd.f32 %v1435, %v1441
      %v1445 = vld [vmem:[%s7] sm:$0xff]
      %v1446 = vld [vmem:[%s7 + $0x8] sm:$0xff]
      %v1447 = vld [vmem:[%s7 + $0x10] sm:$0x1]
      %v1448 = vld [vmem:[%s8] sm:$0x1]
      %v1450 = vlaneseq
      %v1451 = vshrl.u32 %v1450, 7
      %v1452 = vsub.s32 0, %v1451
      %v1453 = vrot.slane %v1448, %v1452
      %v1456 = vsel %vm1399, %v1443, 0
      %v1459 = vsel %vm1399, %v1444, 0
      %vm1461 = vcmask 1040384
      %v1463 = vsel %vm1461, %v1447, 0
      %1465 = vmatprep.subr.mxu0 0.0
      %1466 = vmatpush1.msra.mxu0 0.0
      %1467 = vmatprep.subr.mxu0 0.0
      %1468 = vmatpush1.msra.mxu0 0.0
      %1469 = vmatprep.subr.mxu0 0.0
      %1470 = vmatpush1.msra.mxu0 0.0
      %1471 = vmatprep.subr.mxu0 0.0
      %1472 = vmatpush1.msra.mxu0 0.0
      %1473 = vmatprep.subr.mxu0 0.0
      %1474 = vmatpush1.msra.mxu0 0.0
      %1475 = vmatprep.subr.mxu0 0.0
      %1476 = vmatpush1.msra.mxu0 0.0
      %1477 = vmatprep.subr.mxu0 0.0
      %1478 = vmatpush1.msra.mxu0 0.0
      %1479 = vmatprep.subr.mxu0 0.0
      %1480 = vmatpush1.msra.mxu0 0.0
      %1481 = vmatprep.subr.mxu0 0.0
      %1482 = vmatpush1.msra.mxu0 0.0
      %1483 = vmatprep.subr.mxu0 0.0
      %1484 = vmatpush1.msra.mxu0 0.0
      %1485 = vmatprep.subr.mxu0 0.0
      %1486 = vmatpush1.msra.mxu0 0.0
      %1487 = vmatprep.subr.mxu0 0.0
      %1488 = vmatpush1.msra.mxu0 0.0
      %1489 = vmatprep.subr.mxu0 0.0
      %1490 = vmatpush1.msra.mxu0 0.0
      %1491 = vmatprep.subr.mxu0 0.0
      %1492 = vmatpush1.msra.mxu0 %v1463
      %1493 = vmatprep.subr.mxu0 0.0
      %1494 = vmatpush1.msra.mxu0 %v1446
      %1495 = vmatprep.subr.mxu0 0.0
      %1496 = vmatpush1.msra.mxu0 %v1445
      %1497 = vmatprep.subr.mxu0 0.0
      %1498 = vmatpush2.msra.mxu0 0.0
      %1499 = vmatprep.subr.mxu0 0.0
      %1500 = vmatpush2.msra.mxu0 0.0
      %1501 = vmatprep.subr.mxu0 0.0
      %1502 = vmatpush2.msra.mxu0 0.0
      %1503 = vmatprep.subr.mxu0 0.0
      %1504 = vmatpush2.msra.mxu0 0.0
      %1505 = vmatprep.subr.mxu0 0.0
      %1506 = vmatpush2.msra.mxu0 0.0
      %1507 = vmatprep.subr.mxu0 0.0
      %1508 = vmatpush2.msra.mxu0 0.0
      %1509 = vmatprep.subr.mxu0 0.0
      %1510 = vmatpush2.msra.mxu0 0.0
      %1511 = vmatprep.subr.mxu0 0.0
      %1512 = vmatpush2.msra.mxu0 0.0
      %1513 = vmatprep.subr.mxu0 0.0
      %1514 = vmatpush2.msra.mxu0 0.0
      %1515 = vmatprep.subr.mxu0 0.0
      %1516 = vmatpush2.msra.mxu0 0.0
      %1517 = vmatprep.subr.mxu0 0.0
      %1518 = vmatpush2.msra.mxu0 0.0
      %1519 = vmatprep.subr.mxu0 0.0
      %1520 = vmatpush2.msra.mxu0 0.0
      %1521 = vmatprep.subr.mxu0 0.0
      %1522 = vmatpush2.msra.mxu0 0.0
      %1523 = vmatprep.subr.mxu0 0.0
      %1524 = vmatpush2.msra.mxu0 0.0
      %1525 = vmatprep.subr.mxu0 0.0
      %1526 = vmatpush2.msra.mxu0 0.0
      %1527 = vmatprep.subr.mxu0 0.0
      %1528 = vmatpush2.msra.mxu0 0.0
      %1529 = vmatprep.mubr.f32.mxu0 0.0
      %1530 = vmatmul.mubr.f32.gmra.mxu0 %v1456
      %v1531 = vpop.f32.mrf.mxu0
      %v1532 = vadd.f32 %v1453, %v1531
      %v1533 = vpop.f32.mrf.mxu0
      %1534 = vmatprep.mubr.f32.mxu0 0.0
      %1535 = vmatmul.mubr.f32.gmra.mxu0 %v1459
      %v1536 = vpop.f32.mrf.mxu0
      %v1537 = vadd.f32 %v1453, %v1536
      %v1538 = vpop.f32.mrf.mxu0
      %1539 = vdwg.mxu0
      %v1540 = vxor.u32 %v1532, 2147483648
      %v1541 = vxor.u32 %v1537, 2147483648
      %v1542 = vmul.f32 %v1540, 1.442695
      %v1543 = vpow.pop %v1542
      %v1544 = vmul.f32 %v1541, 1.442695
      %v1545 = vpow.pop %v1544
      %v1546 = vadd.f32 %v1543, 1.0
      %v1547 = vadd.f32 %v1545, 1.0
      %v1548 = vrcp.pop %v1546
      %v1549 = vmul.f32 1.0, %v1548
      %v1550 = vrcp.pop %v1547
      %v1551 = vmul.f32 1.0, %v1550
      %1554 = vrot.lane.b32.xlu0 %v1549, 64
      %v1555 = vpop.permute.xlu0 %1554
      %1556 = vrot.lane.b32.xlu0 %v1551, 64
      %v1557 = vpop.permute.xlu0 %1556
      %v1560 = vmul.f32 %v1532, %v1555
      %v1561 = vmul.f32 %v1537, %v1557
      %v1562 = vld [vmem:[%s9] sm:$0x7]
      %v1563 = vld [vmem:[%s10] sm:$0x1]
      %v1564 = vlaneseq
      %v1565 = vshrl.u32 %v1564, 7
      %v1566 = vsub.s32 2, %v1565
      %v1567 = vrot.slane %v1562, %v1566
      %v1568 = vmul.f32 %v1567, %v1560
      %v1569 = vmul.f32 %v1567, %v1561
      %v1571 = vlaneseq
      %v1572 = vshrl.u32 %v1571, 7
      %v1573 = vsub.s32 0, %v1572
      %v1574 = vrot.slane %v1563, %v1573
      %v1576 = vadd.f32 %v1574, %v1568
      %v1577 = vadd.f32 %v1574, %v1569
      %v1578 = vrot.slane %v1560, 6
      %v1579 = vrot.slane %v1561, 6
      %vm1580 = vcmp.lt.s32.totalorder %v1387, 2
      %v1581 = vsel %vm1580, %v1578, %v1579
      %v1582 = vsel %vm1580, %v1579, %v1578
      %vm1583 = vcmp.ge.s32.totalorder %v1387, 2
      %vm1584 = vcmp.ge.s32.totalorder %v1388, 2
      %v1585 = vsel %vm1583, %v1582, 0.0
      %v1586 = vsel %vm1584, %v1581, 0.0
      %v1587 = vlaneseq
      %v1588 = vshrl.u32 %v1587, 7
      %v1589 = vsub.s32 0, %v1588
      %v1590 = vrot.slane %v1562, %v1589
      %v1591 = vmul.f32 %v1590, %v1585
      %v1592 = vmul.f32 %v1590, %v1586
      %v1593 = vadd.f32 %v1576, %v1591
      %v1594 = vadd.f32 %v1577, %v1592
      %v1595 = vrot.slane %v1560, 7
      %v1596 = vrot.slane %v1561, 7
      %vm1597 = vcmp.lt.s32.totalorder %v1387, 1
      %v1598 = vsel %vm1597, %v1595, %v1596
      %v1599 = vsel %vm1597, %v1596, %v1595
      %vm1600 = vcmp.ge.s32.totalorder %v1387, 1
      %vm1601 = vcmp.ge.s32.totalorder %v1388, 1
      %v1602 = vsel %vm1600, %v1599, 0.0
      %v1603 = vsel %vm1601, %v1598, 0.0
      %v1604 = vlaneseq
      %v1605 = vshrl.u32 %v1604, 7
      %v1606 = vsub.s32 1, %v1605
      %v1607 = vrot.slane %v1562, %v1606
      %v1608 = vmul.f32 %v1607, %v1602
      %v1609 = vmul.f32 %v1607, %v1603
      %v1610 = vadd.f32 %v1593, %v1608
      %v1611 = vadd.f32 %v1594, %v1609
      %vm1612 = vcmask 523264
      %v1613 = vsel %vm1612, %v1610, 0.0
      %v1614 = vsel %vm1612, %v1611, 0.0
      %v1615 = vadd.f32 %v1613, %v1614
      %v1616 = vrot.slane %v1615, 4
      %v1617 = vadd.f32 %v1615, %v1616
      %v1618 = vrot.slane %v1617, 2
      %v1619 = vadd.f32 %v1617, %v1618
      %v1620 = vrot.slane %v1619, 1
      %v1621 = vadd.f32 %v1619, %v1620
      %v1623 = vsel %vm1612, %v1621, 0
      %1625 = vmatprep.subr.mxu0 0.0
      %1626 = vmatpush1.msra.mxu0 0.0
      %1627 = vmatprep.subr.mxu0 0.0
      %1628 = vmatpush1.msra.mxu0 0.0
      %1629 = vmatprep.subr.mxu0 0.0
      %1630 = vmatpush1.msra.mxu0 0.0
      %1631 = vmatprep.subr.mxu0 0.0
      %1632 = vmatpush1.msra.mxu0 0.0
      %1633 = vmatprep.subr.mxu0 0.0
      %1634 = vmatpush1.msra.mxu0 0.0
      %1635 = vmatprep.subr.mxu0 0.0
      %1636 = vmatpush1.msra.mxu0 0.0
      %1637 = vmatprep.subr.mxu0 0.0
      %1638 = vmatpush1.msra.mxu0 0.0
      %1639 = vmatprep.subr.mxu0 0.0
      %1640 = vmatpush1.msra.mxu0 0.0
      %1641 = vmatprep.subr.mxu0 0.0
      %1642 = vmatpush1.msra.mxu0 %v1396
      %1643 = vmatprep.subr.mxu0 0.0
      %1644 = vmatpush1.msra.mxu0 %v1395
      %1645 = vmatprep.subr.mxu0 0.0
      %1646 = vmatpush1.msra.mxu0 %v1394
      %1647 = vmatprep.subr.mxu0 0.0
      %1648 = vmatpush1.msra.mxu0 %v1393
      %1649 = vmatprep.subr.mxu0 0.0
      %1650 = vmatpush1.msra.mxu0 %v1392
      %1651 = vmatprep.subr.mxu0 0.0
      %1652 = vmatpush1.msra.mxu0 %v1391
      %1653 = vmatprep.subr.mxu0 0.0
      %1654 = vmatpush1.msra.mxu0 %v1390
      %1655 = vmatprep.subr.mxu0 0.0
      %1656 = vmatpush1.msra.mxu0 %v1389
      %1657 = vmatprep.subr.mxu0 0.0
      %1658 = vmatpush2.msra.mxu0 0.0
      %1659 = vmatprep.subr.mxu0 0.0
      %1660 = vmatpush2.msra.mxu0 0.0
      %1661 = vmatprep.subr.mxu0 0.0
      %1662 = vmatpush2.msra.mxu0 0.0
      %1663 = vmatprep.subr.mxu0 0.0
      %1664 = vmatpush2.msra.mxu0 0.0
      %1665 = vmatprep.subr.mxu0 0.0
      %1666 = vmatpush2.msra.mxu0 0.0
      %1667 = vmatprep.subr.mxu0 0.0
      %1668 = vmatpush2.msra.mxu0 0.0
      %1669 = vmatprep.subr.mxu0 0.0
      %1670 = vmatpush2.msra.mxu0 0.0
      %1671 = vmatprep.subr.mxu0 0.0
      %1672 = vmatpush2.msra.mxu0 0.0
      %1673 = vmatprep.subr.mxu0 0.0
      %1674 = vmatpush2.msra.mxu0 0.0
      %1675 = vmatprep.subr.mxu0 0.0
      %1676 = vmatpush2.msra.mxu0 0.0
      %1677 = vmatprep.subr.mxu0 0.0
      %1678 = vmatpush2.msra.mxu0 0.0
      %1679 = vmatprep.subr.mxu0 0.0
      %1680 = vmatpush2.msra.mxu0 0.0
      %1681 = vmatprep.subr.mxu0 0.0
      %1682 = vmatpush2.msra.mxu0 0.0
      %1683 = vmatprep.subr.mxu0 0.0
      %1684 = vmatpush2.msra.mxu0 0.0
      %1685 = vmatprep.subr.mxu0 0.0
      %1686 = vmatpush2.msra.mxu0 0.0
      %1687 = vmatprep.subr.mxu0 0.0
      %1688 = vmatpush2.msra.mxu0 0.0
      %1689 = vmatprep.mubr.f32.mxu0 0.0
      %1690 = vmatmul.mubr.f32.gmra.mxu0 %v1623
      %v1691 = vpop.f32.mrf.mxu0
      %v1692 = vadd.f32 0.0, %v1691
      %v1693 = vpop.f32.mrf.mxu0
      %1694 = vdwg.mxu0
      %v1695 = vmul.f32 %v1610, %v1610
      %v1696 = vmul.f32 %v1611, %v1611
      %v1697 = vsel %vm1612, %v1695, 0.0
      %v1698 = vsel %vm1612, %v1696, 0.0
      %v1699 = vadd.f32 %v1697, %v1698
      %v1700 = vrot.slane %v1699, 4
      %v1701 = vadd.f32 %v1699, %v1700
      %v1702 = vrot.slane %v1701, 2
      %v1703 = vadd.f32 %v1701, %v1702
      %v1704 = vrot.slane %v1703, 1
      %v1705 = vadd.f32 %v1703, %v1704
      %v1707 = vsel %vm1612, %v1705, 0
      %1709 = vmatprep.subr.mxu0 0.0
      %1710 = vmatpush1.msra.mxu0 0.0
      %1711 = vmatprep.subr.mxu0 0.0
      %1712 = vmatpush1.msra.mxu0 0.0
      %1713 = vmatprep.subr.mxu0 0.0
      %1714 = vmatpush1.msra.mxu0 0.0
      %1715 = vmatprep.subr.mxu0 0.0
      %1716 = vmatpush1.msra.mxu0 0.0
      %1717 = vmatprep.subr.mxu0 0.0
      %1718 = vmatpush1.msra.mxu0 0.0
      %1719 = vmatprep.subr.mxu0 0.0
      %1720 = vmatpush1.msra.mxu0 0.0
      %1721 = vmatprep.subr.mxu0 0.0
      %1722 = vmatpush1.msra.mxu0 0.0
      %1723 = vmatprep.subr.mxu0 0.0
      %1724 = vmatpush1.msra.mxu0 0.0
      %1725 = vmatprep.subr.mxu0 0.0
      %1726 = vmatpush1.msra.mxu0 %v1396
      %1727 = vmatprep.subr.mxu0 0.0
      %1728 = vmatpush1.msra.mxu0 %v1395
      %1729 = vmatprep.subr.mxu0 0.0
      %1730 = vmatpush1.msra.mxu0 %v1394
      %1731 = vmatprep.subr.mxu0 0.0
      %1732 = vmatpush1.msra.mxu0 %v1393
      %1733 = vmatprep.subr.mxu0 0.0
      %1734 = vmatpush1.msra.mxu0 %v1392
      %1735 = vmatprep.subr.mxu0 0.0
      %1736 = vmatpush1.msra.mxu0 %v1391
      %1737 = vmatprep.subr.mxu0 0.0
      %1738 = vmatpush1.msra.mxu0 %v1390
      %1739 = vmatprep.subr.mxu0 0.0
      %1740 = vmatpush1.msra.mxu0 %v1389
      %1741 = vmatprep.subr.mxu0 0.0
      %1742 = vmatpush2.msra.mxu0 0.0
      %1743 = vmatprep.subr.mxu0 0.0
      %1744 = vmatpush2.msra.mxu0 0.0
      %1745 = vmatprep.subr.mxu0 0.0
      %1746 = vmatpush2.msra.mxu0 0.0
      %1747 = vmatprep.subr.mxu0 0.0
      %1748 = vmatpush2.msra.mxu0 0.0
      %1749 = vmatprep.subr.mxu0 0.0
      %1750 = vmatpush2.msra.mxu0 0.0
      %1751 = vmatprep.subr.mxu0 0.0
      %1752 = vmatpush2.msra.mxu0 0.0
      %1753 = vmatprep.subr.mxu0 0.0
      %1754 = vmatpush2.msra.mxu0 0.0
      %1755 = vmatprep.subr.mxu0 0.0
      %1756 = vmatpush2.msra.mxu0 0.0
      %1757 = vmatprep.subr.mxu0 0.0
      %1758 = vmatpush2.msra.mxu0 0.0
      %1759 = vmatprep.subr.mxu0 0.0
      %1760 = vmatpush2.msra.mxu0 0.0
      %1761 = vmatprep.subr.mxu0 0.0
      %1762 = vmatpush2.msra.mxu0 0.0
      %1763 = vmatprep.subr.mxu0 0.0
      %1764 = vmatpush2.msra.mxu0 0.0
      %1765 = vmatprep.subr.mxu0 0.0
      %1766 = vmatpush2.msra.mxu0 0.0
      %1767 = vmatprep.subr.mxu0 0.0
      %1768 = vmatpush2.msra.mxu0 0.0
      %1769 = vmatprep.subr.mxu0 0.0
      %1770 = vmatpush2.msra.mxu0 0.0
      %1771 = vmatprep.subr.mxu0 0.0
      %1772 = vmatpush2.msra.mxu0 0.0
      %1773 = vmatprep.mubr.f32.mxu0 0.0
      %1774 = vmatmul.mubr.f32.gmra.mxu0 %v1707
      %v1775 = vpop.f32.mrf.mxu0
      %v1776 = vadd.f32 0.0, %v1775
      %v1777 = vpop.f32.mrf.mxu0
      %1778 = vdwg.mxu0
      %v1779 = vrcp.pop 64.0
      %v1780 = vmul.f32 %v1692, %v1779
      %v1781 = vmul.f32 %v1776, %v1779
      %v1782 = vmul.f32 %v1780, %v1780
      %v1783 = vsub.f32 %v1781, %v1782
      %v1784 = vmax.f32 %v1783, 0.0
      %v1786 = vsel %vm717, %v1780, 0
      %1788 = vmatprep.subr.mxu0 0.0
      %1789 = vmatpush1.msra.mxu0 0.0
      %1790 = vmatprep.subr.mxu0 0.0
      %1791 = vmatpush1.msra.mxu0 0.0
      %1792 = vmatprep.subr.mxu0 0.0
      %1793 = vmatpush1.msra.mxu0 0.0
      %1794 = vmatprep.subr.mxu0 0.0
      %1795 = vmatpush1.msra.mxu0 0.0
      %1796 = vmatprep.subr.mxu0 0.0
      %1797 = vmatpush1.msra.mxu0 0.0
      %1798 = vmatprep.subr.mxu0 0.0
      %1799 = vmatpush1.msra.mxu0 0.0
      %1800 = vmatprep.subr.mxu0 0.0
      %1801 = vmatpush1.msra.mxu0 0.0
      %1802 = vmatprep.subr.mxu0 0.0
      %1803 = vmatpush1.msra.mxu0 0.0
      %1804 = vmatprep.subr.mxu0 0.0
      %1805 = vmatpush1.msra.mxu0 0.0
      %1806 = vmatprep.subr.mxu0 0.0
      %1807 = vmatpush1.msra.mxu0 0.0
      %1808 = vmatprep.subr.mxu0 0.0
      %1809 = vmatpush1.msra.mxu0 0.0
      %1810 = vmatprep.subr.mxu0 0.0
      %1811 = vmatpush1.msra.mxu0 0.0
      %1812 = vmatprep.subr.mxu0 0.0
      %1813 = vmatpush1.msra.mxu0 0.0
      %1814 = vmatprep.subr.mxu0 0.0
      %1815 = vmatpush1.msra.mxu0 0.0
      %1816 = vmatprep.subr.mxu0 0.0
      %1817 = vmatpush1.msra.mxu0 %v1398
      %1818 = vmatprep.subr.mxu0 0.0
      %1819 = vmatpush1.msra.mxu0 %v1397
      %1820 = vmatprep.subr.mxu0 0.0
      %1821 = vmatpush2.msra.mxu0 0.0
      %1822 = vmatprep.subr.mxu0 0.0
      %1823 = vmatpush2.msra.mxu0 0.0
      %1824 = vmatprep.subr.mxu0 0.0
      %1825 = vmatpush2.msra.mxu0 0.0
      %1826 = vmatprep.subr.mxu0 0.0
      %1827 = vmatpush2.msra.mxu0 0.0
      %1828 = vmatprep.subr.mxu0 0.0
      %1829 = vmatpush2.msra.mxu0 0.0
      %1830 = vmatprep.subr.mxu0 0.0
      %1831 = vmatpush2.msra.mxu0 0.0
      %1832 = vmatprep.subr.mxu0 0.0
      %1833 = vmatpush2.msra.mxu0 0.0
      %1834 = vmatprep.subr.mxu0 0.0
      %1835 = vmatpush2.msra.mxu0 0.0
      %1836 = vmatprep.subr.mxu0 0.0
      %1837 = vmatpush2.msra.mxu0 0.0
      %1838 = vmatprep.subr.mxu0 0.0
      %1839 = vmatpush2.msra.mxu0 0.0
      %1840 = vmatprep.subr.mxu0 0.0
      %1841 = vmatpush2.msra.mxu0 0.0
      %1842 = vmatprep.subr.mxu0 0.0
      %1843 = vmatpush2.msra.mxu0 0.0
      %1844 = vmatprep.subr.mxu0 0.0
      %1845 = vmatpush2.msra.mxu0 0.0
      %1846 = vmatprep.subr.mxu0 0.0
      %1847 = vmatpush2.msra.mxu0 0.0
      %1848 = vmatprep.subr.mxu0 0.0
      %1849 = vmatpush2.msra.mxu0 0.0
      %1850 = vmatprep.subr.mxu0 0.0
      %1851 = vmatpush2.msra.mxu0 0.0
      %1852 = vmatprep.mubr.f32.mxu0 0.0
      %1853 = vmatmul.mubr.f32.gmra.mxu0 %v1786
      %v1854 = vpop.f32.mrf.mxu0
      %v1855 = vadd.f32 0.0, %v1854
      %v1856 = vpop.f32.mrf.mxu0
      %1857 = vdwg.mxu0
      %v1858 = vlaneseq
      %v1859 = vshrl.u32 %v1858, 7
      %v1860 = vsub.s32 0, %v1859
      %v1861 = vrot.slane %v1855, %v1860
      %v1862 = vsub.f32 %v1610, %v1861
      %v1863 = vsub.f32 %v1611, %v1861
      %v1865 = vsel %vm717, %v1784, 0
      %1867 = vmatprep.subr.mxu0 0.0
      %1868 = vmatpush1.msra.mxu0 0.0
      %1869 = vmatprep.subr.mxu0 0.0
      %1870 = vmatpush1.msra.mxu0 0.0
      %1871 = vmatprep.subr.mxu0 0.0
      %1872 = vmatpush1.msra.mxu0 0.0
      %1873 = vmatprep.subr.mxu0 0.0
      %1874 = vmatpush1.msra.mxu0 0.0
      %1875 = vmatprep.subr.mxu0 0.0
      %1876 = vmatpush1.msra.mxu0 0.0
      %1877 = vmatprep.subr.mxu0 0.0
      %1878 = vmatpush1.msra.mxu0 0.0
      %1879 = vmatprep.subr.mxu0 0.0
      %1880 = vmatpush1.msra.mxu0 0.0
      %1881 = vmatprep.subr.mxu0 0.0
      %1882 = vmatpush1.msra.mxu0 0.0
      %1883 = vmatprep.subr.mxu0 0.0
      %1884 = vmatpush1.msra.mxu0 0.0
      %1885 = vmatprep.subr.mxu0 0.0
      %1886 = vmatpush1.msra.mxu0 0.0
      %1887 = vmatprep.subr.mxu0 0.0
      %1888 = vmatpush1.msra.mxu0 0.0
      %1889 = vmatprep.subr.mxu0 0.0
      %1890 = vmatpush1.msra.mxu0 0.0
      %1891 = vmatprep.subr.mxu0 0.0
      %1892 = vmatpush1.msra.mxu0 0.0
      %1893 = vmatprep.subr.mxu0 0.0
      %1894 = vmatpush1.msra.mxu0 0.0
      %1895 = vmatprep.subr.mxu0 0.0
      %1896 = vmatpush1.msra.mxu0 %v1398
      %1897 = vmatprep.subr.mxu0 0.0
      %1898 = vmatpush1.msra.mxu0 %v1397
      %1899 = vmatprep.subr.mxu0 0.0
      %1900 = vmatpush2.msra.mxu0 0.0
      %1901 = vmatprep.subr.mxu0 0.0
      %1902 = vmatpush2.msra.mxu0 0.0
      %1903 = vmatprep.subr.mxu0 0.0
      %1904 = vmatpush2.msra.mxu0 0.0
      %1905 = vmatprep.subr.mxu0 0.0
      %1906 = vmatpush2.msra.mxu0 0.0
      %1907 = vmatprep.subr.mxu0 0.0
      %1908 = vmatpush2.msra.mxu0 0.0
      %1909 = vmatprep.subr.mxu0 0.0
      %1910 = vmatpush2.msra.mxu0 0.0
      %1911 = vmatprep.subr.mxu0 0.0
      %1912 = vmatpush2.msra.mxu0 0.0
      %1913 = vmatprep.subr.mxu0 0.0
      %1914 = vmatpush2.msra.mxu0 0.0
      %1915 = vmatprep.subr.mxu0 0.0
      %1916 = vmatpush2.msra.mxu0 0.0
      %1917 = vmatprep.subr.mxu0 0.0
      %1918 = vmatpush2.msra.mxu0 0.0
      %1919 = vmatprep.subr.mxu0 0.0
      %1920 = vmatpush2.msra.mxu0 0.0
      %1921 = vmatprep.subr.mxu0 0.0
      %1922 = vmatpush2.msra.mxu0 0.0
      %1923 = vmatprep.subr.mxu0 0.0
      %1924 = vmatpush2.msra.mxu0 0.0
      %1925 = vmatprep.subr.mxu0 0.0
      %1926 = vmatpush2.msra.mxu0 0.0
      %1927 = vmatprep.subr.mxu0 0.0
      %1928 = vmatpush2.msra.mxu0 0.0
      %1929 = vmatprep.subr.mxu0 0.0
      %1930 = vmatpush2.msra.mxu0 0.0
      %1931 = vmatprep.mubr.f32.mxu0 0.0
      %1932 = vmatmul.mubr.f32.gmra.mxu0 %v1865
      %v1933 = vpop.f32.mrf.mxu0
      %v1934 = vadd.f32 1e-05, %v1933
      %v1935 = vpop.f32.mrf.mxu0
      %1936 = vdwg.mxu0
      %v1937 = vrsqrt.pop %v1934
      %v1938 = vlaneseq
      %v1939 = vshrl.u32 %v1938, 7
      %v1940 = vsub.s32 0, %v1939
      %v1941 = vrot.slane %v1937, %v1940
      %v1942 = vmul.f32 %v1862, %v1941
      %v1943 = vmul.f32 %v1863, %v1941
      %v1944 = vld [vmem:[%s11] sm:$0x1]
      %v1946 = vlaneseq
      %v1947 = vshrl.u32 %v1946, 7
      %v1948 = vsub.s32 0, %v1947
      %v1949 = vrot.slane %v1944, %v1948
      %v1951 = vmul.f32 %v1942, %v1949
      %v1952 = vmul.f32 %v1943, %v1949
      %v1953 = vld [vmem:[%s12] sm:$0x1]
      %v1955 = vlaneseq
      %v1956 = vshrl.u32 %v1955, 7
      %v1957 = vsub.s32 0, %v1956
      %v1958 = vrot.slane %v1953, %v1957
      %v1960 = vadd.f32 %v1951, %v1958
      %v1961 = vadd.f32 %v1952, %v1958
      %v1962 = vxor.u32 %v1960, 2147483648
      %v1963 = vxor.u32 %v1961, 2147483648
      %v1964 = vmul.f32 %v1962, 1.442695
      %v1965 = vpow.pop %v1964
      %v1966 = vmul.f32 %v1963, 1.442695
      %v1967 = vpow.pop %v1966
      %v1968 = vadd.f32 %v1965, 1.0
      %v1969 = vadd.f32 %v1967, 1.0
      %v1970 = vrcp.pop %v1968
      %v1971 = vmul.f32 1.0, %v1970
      %v1972 = vrcp.pop %v1969
      %v1973 = vmul.f32 1.0, %v1972
      %v1974 = vmul.f32 %v1960, %v1971
      %v1975 = vmul.f32 %v1961, %v1973
      %v1976 = vld [vmem:[%s13] sm:$0xff]
      %v1977 = vld [vmem:[%s13 + $0x8] sm:$0xff]
      %v1978 = vld [vmem:[%s13 + $0x10] sm:$0xff]
      %v1979 = vld [vmem:[%s13 + $0x18] sm:$0xff]
      %v1980 = vld [vmem:[%s13 + $0x20] sm:$0xff]
      %v1981 = vld [vmem:[%s13 + $0x28] sm:$0xff]
      %v1982 = vld [vmem:[%s13 + $0x30] sm:$0xff]
      %v1983 = vld [vmem:[%s13 + $0x38] sm:$0xff]
      %v1984 = vld [vmem:[%s14] sm:$0x1]
      %v1986 = vlaneseq
      %v1987 = vshrl.u32 %v1986, 7
      %v1988 = vsub.s32 0, %v1987
      %v1989 = vrot.slane %v1984, %v1988
      %v1992 = vsel %vm1612, %v1974, 0
      %v1995 = vsel %vm1612, %v1975, 0
      %1997 = vmatprep.subr.mxu0 0.0
      %1998 = vmatpush1.msra.mxu0 0.0
      %1999 = vmatprep.subr.mxu0 0.0
      %2000 = vmatpush1.msra.mxu0 0.0
      %2001 = vmatprep.subr.mxu0 0.0
      %2002 = vmatpush1.msra.mxu0 0.0
      %2003 = vmatprep.subr.mxu0 0.0
      %2004 = vmatpush1.msra.mxu0 0.0
      %2005 = vmatprep.subr.mxu0 0.0
      %2006 = vmatpush1.msra.mxu0 0.0
      %2007 = vmatprep.subr.mxu0 0.0
      %2008 = vmatpush1.msra.mxu0 0.0
      %2009 = vmatprep.subr.mxu0 0.0
      %2010 = vmatpush1.msra.mxu0 0.0
      %2011 = vmatprep.subr.mxu0 0.0
      %2012 = vmatpush1.msra.mxu0 0.0
      %2013 = vmatprep.subr.mxu0 0.0
      %2014 = vmatpush1.msra.mxu0 %v1983
      %2015 = vmatprep.subr.mxu0 0.0
      %2016 = vmatpush1.msra.mxu0 %v1982
      %2017 = vmatprep.subr.mxu0 0.0
      %2018 = vmatpush1.msra.mxu0 %v1981
      %2019 = vmatprep.subr.mxu0 0.0
      %2020 = vmatpush1.msra.mxu0 %v1980
      %2021 = vmatprep.subr.mxu0 0.0
      %2022 = vmatpush1.msra.mxu0 %v1979
      %2023 = vmatprep.subr.mxu0 0.0
      %2024 = vmatpush1.msra.mxu0 %v1978
      %2025 = vmatprep.subr.mxu0 0.0
      %2026 = vmatpush1.msra.mxu0 %v1977
      %2027 = vmatprep.subr.mxu0 0.0
      %2028 = vmatpush1.msra.mxu0 %v1976
      %2029 = vmatprep.subr.mxu0 0.0
      %2030 = vmatpush2.msra.mxu0 0.0
      %2031 = vmatprep.subr.mxu0 0.0
      %2032 = vmatpush2.msra.mxu0 0.0
      %2033 = vmatprep.subr.mxu0 0.0
      %2034 = vmatpush2.msra.mxu0 0.0
      %2035 = vmatprep.subr.mxu0 0.0
      %2036 = vmatpush2.msra.mxu0 0.0
      %2037 = vmatprep.subr.mxu0 0.0
      %2038 = vmatpush2.msra.mxu0 0.0
      %2039 = vmatprep.subr.mxu0 0.0
      %2040 = vmatpush2.msra.mxu0 0.0
      %2041 = vmatprep.subr.mxu0 0.0
      %2042 = vmatpush2.msra.mxu0 0.0
      %2043 = vmatprep.subr.mxu0 0.0
      %2044 = vmatpush2.msra.mxu0 0.0
      %2045 = vmatprep.subr.mxu0 0.0
      %2046 = vmatpush2.msra.mxu0 0.0
      %2047 = vmatprep.subr.mxu0 0.0
      %2048 = vmatpush2.msra.mxu0 0.0
      %2049 = vmatprep.subr.mxu0 0.0
      %2050 = vmatpush2.msra.mxu0 0.0
      %2051 = vmatprep.subr.mxu0 0.0
      %2052 = vmatpush2.msra.mxu0 0.0
      %2053 = vmatprep.subr.mxu0 0.0
      %2054 = vmatpush2.msra.mxu0 0.0
      %2055 = vmatprep.subr.mxu0 0.0
      %2056 = vmatpush2.msra.mxu0 0.0
      %2057 = vmatprep.subr.mxu0 0.0
      %2058 = vmatpush2.msra.mxu0 0.0
      %2059 = vmatprep.subr.mxu0 0.0
      %2060 = vmatpush2.msra.mxu0 0.0
      %2061 = vmatprep.mubr.f32.mxu0 0.0
      %2062 = vmatmul.mubr.f32.gmra.mxu0 %v1992
      %v2063 = vpop.f32.mrf.mxu0
      %v2064 = vadd.f32 %v1989, %v2063
      %v2065 = vpop.f32.mrf.mxu0
      %2066 = vmatprep.mubr.f32.mxu0 0.0
      %2067 = vmatmul.mubr.f32.gmra.mxu0 %v1995
      %v2068 = vpop.f32.mrf.mxu0
      %v2069 = vadd.f32 %v1989, %v2068
      %v2070 = vpop.f32.mrf.mxu0
      %2071 = vdwg.mxu0
      %v2072 = vsel %vm1399, %v1378, 0.0
      %2073 = vadd.xlane.f32.xlu0 %v2072
      %v2074 = vpop.xlane.xlu0 %2073
      %v2075 = vsel %vm1399, %v1385, 0.0
      %2076 = vadd.xlane.f32.xlu0 %v2075
      %v2077 = vpop.xlane.xlu0 %2076
      %v2078 = vmul.f32 %v2074, %v1406
      %v2079 = vmul.f32 %v2077, %v1406
      %v2080 = vsub.f32 %v1378, %v2078
      %v2081 = vsub.f32 %v1385, %v2079
      %v2082 = vmul.f32 %v2080, %v2080
      %v2083 = vmul.f32 %v2081, %v2081
      %v2084 = vsel %vm1399, %v2082, 0.0
      %2085 = vadd.xlane.f32.xlu0 %v2084
      %v2086 = vpop.xlane.xlu0 %2085
      %v2087 = vsel %vm1399, %v2083, 0.0
      %2088 = vadd.xlane.f32.xlu0 %v2087
      %v2089 = vpop.xlane.xlu0 %2088
      %v2090 = vmul.f32 %v2086, %v1406
      %v2091 = vmul.f32 %v2089, %v1406
      %v2092 = vadd.f32 %v2090, 1e-05
      %v2093 = vadd.f32 %v2091, 1e-05
      %v2094 = vrsqrt.pop %v2092
      %v2095 = vrsqrt.pop %v2093
      %v2096 = vmul.f32 %v2080, %v2094
      %v2097 = vmul.f32 %v2081, %v2095
      %s2098 = scalar_lea.vmem %s5, 1
      %v2099 = vld [vmem:[%s2098] sm:$0x1]
      %v2101 = vlaneseq
      %v2102 = vshrl.u32 %v2101, 7
      %v2103 = vsub.s32 0, %v2102
      %v2104 = vrot.slane %v2099, %v2103
      %v2106 = vmul.f32 %v2096, %v2104
      %v2107 = vmul.f32 %v2097, %v2104
      %s2108 = scalar_lea.vmem %s6, 1
      %v2109 = vld [vmem:[%s2108] sm:$0x1]
      %v2111 = vlaneseq
      %v2112 = vshrl.u32 %v2111, 7
      %v2113 = vsub.s32 0, %v2112
      %v2114 = vrot.slane %v2109, %v2113
      %v2116 = vadd.f32 %v2106, %v2114
      %v2117 = vadd.f32 %v2107, %v2114
      %s2118 = scalar_lea.vmem %s7, 24
      %v2119 = vld [vmem:[%s2118] sm:$0xff]
      %v2120 = vld [vmem:[%s2118 + $0x8] sm:$0xff]
      %v2121 = vld [vmem:[%s2118 + $0x10] sm:$0x1]
      %s2122 = scalar_lea.vmem %s8, 1
      %v2123 = vld [vmem:[%s2122] sm:$0x1]
      %v2125 = vlaneseq
      %v2126 = vshrl.u32 %v2125, 7
      %v2127 = vsub.s32 0, %v2126
      %v2128 = vrot.slane %v2123, %v2127
      %v2131 = vsel %vm1399, %v2116, 0
      %v2134 = vsel %vm1399, %v2117, 0
      %v2137 = vsel %vm1461, %v2121, 0
      %2139 = vmatprep.subr.mxu0 0.0
      %2140 = vmatpush1.msra.mxu0 0.0
      %2141 = vmatprep.subr.mxu0 0.0
      %2142 = vmatpush1.msra.mxu0 0.0
      %2143 = vmatprep.subr.mxu0 0.0
      %2144 = vmatpush1.msra.mxu0 0.0
      %2145 = vmatprep.subr.mxu0 0.0
      %2146 = vmatpush1.msra.mxu0 0.0
      %2147 = vmatprep.subr.mxu0 0.0
      %2148 = vmatpush1.msra.mxu0 0.0
      %2149 = vmatprep.subr.mxu0 0.0
      %2150 = vmatpush1.msra.mxu0 0.0
      %2151 = vmatprep.subr.mxu0 0.0
      %2152 = vmatpush1.msra.mxu0 0.0
      %2153 = vmatprep.subr.mxu0 0.0
      %2154 = vmatpush1.msra.mxu0 0.0
      %2155 = vmatprep.subr.mxu0 0.0
      %2156 = vmatpush1.msra.mxu0 0.0
      %2157 = vmatprep.subr.mxu0 0.0
      %2158 = vmatpush1.msra.mxu0 0.0
      %2159 = vmatprep.subr.mxu0 0.0
      %2160 = vmatpush1.msra.mxu0 0.0
      %2161 = vmatprep.subr.mxu0 0.0
      %2162 = vmatpush1.msra.mxu0 0.0
      %2163 = vmatprep.subr.mxu0 0.0
      %2164 = vmatpush1.msra.mxu0 0.0
      %2165 = vmatprep.subr.mxu0 0.0
      %2166 = vmatpush1.msra.mxu0 %v2137
      %2167 = vmatprep.subr.mxu0 0.0
      %2168 = vmatpush1.msra.mxu0 %v2120
      %2169 = vmatprep.subr.mxu0 0.0
      %2170 = vmatpush1.msra.mxu0 %v2119
      %2171 = vmatprep.subr.mxu0 0.0
      %2172 = vmatpush2.msra.mxu0 0.0
      %2173 = vmatprep.subr.mxu0 0.0
      %2174 = vmatpush2.msra.mxu0 0.0
      %2175 = vmatprep.subr.mxu0 0.0
      %2176 = vmatpush2.msra.mxu0 0.0
      %2177 = vmatprep.subr.mxu0 0.0
      %2178 = vmatpush2.msra.mxu0 0.0
      %2179 = vmatprep.subr.mxu0 0.0
      %2180 = vmatpush2.msra.mxu0 0.0
      %2181 = vmatprep.subr.mxu0 0.0
      %2182 = vmatpush2.msra.mxu0 0.0
      %2183 = vmatprep.subr.mxu0 0.0
      %2184 = vmatpush2.msra.mxu0 0.0
      %2185 = vmatprep.subr.mxu0 0.0
      %2186 = vmatpush2.msra.mxu0 0.0
      %2187 = vmatprep.subr.mxu0 0.0
      %2188 = vmatpush2.msra.mxu0 0.0
      %2189 = vmatprep.subr.mxu0 0.0
      %2190 = vmatpush2.msra.mxu0 0.0
      %2191 = vmatprep.subr.mxu0 0.0
      %2192 = vmatpush2.msra.mxu0 0.0
      %2193 = vmatprep.subr.mxu0 0.0
      %2194 = vmatpush2.msra.mxu0 0.0
      %2195 = vmatprep.subr.mxu0 0.0
      %2196 = vmatpush2.msra.mxu0 0.0
      %2197 = vmatprep.subr.mxu0 0.0
      %2198 = vmatpush2.msra.mxu0 0.0
      %2199 = vmatprep.subr.mxu0 0.0
      %2200 = vmatpush2.msra.mxu0 0.0
      %2201 = vmatprep.subr.mxu0 0.0
      %2202 = vmatpush2.msra.mxu0 0.0
      %2203 = vmatprep.mubr.f32.mxu0 0.0
      %2204 = vmatmul.mubr.f32.gmra.mxu0 %v2131
      %v2205 = vpop.f32.mrf.mxu0
      %v2206 = vadd.f32 %v2128, %v2205
      %v2207 = vpop.f32.mrf.mxu0
      %2208 = vmatprep.mubr.f32.mxu0 0.0
      %2209 = vmatmul.mubr.f32.gmra.mxu0 %v2134
      %v2210 = vpop.f32.mrf.mxu0
      %v2211 = vadd.f32 %v2128, %v2210
      %v2212 = vpop.f32.mrf.mxu0
      %2213 = vdwg.mxu0
      %v2214 = vxor.u32 %v2206, 2147483648
      %v2215 = vxor.u32 %v2211, 2147483648
      %v2216 = vmul.f32 %v2214, 1.442695
      %v2217 = vpow.pop %v2216
      %v2218 = vmul.f32 %v2215, 1.442695
      %v2219 = vpow.pop %v2218
      %v2220 = vadd.f32 %v2217, 1.0
      %v2221 = vadd.f32 %v2219, 1.0
      %v2222 = vrcp.pop %v2220
      %v2223 = vmul.f32 1.0, %v2222
      %v2224 = vrcp.pop %v2221
      %v2225 = vmul.f32 1.0, %v2224
      %2228 = vrot.lane.b32.xlu0 %v2223, 64
      %v2229 = vpop.permute.xlu0 %2228
      %2230 = vrot.lane.b32.xlu0 %v2225, 64
      %v2231 = vpop.permute.xlu0 %2230
      %v2234 = vmul.f32 %v2206, %v2229
      %v2235 = vmul.f32 %v2211, %v2231
      %s2236 = scalar_lea.vmem %s9, 4
      %v2237 = vld [vmem:[%s2236] sm:$0x7]
      %s2238 = scalar_lea.vmem %s10, 1
      %v2239 = vld [vmem:[%s2238] sm:$0x1]
      %v2240 = vlaneseq
      %v2241 = vshrl.u32 %v2240, 7
      %v2242 = vsub.s32 2, %v2241
      %v2243 = vrot.slane %v2237, %v2242
      %v2244 = vmul.f32 %v2243, %v2234
      %v2245 = vmul.f32 %v2243, %v2235
      %v2247 = vlaneseq
      %v2248 = vshrl.u32 %v2247, 7
      %v2249 = vsub.s32 0, %v2248
      %v2250 = vrot.slane %v2239, %v2249
      %v2252 = vadd.f32 %v2250, %v2244
      %v2253 = vadd.f32 %v2250, %v2245
      %v2254 = vrot.slane %v2234, 6
      %v2255 = vrot.slane %v2235, 6
      %v2256 = vsel %vm1580, %v2254, %v2255
      %v2257 = vsel %vm1580, %v2255, %v2254
      %v2258 = vsel %vm1583, %v2257, 0.0
      %v2259 = vsel %vm1584, %v2256, 0.0
      %v2260 = vlaneseq
      %v2261 = vshrl.u32 %v2260, 7
      %v2262 = vsub.s32 0, %v2261
      %v2263 = vrot.slane %v2237, %v2262
      %v2264 = vmul.f32 %v2263, %v2258
      %v2265 = vmul.f32 %v2263, %v2259
      %v2266 = vadd.f32 %v2252, %v2264
      %v2267 = vadd.f32 %v2253, %v2265
      %v2268 = vrot.slane %v2234, 7
      %v2269 = vrot.slane %v2235, 7
      %v2270 = vsel %vm1597, %v2268, %v2269
      %v2271 = vsel %vm1597, %v2269, %v2268
      %v2272 = vsel %vm1600, %v2271, 0.0
      %v2273 = vsel %vm1601, %v2270, 0.0
      %v2274 = vlaneseq
      %v2275 = vshrl.u32 %v2274, 7
      %v2276 = vsub.s32 1, %v2275
      %v2277 = vrot.slane %v2237, %v2276
      %v2278 = vmul.f32 %v2277, %v2272
      %v2279 = vmul.f32 %v2277, %v2273
      %v2280 = vadd.f32 %v2266, %v2278
      %v2281 = vadd.f32 %v2267, %v2279
      %v2282 = vsel %vm1612, %v2280, 0.0
      %v2283 = vsel %vm1612, %v2281, 0.0
      %v2284 = vadd.f32 %v2282, %v2283
      %v2285 = vrot.slane %v2284, 4
      %v2286 = vadd.f32 %v2284, %v2285
      %v2287 = vrot.slane %v2286, 2
      %v2288 = vadd.f32 %v2286, %v2287
      %v2289 = vrot.slane %v2288, 1
      %v2290 = vadd.f32 %v2288, %v2289
      %v2292 = vsel %vm1612, %v2290, 0
      %2294 = vmatprep.subr.mxu0 0.0
      %2295 = vmatpush1.msra.mxu0 0.0
      %2296 = vmatprep.subr.mxu0 0.0
      %2297 = vmatpush1.msra.mxu0 0.0
      %2298 = vmatprep.subr.mxu0 0.0
      %2299 = vmatpush1.msra.mxu0 0.0
      %2300 = vmatprep.subr.mxu0 0.0
      %2301 = vmatpush1.msra.mxu0 0.0
      %2302 = vmatprep.subr.mxu0 0.0
      %2303 = vmatpush1.msra.mxu0 0.0
      %2304 = vmatprep.subr.mxu0 0.0
      %2305 = vmatpush1.msra.mxu0 0.0
      %2306 = vmatprep.subr.mxu0 0.0
      %2307 = vmatpush1.msra.mxu0 0.0
      %2308 = vmatprep.subr.mxu0 0.0
      %2309 = vmatpush1.msra.mxu0 0.0
      %2310 = vmatprep.subr.mxu0 0.0
      %2311 = vmatpush1.msra.mxu0 %v1396
      %2312 = vmatprep.subr.mxu0 0.0
      %2313 = vmatpush1.msra.mxu0 %v1395
      %2314 = vmatprep.subr.mxu0 0.0
      %2315 = vmatpush1.msra.mxu0 %v1394
      %2316 = vmatprep.subr.mxu0 0.0
      %2317 = vmatpush1.msra.mxu0 %v1393
      %2318 = vmatprep.subr.mxu0 0.0
      %2319 = vmatpush1.msra.mxu0 %v1392
      %2320 = vmatprep.subr.mxu0 0.0
      %2321 = vmatpush1.msra.mxu0 %v1391
      %2322 = vmatprep.subr.mxu0 0.0
      %2323 = vmatpush1.msra.mxu0 %v1390
      %2324 = vmatprep.subr.mxu0 0.0
      %2325 = vmatpush1.msra.mxu0 %v1389
      %2326 = vmatprep.subr.mxu0 0.0
      %2327 = vmatpush2.msra.mxu0 0.0
      %2328 = vmatprep.subr.mxu0 0.0
      %2329 = vmatpush2.msra.mxu0 0.0
      %2330 = vmatprep.subr.mxu0 0.0
      %2331 = vmatpush2.msra.mxu0 0.0
      %2332 = vmatprep.subr.mxu0 0.0
      %2333 = vmatpush2.msra.mxu0 0.0
      %2334 = vmatprep.subr.mxu0 0.0
      %2335 = vmatpush2.msra.mxu0 0.0
      %2336 = vmatprep.subr.mxu0 0.0
      %2337 = vmatpush2.msra.mxu0 0.0
      %2338 = vmatprep.subr.mxu0 0.0
      %2339 = vmatpush2.msra.mxu0 0.0
      %2340 = vmatprep.subr.mxu0 0.0
      %2341 = vmatpush2.msra.mxu0 0.0
      %2342 = vmatprep.subr.mxu0 0.0
      %2343 = vmatpush2.msra.mxu0 0.0
      %2344 = vmatprep.subr.mxu0 0.0
      %2345 = vmatpush2.msra.mxu0 0.0
      %2346 = vmatprep.subr.mxu0 0.0
      %2347 = vmatpush2.msra.mxu0 0.0
      %2348 = vmatprep.subr.mxu0 0.0
      %2349 = vmatpush2.msra.mxu0 0.0
      %2350 = vmatprep.subr.mxu0 0.0
      %2351 = vmatpush2.msra.mxu0 0.0
      %2352 = vmatprep.subr.mxu0 0.0
      %2353 = vmatpush2.msra.mxu0 0.0
      %2354 = vmatprep.subr.mxu0 0.0
      %2355 = vmatpush2.msra.mxu0 0.0
      %2356 = vmatprep.subr.mxu0 0.0
      %2357 = vmatpush2.msra.mxu0 0.0
      %2358 = vmatprep.mubr.f32.mxu0 0.0
      %2359 = vmatmul.mubr.f32.gmra.mxu0 %v2292
      %v2360 = vpop.f32.mrf.mxu0
      %v2361 = vadd.f32 0.0, %v2360
      %v2362 = vpop.f32.mrf.mxu0
      %2363 = vdwg.mxu0
      %v2364 = vmul.f32 %v2280, %v2280
      %v2365 = vmul.f32 %v2281, %v2281
      %v2366 = vsel %vm1612, %v2364, 0.0
      %v2367 = vsel %vm1612, %v2365, 0.0
      %v2368 = vadd.f32 %v2366, %v2367
      %v2369 = vrot.slane %v2368, 4
      %v2370 = vadd.f32 %v2368, %v2369
      %v2371 = vrot.slane %v2370, 2
      %v2372 = vadd.f32 %v2370, %v2371
      %v2373 = vrot.slane %v2372, 1
      %v2374 = vadd.f32 %v2372, %v2373
      %v2376 = vsel %vm1612, %v2374, 0
      %2378 = vmatprep.subr.mxu0 0.0
      %2379 = vmatpush1.msra.mxu0 0.0
      %2380 = vmatprep.subr.mxu0 0.0
      %2381 = vmatpush1.msra.mxu0 0.0
      %2382 = vmatprep.subr.mxu0 0.0
      %2383 = vmatpush1.msra.mxu0 0.0
      %2384 = vmatprep.subr.mxu0 0.0
      %2385 = vmatpush1.msra.mxu0 0.0
      %2386 = vmatprep.subr.mxu0 0.0
      %2387 = vmatpush1.msra.mxu0 0.0
      %2388 = vmatprep.subr.mxu0 0.0
      %2389 = vmatpush1.msra.mxu0 0.0
      %2390 = vmatprep.subr.mxu0 0.0
      %2391 = vmatpush1.msra.mxu0 0.0
      %2392 = vmatprep.subr.mxu0 0.0
      %2393 = vmatpush1.msra.mxu0 0.0
      %2394 = vmatprep.subr.mxu0 0.0
      %2395 = vmatpush1.msra.mxu0 %v1396
      %2396 = vmatprep.subr.mxu0 0.0
      %2397 = vmatpush1.msra.mxu0 %v1395
      %2398 = vmatprep.subr.mxu0 0.0
      %2399 = vmatpush1.msra.mxu0 %v1394
      %2400 = vmatprep.subr.mxu0 0.0
      %2401 = vmatpush1.msra.mxu0 %v1393
      %2402 = vmatprep.subr.mxu0 0.0
      %2403 = vmatpush1.msra.mxu0 %v1392
      %2404 = vmatprep.subr.mxu0 0.0
      %2405 = vmatpush1.msra.mxu0 %v1391
      %2406 = vmatprep.subr.mxu0 0.0
      %2407 = vmatpush1.msra.mxu0 %v1390
      %2408 = vmatprep.subr.mxu0 0.0
      %2409 = vmatpush1.msra.mxu0 %v1389
      %2410 = vmatprep.subr.mxu0 0.0
      %2411 = vmatpush2.msra.mxu0 0.0
      %2412 = vmatprep.subr.mxu0 0.0
      %2413 = vmatpush2.msra.mxu0 0.0
      %2414 = vmatprep.subr.mxu0 0.0
      %2415 = vmatpush2.msra.mxu0 0.0
      %2416 = vmatprep.subr.mxu0 0.0
      %2417 = vmatpush2.msra.mxu0 0.0
      %2418 = vmatprep.subr.mxu0 0.0
      %2419 = vmatpush2.msra.mxu0 0.0
      %2420 = vmatprep.subr.mxu0 0.0
      %2421 = vmatpush2.msra.mxu0 0.0
      %2422 = vmatprep.subr.mxu0 0.0
      %2423 = vmatpush2.msra.mxu0 0.0
      %2424 = vmatprep.subr.mxu0 0.0
      %2425 = vmatpush2.msra.mxu0 0.0
      %2426 = vmatprep.subr.mxu0 0.0
      %2427 = vmatpush2.msra.mxu0 0.0
      %2428 = vmatprep.subr.mxu0 0.0
      %2429 = vmatpush2.msra.mxu0 0.0
      %2430 = vmatprep.subr.mxu0 0.0
      %2431 = vmatpush2.msra.mxu0 0.0
      %2432 = vmatprep.subr.mxu0 0.0
      %2433 = vmatpush2.msra.mxu0 0.0
      %2434 = vmatprep.subr.mxu0 0.0
      %2435 = vmatpush2.msra.mxu0 0.0
      %2436 = vmatprep.subr.mxu0 0.0
      %2437 = vmatpush2.msra.mxu0 0.0
      %2438 = vmatprep.subr.mxu0 0.0
      %2439 = vmatpush2.msra.mxu0 0.0
      %2440 = vmatprep.subr.mxu0 0.0
      %2441 = vmatpush2.msra.mxu0 0.0
      %2442 = vmatprep.mubr.f32.mxu0 0.0
      %2443 = vmatmul.mubr.f32.gmra.mxu0 %v2376
      %v2444 = vpop.f32.mrf.mxu0
      %v2445 = vadd.f32 0.0, %v2444
      %v2446 = vpop.f32.mrf.mxu0
      %2447 = vdwg.mxu0
      %v2448 = vmul.f32 %v2361, %v1779
      %v2449 = vmul.f32 %v2445, %v1779
      %v2450 = vmul.f32 %v2448, %v2448
      %v2451 = vsub.f32 %v2449, %v2450
      %v2452 = vmax.f32 %v2451, 0.0
      %v2454 = vsel %vm717, %v2448, 0
      %2456 = vmatprep.subr.mxu0 0.0
      %2457 = vmatpush1.msra.mxu0 0.0
      %2458 = vmatprep.subr.mxu0 0.0
      %2459 = vmatpush1.msra.mxu0 0.0
      %2460 = vmatprep.subr.mxu0 0.0
      %2461 = vmatpush1.msra.mxu0 0.0
      %2462 = vmatprep.subr.mxu0 0.0
      %2463 = vmatpush1.msra.mxu0 0.0
      %2464 = vmatprep.subr.mxu0 0.0
      %2465 = vmatpush1.msra.mxu0 0.0
      %2466 = vmatprep.subr.mxu0 0.0
      %2467 = vmatpush1.msra.mxu0 0.0
      %2468 = vmatprep.subr.mxu0 0.0
      %2469 = vmatpush1.msra.mxu0 0.0
      %2470 = vmatprep.subr.mxu0 0.0
      %2471 = vmatpush1.msra.mxu0 0.0
      %2472 = vmatprep.subr.mxu0 0.0
      %2473 = vmatpush1.msra.mxu0 0.0
      %2474 = vmatprep.subr.mxu0 0.0
      %2475 = vmatpush1.msra.mxu0 0.0
      %2476 = vmatprep.subr.mxu0 0.0
      %2477 = vmatpush1.msra.mxu0 0.0
      %2478 = vmatprep.subr.mxu0 0.0
      %2479 = vmatpush1.msra.mxu0 0.0
      %2480 = vmatprep.subr.mxu0 0.0
      %2481 = vmatpush1.msra.mxu0 0.0
      %2482 = vmatprep.subr.mxu0 0.0
      %2483 = vmatpush1.msra.mxu0 0.0
      %2484 = vmatprep.subr.mxu0 0.0
      %2485 = vmatpush1.msra.mxu0 %v1398
      %2486 = vmatprep.subr.mxu0 0.0
      %2487 = vmatpush1.msra.mxu0 %v1397
      %2488 = vmatprep.subr.mxu0 0.0
      %2489 = vmatpush2.msra.mxu0 0.0
      %2490 = vmatprep.subr.mxu0 0.0
      %2491 = vmatpush2.msra.mxu0 0.0
      %2492 = vmatprep.subr.mxu0 0.0
      %2493 = vmatpush2.msra.mxu0 0.0
      %2494 = vmatprep.subr.mxu0 0.0
      %2495 = vmatpush2.msra.mxu0 0.0
      %2496 = vmatprep.subr.mxu0 0.0
      %2497 = vmatpush2.msra.mxu0 0.0
      %2498 = vmatprep.subr.mxu0 0.0
      %2499 = vmatpush2.msra.mxu0 0.0
      %2500 = vmatprep.subr.mxu0 0.0
      %2501 = vmatpush2.msra.mxu0 0.0
      %2502 = vmatprep.subr.mxu0 0.0
      %2503 = vmatpush2.msra.mxu0 0.0
      %2504 = vmatprep.subr.mxu0 0.0
      %2505 = vmatpush2.msra.mxu0 0.0
      %2506 = vmatprep.subr.mxu0 0.0
      %2507 = vmatpush2.msra.mxu0 0.0
      %2508 = vmatprep.subr.mxu0 0.0
      %2509 = vmatpush2.msra.mxu0 0.0
      %2510 = vmatprep.subr.mxu0 0.0
      %2511 = vmatpush2.msra.mxu0 0.0
      %2512 = vmatprep.subr.mxu0 0.0
      %2513 = vmatpush2.msra.mxu0 0.0
      %2514 = vmatprep.subr.mxu0 0.0
      %2515 = vmatpush2.msra.mxu0 0.0
      %2516 = vmatprep.subr.mxu0 0.0
      %2517 = vmatpush2.msra.mxu0 0.0
      %2518 = vmatprep.subr.mxu0 0.0
      %2519 = vmatpush2.msra.mxu0 0.0
      %2520 = vmatprep.mubr.f32.mxu0 0.0
      %2521 = vmatmul.mubr.f32.gmra.mxu0 %v2454
      %v2522 = vpop.f32.mrf.mxu0
      %v2523 = vadd.f32 0.0, %v2522
      %v2524 = vpop.f32.mrf.mxu0
      %2525 = vdwg.mxu0
      %v2526 = vlaneseq
      %v2527 = vshrl.u32 %v2526, 7
      %v2528 = vsub.s32 0, %v2527
      %v2529 = vrot.slane %v2523, %v2528
      %v2530 = vsub.f32 %v2280, %v2529
      %v2531 = vsub.f32 %v2281, %v2529
      %v2533 = vsel %vm717, %v2452, 0
      %2535 = vmatprep.subr.mxu0 0.0
      %2536 = vmatpush1.msra.mxu0 0.0
      %2537 = vmatprep.subr.mxu0 0.0
      %2538 = vmatpush1.msra.mxu0 0.0
      %2539 = vmatprep.subr.mxu0 0.0
      %2540 = vmatpush1.msra.mxu0 0.0
      %2541 = vmatprep.subr.mxu0 0.0
      %2542 = vmatpush1.msra.mxu0 0.0
      %2543 = vmatprep.subr.mxu0 0.0
      %2544 = vmatpush1.msra.mxu0 0.0
      %2545 = vmatprep.subr.mxu0 0.0
      %2546 = vmatpush1.msra.mxu0 0.0
      %2547 = vmatprep.subr.mxu0 0.0
      %2548 = vmatpush1.msra.mxu0 0.0
      %2549 = vmatprep.subr.mxu0 0.0
      %2550 = vmatpush1.msra.mxu0 0.0
      %2551 = vmatprep.subr.mxu0 0.0
      %2552 = vmatpush1.msra.mxu0 0.0
      %2553 = vmatprep.subr.mxu0 0.0
      %2554 = vmatpush1.msra.mxu0 0.0
      %2555 = vmatprep.subr.mxu0 0.0
      %2556 = vmatpush1.msra.mxu0 0.0
      %2557 = vmatprep.subr.mxu0 0.0
      %2558 = vmatpush1.msra.mxu0 0.0
      %2559 = vmatprep.subr.mxu0 0.0
      %2560 = vmatpush1.msra.mxu0 0.0
      %2561 = vmatprep.subr.mxu0 0.0
      %2562 = vmatpush1.msra.mxu0 0.0
      %2563 = vmatprep.subr.mxu0 0.0
      %2564 = vmatpush1.msra.mxu0 %v1398
      %2565 = vmatprep.subr.mxu0 0.0
      %2566 = vmatpush1.msra.mxu0 %v1397
      %2567 = vmatprep.subr.mxu0 0.0
      %2568 = vmatpush2.msra.mxu0 0.0
      %2569 = vmatprep.subr.mxu0 0.0
      %2570 = vmatpush2.msra.mxu0 0.0
      %2571 = vmatprep.subr.mxu0 0.0
      %2572 = vmatpush2.msra.mxu0 0.0
      %2573 = vmatprep.subr.mxu0 0.0
      %2574 = vmatpush2.msra.mxu0 0.0
      %2575 = vmatprep.subr.mxu0 0.0
      %2576 = vmatpush2.msra.mxu0 0.0
      %2577 = vmatprep.subr.mxu0 0.0
      %2578 = vmatpush2.msra.mxu0 0.0
      %2579 = vmatprep.subr.mxu0 0.0
      %2580 = vmatpush2.msra.mxu0 0.0
      %2581 = vmatprep.subr.mxu0 0.0
      %2582 = vmatpush2.msra.mxu0 0.0
      %2583 = vmatprep.subr.mxu0 0.0
      %2584 = vmatpush2.msra.mxu0 0.0
      %2585 = vmatprep.subr.mxu0 0.0
      %2586 = vmatpush2.msra.mxu0 0.0
      %2587 = vmatprep.subr.mxu0 0.0
      %2588 = vmatpush2.msra.mxu0 0.0
      %2589 = vmatprep.subr.mxu0 0.0
      %2590 = vmatpush2.msra.mxu0 0.0
      %2591 = vmatprep.subr.mxu0 0.0
      %2592 = vmatpush2.msra.mxu0 0.0
      %2593 = vmatprep.subr.mxu0 0.0
      %2594 = vmatpush2.msra.mxu0 0.0
      %2595 = vmatprep.subr.mxu0 0.0
      %2596 = vmatpush2.msra.mxu0 0.0
      %2597 = vmatprep.subr.mxu0 0.0
      %2598 = vmatpush2.msra.mxu0 0.0
      %2599 = vmatprep.mubr.f32.mxu0 0.0
      %2600 = vmatmul.mubr.f32.gmra.mxu0 %v2533
      %v2601 = vpop.f32.mrf.mxu0
      %v2602 = vadd.f32 1e-05, %v2601
      %v2603 = vpop.f32.mrf.mxu0
      %2604 = vdwg.mxu0
      %v2605 = vrsqrt.pop %v2602
      %v2606 = vlaneseq
      %v2607 = vshrl.u32 %v2606, 7
      %v2608 = vsub.s32 0, %v2607
      %v2609 = vrot.slane %v2605, %v2608
      %v2610 = vmul.f32 %v2530, %v2609
      %v2611 = vmul.f32 %v2531, %v2609
      %s2612 = scalar_lea.vmem %s11, 1
      %v2613 = vld [vmem:[%s2612] sm:$0x1]
      %v2615 = vlaneseq
      %v2616 = vshrl.u32 %v2615, 7
      %v2617 = vsub.s32 0, %v2616
      %v2618 = vrot.slane %v2613, %v2617
      %v2620 = vmul.f32 %v2610, %v2618
      %v2621 = vmul.f32 %v2611, %v2618
      %s2622 = scalar_lea.vmem %s12, 1
      %v2623 = vld [vmem:[%s2622] sm:$0x1]
      %v2625 = vlaneseq
      %v2626 = vshrl.u32 %v2625, 7
      %v2627 = vsub.s32 0, %v2626
      %v2628 = vrot.slane %v2623, %v2627
      %v2630 = vadd.f32 %v2620, %v2628
      %v2631 = vadd.f32 %v2621, %v2628
      %v2632 = vxor.u32 %v2630, 2147483648
      %v2633 = vxor.u32 %v2631, 2147483648
      %v2634 = vmul.f32 %v2632, 1.442695
      %v2635 = vpow.pop %v2634
      %v2636 = vmul.f32 %v2633, 1.442695
      %v2637 = vpow.pop %v2636
      %v2638 = vadd.f32 %v2635, 1.0
      %v2639 = vadd.f32 %v2637, 1.0
      %v2640 = vrcp.pop %v2638
      %v2641 = vmul.f32 1.0, %v2640
      %v2642 = vrcp.pop %v2639
      %v2643 = vmul.f32 1.0, %v2642
      %v2644 = vmul.f32 %v2630, %v2641
      %v2645 = vmul.f32 %v2631, %v2643
      %s2646 = scalar_lea.vmem %s13, 64
      %v2647 = vld [vmem:[%s2646] sm:$0xff]
      %v2648 = vld [vmem:[%s2646 + $0x8] sm:$0xff]
      %v2649 = vld [vmem:[%s2646 + $0x10] sm:$0xff]
      %v2650 = vld [vmem:[%s2646 + $0x18] sm:$0xff]
      %v2651 = vld [vmem:[%s2646 + $0x20] sm:$0xff]
      %v2652 = vld [vmem:[%s2646 + $0x28] sm:$0xff]
      %v2653 = vld [vmem:[%s2646 + $0x30] sm:$0xff]
      %v2654 = vld [vmem:[%s2646 + $0x38] sm:$0xff]
      %s2655 = scalar_lea.vmem %s14, 1
      %v2656 = vld [vmem:[%s2655] sm:$0x1]
      %v2658 = vlaneseq
      %v2659 = vshrl.u32 %v2658, 7
      %v2660 = vsub.s32 0, %v2659
      %v2661 = vrot.slane %v2656, %v2660
      %v2664 = vsel %vm1612, %v2644, 0
      %v2667 = vsel %vm1612, %v2645, 0
      %2669 = vmatprep.subr.mxu0 0.0
      %2670 = vmatpush1.msra.mxu0 0.0
      %2671 = vmatprep.subr.mxu0 0.0
      %2672 = vmatpush1.msra.mxu0 0.0
      %2673 = vmatprep.subr.mxu0 0.0
      %2674 = vmatpush1.msra.mxu0 0.0
      %2675 = vmatprep.subr.mxu0 0.0
      %2676 = vmatpush1.msra.mxu0 0.0
      %2677 = vmatprep.subr.mxu0 0.0
      %2678 = vmatpush1.msra.mxu0 0.0
      %2679 = vmatprep.subr.mxu0 0.0
      %2680 = vmatpush1.msra.mxu0 0.0
      %2681 = vmatprep.subr.mxu0 0.0
      %2682 = vmatpush1.msra.mxu0 0.0
      %2683 = vmatprep.subr.mxu0 0.0
      %2684 = vmatpush1.msra.mxu0 0.0
      %2685 = vmatprep.subr.mxu0 0.0
      %2686 = vmatpush1.msra.mxu0 %v2654
      %2687 = vmatprep.subr.mxu0 0.0
      %2688 = vmatpush1.msra.mxu0 %v2653
      %2689 = vmatprep.subr.mxu0 0.0
      %2690 = vmatpush1.msra.mxu0 %v2652
      %2691 = vmatprep.subr.mxu0 0.0
      %2692 = vmatpush1.msra.mxu0 %v2651
      %2693 = vmatprep.subr.mxu0 0.0
      %2694 = vmatpush1.msra.mxu0 %v2650
      %2695 = vmatprep.subr.mxu0 0.0
      %2696 = vmatpush1.msra.mxu0 %v2649
      %2697 = vmatprep.subr.mxu0 0.0
      %2698 = vmatpush1.msra.mxu0 %v2648
      %2699 = vmatprep.subr.mxu0 0.0
      %2700 = vmatpush1.msra.mxu0 %v2647
      %2701 = vmatprep.subr.mxu0 0.0
      %2702 = vmatpush2.msra.mxu0 0.0
      %2703 = vmatprep.subr.mxu0 0.0
      %2704 = vmatpush2.msra.mxu0 0.0
      %2705 = vmatprep.subr.mxu0 0.0
      %2706 = vmatpush2.msra.mxu0 0.0
      %2707 = vmatprep.subr.mxu0 0.0
      %2708 = vmatpush2.msra.mxu0 0.0
      %2709 = vmatprep.subr.mxu0 0.0
      %2710 = vmatpush2.msra.mxu0 0.0
      %2711 = vmatprep.subr.mxu0 0.0
      %2712 = vmatpush2.msra.mxu0 0.0
      %2713 = vmatprep.subr.mxu0 0.0
      %2714 = vmatpush2.msra.mxu0 0.0
      %2715 = vmatprep.subr.mxu0 0.0
      %2716 = vmatpush2.msra.mxu0 0.0
      %2717 = vmatprep.subr.mxu0 0.0
      %2718 = vmatpush2.msra.mxu0 0.0
      %2719 = vmatprep.subr.mxu0 0.0
      %2720 = vmatpush2.msra.mxu0 0.0
      %2721 = vmatprep.subr.mxu0 0.0
      %2722 = vmatpush2.msra.mxu0 0.0
      %2723 = vmatprep.subr.mxu0 0.0
      %2724 = vmatpush2.msra.mxu0 0.0
      %2725 = vmatprep.subr.mxu0 0.0
      %2726 = vmatpush2.msra.mxu0 0.0
      %2727 = vmatprep.subr.mxu0 0.0
      %2728 = vmatpush2.msra.mxu0 0.0
      %2729 = vmatprep.subr.mxu0 0.0
      %2730 = vmatpush2.msra.mxu0 0.0
      %2731 = vmatprep.subr.mxu0 0.0
      %2732 = vmatpush2.msra.mxu0 0.0
      %2733 = vmatprep.mubr.f32.mxu0 0.0
      %2734 = vmatmul.mubr.f32.gmra.mxu0 %v2664
      %v2735 = vpop.f32.mrf.mxu0
      %v2736 = vadd.f32 %v2661, %v2735
      %v2737 = vpop.f32.mrf.mxu0
      %2738 = vmatprep.mubr.f32.mxu0 0.0
      %2739 = vmatmul.mubr.f32.gmra.mxu0 %v2667
      %v2740 = vpop.f32.mrf.mxu0
      %v2741 = vadd.f32 %v2661, %v2740
      %v2742 = vpop.f32.mrf.mxu0
      %2743 = vdwg.mxu0
      %v2744 = vld [vmem:[%s17] sm:$0xff]
      %v2745 = vld [vmem:[%s17 + $0x8] sm:$0xff]
      %v2746 = vld [vmem:[%s17 + $0x10] sm:$0xff]
      %v2747 = vld [vmem:[%s17 + $0x18] sm:$0xff]
      %v2748 = vld [vmem:[%s17 + $0x20] sm:$0xff]
      %v2749 = vld [vmem:[%s17 + $0x28] sm:$0xff]
      %v2750 = vld [vmem:[%s17 + $0x30] sm:$0xff]
      %v2751 = vld [vmem:[%s17 + $0x38] sm:$0xff]
      %v2752 = vld [vmem:[%s17 + $0x40] sm:$0xff]
      %v2753 = vld [vmem:[%s17 + $0x48] sm:$0xff]
      %v2754 = vld [vmem:[%s17 + $0x50] sm:$0xff]
      %v2755 = vld [vmem:[%s17 + $0x58] sm:$0xff]
      %v2756 = vld [vmem:[%s17 + $0x60] sm:$0xff]
      %v2757 = vld [vmem:[%s17 + $0x68] sm:$0xff]
      %v2758 = vld [vmem:[%s17 + $0x70] sm:$0xff]
      %v2759 = vld [vmem:[%s17 + $0x78] sm:$0xff]
      %vm2760 = vcmask 261120
      %v2762 = vsel %vm2760, %v2736, 0
      %v2765 = vsel %vm2760, %v2741, 0
      %2767 = vmatprep.subr.mxu0 0.0
      %2768 = vmatpush1.msra.mxu0 0.0
      %2769 = vmatprep.subr.mxu0 0.0
      %2770 = vmatpush1.msra.mxu0 0.0
      %2771 = vmatprep.subr.mxu0 0.0
      %2772 = vmatpush1.msra.mxu0 0.0
      %2773 = vmatprep.subr.mxu0 0.0
      %2774 = vmatpush1.msra.mxu0 0.0
      %2775 = vmatprep.subr.mxu0 0.0
      %2776 = vmatpush1.msra.mxu0 0.0
      %2777 = vmatprep.subr.mxu0 0.0
      %2778 = vmatpush1.msra.mxu0 0.0
      %2779 = vmatprep.subr.mxu0 0.0
      %2780 = vmatpush1.msra.mxu0 0.0
      %2781 = vmatprep.subr.mxu0 0.0
      %2782 = vmatpush1.msra.mxu0 0.0
      %2783 = vmatprep.subr.mxu0 0.0
      %2784 = vmatpush1.msra.mxu0 0.0
      %2785 = vmatprep.subr.mxu0 0.0
      %2786 = vmatpush1.msra.mxu0 0.0
      %2787 = vmatprep.subr.mxu0 0.0
      %2788 = vmatpush1.msra.mxu0 0.0
      %2789 = vmatprep.subr.mxu0 0.0
      %2790 = vmatpush1.msra.mxu0 0.0
      %2791 = vmatprep.subr.mxu0 %v2759
      %2792 = vmatpush1.msra.mxu0 %v2758
      %2793 = vmatprep.subr.mxu0 %v2757
      %2794 = vmatpush1.msra.mxu0 %v2756
      %2795 = vmatprep.subr.mxu0 %v2755
      %2796 = vmatpush1.msra.mxu0 %v2754
      %2797 = vmatprep.subr.mxu0 %v2753
      %2798 = vmatpush1.msra.mxu0 %v2752
      %2799 = vmatprep.subr.mxu0 0.0
      %2800 = vmatpush2.msra.mxu0 0.0
      %2801 = vmatprep.subr.mxu0 0.0
      %2802 = vmatpush2.msra.mxu0 0.0
      %2803 = vmatprep.subr.mxu0 0.0
      %2804 = vmatpush2.msra.mxu0 0.0
      %2805 = vmatprep.subr.mxu0 0.0
      %2806 = vmatpush2.msra.mxu0 0.0
      %2807 = vmatprep.subr.mxu0 0.0
      %2808 = vmatpush2.msra.mxu0 0.0
      %2809 = vmatprep.subr.mxu0 0.0
      %2810 = vmatpush2.msra.mxu0 0.0
      %2811 = vmatprep.subr.mxu0 0.0
      %2812 = vmatpush2.msra.mxu0 0.0
      %2813 = vmatprep.subr.mxu0 0.0
      %2814 = vmatpush2.msra.mxu0 0.0
      %2815 = vmatprep.subr.mxu0 0.0
      %2816 = vmatpush2.msra.mxu0 0.0
      %2817 = vmatprep.subr.mxu0 0.0
      %2818 = vmatpush2.msra.mxu0 0.0
      %2819 = vmatprep.subr.mxu0 0.0
      %2820 = vmatpush2.msra.mxu0 0.0
      %2821 = vmatprep.subr.mxu0 0.0
      %2822 = vmatpush2.msra.mxu0 0.0
      %2823 = vmatprep.subr.mxu0 0.0
      %2824 = vmatpush2.msra.mxu0 0.0
      %2825 = vmatprep.subr.mxu0 0.0
      %2826 = vmatpush2.msra.mxu0 0.0
      %2827 = vmatprep.subr.mxu0 0.0
      %2828 = vmatpush2.msra.mxu0 0.0
      %2829 = vmatprep.subr.mxu0 0.0
      %2830 = vmatpush2.msra.mxu0 0.0
      %2831 = vmatprep.mubr.f32.mxu0 0.0
      %2832 = vmatmul.mubr.f32.gmra.mxu0 %v2762
      %v2833 = vpop.f32.mrf.mxu0
      %v2834 = vadd.f32 0.0, %v2833
      %v2835 = vpop.f32.mrf.mxu0
      %v2836 = vadd.f32 0.0, %v2835
      %2837 = vmatprep.mubr.f32.mxu0 0.0
      %2838 = vmatmul.mubr.f32.gmra.mxu0 %v2765
      %v2839 = vpop.f32.mrf.mxu0
      %v2840 = vadd.f32 0.0, %v2839
      %v2841 = vpop.f32.mrf.mxu0
      %v2842 = vadd.f32 0.0, %v2841
      %2843 = vdwg.mxu0
      %v2845 = vsel %vm2760, %v2064, 0
      %v2848 = vsel %vm2760, %v2069, 0
      %2850 = vmatprep.subr.mxu0 0.0
      %2851 = vmatpush1.msra.mxu0 0.0
      %2852 = vmatprep.subr.mxu0 0.0
      %2853 = vmatpush1.msra.mxu0 0.0
      %2854 = vmatprep.subr.mxu0 0.0
      %2855 = vmatpush1.msra.mxu0 0.0
      %2856 = vmatprep.subr.mxu0 0.0
      %2857 = vmatpush1.msra.mxu0 0.0
      %2858 = vmatprep.subr.mxu0 0.0
      %2859 = vmatpush1.msra.mxu0 0.0
      %2860 = vmatprep.subr.mxu0 0.0
      %2861 = vmatpush1.msra.mxu0 0.0
      %2862 = vmatprep.subr.mxu0 0.0
      %2863 = vmatpush1.msra.mxu0 0.0
      %2864 = vmatprep.subr.mxu0 0.0
      %2865 = vmatpush1.msra.mxu0 0.0
      %2866 = vmatprep.subr.mxu0 0.0
      %2867 = vmatpush1.msra.mxu0 0.0
      %2868 = vmatprep.subr.mxu0 0.0
      %2869 = vmatpush1.msra.mxu0 0.0
      %2870 = vmatprep.subr.mxu0 0.0
      %2871 = vmatpush1.msra.mxu0 0.0
      %2872 = vmatprep.subr.mxu0 0.0
      %2873 = vmatpush1.msra.mxu0 0.0
      %2874 = vmatprep.subr.mxu0 %v2751
      %2875 = vmatpush1.msra.mxu0 %v2750
      %2876 = vmatprep.subr.mxu0 %v2749
      %2877 = vmatpush1.msra.mxu0 %v2748
      %2878 = vmatprep.subr.mxu0 %v2747
      %2879 = vmatpush1.msra.mxu0 %v2746
      %2880 = vmatprep.subr.mxu0 %v2745
      %2881 = vmatpush1.msra.mxu0 %v2744
      %2882 = vmatprep.subr.mxu0 0.0
      %2883 = vmatpush2.msra.mxu0 0.0
      %2884 = vmatprep.subr.mxu0 0.0
      %2885 = vmatpush2.msra.mxu0 0.0
      %2886 = vmatprep.subr.mxu0 0.0
      %2887 = vmatpush2.msra.mxu0 0.0
      %2888 = vmatprep.subr.mxu0 0.0
      %2889 = vmatpush2.msra.mxu0 0.0
      %2890 = vmatprep.subr.mxu0 0.0
      %2891 = vmatpush2.msra.mxu0 0.0
      %2892 = vmatprep.subr.mxu0 0.0
      %2893 = vmatpush2.msra.mxu0 0.0
      %2894 = vmatprep.subr.mxu0 0.0
      %2895 = vmatpush2.msra.mxu0 0.0
      %2896 = vmatprep.subr.mxu0 0.0
      %2897 = vmatpush2.msra.mxu0 0.0
      %2898 = vmatprep.subr.mxu0 0.0
      %2899 = vmatpush2.msra.mxu0 0.0
      %2900 = vmatprep.subr.mxu0 0.0
      %2901 = vmatpush2.msra.mxu0 0.0
      %2902 = vmatprep.subr.mxu0 0.0
      %2903 = vmatpush2.msra.mxu0 0.0
      %2904 = vmatprep.subr.mxu0 0.0
      %2905 = vmatpush2.msra.mxu0 0.0
      %2906 = vmatprep.subr.mxu0 0.0
      %2907 = vmatpush2.msra.mxu0 0.0
      %2908 = vmatprep.subr.mxu0 0.0
      %2909 = vmatpush2.msra.mxu0 0.0
      %2910 = vmatprep.subr.mxu0 0.0
      %2911 = vmatpush2.msra.mxu0 0.0
      %2912 = vmatprep.subr.mxu0 0.0
      %2913 = vmatpush2.msra.mxu0 0.0
      %2914 = vmatprep.mubr.f32.mxu0 0.0
      %2915 = vmatmul.mubr.f32.gmra.mxu0 %v2845
      %v2916 = vpop.f32.mrf.mxu0
      %v2917 = vadd.f32 %v2834, %v2916
      %v2918 = vpop.f32.mrf.mxu0
      %v2919 = vadd.f32 %v2836, %v2918
      %2920 = vmatprep.mubr.f32.mxu0 0.0
      %2921 = vmatmul.mubr.f32.gmra.mxu0 %v2848
      %v2922 = vpop.f32.mrf.mxu0
      %v2923 = vadd.f32 %v2840, %v2922
      %v2924 = vpop.f32.mrf.mxu0
      %v2925 = vadd.f32 %v2842, %v2924
      %2926 = vdwg.mxu0
      %v2927 = vld [vmem:[%s19] sm:$0x3]
      %v2929 = vlaneseq
      %v2930 = vshrl.u32 %v2929, 7
      %v2931 = vsub.s32 0, %v2930
      %v2932 = vrot.slane %v2927, %v2931
      %v2933 = vlaneseq
      %v2934 = vshrl.u32 %v2933, 7
      %v2935 = vsub.s32 1, %v2934
      %v2936 = vrot.slane %v2927, %v2935
      %v2939 = vadd.f32 %v2917, %v2932
      %v2940 = vadd.f32 %v2919, %v2936
      %v2941 = vadd.f32 %v2923, %v2932
      %v2942 = vadd.f32 %v2925, %v2936
      %2943 = vst [vmem:[#allocation2] sm:$0xff] %v2939
      %2944 = vst [vmem:[#allocation2 + $0x8] sm:$0xff] %v2940
      %2945 = vst [vmem:[#allocation2 + $0x10] sm:$0xff] %v2941
      %2946 = vst [vmem:[#allocation2 + $0x18] sm:$0xff] %v2942
      %v2947 = vld [vmem:[%s18] sm:$0xff]
      %v2948 = vld [vmem:[%s18 + $0x8] sm:$0xff]
      %v2949 = vld [vmem:[%s18 + $0x10] sm:$0xff]
      %v2950 = vld [vmem:[%s18 + $0x18] sm:$0xff]
      %v2951 = vld [vmem:[%s18 + $0x20] sm:$0xff]
      %v2952 = vld [vmem:[%s18 + $0x28] sm:$0xff]
      %v2953 = vld [vmem:[%s18 + $0x30] sm:$0xff]
      %v2954 = vld [vmem:[%s18 + $0x38] sm:$0xff]
      %v2955 = vld [vmem:[%s18 + $0x40] sm:$0xff]
      %v2956 = vld [vmem:[%s18 + $0x48] sm:$0xff]
      %v2957 = vld [vmem:[%s18 + $0x50] sm:$0xff]
      %v2958 = vld [vmem:[%s18 + $0x58] sm:$0xff]
      %v2959 = vld [vmem:[%s18 + $0x60] sm:$0xff]
      %v2960 = vld [vmem:[%s18 + $0x68] sm:$0xff]
      %v2961 = vld [vmem:[%s18 + $0x70] sm:$0xff]
      %v2962 = vld [vmem:[%s18 + $0x78] sm:$0xff]
      %s2963 = scalar_lea.vmem %s18, 128
      %v2964 = vld [vmem:[%s2963] sm:$0xff]
      %v2965 = vld [vmem:[%s2963 + $0x8] sm:$0xff]
      %v2966 = vld [vmem:[%s2963 + $0x10] sm:$0xff]
      %v2967 = vld [vmem:[%s2963 + $0x18] sm:$0xff]
      %v2968 = vld [vmem:[%s2963 + $0x20] sm:$0xff]
      %v2969 = vld [vmem:[%s2963 + $0x28] sm:$0xff]
      %v2970 = vld [vmem:[%s2963 + $0x30] sm:$0xff]
      %v2971 = vld [vmem:[%s2963 + $0x38] sm:$0xff]
      %v2972 = vld [vmem:[%s2963 + $0x40] sm:$0xff]
      %v2973 = vld [vmem:[%s2963 + $0x48] sm:$0xff]
      %v2974 = vld [vmem:[%s2963 + $0x50] sm:$0xff]
      %v2975 = vld [vmem:[%s2963 + $0x58] sm:$0xff]
      %v2976 = vld [vmem:[%s2963 + $0x60] sm:$0xff]
      %v2977 = vld [vmem:[%s2963 + $0x68] sm:$0xff]
      %v2978 = vld [vmem:[%s2963 + $0x70] sm:$0xff]
      %v2979 = vld [vmem:[%s2963 + $0x78] sm:$0xff]
      %s2980 = scalar_lea.vmem %s17, 128
      %v2981 = vld [vmem:[%s2980] sm:$0xff]
      %v2982 = vld [vmem:[%s2980 + $0x8] sm:$0xff]
      %v2983 = vld [vmem:[%s2980 + $0x10] sm:$0xff]
      %v2984 = vld [vmem:[%s2980 + $0x18] sm:$0xff]
      %v2985 = vld [vmem:[%s2980 + $0x20] sm:$0xff]
      %v2986 = vld [vmem:[%s2980 + $0x28] sm:$0xff]
      %v2987 = vld [vmem:[%s2980 + $0x30] sm:$0xff]
      %v2988 = vld [vmem:[%s2980 + $0x38] sm:$0xff]
      %v2989 = vld [vmem:[%s2980 + $0x40] sm:$0xff]
      %v2990 = vld [vmem:[%s2980 + $0x48] sm:$0xff]
      %v2991 = vld [vmem:[%s2980 + $0x50] sm:$0xff]
      %v2992 = vld [vmem:[%s2980 + $0x58] sm:$0xff]
      %v2993 = vld [vmem:[%s2980 + $0x60] sm:$0xff]
      %v2994 = vld [vmem:[%s2980 + $0x68] sm:$0xff]
      %v2995 = vld [vmem:[%s2980 + $0x70] sm:$0xff]
      %v2996 = vld [vmem:[%s2980 + $0x78] sm:$0xff]
      %s2997 = scalar_lea.vmem %s19, 2
      %v2998 = vld [vmem:[%s2997] sm:$0x3]
      %v2999 = vld [vmem:[#allocation2] ss:$8 sm:$0x3]
      %v3000 = vxor.u32 %v2999, 2147483648
      %v3001 = vmul.f32 %v3000, 1.442695
      %v3002 = vpow.pop %v3001
      %v3003 = vadd.f32 %v3002, 1.0
      %v3004 = vrcp.pop %v3003
      %v3005 = vmul.f32 1.0, %v3004
      %3007 = vrot.lane.b32.xlu0 %v2999, 64
      %v3008 = vpop.permute.xlu0 %3007
      %v3009 = vrot.slane %v3008, 1
      %v3011 = vtanh.pop %v3009
      %v3012 = vmul.f32 %v3005, 0.0
      %v3013 = vmul.f32 %v3005, %v3011
      %3015 = vrot.lane.b32.xlu0 %v3013, 64
      %v3016 = vpop.permute.xlu0 %3015
      %v3018 = vadd.f32 %v3012, %v3016
      %v3019 = vtanh.pop %v3018
      %v3021 = vrot.slane %v3005, 1
      %3024 = vrot.lane.b32.xlu0 %v3019, 64
      %v3025 = vpop.permute.xlu0 %3024
      %v3027 = vmul.f32 %v3021, %v3025
      %s3028 = scalar_lea.vmem [#allocation2], 1
      %v3029 = vld [vmem:[%s3028] ss:$8 sm:$0x3]
      %v3031 = vsel %vm1612, %v3027, 0
      %3033 = vmatprep.subr.mxu0 0.0
      %3034 = vmatpush1.msra.mxu0 0.0
      %3035 = vmatprep.subr.mxu0 0.0
      %3036 = vmatpush1.msra.mxu0 0.0
      %3037 = vmatprep.subr.mxu0 0.0
      %3038 = vmatpush1.msra.mxu0 0.0
      %3039 = vmatprep.subr.mxu0 0.0
      %3040 = vmatpush1.msra.mxu0 0.0
      %3041 = vmatprep.subr.mxu0 0.0
      %3042 = vmatpush1.msra.mxu0 0.0
      %3043 = vmatprep.subr.mxu0 0.0
      %3044 = vmatpush1.msra.mxu0 0.0
      %3045 = vmatprep.subr.mxu0 0.0
      %3046 = vmatpush1.msra.mxu0 0.0
      %3047 = vmatprep.subr.mxu0 0.0
      %3048 = vmatpush1.msra.mxu0 0.0
      %3049 = vmatprep.subr.mxu0 %v2962
      %3050 = vmatpush1.msra.mxu0 %v2961
      %3051 = vmatprep.subr.mxu0 %v2960
      %3052 = vmatpush1.msra.mxu0 %v2959
      %3053 = vmatprep.subr.mxu0 %v2958
      %3054 = vmatpush1.msra.mxu0 %v2957
      %3055 = vmatprep.subr.mxu0 %v2956
      %3056 = vmatpush1.msra.mxu0 %v2955
      %3057 = vmatprep.subr.mxu0 %v2954
      %3058 = vmatpush1.msra.mxu0 %v2953
      %3059 = vmatprep.subr.mxu0 %v2952
      %3060 = vmatpush1.msra.mxu0 %v2951
      %3061 = vmatprep.subr.mxu0 %v2950
      %3062 = vmatpush1.msra.mxu0 %v2949
      %3063 = vmatprep.subr.mxu0 %v2948
      %3064 = vmatpush1.msra.mxu0 %v2947
      %3065 = vmatprep.subr.mxu0 0.0
      %3066 = vmatpush2.msra.mxu0 0.0
      %3067 = vmatprep.subr.mxu0 0.0
      %3068 = vmatpush2.msra.mxu0 0.0
      %3069 = vmatprep.subr.mxu0 0.0
      %3070 = vmatpush2.msra.mxu0 0.0
      %3071 = vmatprep.subr.mxu0 0.0
      %3072 = vmatpush2.msra.mxu0 0.0
      %3073 = vmatprep.subr.mxu0 0.0
      %3074 = vmatpush2.msra.mxu0 0.0
      %3075 = vmatprep.subr.mxu0 0.0
      %3076 = vmatpush2.msra.mxu0 0.0
      %3077 = vmatprep.subr.mxu0 0.0
      %3078 = vmatpush2.msra.mxu0 0.0
      %3079 = vmatprep.subr.mxu0 0.0
      %3080 = vmatpush2.msra.mxu0 0.0
      %3081 = vmatprep.subr.mxu0 0.0
      %3082 = vmatpush2.msra.mxu0 0.0
      %3083 = vmatprep.subr.mxu0 0.0
      %3084 = vmatpush2.msra.mxu0 0.0
      %3085 = vmatprep.subr.mxu0 0.0
      %3086 = vmatpush2.msra.mxu0 0.0
      %3087 = vmatprep.subr.mxu0 0.0
      %3088 = vmatpush2.msra.mxu0 0.0
      %3089 = vmatprep.subr.mxu0 0.0
      %3090 = vmatpush2.msra.mxu0 0.0
      %3091 = vmatprep.subr.mxu0 0.0
      %3092 = vmatpush2.msra.mxu0 0.0
      %3093 = vmatprep.subr.mxu0 0.0
      %3094 = vmatpush2.msra.mxu0 0.0
      %3095 = vmatprep.subr.mxu0 0.0
      %3096 = vmatpush2.msra.mxu0 0.0
      %3097 = vmatprep.mubr.f32.mxu0 0.0
      %3098 = vmatmul.mubr.f32.gmra.mxu0 %v3031
      %v3099 = vpop.f32.mrf.mxu0
      %v3100 = vadd.f32 0.0, %v3099
      %v3101 = vpop.f32.mrf.mxu0
      %v3102 = vadd.f32 0.0, %v3101
      %3103 = vdwg.mxu0
      %v3106 = vcombine.low %v3100, %v3102
      %v3108 = vunpack.c.l.s4 1966171168
      %v3109 = vunpack.c.0.s8 %v3108
      %v3110 = vlaneseq
      %v3111 = vshrl.u32 %v3110, 7
      %v3112 = vsub.s32 %v3109, %v3111
      %v3113 = vrot.slane %v3106, %v3112
      %v3115 = vunpack.c.l.s4 1966171168
      %v3116 = vunpack.c.0.s8 %v3115
      %v3117 = vlaneseq
      %v3118 = vshrl.u32 %v3117, 7
      %v3119 = vsub.s32 %v3116, %v3118
      %v3120 = vrot.slane %v3113, %v3119
      %v3122 = vadd.f32 %v3029, %v3120
      %v3123 = vxor.u32 %v3122, 2147483648
      %v3124 = vmul.f32 %v3123, 1.442695
      %v3125 = vpow.pop %v3124
      %v3126 = vadd.f32 %v3125, 1.0
      %v3127 = vrcp.pop %v3126
      %v3128 = vmul.f32 1.0, %v3127
      %3130 = vrot.lane.b32.xlu0 %v3122, 64
      %v3131 = vpop.permute.xlu0 %3130
      %v3132 = vrot.slane %v3131, 1
      %v3134 = vtanh.pop %v3132
      %v3135 = vmul.f32 %v3128, %v3018
      %v3136 = vmul.f32 %v3128, %v3134
      %3138 = vrot.lane.b32.xlu0 %v3136, 64
      %v3139 = vpop.permute.xlu0 %3138
      %v3141 = vadd.f32 %v3135, %v3139
      %v3142 = vtanh.pop %v3141
      %v3144 = vrot.slane %v3128, 1
      %3147 = vrot.lane.b32.xlu0 %v3142, 64
      %v3148 = vpop.permute.xlu0 %3147
      %v3150 = vmul.f32 %v3144, %v3148
      %v3152 = vlaneseq
      %v3153 = vshrl.u32 %v3152, 7
      %v3154 = vsub.s32 0, %v3153
      %v3155 = vrot.slane %v2998, %v3154
      %v3156 = vlaneseq
      %v3157 = vshrl.u32 %v3156, 7
      %v3158 = vsub.s32 1, %v3157
      %v3159 = vrot.slane %v2998, %v3158
      %3162 = vmatprep.subr.mxu0 0.0
      %3163 = vmatpush1.msra.mxu0 0.0
      %3164 = vmatprep.subr.mxu0 0.0
      %3165 = vmatpush1.msra.mxu0 0.0
      %3166 = vmatprep.subr.mxu0 0.0
      %3167 = vmatpush1.msra.mxu0 0.0
      %3168 = vmatprep.subr.mxu0 0.0
      %3169 = vmatpush1.msra.mxu0 0.0
      %3170 = vmatprep.subr.mxu0 0.0
      %3171 = vmatpush1.msra.mxu0 0.0
      %3172 = vmatprep.subr.mxu0 0.0
      %3173 = vmatpush1.msra.mxu0 0.0
      %3174 = vmatprep.subr.mxu0 0.0
      %3175 = vmatpush1.msra.mxu0 0.0
      %3176 = vmatprep.subr.mxu0 0.0
      %3177 = vmatpush1.msra.mxu0 0.0
      %3178 = vmatprep.subr.mxu0 %v2996
      %3179 = vmatpush1.msra.mxu0 %v2995
      %3180 = vmatprep.subr.mxu0 %v2994
      %3181 = vmatpush1.msra.mxu0 %v2993
      %3182 = vmatprep.subr.mxu0 %v2992
      %3183 = vmatpush1.msra.mxu0 %v2991
      %3184 = vmatprep.subr.mxu0 %v2990
      %3185 = vmatpush1.msra.mxu0 %v2989
      %3186 = vmatprep.subr.mxu0 %v2988
      %3187 = vmatpush1.msra.mxu0 %v2987
      %3188 = vmatprep.subr.mxu0 %v2986
      %3189 = vmatpush1.msra.mxu0 %v2985
      %3190 = vmatprep.subr.mxu0 %v2984
      %3191 = vmatpush1.msra.mxu0 %v2983
      %3192 = vmatprep.subr.mxu0 %v2982
      %3193 = vmatpush1.msra.mxu0 %v2981
      %3194 = vmatprep.subr.mxu0 0.0
      %3195 = vmatpush2.msra.mxu0 0.0
      %3196 = vmatprep.subr.mxu0 0.0
      %3197 = vmatpush2.msra.mxu0 0.0
      %3198 = vmatprep.subr.mxu0 0.0
      %3199 = vmatpush2.msra.mxu0 0.0
      %3200 = vmatprep.subr.mxu0 0.0
      %3201 = vmatpush2.msra.mxu0 0.0
      %3202 = vmatprep.subr.mxu0 0.0
      %3203 = vmatpush2.msra.mxu0 0.0
      %3204 = vmatprep.subr.mxu0 0.0
      %3205 = vmatpush2.msra.mxu0 0.0
      %3206 = vmatprep.subr.mxu0 0.0
      %3207 = vmatpush2.msra.mxu0 0.0
      %3208 = vmatprep.subr.mxu0 0.0
      %3209 = vmatpush2.msra.mxu0 0.0
      %3210 = vmatprep.subr.mxu0 0.0
      %3211 = vmatpush2.msra.mxu0 0.0
      %3212 = vmatprep.subr.mxu0 0.0
      %3213 = vmatpush2.msra.mxu0 0.0
      %3214 = vmatprep.subr.mxu0 0.0
      %3215 = vmatpush2.msra.mxu0 0.0
      %3216 = vmatprep.subr.mxu0 0.0
      %3217 = vmatpush2.msra.mxu0 0.0
      %3218 = vmatprep.subr.mxu0 0.0
      %3219 = vmatpush2.msra.mxu0 0.0
      %3220 = vmatprep.subr.mxu0 0.0
      %3221 = vmatpush2.msra.mxu0 0.0
      %3222 = vmatprep.subr.mxu0 0.0
      %3223 = vmatpush2.msra.mxu0 0.0
      %3224 = vmatprep.subr.mxu0 0.0
      %3225 = vmatpush2.msra.mxu0 0.0
      %3226 = vmatprep.mubr.f32.mxu0 0.0
      %3227 = vmatmul.mubr.f32.gmra.mxu0 %v3031
      %v3228 = vpop.f32.mrf.mxu0
      %v3229 = vadd.f32 %v3155, %v3228
      %v3230 = vpop.f32.mrf.mxu0
      %v3231 = vadd.f32 %v3159, %v3230
      %3232 = vdwg.mxu0
      %v3233 = vxor.u32 %v3229, 2147483648
      %v3234 = vxor.u32 %v3231, 2147483648
      %v3235 = vmul.f32 %v3233, 1.442695
      %v3236 = vpow.pop %v3235
      %v3237 = vmul.f32 %v3234, 1.442695
      %v3238 = vpow.pop %v3237
      %v3239 = vadd.f32 %v3236, 1.0
      %v3240 = vadd.f32 %v3238, 1.0
      %v3241 = vrcp.pop %v3239
      %v3242 = vmul.f32 1.0, %v3241
      %v3243 = vrcp.pop %v3240
      %v3244 = vmul.f32 1.0, %v3243
      %v3245 = vtanh.pop %v3231
      %v3246 = vmul.f32 %v3242, 0.0
      %3248 = vrot.lane.b32.xlu0 %v3245, 64
      %v3249 = vpop.permute.xlu0 %3248
      %v3251 = vmul.f32 %v3242, %v3249
      %3253 = vrot.lane.b32.xlu0 %v3251, 64
      %v3254 = vpop.permute.xlu0 %3253
      %v3256 = vadd.f32 %v3246, %v3254
      %v3257 = vtanh.pop %v3256
      %3259 = vrot.lane.b32.xlu0 %v3257, 64
      %v3260 = vpop.permute.xlu0 %3259
      %v3262 = vmul.f32 %v3244, %v3260
      %vm3263 = vcmask 516096
      %3264 = vst.msk [vmem:[#allocation3] sm:$0x1] %vm3263, %v3262
      %s3265 = scalar_lea.vmem [#allocation2], 2
      %v3266 = vld [vmem:[%s3265] ss:$8 sm:$0x3]
      %v3268 = vsel %vm1612, %v3150, 0
      %3270 = vmatprep.subr.mxu0 0.0
      %3271 = vmatpush1.msra.mxu0 0.0
      %3272 = vmatprep.subr.mxu0 0.0
      %3273 = vmatpush1.msra.mxu0 0.0
      %3274 = vmatprep.subr.mxu0 0.0
      %3275 = vmatpush1.msra.mxu0 0.0
      %3276 = vmatprep.subr.mxu0 0.0
      %3277 = vmatpush1.msra.mxu0 0.0
      %3278 = vmatprep.subr.mxu0 0.0
      %3279 = vmatpush1.msra.mxu0 0.0
      %3280 = vmatprep.subr.mxu0 0.0
      %3281 = vmatpush1.msra.mxu0 0.0
      %3282 = vmatprep.subr.mxu0 0.0
      %3283 = vmatpush1.msra.mxu0 0.0
      %3284 = vmatprep.subr.mxu0 0.0
      %3285 = vmatpush1.msra.mxu0 0.0
      %3286 = vmatprep.subr.mxu0 %v2962
      %3287 = vmatpush1.msra.mxu0 %v2961
      %3288 = vmatprep.subr.mxu0 %v2960
      %3289 = vmatpush1.msra.mxu0 %v2959
      %3290 = vmatprep.subr.mxu0 %v2958
      %3291 = vmatpush1.msra.mxu0 %v2957
      %3292 = vmatprep.subr.mxu0 %v2956
      %3293 = vmatpush1.msra.mxu0 %v2955
      %3294 = vmatprep.subr.mxu0 %v2954
      %3295 = vmatpush1.msra.mxu0 %v2953
      %3296 = vmatprep.subr.mxu0 %v2952
      %3297 = vmatpush1.msra.mxu0 %v2951
      %3298 = vmatprep.subr.mxu0 %v2950
      %3299 = vmatpush1.msra.mxu0 %v2949
      %3300 = vmatprep.subr.mxu0 %v2948
      %3301 = vmatpush1.msra.mxu0 %v2947
      %3302 = vmatprep.subr.mxu0 0.0
      %3303 = vmatpush2.msra.mxu0 0.0
      %3304 = vmatprep.subr.mxu0 0.0
      %3305 = vmatpush2.msra.mxu0 0.0
      %3306 = vmatprep.subr.mxu0 0.0
      %3307 = vmatpush2.msra.mxu0 0.0
      %3308 = vmatprep.subr.mxu0 0.0
      %3309 = vmatpush2.msra.mxu0 0.0
      %3310 = vmatprep.subr.mxu0 0.0
      %3311 = vmatpush2.msra.mxu0 0.0
      %3312 = vmatprep.subr.mxu0 0.0
      %3313 = vmatpush2.msra.mxu0 0.0
      %3314 = vmatprep.subr.mxu0 0.0
      %3315 = vmatpush2.msra.mxu0 0.0
      %3316 = vmatprep.subr.mxu0 0.0
      %3317 = vmatpush2.msra.mxu0 0.0
      %3318 = vmatprep.subr.mxu0 0.0
      %3319 = vmatpush2.msra.mxu0 0.0
      %3320 = vmatprep.subr.mxu0 0.0
      %3321 = vmatpush2.msra.mxu0 0.0
      %3322 = vmatprep.subr.mxu0 0.0
      %3323 = vmatpush2.msra.mxu0 0.0
      %3324 = vmatprep.subr.mxu0 0.0
      %3325 = vmatpush2.msra.mxu0 0.0
      %3326 = vmatprep.subr.mxu0 0.0
      %3327 = vmatpush2.msra.mxu0 0.0
      %3328 = vmatprep.subr.mxu0 0.0
      %3329 = vmatpush2.msra.mxu0 0.0
      %3330 = vmatprep.subr.mxu0 0.0
      %3331 = vmatpush2.msra.mxu0 0.0
      %3332 = vmatprep.subr.mxu0 0.0
      %3333 = vmatpush2.msra.mxu0 0.0
      %3334 = vmatprep.mubr.f32.mxu0 0.0
      %3335 = vmatmul.mubr.f32.gmra.mxu0 %v3268
      %v3336 = vpop.f32.mrf.mxu0
      %v3337 = vadd.f32 0.0, %v3336
      %v3338 = vpop.f32.mrf.mxu0
      %v3339 = vadd.f32 0.0, %v3338
      %3340 = vdwg.mxu0
      %v3343 = vcombine.low %v3337, %v3339
      %v3345 = vunpack.c.l.s4 1966171168
      %v3346 = vunpack.c.0.s8 %v3345
      %v3347 = vlaneseq
      %v3348 = vshrl.u32 %v3347, 7
      %v3349 = vsub.s32 %v3346, %v3348
      %v3350 = vrot.slane %v3343, %v3349
      %v3352 = vunpack.c.l.s4 1966171168
      %v3353 = vunpack.c.0.s8 %v3352
      %v3354 = vlaneseq
      %v3355 = vshrl.u32 %v3354, 7
      %v3356 = vsub.s32 %v3353, %v3355
      %v3357 = vrot.slane %v3350, %v3356
      %v3359 = vadd.f32 %v3266, %v3357
      %v3360 = vxor.u32 %v3359, 2147483648
      %v3361 = vmul.f32 %v3360, 1.442695
      %v3362 = vpow.pop %v3361
      %v3363 = vadd.f32 %v3362, 1.0
      %v3364 = vrcp.pop %v3363
      %v3365 = vmul.f32 1.0, %v3364
      %3367 = vrot.lane.b32.xlu0 %v3359, 64
      %v3368 = vpop.permute.xlu0 %3367
      %v3369 = vrot.slane %v3368, 1
      %v3371 = vtanh.pop %v3369
      %v3372 = vmul.f32 %v3365, %v3141
      %v3373 = vmul.f32 %v3365, %v3371
      %3375 = vrot.lane.b32.xlu0 %v3373, 64
      %v3376 = vpop.permute.xlu0 %3375
      %v3378 = vadd.f32 %v3372, %v3376
      %v3379 = vtanh.pop %v3378
      %v3381 = vrot.slane %v3365, 1
      %3384 = vrot.lane.b32.xlu0 %v3379, 64
      %v3385 = vpop.permute.xlu0 %3384
      %v3387 = vmul.f32 %v3381, %v3385
      %3388 = vmatprep.subr.mxu0 0.0
      %3389 = vmatpush1.msra.mxu0 0.0
      %3390 = vmatprep.subr.mxu0 0.0
      %3391 = vmatpush1.msra.mxu0 0.0
      %3392 = vmatprep.subr.mxu0 0.0
      %3393 = vmatpush1.msra.mxu0 0.0
      %3394 = vmatprep.subr.mxu0 0.0
      %3395 = vmatpush1.msra.mxu0 0.0
      %3396 = vmatprep.subr.mxu0 0.0
      %3397 = vmatpush1.msra.mxu0 0.0
      %3398 = vmatprep.subr.mxu0 0.0
      %3399 = vmatpush1.msra.mxu0 0.0
      %3400 = vmatprep.subr.mxu0 0.0
      %3401 = vmatpush1.msra.mxu0 0.0
      %3402 = vmatprep.subr.mxu0 0.0
      %3403 = vmatpush1.msra.mxu0 0.0
      %3404 = vmatprep.subr.mxu0 %v2996
      %3405 = vmatpush1.msra.mxu0 %v2995
      %3406 = vmatprep.subr.mxu0 %v2994
      %3407 = vmatpush1.msra.mxu0 %v2993
      %3408 = vmatprep.subr.mxu0 %v2992
      %3409 = vmatpush1.msra.mxu0 %v2991
      %3410 = vmatprep.subr.mxu0 %v2990
      %3411 = vmatpush1.msra.mxu0 %v2989
      %3412 = vmatprep.subr.mxu0 %v2988
      %3413 = vmatpush1.msra.mxu0 %v2987
      %3414 = vmatprep.subr.mxu0 %v2986
      %3415 = vmatpush1.msra.mxu0 %v2985
      %3416 = vmatprep.subr.mxu0 %v2984
      %3417 = vmatpush1.msra.mxu0 %v2983
      %3418 = vmatprep.subr.mxu0 %v2982
      %3419 = vmatpush1.msra.mxu0 %v2981
      %3420 = vmatprep.subr.mxu0 0.0
      %3421 = vmatpush2.msra.mxu0 0.0
      %3422 = vmatprep.subr.mxu0 0.0
      %3423 = vmatpush2.msra.mxu0 0.0
      %3424 = vmatprep.subr.mxu0 0.0
      %3425 = vmatpush2.msra.mxu0 0.0
      %3426 = vmatprep.subr.mxu0 0.0
      %3427 = vmatpush2.msra.mxu0 0.0
      %3428 = vmatprep.subr.mxu0 0.0
      %3429 = vmatpush2.msra.mxu0 0.0
      %3430 = vmatprep.subr.mxu0 0.0
      %3431 = vmatpush2.msra.mxu0 0.0
      %3432 = vmatprep.subr.mxu0 0.0
      %3433 = vmatpush2.msra.mxu0 0.0
      %3434 = vmatprep.subr.mxu0 0.0
      %3435 = vmatpush2.msra.mxu0 0.0
      %3436 = vmatprep.subr.mxu0 0.0
      %3437 = vmatpush2.msra.mxu0 0.0
      %3438 = vmatprep.subr.mxu0 0.0
      %3439 = vmatpush2.msra.mxu0 0.0
      %3440 = vmatprep.subr.mxu0 0.0
      %3441 = vmatpush2.msra.mxu0 0.0
      %3442 = vmatprep.subr.mxu0 0.0
      %3443 = vmatpush2.msra.mxu0 0.0
      %3444 = vmatprep.subr.mxu0 0.0
      %3445 = vmatpush2.msra.mxu0 0.0
      %3446 = vmatprep.subr.mxu0 0.0
      %3447 = vmatpush2.msra.mxu0 0.0
      %3448 = vmatprep.subr.mxu0 0.0
      %3449 = vmatpush2.msra.mxu0 0.0
      %3450 = vmatprep.subr.mxu0 0.0
      %3451 = vmatpush2.msra.mxu0 0.0
      %3452 = vmatprep.mubr.f32.mxu0 0.0
      %3453 = vmatmul.mubr.f32.gmra.mxu0 %v3268
      %v3454 = vpop.f32.mrf.mxu0
      %v3455 = vadd.f32 %v3155, %v3454
      %v3456 = vpop.f32.mrf.mxu0
      %v3457 = vadd.f32 %v3159, %v3456
      %3458 = vdwg.mxu0
      %v3460 = vsel %vm1612, %v3262, 0
      %3462 = vmatprep.subr.mxu0 0.0
      %3463 = vmatpush1.msra.mxu0 0.0
      %3464 = vmatprep.subr.mxu0 0.0
      %3465 = vmatpush1.msra.mxu0 0.0
      %3466 = vmatprep.subr.mxu0 0.0
      %3467 = vmatpush1.msra.mxu0 0.0
      %3468 = vmatprep.subr.mxu0 0.0
      %3469 = vmatpush1.msra.mxu0 0.0
      %3470 = vmatprep.subr.mxu0 0.0
      %3471 = vmatpush1.msra.mxu0 0.0
      %3472 = vmatprep.subr.mxu0 0.0
      %3473 = vmatpush1.msra.mxu0 0.0
      %3474 = vmatprep.subr.mxu0 0.0
      %3475 = vmatpush1.msra.mxu0 0.0
      %3476 = vmatprep.subr.mxu0 0.0
      %3477 = vmatpush1.msra.mxu0 0.0
      %3478 = vmatprep.subr.mxu0 %v2979
      %3479 = vmatpush1.msra.mxu0 %v2978
      %3480 = vmatprep.subr.mxu0 %v2977
      %3481 = vmatpush1.msra.mxu0 %v2976
      %3482 = vmatprep.subr.mxu0 %v2975
      %3483 = vmatpush1.msra.mxu0 %v2974
      %3484 = vmatprep.subr.mxu0 %v2973
      %3485 = vmatpush1.msra.mxu0 %v2972
      %3486 = vmatprep.subr.mxu0 %v2971
      %3487 = vmatpush1.msra.mxu0 %v2970
      %3488 = vmatprep.subr.mxu0 %v2969
      %3489 = vmatpush1.msra.mxu0 %v2968
      %3490 = vmatprep.subr.mxu0 %v2967
      %3491 = vmatpush1.msra.mxu0 %v2966
      %3492 = vmatprep.subr.mxu0 %v2965
      %3493 = vmatpush1.msra.mxu0 %v2964
      %3494 = vmatprep.subr.mxu0 0.0
      %3495 = vmatpush2.msra.mxu0 0.0
      %3496 = vmatprep.subr.mxu0 0.0
      %3497 = vmatpush2.msra.mxu0 0.0
      %3498 = vmatprep.subr.mxu0 0.0
      %3499 = vmatpush2.msra.mxu0 0.0
      %3500 = vmatprep.subr.mxu0 0.0
      %3501 = vmatpush2.msra.mxu0 0.0
      %3502 = vmatprep.subr.mxu0 0.0
      %3503 = vmatpush2.msra.mxu0 0.0
      %3504 = vmatprep.subr.mxu0 0.0
      %3505 = vmatpush2.msra.mxu0 0.0
      %3506 = vmatprep.subr.mxu0 0.0
      %3507 = vmatpush2.msra.mxu0 0.0
      %3508 = vmatprep.subr.mxu0 0.0
      %3509 = vmatpush2.msra.mxu0 0.0
      %3510 = vmatprep.subr.mxu0 0.0
      %3511 = vmatpush2.msra.mxu0 0.0
      %3512 = vmatprep.subr.mxu0 0.0
      %3513 = vmatpush2.msra.mxu0 0.0
      %3514 = vmatprep.subr.mxu0 0.0
      %3515 = vmatpush2.msra.mxu0 0.0
      %3516 = vmatprep.subr.mxu0 0.0
      %3517 = vmatpush2.msra.mxu0 0.0
      %3518 = vmatprep.subr.mxu0 0.0
      %3519 = vmatpush2.msra.mxu0 0.0
      %3520 = vmatprep.subr.mxu0 0.0
      %3521 = vmatpush2.msra.mxu0 0.0
      %3522 = vmatprep.subr.mxu0 0.0
      %3523 = vmatpush2.msra.mxu0 0.0
      %3524 = vmatprep.subr.mxu0 0.0
      %3525 = vmatpush2.msra.mxu0 0.0
      %3526 = vmatprep.mubr.f32.mxu0 0.0
      %3527 = vmatmul.mubr.f32.gmra.mxu0 %v3460
      %v3528 = vpop.f32.mrf.mxu0
      %v3529 = vadd.f32 0.0, %v3528
      %v3530 = vpop.f32.mrf.mxu0
      %v3531 = vadd.f32 0.0, %v3530
      %3532 = vdwg.mxu0
      %v3533 = vadd.f32 %v3455, %v3529
      %v3534 = vadd.f32 %v3457, %v3531
      %v3535 = vxor.u32 %v3533, 2147483648
      %v3536 = vxor.u32 %v3534, 2147483648
      %v3537 = vmul.f32 %v3535, 1.442695
      %v3538 = vpow.pop %v3537
      %v3539 = vmul.f32 %v3536, 1.442695
      %v3540 = vpow.pop %v3539
      %v3541 = vadd.f32 %v3538, 1.0
      %v3542 = vadd.f32 %v3540, 1.0
      %v3543 = vrcp.pop %v3541
      %v3544 = vmul.f32 1.0, %v3543
      %v3545 = vrcp.pop %v3542
      %v3546 = vmul.f32 1.0, %v3545
      %v3547 = vtanh.pop %v3534
      %v3548 = vmul.f32 %v3544, %v3256
      %3550 = vrot.lane.b32.xlu0 %v3547, 64
      %v3551 = vpop.permute.xlu0 %3550
      %v3553 = vmul.f32 %v3544, %v3551
      %3555 = vrot.lane.b32.xlu0 %v3553, 64
      %v3556 = vpop.permute.xlu0 %3555
      %v3558 = vadd.f32 %v3548, %v3556
      %v3559 = vtanh.pop %v3558
      %3561 = vrot.lane.b32.xlu0 %v3559, 64
      %v3562 = vpop.permute.xlu0 %3561
      %v3564 = vmul.f32 %v3546, %v3562
      %3565 = vst.msk [vmem:[#allocation3 + $0x1] sm:$0x1] %vm3263, %v3564
      %s3566 = scalar_lea.vmem [#allocation2], 3
      %v3567 = vld [vmem:[%s3566] ss:$8 sm:$0x3]
      %v3569 = vsel %vm1612, %v3387, 0
      %3571 = vmatprep.subr.mxu0 0.0
      %3572 = vmatpush1.msra.mxu0 0.0
      %3573 = vmatprep.subr.mxu0 0.0
      %3574 = vmatpush1.msra.mxu0 0.0
      %3575 = vmatprep.subr.mxu0 0.0
      %3576 = vmatpush1.msra.mxu0 0.0
      %3577 = vmatprep.subr.mxu0 0.0
      %3578 = vmatpush1.msra.mxu0 0.0
      %3579 = vmatprep.subr.mxu0 0.0
      %3580 = vmatpush1.msra.mxu0 0.0
      %3581 = vmatprep.subr.mxu0 0.0
      %3582 = vmatpush1.msra.mxu0 0.0
      %3583 = vmatprep.subr.mxu0 0.0
      %3584 = vmatpush1.msra.mxu0 0.0
      %3585 = vmatprep.subr.mxu0 0.0
      %3586 = vmatpush1.msra.mxu0 0.0
      %3587 = vmatprep.subr.mxu0 %v2962
      %3588 = vmatpush1.msra.mxu0 %v2961
      %3589 = vmatprep.subr.mxu0 %v2960
      %3590 = vmatpush1.msra.mxu0 %v2959
      %3591 = vmatprep.subr.mxu0 %v2958
      %3592 = vmatpush1.msra.mxu0 %v2957
      %3593 = vmatprep.subr.mxu0 %v2956
      %3594 = vmatpush1.msra.mxu0 %v2955
      %3595 = vmatprep.subr.mxu0 %v2954
      %3596 = vmatpush1.msra.mxu0 %v2953
      %3597 = vmatprep.subr.mxu0 %v2952
      %3598 = vmatpush1.msra.mxu0 %v2951
      %3599 = vmatprep.subr.mxu0 %v2950
      %3600 = vmatpush1.msra.mxu0 %v2949
      %3601 = vmatprep.subr.mxu0 %v2948
      %3602 = vmatpush1.msra.mxu0 %v2947
      %3603 = vmatprep.subr.mxu0 0.0
      %3604 = vmatpush2.msra.mxu0 0.0
      %3605 = vmatprep.subr.mxu0 0.0
      %3606 = vmatpush2.msra.mxu0 0.0
      %3607 = vmatprep.subr.mxu0 0.0
      %3608 = vmatpush2.msra.mxu0 0.0
      %3609 = vmatprep.subr.mxu0 0.0
      %3610 = vmatpush2.msra.mxu0 0.0
      %3611 = vmatprep.subr.mxu0 0.0
      %3612 = vmatpush2.msra.mxu0 0.0
      %3613 = vmatprep.subr.mxu0 0.0
      %3614 = vmatpush2.msra.mxu0 0.0
      %3615 = vmatprep.subr.mxu0 0.0
      %3616 = vmatpush2.msra.mxu0 0.0
      %3617 = vmatprep.subr.mxu0 0.0
      %3618 = vmatpush2.msra.mxu0 0.0
      %3619 = vmatprep.subr.mxu0 0.0
      %3620 = vmatpush2.msra.mxu0 0.0
      %3621 = vmatprep.subr.mxu0 0.0
      %3622 = vmatpush2.msra.mxu0 0.0
      %3623 = vmatprep.subr.mxu0 0.0
      %3624 = vmatpush2.msra.mxu0 0.0
      %3625 = vmatprep.subr.mxu0 0.0
      %3626 = vmatpush2.msra.mxu0 0.0
      %3627 = vmatprep.subr.mxu0 0.0
      %3628 = vmatpush2.msra.mxu0 0.0
      %3629 = vmatprep.subr.mxu0 0.0
      %3630 = vmatpush2.msra.mxu0 0.0
      %3631 = vmatprep.subr.mxu0 0.0
      %3632 = vmatpush2.msra.mxu0 0.0
      %3633 = vmatprep.subr.mxu0 0.0
      %3634 = vmatpush2.msra.mxu0 0.0
      %3635 = vmatprep.mubr.f32.mxu0 0.0
      %3636 = vmatmul.mubr.f32.gmra.mxu0 %v3569
      %v3637 = vpop.f32.mrf.mxu0
      %v3638 = vadd.f32 0.0, %v3637
      %v3639 = vpop.f32.mrf.mxu0
      %v3640 = vadd.f32 0.0, %v3639
      %3641 = vdwg.mxu0
      %v3644 = vcombine.low %v3638, %v3640
      %v3646 = vunpack.c.l.s4 1966171168
      %v3647 = vunpack.c.0.s8 %v3646
      %v3648 = vlaneseq
      %v3649 = vshrl.u32 %v3648, 7
      %v3650 = vsub.s32 %v3647, %v3649
      %v3651 = vrot.slane %v3644, %v3650
      %v3653 = vunpack.c.l.s4 1966171168
      %v3654 = vunpack.c.0.s8 %v3653
      %v3655 = vlaneseq
      %v3656 = vshrl.u32 %v3655, 7
      %v3657 = vsub.s32 %v3654, %v3656
      %v3658 = vrot.slane %v3651, %v3657
      %v3660 = vadd.f32 %v3567, %v3658
      %v3661 = vxor.u32 %v3660, 2147483648
      %v3662 = vmul.f32 %v3661, 1.442695
      %v3663 = vpow.pop %v3662
      %v3664 = vadd.f32 %v3663, 1.0
      %v3665 = vrcp.pop %v3664
      %v3666 = vmul.f32 1.0, %v3665
      %3668 = vrot.lane.b32.xlu0 %v3660, 64
      %v3669 = vpop.permute.xlu0 %3668
      %v3670 = vrot.slane %v3669, 1
      %v3672 = vtanh.pop %v3670
      %v3673 = vmul.f32 %v3666, %v3378
      %v3674 = vmul.f32 %v3666, %v3672
      %3676 = vrot.lane.b32.xlu0 %v3674, 64
      %v3677 = vpop.permute.xlu0 %3676
      %v3679 = vadd.f32 %v3673, %v3677
      %v3680 = vtanh.pop %v3679
      %v3682 = vrot.slane %v3666, 1
      %3685 = vrot.lane.b32.xlu0 %v3680, 64
      %v3686 = vpop.permute.xlu0 %3685
      %v3688 = vmul.f32 %v3682, %v3686
      %3689 = vmatprep.subr.mxu0 0.0
      %3690 = vmatpush1.msra.mxu0 0.0
      %3691 = vmatprep.subr.mxu0 0.0
      %3692 = vmatpush1.msra.mxu0 0.0
      %3693 = vmatprep.subr.mxu0 0.0
      %3694 = vmatpush1.msra.mxu0 0.0
      %3695 = vmatprep.subr.mxu0 0.0
      %3696 = vmatpush1.msra.mxu0 0.0
      %3697 = vmatprep.subr.mxu0 0.0
      %3698 = vmatpush1.msra.mxu0 0.0
      %3699 = vmatprep.subr.mxu0 0.0
      %3700 = vmatpush1.msra.mxu0 0.0
      %3701 = vmatprep.subr.mxu0 0.0
      %3702 = vmatpush1.msra.mxu0 0.0
      %3703 = vmatprep.subr.mxu0 0.0
      %3704 = vmatpush1.msra.mxu0 0.0
      %3705 = vmatprep.subr.mxu0 %v2996
      %3706 = vmatpush1.msra.mxu0 %v2995
      %3707 = vmatprep.subr.mxu0 %v2994
      %3708 = vmatpush1.msra.mxu0 %v2993
      %3709 = vmatprep.subr.mxu0 %v2992
      %3710 = vmatpush1.msra.mxu0 %v2991
      %3711 = vmatprep.subr.mxu0 %v2990
      %3712 = vmatpush1.msra.mxu0 %v2989
      %3713 = vmatprep.subr.mxu0 %v2988
      %3714 = vmatpush1.msra.mxu0 %v2987
      %3715 = vmatprep.subr.mxu0 %v2986
      %3716 = vmatpush1.msra.mxu0 %v2985
      %3717 = vmatprep.subr.mxu0 %v2984
      %3718 = vmatpush1.msra.mxu0 %v2983
      %3719 = vmatprep.subr.mxu0 %v2982
      %3720 = vmatpush1.msra.mxu0 %v2981
      %3721 = vmatprep.subr.mxu0 0.0
      %3722 = vmatpush2.msra.mxu0 0.0
      %3723 = vmatprep.subr.mxu0 0.0
      %3724 = vmatpush2.msra.mxu0 0.0
      %3725 = vmatprep.subr.mxu0 0.0
      %3726 = vmatpush2.msra.mxu0 0.0
      %3727 = vmatprep.subr.mxu0 0.0
      %3728 = vmatpush2.msra.mxu0 0.0
      %3729 = vmatprep.subr.mxu0 0.0
      %3730 = vmatpush2.msra.mxu0 0.0
      %3731 = vmatprep.subr.mxu0 0.0
      %3732 = vmatpush2.msra.mxu0 0.0
      %3733 = vmatprep.subr.mxu0 0.0
      %3734 = vmatpush2.msra.mxu0 0.0
      %3735 = vmatprep.subr.mxu0 0.0
      %3736 = vmatpush2.msra.mxu0 0.0
      %3737 = vmatprep.subr.mxu0 0.0
      %3738 = vmatpush2.msra.mxu0 0.0
      %3739 = vmatprep.subr.mxu0 0.0
      %3740 = vmatpush2.msra.mxu0 0.0
      %3741 = vmatprep.subr.mxu0 0.0
      %3742 = vmatpush2.msra.mxu0 0.0
      %3743 = vmatprep.subr.mxu0 0.0
      %3744 = vmatpush2.msra.mxu0 0.0
      %3745 = vmatprep.subr.mxu0 0.0
      %3746 = vmatpush2.msra.mxu0 0.0
      %3747 = vmatprep.subr.mxu0 0.0
      %3748 = vmatpush2.msra.mxu0 0.0
      %3749 = vmatprep.subr.mxu0 0.0
      %3750 = vmatpush2.msra.mxu0 0.0
      %3751 = vmatprep.subr.mxu0 0.0
      %3752 = vmatpush2.msra.mxu0 0.0
      %3753 = vmatprep.mubr.f32.mxu0 0.0
      %3754 = vmatmul.mubr.f32.gmra.mxu0 %v3569
      %v3755 = vpop.f32.mrf.mxu0
      %v3756 = vadd.f32 %v3155, %v3755
      %v3757 = vpop.f32.mrf.mxu0
      %v3758 = vadd.f32 %v3159, %v3757
      %3759 = vdwg.mxu0
      %v3761 = vsel %vm1612, %v3564, 0
      %3763 = vmatprep.subr.mxu0 0.0
      %3764 = vmatpush1.msra.mxu0 0.0
      %3765 = vmatprep.subr.mxu0 0.0
      %3766 = vmatpush1.msra.mxu0 0.0
      %3767 = vmatprep.subr.mxu0 0.0
      %3768 = vmatpush1.msra.mxu0 0.0
      %3769 = vmatprep.subr.mxu0 0.0
      %3770 = vmatpush1.msra.mxu0 0.0
      %3771 = vmatprep.subr.mxu0 0.0
      %3772 = vmatpush1.msra.mxu0 0.0
      %3773 = vmatprep.subr.mxu0 0.0
      %3774 = vmatpush1.msra.mxu0 0.0
      %3775 = vmatprep.subr.mxu0 0.0
      %3776 = vmatpush1.msra.mxu0 0.0
      %3777 = vmatprep.subr.mxu0 0.0
      %3778 = vmatpush1.msra.mxu0 0.0
      %3779 = vmatprep.subr.mxu0 %v2979
      %3780 = vmatpush1.msra.mxu0 %v2978
      %3781 = vmatprep.subr.mxu0 %v2977
      %3782 = vmatpush1.msra.mxu0 %v2976
      %3783 = vmatprep.subr.mxu0 %v2975
      %3784 = vmatpush1.msra.mxu0 %v2974
      %3785 = vmatprep.subr.mxu0 %v2973
      %3786 = vmatpush1.msra.mxu0 %v2972
      %3787 = vmatprep.subr.mxu0 %v2971
      %3788 = vmatpush1.msra.mxu0 %v2970
      %3789 = vmatprep.subr.mxu0 %v2969
      %3790 = vmatpush1.msra.mxu0 %v2968
      %3791 = vmatprep.subr.mxu0 %v2967
      %3792 = vmatpush1.msra.mxu0 %v2966
      %3793 = vmatprep.subr.mxu0 %v2965
      %3794 = vmatpush1.msra.mxu0 %v2964
      %3795 = vmatprep.subr.mxu0 0.0
      %3796 = vmatpush2.msra.mxu0 0.0
      %3797 = vmatprep.subr.mxu0 0.0
      %3798 = vmatpush2.msra.mxu0 0.0
      %3799 = vmatprep.subr.mxu0 0.0
      %3800 = vmatpush2.msra.mxu0 0.0
      %3801 = vmatprep.subr.mxu0 0.0
      %3802 = vmatpush2.msra.mxu0 0.0
      %3803 = vmatprep.subr.mxu0 0.0
      %3804 = vmatpush2.msra.mxu0 0.0
      %3805 = vmatprep.subr.mxu0 0.0
      %3806 = vmatpush2.msra.mxu0 0.0
      %3807 = vmatprep.subr.mxu0 0.0
      %3808 = vmatpush2.msra.mxu0 0.0
      %3809 = vmatprep.subr.mxu0 0.0
      %3810 = vmatpush2.msra.mxu0 0.0
      %3811 = vmatprep.subr.mxu0 0.0
      %3812 = vmatpush2.msra.mxu0 0.0
      %3813 = vmatprep.subr.mxu0 0.0
      %3814 = vmatpush2.msra.mxu0 0.0
      %3815 = vmatprep.subr.mxu0 0.0
      %3816 = vmatpush2.msra.mxu0 0.0
      %3817 = vmatprep.subr.mxu0 0.0
      %3818 = vmatpush2.msra.mxu0 0.0
      %3819 = vmatprep.subr.mxu0 0.0
      %3820 = vmatpush2.msra.mxu0 0.0
      %3821 = vmatprep.subr.mxu0 0.0
      %3822 = vmatpush2.msra.mxu0 0.0
      %3823 = vmatprep.subr.mxu0 0.0
      %3824 = vmatpush2.msra.mxu0 0.0
      %3825 = vmatprep.subr.mxu0 0.0
      %3826 = vmatpush2.msra.mxu0 0.0
      %3827 = vmatprep.mubr.f32.mxu0 0.0
      %3828 = vmatmul.mubr.f32.gmra.mxu0 %v3761
      %v3829 = vpop.f32.mrf.mxu0
      %v3830 = vadd.f32 0.0, %v3829
      %v3831 = vpop.f32.mrf.mxu0
      %v3832 = vadd.f32 0.0, %v3831
      %3833 = vdwg.mxu0
      %v3834 = vadd.f32 %v3756, %v3830
      %v3835 = vadd.f32 %v3758, %v3832
      %v3836 = vxor.u32 %v3834, 2147483648
      %v3837 = vxor.u32 %v3835, 2147483648
      %v3838 = vmul.f32 %v3836, 1.442695
      %v3839 = vpow.pop %v3838
      %v3840 = vmul.f32 %v3837, 1.442695
      %v3841 = vpow.pop %v3840
      %v3842 = vadd.f32 %v3839, 1.0
      %v3843 = vadd.f32 %v3841, 1.0
      %v3844 = vrcp.pop %v3842
      %v3845 = vmul.f32 1.0, %v3844
      %v3846 = vrcp.pop %v3843
      %v3847 = vmul.f32 1.0, %v3846
      %v3848 = vtanh.pop %v3835
      %v3849 = vmul.f32 %v3845, %v3558
      %3851 = vrot.lane.b32.xlu0 %v3848, 64
      %v3852 = vpop.permute.xlu0 %3851
      %v3854 = vmul.f32 %v3845, %v3852
      %3856 = vrot.lane.b32.xlu0 %v3854, 64
      %v3857 = vpop.permute.xlu0 %3856
      %v3859 = vadd.f32 %v3849, %v3857
      %v3860 = vtanh.pop %v3859
      %3862 = vrot.lane.b32.xlu0 %v3860, 64
      %v3863 = vpop.permute.xlu0 %3862
      %v3865 = vmul.f32 %v3847, %v3863
      %3866 = vst.msk [vmem:[#allocation3 + $0x2] sm:$0x1] %vm3263, %v3865
      %s3867 = scalar_lea.vmem [#allocation2], 4
      %v3868 = vld [vmem:[%s3867] ss:$8 sm:$0x3]
      %v3870 = vsel %vm1612, %v3688, 0
      %3872 = vmatprep.subr.mxu0 0.0
      %3873 = vmatpush1.msra.mxu0 0.0
      %3874 = vmatprep.subr.mxu0 0.0
      %3875 = vmatpush1.msra.mxu0 0.0
      %3876 = vmatprep.subr.mxu0 0.0
      %3877 = vmatpush1.msra.mxu0 0.0
      %3878 = vmatprep.subr.mxu0 0.0
      %3879 = vmatpush1.msra.mxu0 0.0
      %3880 = vmatprep.subr.mxu0 0.0
      %3881 = vmatpush1.msra.mxu0 0.0
      %3882 = vmatprep.subr.mxu0 0.0
      %3883 = vmatpush1.msra.mxu0 0.0
      %3884 = vmatprep.subr.mxu0 0.0
      %3885 = vmatpush1.msra.mxu0 0.0
      %3886 = vmatprep.subr.mxu0 0.0
      %3887 = vmatpush1.msra.mxu0 0.0
      %3888 = vmatprep.subr.mxu0 %v2962
      %3889 = vmatpush1.msra.mxu0 %v2961
      %3890 = vmatprep.subr.mxu0 %v2960
      %3891 = vmatpush1.msra.mxu0 %v2959
      %3892 = vmatprep.subr.mxu0 %v2958
      %3893 = vmatpush1.msra.mxu0 %v2957
      %3894 = vmatprep.subr.mxu0 %v2956
      %3895 = vmatpush1.msra.mxu0 %v2955
      %3896 = vmatprep.subr.mxu0 %v2954
      %3897 = vmatpush1.msra.mxu0 %v2953
      %3898 = vmatprep.subr.mxu0 %v2952
      %3899 = vmatpush1.msra.mxu0 %v2951
      %3900 = vmatprep.subr.mxu0 %v2950
      %3901 = vmatpush1.msra.mxu0 %v2949
      %3902 = vmatprep.subr.mxu0 %v2948
      %3903 = vmatpush1.msra.mxu0 %v2947
      %3904 = vmatprep.subr.mxu0 0.0
      %3905 = vmatpush2.msra.mxu0 0.0
      %3906 = vmatprep.subr.mxu0 0.0
      %3907 = vmatpush2.msra.mxu0 0.0
      %3908 = vmatprep.subr.mxu0 0.0
      %3909 = vmatpush2.msra.mxu0 0.0
      %3910 = vmatprep.subr.mxu0 0.0
      %3911 = vmatpush2.msra.mxu0 0.0
      %3912 = vmatprep.subr.mxu0 0.0
      %3913 = vmatpush2.msra.mxu0 0.0
      %3914 = vmatprep.subr.mxu0 0.0
      %3915 = vmatpush2.msra.mxu0 0.0
      %3916 = vmatprep.subr.mxu0 0.0
      %3917 = vmatpush2.msra.mxu0 0.0
      %3918 = vmatprep.subr.mxu0 0.0
      %3919 = vmatpush2.msra.mxu0 0.0
      %3920 = vmatprep.subr.mxu0 0.0
      %3921 = vmatpush2.msra.mxu0 0.0
      %3922 = vmatprep.subr.mxu0 0.0
      %3923 = vmatpush2.msra.mxu0 0.0
      %3924 = vmatprep.subr.mxu0 0.0
      %3925 = vmatpush2.msra.mxu0 0.0
      %3926 = vmatprep.subr.mxu0 0.0
      %3927 = vmatpush2.msra.mxu0 0.0
      %3928 = vmatprep.subr.mxu0 0.0
      %3929 = vmatpush2.msra.mxu0 0.0
      %3930 = vmatprep.subr.mxu0 0.0
      %3931 = vmatpush2.msra.mxu0 0.0
      %3932 = vmatprep.subr.mxu0 0.0
      %3933 = vmatpush2.msra.mxu0 0.0
      %3934 = vmatprep.subr.mxu0 0.0
      %3935 = vmatpush2.msra.mxu0 0.0
      %3936 = vmatprep.mubr.f32.mxu0 0.0
      %3937 = vmatmul.mubr.f32.gmra.mxu0 %v3870
      %v3938 = vpop.f32.mrf.mxu0
      %v3939 = vadd.f32 0.0, %v3938
      %v3940 = vpop.f32.mrf.mxu0
      %v3941 = vadd.f32 0.0, %v3940
      %3942 = vdwg.mxu0
      %v3945 = vcombine.low %v3939, %v3941
      %v3947 = vunpack.c.l.s4 1966171168
      %v3948 = vunpack.c.0.s8 %v3947
      %v3949 = vlaneseq
      %v3950 = vshrl.u32 %v3949, 7
      %v3951 = vsub.s32 %v3948, %v3950
      %v3952 = vrot.slane %v3945, %v3951
      %v3954 = vunpack.c.l.s4 1966171168
      %v3955 = vunpack.c.0.s8 %v3954
      %v3956 = vlaneseq
      %v3957 = vshrl.u32 %v3956, 7
      %v3958 = vsub.s32 %v3955, %v3957
      %v3959 = vrot.slane %v3952, %v3958
      %v3961 = vadd.f32 %v3868, %v3959
      %v3962 = vxor.u32 %v3961, 2147483648
      %v3963 = vmul.f32 %v3962, 1.442695
      %v3964 = vpow.pop %v3963
      %v3965 = vadd.f32 %v3964, 1.0
      %v3966 = vrcp.pop %v3965
      %v3967 = vmul.f32 1.0, %v3966
      %3969 = vrot.lane.b32.xlu0 %v3961, 64
      %v3970 = vpop.permute.xlu0 %3969
      %v3971 = vrot.slane %v3970, 1
      %v3973 = vtanh.pop %v3971
      %v3974 = vmul.f32 %v3967, %v3679
      %v3975 = vmul.f32 %v3967, %v3973
      %3977 = vrot.lane.b32.xlu0 %v3975, 64
      %v3978 = vpop.permute.xlu0 %3977
      %v3980 = vadd.f32 %v3974, %v3978
      %v3981 = vtanh.pop %v3980
      %v3983 = vrot.slane %v3967, 1
      %3986 = vrot.lane.b32.xlu0 %v3981, 64
      %v3987 = vpop.permute.xlu0 %3986
      %v3989 = vmul.f32 %v3983, %v3987
      %3990 = vmatprep.subr.mxu0 0.0
      %3991 = vmatpush1.msra.mxu0 0.0
      %3992 = vmatprep.subr.mxu0 0.0
      %3993 = vmatpush1.msra.mxu0 0.0
      %3994 = vmatprep.subr.mxu0 0.0
      %3995 = vmatpush1.msra.mxu0 0.0
      %3996 = vmatprep.subr.mxu0 0.0
      %3997 = vmatpush1.msra.mxu0 0.0
      %3998 = vmatprep.subr.mxu0 0.0
      %3999 = vmatpush1.msra.mxu0 0.0
      %4000 = vmatprep.subr.mxu0 0.0
      %4001 = vmatpush1.msra.mxu0 0.0
      %4002 = vmatprep.subr.mxu0 0.0
      %4003 = vmatpush1.msra.mxu0 0.0
      %4004 = vmatprep.subr.mxu0 0.0
      %4005 = vmatpush1.msra.mxu0 0.0
      %4006 = vmatprep.subr.mxu0 %v2996
      %4007 = vmatpush1.msra.mxu0 %v2995
      %4008 = vmatprep.subr.mxu0 %v2994
      %4009 = vmatpush1.msra.mxu0 %v2993
      %4010 = vmatprep.subr.mxu0 %v2992
      %4011 = vmatpush1.msra.mxu0 %v2991
      %4012 = vmatprep.subr.mxu0 %v2990
      %4013 = vmatpush1.msra.mxu0 %v2989
      %4014 = vmatprep.subr.mxu0 %v2988
      %4015 = vmatpush1.msra.mxu0 %v2987
      %4016 = vmatprep.subr.mxu0 %v2986
      %4017 = vmatpush1.msra.mxu0 %v2985
      %4018 = vmatprep.subr.mxu0 %v2984
      %4019 = vmatpush1.msra.mxu0 %v2983
      %4020 = vmatprep.subr.mxu0 %v2982
      %4021 = vmatpush1.msra.mxu0 %v2981
      %4022 = vmatprep.subr.mxu0 0.0
      %4023 = vmatpush2.msra.mxu0 0.0
      %4024 = vmatprep.subr.mxu0 0.0
      %4025 = vmatpush2.msra.mxu0 0.0
      %4026 = vmatprep.subr.mxu0 0.0
      %4027 = vmatpush2.msra.mxu0 0.0
      %4028 = vmatprep.subr.mxu0 0.0
      %4029 = vmatpush2.msra.mxu0 0.0
      %4030 = vmatprep.subr.mxu0 0.0
      %4031 = vmatpush2.msra.mxu0 0.0
      %4032 = vmatprep.subr.mxu0 0.0
      %4033 = vmatpush2.msra.mxu0 0.0
      %4034 = vmatprep.subr.mxu0 0.0
      %4035 = vmatpush2.msra.mxu0 0.0
      %4036 = vmatprep.subr.mxu0 0.0
      %4037 = vmatpush2.msra.mxu0 0.0
      %4038 = vmatprep.subr.mxu0 0.0
      %4039 = vmatpush2.msra.mxu0 0.0
      %4040 = vmatprep.subr.mxu0 0.0
      %4041 = vmatpush2.msra.mxu0 0.0
      %4042 = vmatprep.subr.mxu0 0.0
      %4043 = vmatpush2.msra.mxu0 0.0
      %4044 = vmatprep.subr.mxu0 0.0
      %4045 = vmatpush2.msra.mxu0 0.0
      %4046 = vmatprep.subr.mxu0 0.0
      %4047 = vmatpush2.msra.mxu0 0.0
      %4048 = vmatprep.subr.mxu0 0.0
      %4049 = vmatpush2.msra.mxu0 0.0
      %4050 = vmatprep.subr.mxu0 0.0
      %4051 = vmatpush2.msra.mxu0 0.0
      %4052 = vmatprep.subr.mxu0 0.0
      %4053 = vmatpush2.msra.mxu0 0.0
      %4054 = vmatprep.mubr.f32.mxu0 0.0
      %4055 = vmatmul.mubr.f32.gmra.mxu0 %v3870
      %v4056 = vpop.f32.mrf.mxu0
      %v4057 = vadd.f32 %v3155, %v4056
      %v4058 = vpop.f32.mrf.mxu0
      %v4059 = vadd.f32 %v3159, %v4058
      %4060 = vdwg.mxu0
      %v4062 = vsel %vm1612, %v3865, 0
      %4064 = vmatprep.subr.mxu0 0.0
      %4065 = vmatpush1.msra.mxu0 0.0
      %4066 = vmatprep.subr.mxu0 0.0
      %4067 = vmatpush1.msra.mxu0 0.0
      %4068 = vmatprep.subr.mxu0 0.0
      %4069 = vmatpush1.msra.mxu0 0.0
      %4070 = vmatprep.subr.mxu0 0.0
      %4071 = vmatpush1.msra.mxu0 0.0
      %4072 = vmatprep.subr.mxu0 0.0
      %4073 = vmatpush1.msra.mxu0 0.0
      %4074 = vmatprep.subr.mxu0 0.0
      %4075 = vmatpush1.msra.mxu0 0.0
      %4076 = vmatprep.subr.mxu0 0.0
      %4077 = vmatpush1.msra.mxu0 0.0
      %4078 = vmatprep.subr.mxu0 0.0
      %4079 = vmatpush1.msra.mxu0 0.0
      %4080 = vmatprep.subr.mxu0 %v2979
      %4081 = vmatpush1.msra.mxu0 %v2978
      %4082 = vmatprep.subr.mxu0 %v2977
      %4083 = vmatpush1.msra.mxu0 %v2976
      %4084 = vmatprep.subr.mxu0 %v2975
      %4085 = vmatpush1.msra.mxu0 %v2974
      %4086 = vmatprep.subr.mxu0 %v2973
      %4087 = vmatpush1.msra.mxu0 %v2972
      %4088 = vmatprep.subr.mxu0 %v2971
      %4089 = vmatpush1.msra.mxu0 %v2970
      %4090 = vmatprep.subr.mxu0 %v2969
      %4091 = vmatpush1.msra.mxu0 %v2968
      %4092 = vmatprep.subr.mxu0 %v2967
      %4093 = vmatpush1.msra.mxu0 %v2966
      %4094 = vmatprep.subr.mxu0 %v2965
      %4095 = vmatpush1.msra.mxu0 %v2964
      %4096 = vmatprep.subr.mxu0 0.0
      %4097 = vmatpush2.msra.mxu0 0.0
      %4098 = vmatprep.subr.mxu0 0.0
      %4099 = vmatpush2.msra.mxu0 0.0
      %4100 = vmatprep.subr.mxu0 0.0
      %4101 = vmatpush2.msra.mxu0 0.0
      %4102 = vmatprep.subr.mxu0 0.0
      %4103 = vmatpush2.msra.mxu0 0.0
      %4104 = vmatprep.subr.mxu0 0.0
      %4105 = vmatpush2.msra.mxu0 0.0
      %4106 = vmatprep.subr.mxu0 0.0
      %4107 = vmatpush2.msra.mxu0 0.0
      %4108 = vmatprep.subr.mxu0 0.0
      %4109 = vmatpush2.msra.mxu0 0.0
      %4110 = vmatprep.subr.mxu0 0.0
      %4111 = vmatpush2.msra.mxu0 0.0
      %4112 = vmatprep.subr.mxu0 0.0
      %4113 = vmatpush2.msra.mxu0 0.0
      %4114 = vmatprep.subr.mxu0 0.0
      %4115 = vmatpush2.msra.mxu0 0.0
      %4116 = vmatprep.subr.mxu0 0.0
      %4117 = vmatpush2.msra.mxu0 0.0
      %4118 = vmatprep.subr.mxu0 0.0
      %4119 = vmatpush2.msra.mxu0 0.0
      %4120 = vmatprep.subr.mxu0 0.0
      %4121 = vmatpush2.msra.mxu0 0.0
      %4122 = vmatprep.subr.mxu0 0.0
      %4123 = vmatpush2.msra.mxu0 0.0
      %4124 = vmatprep.subr.mxu0 0.0
      %4125 = vmatpush2.msra.mxu0 0.0
      %4126 = vmatprep.subr.mxu0 0.0
      %4127 = vmatpush2.msra.mxu0 0.0
      %4128 = vmatprep.mubr.f32.mxu0 0.0
      %4129 = vmatmul.mubr.f32.gmra.mxu0 %v4062
      %v4130 = vpop.f32.mrf.mxu0
      %v4131 = vadd.f32 0.0, %v4130
      %v4132 = vpop.f32.mrf.mxu0
      %v4133 = vadd.f32 0.0, %v4132
      %4134 = vdwg.mxu0
      %v4135 = vadd.f32 %v4057, %v4131
      %v4136 = vadd.f32 %v4059, %v4133
      %v4137 = vxor.u32 %v4135, 2147483648
      %v4138 = vxor.u32 %v4136, 2147483648
      %v4139 = vmul.f32 %v4137, 1.442695
      %v4140 = vpow.pop %v4139
      %v4141 = vmul.f32 %v4138, 1.442695
      %v4142 = vpow.pop %v4141
      %v4143 = vadd.f32 %v4140, 1.0
      %v4144 = vadd.f32 %v4142, 1.0
      %v4145 = vrcp.pop %v4143
      %v4146 = vmul.f32 1.0, %v4145
      %v4147 = vrcp.pop %v4144
      %v4148 = vmul.f32 1.0, %v4147
      %v4149 = vtanh.pop %v4136
      %v4150 = vmul.f32 %v4146, %v3859
      %4152 = vrot.lane.b32.xlu0 %v4149, 64
      %v4153 = vpop.permute.xlu0 %4152
      %v4155 = vmul.f32 %v4146, %v4153
      %4157 = vrot.lane.b32.xlu0 %v4155, 64
      %v4158 = vpop.permute.xlu0 %4157
      %v4160 = vadd.f32 %v4150, %v4158
      %v4161 = vtanh.pop %v4160
      %4163 = vrot.lane.b32.xlu0 %v4161, 64
      %v4164 = vpop.permute.xlu0 %4163
      %v4166 = vmul.f32 %v4148, %v4164
      %4167 = vst.msk [vmem:[#allocation3 + $0x3] sm:$0x1] %vm3263, %v4166
      %s4168 = scalar_lea.vmem [#allocation2], 5
      %v4169 = vld [vmem:[%s4168] ss:$8 sm:$0x3]
      %v4171 = vsel %vm1612, %v3989, 0
      %4173 = vmatprep.subr.mxu0 0.0
      %4174 = vmatpush1.msra.mxu0 0.0
      %4175 = vmatprep.subr.mxu0 0.0
      %4176 = vmatpush1.msra.mxu0 0.0
      %4177 = vmatprep.subr.mxu0 0.0
      %4178 = vmatpush1.msra.mxu0 0.0
      %4179 = vmatprep.subr.mxu0 0.0
      %4180 = vmatpush1.msra.mxu0 0.0
      %4181 = vmatprep.subr.mxu0 0.0
      %4182 = vmatpush1.msra.mxu0 0.0
      %4183 = vmatprep.subr.mxu0 0.0
      %4184 = vmatpush1.msra.mxu0 0.0
      %4185 = vmatprep.subr.mxu0 0.0
      %4186 = vmatpush1.msra.mxu0 0.0
      %4187 = vmatprep.subr.mxu0 0.0
      %4188 = vmatpush1.msra.mxu0 0.0
      %4189 = vmatprep.subr.mxu0 %v2962
      %4190 = vmatpush1.msra.mxu0 %v2961
      %4191 = vmatprep.subr.mxu0 %v2960
      %4192 = vmatpush1.msra.mxu0 %v2959
      %4193 = vmatprep.subr.mxu0 %v2958
      %4194 = vmatpush1.msra.mxu0 %v2957
      %4195 = vmatprep.subr.mxu0 %v2956
      %4196 = vmatpush1.msra.mxu0 %v2955
      %4197 = vmatprep.subr.mxu0 %v2954
      %4198 = vmatpush1.msra.mxu0 %v2953
      %4199 = vmatprep.subr.mxu0 %v2952
      %4200 = vmatpush1.msra.mxu0 %v2951
      %4201 = vmatprep.subr.mxu0 %v2950
      %4202 = vmatpush1.msra.mxu0 %v2949
      %4203 = vmatprep.subr.mxu0 %v2948
      %4204 = vmatpush1.msra.mxu0 %v2947
      %4205 = vmatprep.subr.mxu0 0.0
      %4206 = vmatpush2.msra.mxu0 0.0
      %4207 = vmatprep.subr.mxu0 0.0
      %4208 = vmatpush2.msra.mxu0 0.0
      %4209 = vmatprep.subr.mxu0 0.0
      %4210 = vmatpush2.msra.mxu0 0.0
      %4211 = vmatprep.subr.mxu0 0.0
      %4212 = vmatpush2.msra.mxu0 0.0
      %4213 = vmatprep.subr.mxu0 0.0
      %4214 = vmatpush2.msra.mxu0 0.0
      %4215 = vmatprep.subr.mxu0 0.0
      %4216 = vmatpush2.msra.mxu0 0.0
      %4217 = vmatprep.subr.mxu0 0.0
      %4218 = vmatpush2.msra.mxu0 0.0
      %4219 = vmatprep.subr.mxu0 0.0
      %4220 = vmatpush2.msra.mxu0 0.0
      %4221 = vmatprep.subr.mxu0 0.0
      %4222 = vmatpush2.msra.mxu0 0.0
      %4223 = vmatprep.subr.mxu0 0.0
      %4224 = vmatpush2.msra.mxu0 0.0
      %4225 = vmatprep.subr.mxu0 0.0
      %4226 = vmatpush2.msra.mxu0 0.0
      %4227 = vmatprep.subr.mxu0 0.0
      %4228 = vmatpush2.msra.mxu0 0.0
      %4229 = vmatprep.subr.mxu0 0.0
      %4230 = vmatpush2.msra.mxu0 0.0
      %4231 = vmatprep.subr.mxu0 0.0
      %4232 = vmatpush2.msra.mxu0 0.0
      %4233 = vmatprep.subr.mxu0 0.0
      %4234 = vmatpush2.msra.mxu0 0.0
      %4235 = vmatprep.subr.mxu0 0.0
      %4236 = vmatpush2.msra.mxu0 0.0
      %4237 = vmatprep.mubr.f32.mxu0 0.0
      %4238 = vmatmul.mubr.f32.gmra.mxu0 %v4171
      %v4239 = vpop.f32.mrf.mxu0
      %v4240 = vadd.f32 0.0, %v4239
      %v4241 = vpop.f32.mrf.mxu0
      %v4242 = vadd.f32 0.0, %v4241
      %4243 = vdwg.mxu0
      %v4246 = vcombine.low %v4240, %v4242
      %v4248 = vunpack.c.l.s4 1966171168
      %v4249 = vunpack.c.0.s8 %v4248
      %v4250 = vlaneseq
      %v4251 = vshrl.u32 %v4250, 7
      %v4252 = vsub.s32 %v4249, %v4251
      %v4253 = vrot.slane %v4246, %v4252
      %v4255 = vunpack.c.l.s4 1966171168
      %v4256 = vunpack.c.0.s8 %v4255
      %v4257 = vlaneseq
      %v4258 = vshrl.u32 %v4257, 7
      %v4259 = vsub.s32 %v4256, %v4258
      %v4260 = vrot.slane %v4253, %v4259
      %v4262 = vadd.f32 %v4169, %v4260
      %v4263 = vxor.u32 %v4262, 2147483648
      %v4264 = vmul.f32 %v4263, 1.442695
      %v4265 = vpow.pop %v4264
      %v4266 = vadd.f32 %v4265, 1.0
      %v4267 = vrcp.pop %v4266
      %v4268 = vmul.f32 1.0, %v4267
      %4270 = vrot.lane.b32.xlu0 %v4262, 64
      %v4271 = vpop.permute.xlu0 %4270
      %v4272 = vrot.slane %v4271, 1
      %v4274 = vtanh.pop %v4272
      %v4275 = vmul.f32 %v4268, %v3980
      %v4276 = vmul.f32 %v4268, %v4274
      %4278 = vrot.lane.b32.xlu0 %v4276, 64
      %v4279 = vpop.permute.xlu0 %4278
      %v4281 = vadd.f32 %v4275, %v4279
      %v4282 = vtanh.pop %v4281
      %v4284 = vrot.slane %v4268, 1
      %4287 = vrot.lane.b32.xlu0 %v4282, 64
      %v4288 = vpop.permute.xlu0 %4287
      %v4290 = vmul.f32 %v4284, %v4288
      %4291 = vmatprep.subr.mxu0 0.0
      %4292 = vmatpush1.msra.mxu0 0.0
      %4293 = vmatprep.subr.mxu0 0.0
      %4294 = vmatpush1.msra.mxu0 0.0
      %4295 = vmatprep.subr.mxu0 0.0
      %4296 = vmatpush1.msra.mxu0 0.0
      %4297 = vmatprep.subr.mxu0 0.0
      %4298 = vmatpush1.msra.mxu0 0.0
      %4299 = vmatprep.subr.mxu0 0.0
      %4300 = vmatpush1.msra.mxu0 0.0
      %4301 = vmatprep.subr.mxu0 0.0
      %4302 = vmatpush1.msra.mxu0 0.0
      %4303 = vmatprep.subr.mxu0 0.0
      %4304 = vmatpush1.msra.mxu0 0.0
      %4305 = vmatprep.subr.mxu0 0.0
      %4306 = vmatpush1.msra.mxu0 0.0
      %4307 = vmatprep.subr.mxu0 %v2996
      %4308 = vmatpush1.msra.mxu0 %v2995
      %4309 = vmatprep.subr.mxu0 %v2994
      %4310 = vmatpush1.msra.mxu0 %v2993
      %4311 = vmatprep.subr.mxu0 %v2992
      %4312 = vmatpush1.msra.mxu0 %v2991
      %4313 = vmatprep.subr.mxu0 %v2990
      %4314 = vmatpush1.msra.mxu0 %v2989
      %4315 = vmatprep.subr.mxu0 %v2988
      %4316 = vmatpush1.msra.mxu0 %v2987
      %4317 = vmatprep.subr.mxu0 %v2986
      %4318 = vmatpush1.msra.mxu0 %v2985
      %4319 = vmatprep.subr.mxu0 %v2984
      %4320 = vmatpush1.msra.mxu0 %v2983
      %4321 = vmatprep.subr.mxu0 %v2982
      %4322 = vmatpush1.msra.mxu0 %v2981
      %4323 = vmatprep.subr.mxu0 0.0
      %4324 = vmatpush2.msra.mxu0 0.0
      %4325 = vmatprep.subr.mxu0 0.0
      %4326 = vmatpush2.msra.mxu0 0.0
      %4327 = vmatprep.subr.mxu0 0.0
      %4328 = vmatpush2.msra.mxu0 0.0
      %4329 = vmatprep.subr.mxu0 0.0
      %4330 = vmatpush2.msra.mxu0 0.0
      %4331 = vmatprep.subr.mxu0 0.0
      %4332 = vmatpush2.msra.mxu0 0.0
      %4333 = vmatprep.subr.mxu0 0.0
      %4334 = vmatpush2.msra.mxu0 0.0
      %4335 = vmatprep.subr.mxu0 0.0
      %4336 = vmatpush2.msra.mxu0 0.0
      %4337 = vmatprep.subr.mxu0 0.0
      %4338 = vmatpush2.msra.mxu0 0.0
      %4339 = vmatprep.subr.mxu0 0.0
      %4340 = vmatpush2.msra.mxu0 0.0
      %4341 = vmatprep.subr.mxu0 0.0
      %4342 = vmatpush2.msra.mxu0 0.0
      %4343 = vmatprep.subr.mxu0 0.0
      %4344 = vmatpush2.msra.mxu0 0.0
      %4345 = vmatprep.subr.mxu0 0.0
      %4346 = vmatpush2.msra.mxu0 0.0
      %4347 = vmatprep.subr.mxu0 0.0
      %4348 = vmatpush2.msra.mxu0 0.0
      %4349 = vmatprep.subr.mxu0 0.0
      %4350 = vmatpush2.msra.mxu0 0.0
      %4351 = vmatprep.subr.mxu0 0.0
      %4352 = vmatpush2.msra.mxu0 0.0
      %4353 = vmatprep.subr.mxu0 0.0
      %4354 = vmatpush2.msra.mxu0 0.0
      %4355 = vmatprep.mubr.f32.mxu0 0.0
      %4356 = vmatmul.mubr.f32.gmra.mxu0 %v4171
      %v4357 = vpop.f32.mrf.mxu0
      %v4358 = vadd.f32 %v3155, %v4357
      %v4359 = vpop.f32.mrf.mxu0
      %v4360 = vadd.f32 %v3159, %v4359
      %4361 = vdwg.mxu0
      %v4363 = vsel %vm1612, %v4166, 0
      %4365 = vmatprep.subr.mxu0 0.0
      %4366 = vmatpush1.msra.mxu0 0.0
      %4367 = vmatprep.subr.mxu0 0.0
      %4368 = vmatpush1.msra.mxu0 0.0
      %4369 = vmatprep.subr.mxu0 0.0
      %4370 = vmatpush1.msra.mxu0 0.0
      %4371 = vmatprep.subr.mxu0 0.0
      %4372 = vmatpush1.msra.mxu0 0.0
      %4373 = vmatprep.subr.mxu0 0.0
      %4374 = vmatpush1.msra.mxu0 0.0
      %4375 = vmatprep.subr.mxu0 0.0
      %4376 = vmatpush1.msra.mxu0 0.0
      %4377 = vmatprep.subr.mxu0 0.0
      %4378 = vmatpush1.msra.mxu0 0.0
      %4379 = vmatprep.subr.mxu0 0.0
      %4380 = vmatpush1.msra.mxu0 0.0
      %4381 = vmatprep.subr.mxu0 %v2979
      %4382 = vmatpush1.msra.mxu0 %v2978
      %4383 = vmatprep.subr.mxu0 %v2977
      %4384 = vmatpush1.msra.mxu0 %v2976
      %4385 = vmatprep.subr.mxu0 %v2975
      %4386 = vmatpush1.msra.mxu0 %v2974
      %4387 = vmatprep.subr.mxu0 %v2973
      %4388 = vmatpush1.msra.mxu0 %v2972
      %4389 = vmatprep.subr.mxu0 %v2971
      %4390 = vmatpush1.msra.mxu0 %v2970
      %4391 = vmatprep.subr.mxu0 %v2969
      %4392 = vmatpush1.msra.mxu0 %v2968
      %4393 = vmatprep.subr.mxu0 %v2967
      %4394 = vmatpush1.msra.mxu0 %v2966
      %4395 = vmatprep.subr.mxu0 %v2965
      %4396 = vmatpush1.msra.mxu0 %v2964
      %4397 = vmatprep.subr.mxu0 0.0
      %4398 = vmatpush2.msra.mxu0 0.0
      %4399 = vmatprep.subr.mxu0 0.0
      %4400 = vmatpush2.msra.mxu0 0.0
      %4401 = vmatprep.subr.mxu0 0.0
      %4402 = vmatpush2.msra.mxu0 0.0
      %4403 = vmatprep.subr.mxu0 0.0
      %4404 = vmatpush2.msra.mxu0 0.0
      %4405 = vmatprep.subr.mxu0 0.0
      %4406 = vmatpush2.msra.mxu0 0.0
      %4407 = vmatprep.subr.mxu0 0.0
      %4408 = vmatpush2.msra.mxu0 0.0
      %4409 = vmatprep.subr.mxu0 0.0
      %4410 = vmatpush2.msra.mxu0 0.0
      %4411 = vmatprep.subr.mxu0 0.0
      %4412 = vmatpush2.msra.mxu0 0.0
      %4413 = vmatprep.subr.mxu0 0.0
      %4414 = vmatpush2.msra.mxu0 0.0
      %4415 = vmatprep.subr.mxu0 0.0
      %4416 = vmatpush2.msra.mxu0 0.0
      %4417 = vmatprep.subr.mxu0 0.0
      %4418 = vmatpush2.msra.mxu0 0.0
      %4419 = vmatprep.subr.mxu0 0.0
      %4420 = vmatpush2.msra.mxu0 0.0
      %4421 = vmatprep.subr.mxu0 0.0
      %4422 = vmatpush2.msra.mxu0 0.0
      %4423 = vmatprep.subr.mxu0 0.0
      %4424 = vmatpush2.msra.mxu0 0.0
      %4425 = vmatprep.subr.mxu0 0.0
      %4426 = vmatpush2.msra.mxu0 0.0
      %4427 = vmatprep.subr.mxu0 0.0
      %4428 = vmatpush2.msra.mxu0 0.0
      %4429 = vmatprep.mubr.f32.mxu0 0.0
      %4430 = vmatmul.mubr.f32.gmra.mxu0 %v4363
      %v4431 = vpop.f32.mrf.mxu0
      %v4432 = vadd.f32 0.0, %v4431
      %v4433 = vpop.f32.mrf.mxu0
      %v4434 = vadd.f32 0.0, %v4433
      %4435 = vdwg.mxu0
      %v4436 = vadd.f32 %v4358, %v4432
      %v4437 = vadd.f32 %v4360, %v4434
      %v4438 = vxor.u32 %v4436, 2147483648
      %v4439 = vxor.u32 %v4437, 2147483648
      %v4440 = vmul.f32 %v4438, 1.442695
      %v4441 = vpow.pop %v4440
      %v4442 = vmul.f32 %v4439, 1.442695
      %v4443 = vpow.pop %v4442
      %v4444 = vadd.f32 %v4441, 1.0
      %v4445 = vadd.f32 %v4443, 1.0
      %v4446 = vrcp.pop %v4444
      %v4447 = vmul.f32 1.0, %v4446
      %v4448 = vrcp.pop %v4445
      %v4449 = vmul.f32 1.0, %v4448
      %v4450 = vtanh.pop %v4437
      %v4451 = vmul.f32 %v4447, %v4160
      %4453 = vrot.lane.b32.xlu0 %v4450, 64
      %v4454 = vpop.permute.xlu0 %4453
      %v4456 = vmul.f32 %v4447, %v4454
      %4458 = vrot.lane.b32.xlu0 %v4456, 64
      %v4459 = vpop.permute.xlu0 %4458
      %v4461 = vadd.f32 %v4451, %v4459
      %v4462 = vtanh.pop %v4461
      %4464 = vrot.lane.b32.xlu0 %v4462, 64
      %v4465 = vpop.permute.xlu0 %4464
      %v4467 = vmul.f32 %v4449, %v4465
      %4468 = vst.msk [vmem:[#allocation3 + $0x4] sm:$0x1] %vm3263, %v4467
      %s4469 = scalar_lea.vmem [#allocation2], 6
      %v4470 = vld [vmem:[%s4469] ss:$8 sm:$0x3]
      %v4472 = vsel %vm1612, %v4290, 0
      %4474 = vmatprep.subr.mxu0 0.0
      %4475 = vmatpush1.msra.mxu0 0.0
      %4476 = vmatprep.subr.mxu0 0.0
      %4477 = vmatpush1.msra.mxu0 0.0
      %4478 = vmatprep.subr.mxu0 0.0
      %4479 = vmatpush1.msra.mxu0 0.0
      %4480 = vmatprep.subr.mxu0 0.0
      %4481 = vmatpush1.msra.mxu0 0.0
      %4482 = vmatprep.subr.mxu0 0.0
      %4483 = vmatpush1.msra.mxu0 0.0
      %4484 = vmatprep.subr.mxu0 0.0
      %4485 = vmatpush1.msra.mxu0 0.0
      %4486 = vmatprep.subr.mxu0 0.0
      %4487 = vmatpush1.msra.mxu0 0.0
      %4488 = vmatprep.subr.mxu0 0.0
      %4489 = vmatpush1.msra.mxu0 0.0
      %4490 = vmatprep.subr.mxu0 %v2962
      %4491 = vmatpush1.msra.mxu0 %v2961
      %4492 = vmatprep.subr.mxu0 %v2960
      %4493 = vmatpush1.msra.mxu0 %v2959
      %4494 = vmatprep.subr.mxu0 %v2958
      %4495 = vmatpush1.msra.mxu0 %v2957
      %4496 = vmatprep.subr.mxu0 %v2956
      %4497 = vmatpush1.msra.mxu0 %v2955
      %4498 = vmatprep.subr.mxu0 %v2954
      %4499 = vmatpush1.msra.mxu0 %v2953
      %4500 = vmatprep.subr.mxu0 %v2952
      %4501 = vmatpush1.msra.mxu0 %v2951
      %4502 = vmatprep.subr.mxu0 %v2950
      %4503 = vmatpush1.msra.mxu0 %v2949
      %4504 = vmatprep.subr.mxu0 %v2948
      %4505 = vmatpush1.msra.mxu0 %v2947
      %4506 = vmatprep.subr.mxu0 0.0
      %4507 = vmatpush2.msra.mxu0 0.0
      %4508 = vmatprep.subr.mxu0 0.0
      %4509 = vmatpush2.msra.mxu0 0.0
      %4510 = vmatprep.subr.mxu0 0.0
      %4511 = vmatpush2.msra.mxu0 0.0
      %4512 = vmatprep.subr.mxu0 0.0
      %4513 = vmatpush2.msra.mxu0 0.0
      %4514 = vmatprep.subr.mxu0 0.0
      %4515 = vmatpush2.msra.mxu0 0.0
      %4516 = vmatprep.subr.mxu0 0.0
      %4517 = vmatpush2.msra.mxu0 0.0
      %4518 = vmatprep.subr.mxu0 0.0
      %4519 = vmatpush2.msra.mxu0 0.0
      %4520 = vmatprep.subr.mxu0 0.0
      %4521 = vmatpush2.msra.mxu0 0.0
      %4522 = vmatprep.subr.mxu0 0.0
      %4523 = vmatpush2.msra.mxu0 0.0
      %4524 = vmatprep.subr.mxu0 0.0
      %4525 = vmatpush2.msra.mxu0 0.0
      %4526 = vmatprep.subr.mxu0 0.0
      %4527 = vmatpush2.msra.mxu0 0.0
      %4528 = vmatprep.subr.mxu0 0.0
      %4529 = vmatpush2.msra.mxu0 0.0
      %4530 = vmatprep.subr.mxu0 0.0
      %4531 = vmatpush2.msra.mxu0 0.0
      %4532 = vmatprep.subr.mxu0 0.0
      %4533 = vmatpush2.msra.mxu0 0.0
      %4534 = vmatprep.subr.mxu0 0.0
      %4535 = vmatpush2.msra.mxu0 0.0
      %4536 = vmatprep.subr.mxu0 0.0
      %4537 = vmatpush2.msra.mxu0 0.0
      %4538 = vmatprep.mubr.f32.mxu0 0.0
      %4539 = vmatmul.mubr.f32.gmra.mxu0 %v4472
      %v4540 = vpop.f32.mrf.mxu0
      %v4541 = vadd.f32 0.0, %v4540
      %v4542 = vpop.f32.mrf.mxu0
      %v4543 = vadd.f32 0.0, %v4542
      %4544 = vdwg.mxu0
      %v4547 = vcombine.low %v4541, %v4543
      %v4549 = vunpack.c.l.s4 1966171168
      %v4550 = vunpack.c.0.s8 %v4549
      %v4551 = vlaneseq
      %v4552 = vshrl.u32 %v4551, 7
      %v4553 = vsub.s32 %v4550, %v4552
      %v4554 = vrot.slane %v4547, %v4553
      %v4556 = vunpack.c.l.s4 1966171168
      %v4557 = vunpack.c.0.s8 %v4556
      %v4558 = vlaneseq
      %v4559 = vshrl.u32 %v4558, 7
      %v4560 = vsub.s32 %v4557, %v4559
      %v4561 = vrot.slane %v4554, %v4560
      %v4563 = vadd.f32 %v4470, %v4561
      %v4564 = vxor.u32 %v4563, 2147483648
      %v4565 = vmul.f32 %v4564, 1.442695
      %v4566 = vpow.pop %v4565
      %v4567 = vadd.f32 %v4566, 1.0
      %v4568 = vrcp.pop %v4567
      %v4569 = vmul.f32 1.0, %v4568
      %4571 = vrot.lane.b32.xlu0 %v4563, 64
      %v4572 = vpop.permute.xlu0 %4571
      %v4573 = vrot.slane %v4572, 1
      %v4575 = vtanh.pop %v4573
      %v4576 = vmul.f32 %v4569, %v4281
      %v4577 = vmul.f32 %v4569, %v4575
      %4579 = vrot.lane.b32.xlu0 %v4577, 64
      %v4580 = vpop.permute.xlu0 %4579
      %v4582 = vadd.f32 %v4576, %v4580
      %v4583 = vtanh.pop %v4582
      %v4585 = vrot.slane %v4569, 1
      %4588 = vrot.lane.b32.xlu0 %v4583, 64
      %v4589 = vpop.permute.xlu0 %4588
      %v4591 = vmul.f32 %v4585, %v4589
      %4592 = vmatprep.subr.mxu0 0.0
      %4593 = vmatpush1.msra.mxu0 0.0
      %4594 = vmatprep.subr.mxu0 0.0
      %4595 = vmatpush1.msra.mxu0 0.0
      %4596 = vmatprep.subr.mxu0 0.0
      %4597 = vmatpush1.msra.mxu0 0.0
      %4598 = vmatprep.subr.mxu0 0.0
      %4599 = vmatpush1.msra.mxu0 0.0
      %4600 = vmatprep.subr.mxu0 0.0
      %4601 = vmatpush1.msra.mxu0 0.0
      %4602 = vmatprep.subr.mxu0 0.0
      %4603 = vmatpush1.msra.mxu0 0.0
      %4604 = vmatprep.subr.mxu0 0.0
      %4605 = vmatpush1.msra.mxu0 0.0
      %4606 = vmatprep.subr.mxu0 0.0
      %4607 = vmatpush1.msra.mxu0 0.0
      %4608 = vmatprep.subr.mxu0 %v2996
      %4609 = vmatpush1.msra.mxu0 %v2995
      %4610 = vmatprep.subr.mxu0 %v2994
      %4611 = vmatpush1.msra.mxu0 %v2993
      %4612 = vmatprep.subr.mxu0 %v2992
      %4613 = vmatpush1.msra.mxu0 %v2991
      %4614 = vmatprep.subr.mxu0 %v2990
      %4615 = vmatpush1.msra.mxu0 %v2989
      %4616 = vmatprep.subr.mxu0 %v2988
      %4617 = vmatpush1.msra.mxu0 %v2987
      %4618 = vmatprep.subr.mxu0 %v2986
      %4619 = vmatpush1.msra.mxu0 %v2985
      %4620 = vmatprep.subr.mxu0 %v2984
      %4621 = vmatpush1.msra.mxu0 %v2983
      %4622 = vmatprep.subr.mxu0 %v2982
      %4623 = vmatpush1.msra.mxu0 %v2981
      %4624 = vmatprep.subr.mxu0 0.0
      %4625 = vmatpush2.msra.mxu0 0.0
      %4626 = vmatprep.subr.mxu0 0.0
      %4627 = vmatpush2.msra.mxu0 0.0
      %4628 = vmatprep.subr.mxu0 0.0
      %4629 = vmatpush2.msra.mxu0 0.0
      %4630 = vmatprep.subr.mxu0 0.0
      %4631 = vmatpush2.msra.mxu0 0.0
      %4632 = vmatprep.subr.mxu0 0.0
      %4633 = vmatpush2.msra.mxu0 0.0
      %4634 = vmatprep.subr.mxu0 0.0
      %4635 = vmatpush2.msra.mxu0 0.0
      %4636 = vmatprep.subr.mxu0 0.0
      %4637 = vmatpush2.msra.mxu0 0.0
      %4638 = vmatprep.subr.mxu0 0.0
      %4639 = vmatpush2.msra.mxu0 0.0
      %4640 = vmatprep.subr.mxu0 0.0
      %4641 = vmatpush2.msra.mxu0 0.0
      %4642 = vmatprep.subr.mxu0 0.0
      %4643 = vmatpush2.msra.mxu0 0.0
      %4644 = vmatprep.subr.mxu0 0.0
      %4645 = vmatpush2.msra.mxu0 0.0
      %4646 = vmatprep.subr.mxu0 0.0
      %4647 = vmatpush2.msra.mxu0 0.0
      %4648 = vmatprep.subr.mxu0 0.0
      %4649 = vmatpush2.msra.mxu0 0.0
      %4650 = vmatprep.subr.mxu0 0.0
      %4651 = vmatpush2.msra.mxu0 0.0
      %4652 = vmatprep.subr.mxu0 0.0
      %4653 = vmatpush2.msra.mxu0 0.0
      %4654 = vmatprep.subr.mxu0 0.0
      %4655 = vmatpush2.msra.mxu0 0.0
      %4656 = vmatprep.mubr.f32.mxu0 0.0
      %4657 = vmatmul.mubr.f32.gmra.mxu0 %v4472
      %v4658 = vpop.f32.mrf.mxu0
      %v4659 = vadd.f32 %v3155, %v4658
      %v4660 = vpop.f32.mrf.mxu0
      %v4661 = vadd.f32 %v3159, %v4660
      %4662 = vdwg.mxu0
      %v4664 = vsel %vm1612, %v4467, 0
      %4666 = vmatprep.subr.mxu0 0.0
      %4667 = vmatpush1.msra.mxu0 0.0
      %4668 = vmatprep.subr.mxu0 0.0
      %4669 = vmatpush1.msra.mxu0 0.0
      %4670 = vmatprep.subr.mxu0 0.0
      %4671 = vmatpush1.msra.mxu0 0.0
      %4672 = vmatprep.subr.mxu0 0.0
      %4673 = vmatpush1.msra.mxu0 0.0
      %4674 = vmatprep.subr.mxu0 0.0
      %4675 = vmatpush1.msra.mxu0 0.0
      %4676 = vmatprep.subr.mxu0 0.0
      %4677 = vmatpush1.msra.mxu0 0.0
      %4678 = vmatprep.subr.mxu0 0.0
      %4679 = vmatpush1.msra.mxu0 0.0
      %4680 = vmatprep.subr.mxu0 0.0
      %4681 = vmatpush1.msra.mxu0 0.0
      %4682 = vmatprep.subr.mxu0 %v2979
      %4683 = vmatpush1.msra.mxu0 %v2978
      %4684 = vmatprep.subr.mxu0 %v2977
      %4685 = vmatpush1.msra.mxu0 %v2976
      %4686 = vmatprep.subr.mxu0 %v2975
      %4687 = vmatpush1.msra.mxu0 %v2974
      %4688 = vmatprep.subr.mxu0 %v2973
      %4689 = vmatpush1.msra.mxu0 %v2972
      %4690 = vmatprep.subr.mxu0 %v2971
      %4691 = vmatpush1.msra.mxu0 %v2970
      %4692 = vmatprep.subr.mxu0 %v2969
      %4693 = vmatpush1.msra.mxu0 %v2968
      %4694 = vmatprep.subr.mxu0 %v2967
      %4695 = vmatpush1.msra.mxu0 %v2966
      %4696 = vmatprep.subr.mxu0 %v2965
      %4697 = vmatpush1.msra.mxu0 %v2964
      %4698 = vmatprep.subr.mxu0 0.0
      %4699 = vmatpush2.msra.mxu0 0.0
      %4700 = vmatprep.subr.mxu0 0.0
      %4701 = vmatpush2.msra.mxu0 0.0
      %4702 = vmatprep.subr.mxu0 0.0
      %4703 = vmatpush2.msra.mxu0 0.0
      %4704 = vmatprep.subr.mxu0 0.0
      %4705 = vmatpush2.msra.mxu0 0.0
      %4706 = vmatprep.subr.mxu0 0.0
      %4707 = vmatpush2.msra.mxu0 0.0
      %4708 = vmatprep.subr.mxu0 0.0
      %4709 = vmatpush2.msra.mxu0 0.0
      %4710 = vmatprep.subr.mxu0 0.0
      %4711 = vmatpush2.msra.mxu0 0.0
      %4712 = vmatprep.subr.mxu0 0.0
      %4713 = vmatpush2.msra.mxu0 0.0
      %4714 = vmatprep.subr.mxu0 0.0
      %4715 = vmatpush2.msra.mxu0 0.0
      %4716 = vmatprep.subr.mxu0 0.0
      %4717 = vmatpush2.msra.mxu0 0.0
      %4718 = vmatprep.subr.mxu0 0.0
      %4719 = vmatpush2.msra.mxu0 0.0
      %4720 = vmatprep.subr.mxu0 0.0
      %4721 = vmatpush2.msra.mxu0 0.0
      %4722 = vmatprep.subr.mxu0 0.0
      %4723 = vmatpush2.msra.mxu0 0.0
      %4724 = vmatprep.subr.mxu0 0.0
      %4725 = vmatpush2.msra.mxu0 0.0
      %4726 = vmatprep.subr.mxu0 0.0
      %4727 = vmatpush2.msra.mxu0 0.0
      %4728 = vmatprep.subr.mxu0 0.0
      %4729 = vmatpush2.msra.mxu0 0.0
      %4730 = vmatprep.mubr.f32.mxu0 0.0
      %4731 = vmatmul.mubr.f32.gmra.mxu0 %v4664
      %v4732 = vpop.f32.mrf.mxu0
      %v4733 = vadd.f32 0.0, %v4732
      %v4734 = vpop.f32.mrf.mxu0
      %v4735 = vadd.f32 0.0, %v4734
      %4736 = vdwg.mxu0
      %v4737 = vadd.f32 %v4659, %v4733
      %v4738 = vadd.f32 %v4661, %v4735
      %v4739 = vxor.u32 %v4737, 2147483648
      %v4740 = vxor.u32 %v4738, 2147483648
      %v4741 = vmul.f32 %v4739, 1.442695
      %v4742 = vpow.pop %v4741
      %v4743 = vmul.f32 %v4740, 1.442695
      %v4744 = vpow.pop %v4743
      %v4745 = vadd.f32 %v4742, 1.0
      %v4746 = vadd.f32 %v4744, 1.0
      %v4747 = vrcp.pop %v4745
      %v4748 = vmul.f32 1.0, %v4747
      %v4749 = vrcp.pop %v4746
      %v4750 = vmul.f32 1.0, %v4749
      %v4751 = vtanh.pop %v4738
      %v4752 = vmul.f32 %v4748, %v4461
      %4754 = vrot.lane.b32.xlu0 %v4751, 64
      %v4755 = vpop.permute.xlu0 %4754
      %v4757 = vmul.f32 %v4748, %v4755
      %4759 = vrot.lane.b32.xlu0 %v4757, 64
      %v4760 = vpop.permute.xlu0 %4759
      %v4762 = vadd.f32 %v4752, %v4760
      %v4763 = vtanh.pop %v4762
      %4765 = vrot.lane.b32.xlu0 %v4763, 64
      %v4766 = vpop.permute.xlu0 %4765
      %v4768 = vmul.f32 %v4750, %v4766
      %4769 = vst.msk [vmem:[#allocation3 + $0x5] sm:$0x1] %vm3263, %v4768
      %s4770 = scalar_lea.vmem [#allocation2], 7
      %v4771 = vld [vmem:[%s4770] ss:$8 sm:$0x3]
      %v4773 = vsel %vm1612, %v4591, 0
      %4775 = vmatprep.subr.mxu0 0.0
      %4776 = vmatpush1.msra.mxu0 0.0
      %4777 = vmatprep.subr.mxu0 0.0
      %4778 = vmatpush1.msra.mxu0 0.0
      %4779 = vmatprep.subr.mxu0 0.0
      %4780 = vmatpush1.msra.mxu0 0.0
      %4781 = vmatprep.subr.mxu0 0.0
      %4782 = vmatpush1.msra.mxu0 0.0
      %4783 = vmatprep.subr.mxu0 0.0
      %4784 = vmatpush1.msra.mxu0 0.0
      %4785 = vmatprep.subr.mxu0 0.0
      %4786 = vmatpush1.msra.mxu0 0.0
      %4787 = vmatprep.subr.mxu0 0.0
      %4788 = vmatpush1.msra.mxu0 0.0
      %4789 = vmatprep.subr.mxu0 0.0
      %4790 = vmatpush1.msra.mxu0 0.0
      %4791 = vmatprep.subr.mxu0 %v2962
      %4792 = vmatpush1.msra.mxu0 %v2961
      %4793 = vmatprep.subr.mxu0 %v2960
      %4794 = vmatpush1.msra.mxu0 %v2959
      %4795 = vmatprep.subr.mxu0 %v2958
      %4796 = vmatpush1.msra.mxu0 %v2957
      %4797 = vmatprep.subr.mxu0 %v2956
      %4798 = vmatpush1.msra.mxu0 %v2955
      %4799 = vmatprep.subr.mxu0 %v2954
      %4800 = vmatpush1.msra.mxu0 %v2953
      %4801 = vmatprep.subr.mxu0 %v2952
      %4802 = vmatpush1.msra.mxu0 %v2951
      %4803 = vmatprep.subr.mxu0 %v2950
      %4804 = vmatpush1.msra.mxu0 %v2949
      %4805 = vmatprep.subr.mxu0 %v2948
      %4806 = vmatpush1.msra.mxu0 %v2947
      %4807 = vmatprep.subr.mxu0 0.0
      %4808 = vmatpush2.msra.mxu0 0.0
      %4809 = vmatprep.subr.mxu0 0.0
      %4810 = vmatpush2.msra.mxu0 0.0
      %4811 = vmatprep.subr.mxu0 0.0
      %4812 = vmatpush2.msra.mxu0 0.0
      %4813 = vmatprep.subr.mxu0 0.0
      %4814 = vmatpush2.msra.mxu0 0.0
      %4815 = vmatprep.subr.mxu0 0.0
      %4816 = vmatpush2.msra.mxu0 0.0
      %4817 = vmatprep.subr.mxu0 0.0
      %4818 = vmatpush2.msra.mxu0 0.0
      %4819 = vmatprep.subr.mxu0 0.0
      %4820 = vmatpush2.msra.mxu0 0.0
      %4821 = vmatprep.subr.mxu0 0.0
      %4822 = vmatpush2.msra.mxu0 0.0
      %4823 = vmatprep.subr.mxu0 0.0
      %4824 = vmatpush2.msra.mxu0 0.0
      %4825 = vmatprep.subr.mxu0 0.0
      %4826 = vmatpush2.msra.mxu0 0.0
      %4827 = vmatprep.subr.mxu0 0.0
      %4828 = vmatpush2.msra.mxu0 0.0
      %4829 = vmatprep.subr.mxu0 0.0
      %4830 = vmatpush2.msra.mxu0 0.0
      %4831 = vmatprep.subr.mxu0 0.0
      %4832 = vmatpush2.msra.mxu0 0.0
      %4833 = vmatprep.subr.mxu0 0.0
      %4834 = vmatpush2.msra.mxu0 0.0
      %4835 = vmatprep.subr.mxu0 0.0
      %4836 = vmatpush2.msra.mxu0 0.0
      %4837 = vmatprep.subr.mxu0 0.0
      %4838 = vmatpush2.msra.mxu0 0.0
      %4839 = vmatprep.mubr.f32.mxu0 0.0
      %4840 = vmatmul.mubr.f32.gmra.mxu0 %v4773
      %v4841 = vpop.f32.mrf.mxu0
      %v4842 = vadd.f32 0.0, %v4841
      %v4843 = vpop.f32.mrf.mxu0
      %v4844 = vadd.f32 0.0, %v4843
      %4845 = vdwg.mxu0
      %v4848 = vcombine.low %v4842, %v4844
      %v4850 = vunpack.c.l.s4 1966171168
      %v4851 = vunpack.c.0.s8 %v4850
      %v4852 = vlaneseq
      %v4853 = vshrl.u32 %v4852, 7
      %v4854 = vsub.s32 %v4851, %v4853
      %v4855 = vrot.slane %v4848, %v4854
      %v4857 = vunpack.c.l.s4 1966171168
      %v4858 = vunpack.c.0.s8 %v4857
      %v4859 = vlaneseq
      %v4860 = vshrl.u32 %v4859, 7
      %v4861 = vsub.s32 %v4858, %v4860
      %v4862 = vrot.slane %v4855, %v4861
      %v4864 = vadd.f32 %v4771, %v4862
      %v4865 = vxor.u32 %v4864, 2147483648
      %v4866 = vmul.f32 %v4865, 1.442695
      %v4867 = vpow.pop %v4866
      %v4868 = vadd.f32 %v4867, 1.0
      %v4869 = vrcp.pop %v4868
      %v4870 = vmul.f32 1.0, %v4869
      %4872 = vrot.lane.b32.xlu0 %v4864, 64
      %v4873 = vpop.permute.xlu0 %4872
      %v4874 = vrot.slane %v4873, 1
      %v4876 = vtanh.pop %v4874
      %v4877 = vmul.f32 %v4870, %v4582
      %v4878 = vmul.f32 %v4870, %v4876
      %4880 = vrot.lane.b32.xlu0 %v4878, 64
      %v4881 = vpop.permute.xlu0 %4880
      %v4883 = vadd.f32 %v4877, %v4881
      %v4884 = vtanh.pop %v4883
      %v4886 = vrot.slane %v4870, 1
      %4889 = vrot.lane.b32.xlu0 %v4884, 64
      %v4890 = vpop.permute.xlu0 %4889
      %v4892 = vmul.f32 %v4886, %v4890
      %4893 = vmatprep.subr.mxu0 0.0
      %4894 = vmatpush1.msra.mxu0 0.0
      %4895 = vmatprep.subr.mxu0 0.0
      %4896 = vmatpush1.msra.mxu0 0.0
      %4897 = vmatprep.subr.mxu0 0.0
      %4898 = vmatpush1.msra.mxu0 0.0
      %4899 = vmatprep.subr.mxu0 0.0
      %4900 = vmatpush1.msra.mxu0 0.0
      %4901 = vmatprep.subr.mxu0 0.0
      %4902 = vmatpush1.msra.mxu0 0.0
      %4903 = vmatprep.subr.mxu0 0.0
      %4904 = vmatpush1.msra.mxu0 0.0
      %4905 = vmatprep.subr.mxu0 0.0
      %4906 = vmatpush1.msra.mxu0 0.0
      %4907 = vmatprep.subr.mxu0 0.0
      %4908 = vmatpush1.msra.mxu0 0.0
      %4909 = vmatprep.subr.mxu0 %v2996
      %4910 = vmatpush1.msra.mxu0 %v2995
      %4911 = vmatprep.subr.mxu0 %v2994
      %4912 = vmatpush1.msra.mxu0 %v2993
      %4913 = vmatprep.subr.mxu0 %v2992
      %4914 = vmatpush1.msra.mxu0 %v2991
      %4915 = vmatprep.subr.mxu0 %v2990
      %4916 = vmatpush1.msra.mxu0 %v2989
      %4917 = vmatprep.subr.mxu0 %v2988
      %4918 = vmatpush1.msra.mxu0 %v2987
      %4919 = vmatprep.subr.mxu0 %v2986
      %4920 = vmatpush1.msra.mxu0 %v2985
      %4921 = vmatprep.subr.mxu0 %v2984
      %4922 = vmatpush1.msra.mxu0 %v2983
      %4923 = vmatprep.subr.mxu0 %v2982
      %4924 = vmatpush1.msra.mxu0 %v2981
      %4925 = vmatprep.subr.mxu0 0.0
      %4926 = vmatpush2.msra.mxu0 0.0
      %4927 = vmatprep.subr.mxu0 0.0
      %4928 = vmatpush2.msra.mxu0 0.0
      %4929 = vmatprep.subr.mxu0 0.0
      %4930 = vmatpush2.msra.mxu0 0.0
      %4931 = vmatprep.subr.mxu0 0.0
      %4932 = vmatpush2.msra.mxu0 0.0
      %4933 = vmatprep.subr.mxu0 0.0
      %4934 = vmatpush2.msra.mxu0 0.0
      %4935 = vmatprep.subr.mxu0 0.0
      %4936 = vmatpush2.msra.mxu0 0.0
      %4937 = vmatprep.subr.mxu0 0.0
      %4938 = vmatpush2.msra.mxu0 0.0
      %4939 = vmatprep.subr.mxu0 0.0
      %4940 = vmatpush2.msra.mxu0 0.0
      %4941 = vmatprep.subr.mxu0 0.0
      %4942 = vmatpush2.msra.mxu0 0.0
      %4943 = vmatprep.subr.mxu0 0.0
      %4944 = vmatpush2.msra.mxu0 0.0
      %4945 = vmatprep.subr.mxu0 0.0
      %4946 = vmatpush2.msra.mxu0 0.0
      %4947 = vmatprep.subr.mxu0 0.0
      %4948 = vmatpush2.msra.mxu0 0.0
      %4949 = vmatprep.subr.mxu0 0.0
      %4950 = vmatpush2.msra.mxu0 0.0
      %4951 = vmatprep.subr.mxu0 0.0
      %4952 = vmatpush2.msra.mxu0 0.0
      %4953 = vmatprep.subr.mxu0 0.0
      %4954 = vmatpush2.msra.mxu0 0.0
      %4955 = vmatprep.subr.mxu0 0.0
      %4956 = vmatpush2.msra.mxu0 0.0
      %4957 = vmatprep.mubr.f32.mxu0 0.0
      %4958 = vmatmul.mubr.f32.gmra.mxu0 %v4773
      %v4959 = vpop.f32.mrf.mxu0
      %v4960 = vadd.f32 %v3155, %v4959
      %v4961 = vpop.f32.mrf.mxu0
      %v4962 = vadd.f32 %v3159, %v4961
      %4963 = vdwg.mxu0
      %v4965 = vsel %vm1612, %v4768, 0
      %4967 = vmatprep.subr.mxu0 0.0
      %4968 = vmatpush1.msra.mxu0 0.0
      %4969 = vmatprep.subr.mxu0 0.0
      %4970 = vmatpush1.msra.mxu0 0.0
      %4971 = vmatprep.subr.mxu0 0.0
      %4972 = vmatpush1.msra.mxu0 0.0
      %4973 = vmatprep.subr.mxu0 0.0
      %4974 = vmatpush1.msra.mxu0 0.0
      %4975 = vmatprep.subr.mxu0 0.0
      %4976 = vmatpush1.msra.mxu0 0.0
      %4977 = vmatprep.subr.mxu0 0.0
      %4978 = vmatpush1.msra.mxu0 0.0
      %4979 = vmatprep.subr.mxu0 0.0
      %4980 = vmatpush1.msra.mxu0 0.0
      %4981 = vmatprep.subr.mxu0 0.0
      %4982 = vmatpush1.msra.mxu0 0.0
      %4983 = vmatprep.subr.mxu0 %v2979
      %4984 = vmatpush1.msra.mxu0 %v2978
      %4985 = vmatprep.subr.mxu0 %v2977
      %4986 = vmatpush1.msra.mxu0 %v2976
      %4987 = vmatprep.subr.mxu0 %v2975
      %4988 = vmatpush1.msra.mxu0 %v2974
      %4989 = vmatprep.subr.mxu0 %v2973
      %4990 = vmatpush1.msra.mxu0 %v2972
      %4991 = vmatprep.subr.mxu0 %v2971
      %4992 = vmatpush1.msra.mxu0 %v2970
      %4993 = vmatprep.subr.mxu0 %v2969
      %4994 = vmatpush1.msra.mxu0 %v2968
      %4995 = vmatprep.subr.mxu0 %v2967
      %4996 = vmatpush1.msra.mxu0 %v2966
      %4997 = vmatprep.subr.mxu0 %v2965
      %4998 = vmatpush1.msra.mxu0 %v2964
      %4999 = vmatprep.subr.mxu0 0.0
      %5000 = vmatpush2.msra.mxu0 0.0
      %5001 = vmatprep.subr.mxu0 0.0
      %5002 = vmatpush2.msra.mxu0 0.0
      %5003 = vmatprep.subr.mxu0 0.0
      %5004 = vmatpush2.msra.mxu0 0.0
      %5005 = vmatprep.subr.mxu0 0.0
      %5006 = vmatpush2.msra.mxu0 0.0
      %5007 = vmatprep.subr.mxu0 0.0
      %5008 = vmatpush2.msra.mxu0 0.0
      %5009 = vmatprep.subr.mxu0 0.0
      %5010 = vmatpush2.msra.mxu0 0.0
      %5011 = vmatprep.subr.mxu0 0.0
      %5012 = vmatpush2.msra.mxu0 0.0
      %5013 = vmatprep.subr.mxu0 0.0
      %5014 = vmatpush2.msra.mxu0 0.0
      %5015 = vmatprep.subr.mxu0 0.0
      %5016 = vmatpush2.msra.mxu0 0.0
      %5017 = vmatprep.subr.mxu0 0.0
      %5018 = vmatpush2.msra.mxu0 0.0
      %5019 = vmatprep.subr.mxu0 0.0
      %5020 = vmatpush2.msra.mxu0 0.0
      %5021 = vmatprep.subr.mxu0 0.0
      %5022 = vmatpush2.msra.mxu0 0.0
      %5023 = vmatprep.subr.mxu0 0.0
      %5024 = vmatpush2.msra.mxu0 0.0
      %5025 = vmatprep.subr.mxu0 0.0
      %5026 = vmatpush2.msra.mxu0 0.0
      %5027 = vmatprep.subr.mxu0 0.0
      %5028 = vmatpush2.msra.mxu0 0.0
      %5029 = vmatprep.subr.mxu0 0.0
      %5030 = vmatpush2.msra.mxu0 0.0
      %5031 = vmatprep.mubr.f32.mxu0 0.0
      %5032 = vmatmul.mubr.f32.gmra.mxu0 %v4965
      %v5033 = vpop.f32.mrf.mxu0
      %v5034 = vadd.f32 0.0, %v5033
      %v5035 = vpop.f32.mrf.mxu0
      %v5036 = vadd.f32 0.0, %v5035
      %5037 = vdwg.mxu0
      %v5038 = vadd.f32 %v4960, %v5034
      %v5039 = vadd.f32 %v4962, %v5036
      %v5040 = vxor.u32 %v5038, 2147483648
      %v5041 = vxor.u32 %v5039, 2147483648
      %v5042 = vmul.f32 %v5040, 1.442695
      %v5043 = vpow.pop %v5042
      %v5044 = vmul.f32 %v5041, 1.442695
      %v5045 = vpow.pop %v5044
      %v5046 = vadd.f32 %v5043, 1.0
      %v5047 = vadd.f32 %v5045, 1.0
      %v5048 = vrcp.pop %v5046
      %v5049 = vmul.f32 1.0, %v5048
      %v5050 = vrcp.pop %v5047
      %v5051 = vmul.f32 1.0, %v5050
      %v5052 = vtanh.pop %v5039
      %v5053 = vmul.f32 %v5049, %v4762
      %5055 = vrot.lane.b32.xlu0 %v5052, 64
      %v5056 = vpop.permute.xlu0 %5055
      %v5058 = vmul.f32 %v5049, %v5056
      %5060 = vrot.lane.b32.xlu0 %v5058, 64
      %v5061 = vpop.permute.xlu0 %5060
      %v5063 = vadd.f32 %v5053, %v5061
      %v5064 = vtanh.pop %v5063
      %5066 = vrot.lane.b32.xlu0 %v5064, 64
      %v5067 = vpop.permute.xlu0 %5066
      %v5069 = vmul.f32 %v5051, %v5067
      %5070 = vst.msk [vmem:[#allocation3 + $0x6] sm:$0x1] %vm3263, %v5069
      %s5071 = scalar_lea.vmem [#allocation2], 16
      %v5072 = vld [vmem:[%s5071] ss:$8 sm:$0x3]
      %v5074 = vsel %vm1612, %v4892, 0
      %5076 = vmatprep.subr.mxu0 0.0
      %5077 = vmatpush1.msra.mxu0 0.0
      %5078 = vmatprep.subr.mxu0 0.0
      %5079 = vmatpush1.msra.mxu0 0.0
      %5080 = vmatprep.subr.mxu0 0.0
      %5081 = vmatpush1.msra.mxu0 0.0
      %5082 = vmatprep.subr.mxu0 0.0
      %5083 = vmatpush1.msra.mxu0 0.0
      %5084 = vmatprep.subr.mxu0 0.0
      %5085 = vmatpush1.msra.mxu0 0.0
      %5086 = vmatprep.subr.mxu0 0.0
      %5087 = vmatpush1.msra.mxu0 0.0
      %5088 = vmatprep.subr.mxu0 0.0
      %5089 = vmatpush1.msra.mxu0 0.0
      %5090 = vmatprep.subr.mxu0 0.0
      %5091 = vmatpush1.msra.mxu0 0.0
      %5092 = vmatprep.subr.mxu0 %v2962
      %5093 = vmatpush1.msra.mxu0 %v2961
      %5094 = vmatprep.subr.mxu0 %v2960
      %5095 = vmatpush1.msra.mxu0 %v2959
      %5096 = vmatprep.subr.mxu0 %v2958
      %5097 = vmatpush1.msra.mxu0 %v2957
      %5098 = vmatprep.subr.mxu0 %v2956
      %5099 = vmatpush1.msra.mxu0 %v2955
      %5100 = vmatprep.subr.mxu0 %v2954
      %5101 = vmatpush1.msra.mxu0 %v2953
      %5102 = vmatprep.subr.mxu0 %v2952
      %5103 = vmatpush1.msra.mxu0 %v2951
      %5104 = vmatprep.subr.mxu0 %v2950
      %5105 = vmatpush1.msra.mxu0 %v2949
      %5106 = vmatprep.subr.mxu0 %v2948
      %5107 = vmatpush1.msra.mxu0 %v2947
      %5108 = vmatprep.subr.mxu0 0.0
      %5109 = vmatpush2.msra.mxu0 0.0
      %5110 = vmatprep.subr.mxu0 0.0
      %5111 = vmatpush2.msra.mxu0 0.0
      %5112 = vmatprep.subr.mxu0 0.0
      %5113 = vmatpush2.msra.mxu0 0.0
      %5114 = vmatprep.subr.mxu0 0.0
      %5115 = vmatpush2.msra.mxu0 0.0
      %5116 = vmatprep.subr.mxu0 0.0
      %5117 = vmatpush2.msra.mxu0 0.0
      %5118 = vmatprep.subr.mxu0 0.0
      %5119 = vmatpush2.msra.mxu0 0.0
      %5120 = vmatprep.subr.mxu0 0.0
      %5121 = vmatpush2.msra.mxu0 0.0
      %5122 = vmatprep.subr.mxu0 0.0
      %5123 = vmatpush2.msra.mxu0 0.0
      %5124 = vmatprep.subr.mxu0 0.0
      %5125 = vmatpush2.msra.mxu0 0.0
      %5126 = vmatprep.subr.mxu0 0.0
      %5127 = vmatpush2.msra.mxu0 0.0
      %5128 = vmatprep.subr.mxu0 0.0
      %5129 = vmatpush2.msra.mxu0 0.0
      %5130 = vmatprep.subr.mxu0 0.0
      %5131 = vmatpush2.msra.mxu0 0.0
      %5132 = vmatprep.subr.mxu0 0.0
      %5133 = vmatpush2.msra.mxu0 0.0
      %5134 = vmatprep.subr.mxu0 0.0
      %5135 = vmatpush2.msra.mxu0 0.0
      %5136 = vmatprep.subr.mxu0 0.0
      %5137 = vmatpush2.msra.mxu0 0.0
      %5138 = vmatprep.subr.mxu0 0.0
      %5139 = vmatpush2.msra.mxu0 0.0
      %5140 = vmatprep.mubr.f32.mxu0 0.0
      %5141 = vmatmul.mubr.f32.gmra.mxu0 %v5074
      %v5142 = vpop.f32.mrf.mxu0
      %v5143 = vadd.f32 0.0, %v5142
      %v5144 = vpop.f32.mrf.mxu0
      %v5145 = vadd.f32 0.0, %v5144
      %5146 = vdwg.mxu0
      %v5149 = vcombine.low %v5143, %v5145
      %v5151 = vunpack.c.l.s4 1966171168
      %v5152 = vunpack.c.0.s8 %v5151
      %v5153 = vlaneseq
      %v5154 = vshrl.u32 %v5153, 7
      %v5155 = vsub.s32 %v5152, %v5154
      %v5156 = vrot.slane %v5149, %v5155
      %v5158 = vunpack.c.l.s4 1966171168
      %v5159 = vunpack.c.0.s8 %v5158
      %v5160 = vlaneseq
      %v5161 = vshrl.u32 %v5160, 7
      %v5162 = vsub.s32 %v5159, %v5161
      %v5163 = vrot.slane %v5156, %v5162
      %v5165 = vadd.f32 %v5072, %v5163
      %v5166 = vxor.u32 %v5165, 2147483648
      %v5167 = vmul.f32 %v5166, 1.442695
      %v5168 = vpow.pop %v5167
      %v5169 = vadd.f32 %v5168, 1.0
      %v5170 = vrcp.pop %v5169
      %v5171 = vmul.f32 1.0, %v5170
      %5173 = vrot.lane.b32.xlu0 %v5165, 64
      %v5174 = vpop.permute.xlu0 %5173
      %v5175 = vrot.slane %v5174, 1
      %v5177 = vtanh.pop %v5175
      %v5178 = vmul.f32 %v5171, %v4883
      %v5179 = vmul.f32 %v5171, %v5177
      %5181 = vrot.lane.b32.xlu0 %v5179, 64
      %v5182 = vpop.permute.xlu0 %5181
      %v5184 = vadd.f32 %v5178, %v5182
      %v5185 = vtanh.pop %v5184
      %v5187 = vrot.slane %v5171, 1
      %5190 = vrot.lane.b32.xlu0 %v5185, 64
      %v5191 = vpop.permute.xlu0 %5190
      %v5193 = vmul.f32 %v5187, %v5191
      %5194 = vmatprep.subr.mxu0 0.0
      %5195 = vmatpush1.msra.mxu0 0.0
      %5196 = vmatprep.subr.mxu0 0.0
      %5197 = vmatpush1.msra.mxu0 0.0
      %5198 = vmatprep.subr.mxu0 0.0
      %5199 = vmatpush1.msra.mxu0 0.0
      %5200 = vmatprep.subr.mxu0 0.0
      %5201 = vmatpush1.msra.mxu0 0.0
      %5202 = vmatprep.subr.mxu0 0.0
      %5203 = vmatpush1.msra.mxu0 0.0
      %5204 = vmatprep.subr.mxu0 0.0
      %5205 = vmatpush1.msra.mxu0 0.0
      %5206 = vmatprep.subr.mxu0 0.0
      %5207 = vmatpush1.msra.mxu0 0.0
      %5208 = vmatprep.subr.mxu0 0.0
      %5209 = vmatpush1.msra.mxu0 0.0
      %5210 = vmatprep.subr.mxu0 %v2996
      %5211 = vmatpush1.msra.mxu0 %v2995
      %5212 = vmatprep.subr.mxu0 %v2994
      %5213 = vmatpush1.msra.mxu0 %v2993
      %5214 = vmatprep.subr.mxu0 %v2992
      %5215 = vmatpush1.msra.mxu0 %v2991
      %5216 = vmatprep.subr.mxu0 %v2990
      %5217 = vmatpush1.msra.mxu0 %v2989
      %5218 = vmatprep.subr.mxu0 %v2988
      %5219 = vmatpush1.msra.mxu0 %v2987
      %5220 = vmatprep.subr.mxu0 %v2986
      %5221 = vmatpush1.msra.mxu0 %v2985
      %5222 = vmatprep.subr.mxu0 %v2984
      %5223 = vmatpush1.msra.mxu0 %v2983
      %5224 = vmatprep.subr.mxu0 %v2982
      %5225 = vmatpush1.msra.mxu0 %v2981
      %5226 = vmatprep.subr.mxu0 0.0
      %5227 = vmatpush2.msra.mxu0 0.0
      %5228 = vmatprep.subr.mxu0 0.0
      %5229 = vmatpush2.msra.mxu0 0.0
      %5230 = vmatprep.subr.mxu0 0.0
      %5231 = vmatpush2.msra.mxu0 0.0
      %5232 = vmatprep.subr.mxu0 0.0
      %5233 = vmatpush2.msra.mxu0 0.0
      %5234 = vmatprep.subr.mxu0 0.0
      %5235 = vmatpush2.msra.mxu0 0.0
      %5236 = vmatprep.subr.mxu0 0.0
      %5237 = vmatpush2.msra.mxu0 0.0
      %5238 = vmatprep.subr.mxu0 0.0
      %5239 = vmatpush2.msra.mxu0 0.0
      %5240 = vmatprep.subr.mxu0 0.0
      %5241 = vmatpush2.msra.mxu0 0.0
      %5242 = vmatprep.subr.mxu0 0.0
      %5243 = vmatpush2.msra.mxu0 0.0
      %5244 = vmatprep.subr.mxu0 0.0
      %5245 = vmatpush2.msra.mxu0 0.0
      %5246 = vmatprep.subr.mxu0 0.0
      %5247 = vmatpush2.msra.mxu0 0.0
      %5248 = vmatprep.subr.mxu0 0.0
      %5249 = vmatpush2.msra.mxu0 0.0
      %5250 = vmatprep.subr.mxu0 0.0
      %5251 = vmatpush2.msra.mxu0 0.0
      %5252 = vmatprep.subr.mxu0 0.0
      %5253 = vmatpush2.msra.mxu0 0.0
      %5254 = vmatprep.subr.mxu0 0.0
      %5255 = vmatpush2.msra.mxu0 0.0
      %5256 = vmatprep.subr.mxu0 0.0
      %5257 = vmatpush2.msra.mxu0 0.0
      %5258 = vmatprep.mubr.f32.mxu0 0.0
      %5259 = vmatmul.mubr.f32.gmra.mxu0 %v5074
      %v5260 = vpop.f32.mrf.mxu0
      %v5261 = vadd.f32 %v3155, %v5260
      %v5262 = vpop.f32.mrf.mxu0
      %v5263 = vadd.f32 %v3159, %v5262
      %5264 = vdwg.mxu0
      %v5266 = vsel %vm1612, %v5069, 0
      %5268 = vmatprep.subr.mxu0 0.0
      %5269 = vmatpush1.msra.mxu0 0.0
      %5270 = vmatprep.subr.mxu0 0.0
      %5271 = vmatpush1.msra.mxu0 0.0
      %5272 = vmatprep.subr.mxu0 0.0
      %5273 = vmatpush1.msra.mxu0 0.0
      %5274 = vmatprep.subr.mxu0 0.0
      %5275 = vmatpush1.msra.mxu0 0.0
      %5276 = vmatprep.subr.mxu0 0.0
      %5277 = vmatpush1.msra.mxu0 0.0
      %5278 = vmatprep.subr.mxu0 0.0
      %5279 = vmatpush1.msra.mxu0 0.0
      %5280 = vmatprep.subr.mxu0 0.0
      %5281 = vmatpush1.msra.mxu0 0.0
      %5282 = vmatprep.subr.mxu0 0.0
      %5283 = vmatpush1.msra.mxu0 0.0
      %5284 = vmatprep.subr.mxu0 %v2979
      %5285 = vmatpush1.msra.mxu0 %v2978
      %5286 = vmatprep.subr.mxu0 %v2977
      %5287 = vmatpush1.msra.mxu0 %v2976
      %5288 = vmatprep.subr.mxu0 %v2975
      %5289 = vmatpush1.msra.mxu0 %v2974
      %5290 = vmatprep.subr.mxu0 %v2973
      %5291 = vmatpush1.msra.mxu0 %v2972
      %5292 = vmatprep.subr.mxu0 %v2971
      %5293 = vmatpush1.msra.mxu0 %v2970
      %5294 = vmatprep.subr.mxu0 %v2969
      %5295 = vmatpush1.msra.mxu0 %v2968
      %5296 = vmatprep.subr.mxu0 %v2967
      %5297 = vmatpush1.msra.mxu0 %v2966
      %5298 = vmatprep.subr.mxu0 %v2965
      %5299 = vmatpush1.msra.mxu0 %v2964
      %5300 = vmatprep.subr.mxu0 0.0
      %5301 = vmatpush2.msra.mxu0 0.0
      %5302 = vmatprep.subr.mxu0 0.0
      %5303 = vmatpush2.msra.mxu0 0.0
      %5304 = vmatprep.subr.mxu0 0.0
      %5305 = vmatpush2.msra.mxu0 0.0
      %5306 = vmatprep.subr.mxu0 0.0
      %5307 = vmatpush2.msra.mxu0 0.0
      %5308 = vmatprep.subr.mxu0 0.0
      %5309 = vmatpush2.msra.mxu0 0.0
      %5310 = vmatprep.subr.mxu0 0.0
      %5311 = vmatpush2.msra.mxu0 0.0
      %5312 = vmatprep.subr.mxu0 0.0
      %5313 = vmatpush2.msra.mxu0 0.0
      %5314 = vmatprep.subr.mxu0 0.0
      %5315 = vmatpush2.msra.mxu0 0.0
      %5316 = vmatprep.subr.mxu0 0.0
      %5317 = vmatpush2.msra.mxu0 0.0
      %5318 = vmatprep.subr.mxu0 0.0
      %5319 = vmatpush2.msra.mxu0 0.0
      %5320 = vmatprep.subr.mxu0 0.0
      %5321 = vmatpush2.msra.mxu0 0.0
      %5322 = vmatprep.subr.mxu0 0.0
      %5323 = vmatpush2.msra.mxu0 0.0
      %5324 = vmatprep.subr.mxu0 0.0
      %5325 = vmatpush2.msra.mxu0 0.0
      %5326 = vmatprep.subr.mxu0 0.0
      %5327 = vmatpush2.msra.mxu0 0.0
      %5328 = vmatprep.subr.mxu0 0.0
      %5329 = vmatpush2.msra.mxu0 0.0
      %5330 = vmatprep.subr.mxu0 0.0
      %5331 = vmatpush2.msra.mxu0 0.0
      %5332 = vmatprep.mubr.f32.mxu0 0.0
      %5333 = vmatmul.mubr.f32.gmra.mxu0 %v5266
      %v5334 = vpop.f32.mrf.mxu0
      %v5335 = vadd.f32 0.0, %v5334
      %v5336 = vpop.f32.mrf.mxu0
      %v5337 = vadd.f32 0.0, %v5336
      %5338 = vdwg.mxu0
      %v5339 = vadd.f32 %v5261, %v5335
      %v5340 = vadd.f32 %v5263, %v5337
      %v5341 = vxor.u32 %v5339, 2147483648
      %v5342 = vxor.u32 %v5340, 2147483648
      %v5343 = vmul.f32 %v5341, 1.442695
      %v5344 = vpow.pop %v5343
      %v5345 = vmul.f32 %v5342, 1.442695
      %v5346 = vpow.pop %v5345
      %v5347 = vadd.f32 %v5344, 1.0
      %v5348 = vadd.f32 %v5346, 1.0
      %v5349 = vrcp.pop %v5347
      %v5350 = vmul.f32 1.0, %v5349
      %v5351 = vrcp.pop %v5348
      %v5352 = vmul.f32 1.0, %v5351
      %v5353 = vtanh.pop %v5340
      %v5354 = vmul.f32 %v5350, %v5063
      %5356 = vrot.lane.b32.xlu0 %v5353, 64
      %v5357 = vpop.permute.xlu0 %5356
      %v5359 = vmul.f32 %v5350, %v5357
      %5361 = vrot.lane.b32.xlu0 %v5359, 64
      %v5362 = vpop.permute.xlu0 %5361
      %v5364 = vadd.f32 %v5354, %v5362
      %v5365 = vtanh.pop %v5364
      %5367 = vrot.lane.b32.xlu0 %v5365, 64
      %v5368 = vpop.permute.xlu0 %5367
      %v5370 = vmul.f32 %v5352, %v5368
      %5371 = vst.msk [vmem:[#allocation3 + $0x7] sm:$0x1] %vm3263, %v5370
      %s5372 = scalar_lea.vmem [#allocation2], 17
      %v5373 = vld [vmem:[%s5372] ss:$8 sm:$0x3]
      %v5375 = vsel %vm1612, %v5193, 0
      %5377 = vmatprep.subr.mxu0 0.0
      %5378 = vmatpush1.msra.mxu0 0.0
      %5379 = vmatprep.subr.mxu0 0.0
      %5380 = vmatpush1.msra.mxu0 0.0
      %5381 = vmatprep.subr.mxu0 0.0
      %5382 = vmatpush1.msra.mxu0 0.0
      %5383 = vmatprep.subr.mxu0 0.0
      %5384 = vmatpush1.msra.mxu0 0.0
      %5385 = vmatprep.subr.mxu0 0.0
      %5386 = vmatpush1.msra.mxu0 0.0
      %5387 = vmatprep.subr.mxu0 0.0
      %5388 = vmatpush1.msra.mxu0 0.0
      %5389 = vmatprep.subr.mxu0 0.0
      %5390 = vmatpush1.msra.mxu0 0.0
      %5391 = vmatprep.subr.mxu0 0.0
      %5392 = vmatpush1.msra.mxu0 0.0
      %5393 = vmatprep.subr.mxu0 %v2962
      %5394 = vmatpush1.msra.mxu0 %v2961
      %5395 = vmatprep.subr.mxu0 %v2960
      %5396 = vmatpush1.msra.mxu0 %v2959
      %5397 = vmatprep.subr.mxu0 %v2958
      %5398 = vmatpush1.msra.mxu0 %v2957
      %5399 = vmatprep.subr.mxu0 %v2956
      %5400 = vmatpush1.msra.mxu0 %v2955
      %5401 = vmatprep.subr.mxu0 %v2954
      %5402 = vmatpush1.msra.mxu0 %v2953
      %5403 = vmatprep.subr.mxu0 %v2952
      %5404 = vmatpush1.msra.mxu0 %v2951
      %5405 = vmatprep.subr.mxu0 %v2950
      %5406 = vmatpush1.msra.mxu0 %v2949
      %5407 = vmatprep.subr.mxu0 %v2948
      %5408 = vmatpush1.msra.mxu0 %v2947
      %5409 = vmatprep.subr.mxu0 0.0
      %5410 = vmatpush2.msra.mxu0 0.0
      %5411 = vmatprep.subr.mxu0 0.0
      %5412 = vmatpush2.msra.mxu0 0.0
      %5413 = vmatprep.subr.mxu0 0.0
      %5414 = vmatpush2.msra.mxu0 0.0
      %5415 = vmatprep.subr.mxu0 0.0
      %5416 = vmatpush2.msra.mxu0 0.0
      %5417 = vmatprep.subr.mxu0 0.0
      %5418 = vmatpush2.msra.mxu0 0.0
      %5419 = vmatprep.subr.mxu0 0.0
      %5420 = vmatpush2.msra.mxu0 0.0
      %5421 = vmatprep.subr.mxu0 0.0
      %5422 = vmatpush2.msra.mxu0 0.0
      %5423 = vmatprep.subr.mxu0 0.0
      %5424 = vmatpush2.msra.mxu0 0.0
      %5425 = vmatprep.subr.mxu0 0.0
      %5426 = vmatpush2.msra.mxu0 0.0
      %5427 = vmatprep.subr.mxu0 0.0
      %5428 = vmatpush2.msra.mxu0 0.0
      %5429 = vmatprep.subr.mxu0 0.0
      %5430 = vmatpush2.msra.mxu0 0.0
      %5431 = vmatprep.subr.mxu0 0.0
      %5432 = vmatpush2.msra.mxu0 0.0
      %5433 = vmatprep.subr.mxu0 0.0
      %5434 = vmatpush2.msra.mxu0 0.0
      %5435 = vmatprep.subr.mxu0 0.0
      %5436 = vmatpush2.msra.mxu0 0.0
      %5437 = vmatprep.subr.mxu0 0.0
      %5438 = vmatpush2.msra.mxu0 0.0
      %5439 = vmatprep.subr.mxu0 0.0
      %5440 = vmatpush2.msra.mxu0 0.0
      %5441 = vmatprep.mubr.f32.mxu0 0.0
      %5442 = vmatmul.mubr.f32.gmra.mxu0 %v5375
      %v5443 = vpop.f32.mrf.mxu0
      %v5444 = vadd.f32 0.0, %v5443
      %v5445 = vpop.f32.mrf.mxu0
      %v5446 = vadd.f32 0.0, %v5445
      %5447 = vdwg.mxu0
      %v5450 = vcombine.low %v5444, %v5446
      %v5452 = vunpack.c.l.s4 1966171168
      %v5453 = vunpack.c.0.s8 %v5452
      %v5454 = vlaneseq
      %v5455 = vshrl.u32 %v5454, 7
      %v5456 = vsub.s32 %v5453, %v5455
      %v5457 = vrot.slane %v5450, %v5456
      %v5459 = vunpack.c.l.s4 1966171168
      %v5460 = vunpack.c.0.s8 %v5459
      %v5461 = vlaneseq
      %v5462 = vshrl.u32 %v5461, 7
      %v5463 = vsub.s32 %v5460, %v5462
      %v5464 = vrot.slane %v5457, %v5463
      %v5466 = vadd.f32 %v5373, %v5464
      %v5467 = vxor.u32 %v5466, 2147483648
      %v5468 = vmul.f32 %v5467, 1.442695
      %v5469 = vpow.pop %v5468
      %v5470 = vadd.f32 %v5469, 1.0
      %v5471 = vrcp.pop %v5470
      %v5472 = vmul.f32 1.0, %v5471
      %5474 = vrot.lane.b32.xlu0 %v5466, 64
      %v5475 = vpop.permute.xlu0 %5474
      %v5476 = vrot.slane %v5475, 1
      %v5478 = vtanh.pop %v5476
      %v5479 = vmul.f32 %v5472, %v5184
      %v5480 = vmul.f32 %v5472, %v5478
      %5482 = vrot.lane.b32.xlu0 %v5480, 64
      %v5483 = vpop.permute.xlu0 %5482
      %v5485 = vadd.f32 %v5479, %v5483
      %v5486 = vtanh.pop %v5485
      %v5488 = vrot.slane %v5472, 1
      %5491 = vrot.lane.b32.xlu0 %v5486, 64
      %v5492 = vpop.permute.xlu0 %5491
      %v5494 = vmul.f32 %v5488, %v5492
      %5495 = vmatprep.subr.mxu0 0.0
      %5496 = vmatpush1.msra.mxu0 0.0
      %5497 = vmatprep.subr.mxu0 0.0
      %5498 = vmatpush1.msra.mxu0 0.0
      %5499 = vmatprep.subr.mxu0 0.0
      %5500 = vmatpush1.msra.mxu0 0.0
      %5501 = vmatprep.subr.mxu0 0.0
      %5502 = vmatpush1.msra.mxu0 0.0
      %5503 = vmatprep.subr.mxu0 0.0
      %5504 = vmatpush1.msra.mxu0 0.0
      %5505 = vmatprep.subr.mxu0 0.0
      %5506 = vmatpush1.msra.mxu0 0.0
      %5507 = vmatprep.subr.mxu0 0.0
      %5508 = vmatpush1.msra.mxu0 0.0
      %5509 = vmatprep.subr.mxu0 0.0
      %5510 = vmatpush1.msra.mxu0 0.0
      %5511 = vmatprep.subr.mxu0 %v2996
      %5512 = vmatpush1.msra.mxu0 %v2995
      %5513 = vmatprep.subr.mxu0 %v2994
      %5514 = vmatpush1.msra.mxu0 %v2993
      %5515 = vmatprep.subr.mxu0 %v2992
      %5516 = vmatpush1.msra.mxu0 %v2991
      %5517 = vmatprep.subr.mxu0 %v2990
      %5518 = vmatpush1.msra.mxu0 %v2989
      %5519 = vmatprep.subr.mxu0 %v2988
      %5520 = vmatpush1.msra.mxu0 %v2987
      %5521 = vmatprep.subr.mxu0 %v2986
      %5522 = vmatpush1.msra.mxu0 %v2985
      %5523 = vmatprep.subr.mxu0 %v2984
      %5524 = vmatpush1.msra.mxu0 %v2983
      %5525 = vmatprep.subr.mxu0 %v2982
      %5526 = vmatpush1.msra.mxu0 %v2981
      %5527 = vmatprep.subr.mxu0 0.0
      %5528 = vmatpush2.msra.mxu0 0.0
      %5529 = vmatprep.subr.mxu0 0.0
      %5530 = vmatpush2.msra.mxu0 0.0
      %5531 = vmatprep.subr.mxu0 0.0
      %5532 = vmatpush2.msra.mxu0 0.0
      %5533 = vmatprep.subr.mxu0 0.0
      %5534 = vmatpush2.msra.mxu0 0.0
      %5535 = vmatprep.subr.mxu0 0.0
      %5536 = vmatpush2.msra.mxu0 0.0
      %5537 = vmatprep.subr.mxu0 0.0
      %5538 = vmatpush2.msra.mxu0 0.0
      %5539 = vmatprep.subr.mxu0 0.0
      %5540 = vmatpush2.msra.mxu0 0.0
      %5541 = vmatprep.subr.mxu0 0.0
      %5542 = vmatpush2.msra.mxu0 0.0
      %5543 = vmatprep.subr.mxu0 0.0
      %5544 = vmatpush2.msra.mxu0 0.0
      %5545 = vmatprep.subr.mxu0 0.0
      %5546 = vmatpush2.msra.mxu0 0.0
      %5547 = vmatprep.subr.mxu0 0.0
      %5548 = vmatpush2.msra.mxu0 0.0
      %5549 = vmatprep.subr.mxu0 0.0
      %5550 = vmatpush2.msra.mxu0 0.0
      %5551 = vmatprep.subr.mxu0 0.0
      %5552 = vmatpush2.msra.mxu0 0.0
      %5553 = vmatprep.subr.mxu0 0.0
      %5554 = vmatpush2.msra.mxu0 0.0
      %5555 = vmatprep.subr.mxu0 0.0
      %5556 = vmatpush2.msra.mxu0 0.0
      %5557 = vmatprep.subr.mxu0 0.0
      %5558 = vmatpush2.msra.mxu0 0.0
      %5559 = vmatprep.mubr.f32.mxu0 0.0
      %5560 = vmatmul.mubr.f32.gmra.mxu0 %v5375
      %v5561 = vpop.f32.mrf.mxu0
      %v5562 = vadd.f32 %v3155, %v5561
      %v5563 = vpop.f32.mrf.mxu0
      %v5564 = vadd.f32 %v3159, %v5563
      %5565 = vdwg.mxu0
      %v5567 = vsel %vm1612, %v5370, 0
      %5569 = vmatprep.subr.mxu0 0.0
      %5570 = vmatpush1.msra.mxu0 0.0
      %5571 = vmatprep.subr.mxu0 0.0
      %5572 = vmatpush1.msra.mxu0 0.0
      %5573 = vmatprep.subr.mxu0 0.0
      %5574 = vmatpush1.msra.mxu0 0.0
      %5575 = vmatprep.subr.mxu0 0.0
      %5576 = vmatpush1.msra.mxu0 0.0
      %5577 = vmatprep.subr.mxu0 0.0
      %5578 = vmatpush1.msra.mxu0 0.0
      %5579 = vmatprep.subr.mxu0 0.0
      %5580 = vmatpush1.msra.mxu0 0.0
      %5581 = vmatprep.subr.mxu0 0.0
      %5582 = vmatpush1.msra.mxu0 0.0
      %5583 = vmatprep.subr.mxu0 0.0
      %5584 = vmatpush1.msra.mxu0 0.0
      %5585 = vmatprep.subr.mxu0 %v2979
      %5586 = vmatpush1.msra.mxu0 %v2978
      %5587 = vmatprep.subr.mxu0 %v2977
      %5588 = vmatpush1.msra.mxu0 %v2976
      %5589 = vmatprep.subr.mxu0 %v2975
      %5590 = vmatpush1.msra.mxu0 %v2974
      %5591 = vmatprep.subr.mxu0 %v2973
      %5592 = vmatpush1.msra.mxu0 %v2972
      %5593 = vmatprep.subr.mxu0 %v2971
      %5594 = vmatpush1.msra.mxu0 %v2970
      %5595 = vmatprep.subr.mxu0 %v2969
      %5596 = vmatpush1.msra.mxu0 %v2968
      %5597 = vmatprep.subr.mxu0 %v2967
      %5598 = vmatpush1.msra.mxu0 %v2966
      %5599 = vmatprep.subr.mxu0 %v2965
      %5600 = vmatpush1.msra.mxu0 %v2964
      %5601 = vmatprep.subr.mxu0 0.0
      %5602 = vmatpush2.msra.mxu0 0.0
      %5603 = vmatprep.subr.mxu0 0.0
      %5604 = vmatpush2.msra.mxu0 0.0
      %5605 = vmatprep.subr.mxu0 0.0
      %5606 = vmatpush2.msra.mxu0 0.0
      %5607 = vmatprep.subr.mxu0 0.0
      %5608 = vmatpush2.msra.mxu0 0.0
      %5609 = vmatprep.subr.mxu0 0.0
      %5610 = vmatpush2.msra.mxu0 0.0
      %5611 = vmatprep.subr.mxu0 0.0
      %5612 = vmatpush2.msra.mxu0 0.0
      %5613 = vmatprep.subr.mxu0 0.0
      %5614 = vmatpush2.msra.mxu0 0.0
      %5615 = vmatprep.subr.mxu0 0.0
      %5616 = vmatpush2.msra.mxu0 0.0
      %5617 = vmatprep.subr.mxu0 0.0
      %5618 = vmatpush2.msra.mxu0 0.0
      %5619 = vmatprep.subr.mxu0 0.0
      %5620 = vmatpush2.msra.mxu0 0.0
      %5621 = vmatprep.subr.mxu0 0.0
      %5622 = vmatpush2.msra.mxu0 0.0
      %5623 = vmatprep.subr.mxu0 0.0
      %5624 = vmatpush2.msra.mxu0 0.0
      %5625 = vmatprep.subr.mxu0 0.0
      %5626 = vmatpush2.msra.mxu0 0.0
      %5627 = vmatprep.subr.mxu0 0.0
      %5628 = vmatpush2.msra.mxu0 0.0
      %5629 = vmatprep.subr.mxu0 0.0
      %5630 = vmatpush2.msra.mxu0 0.0
      %5631 = vmatprep.subr.mxu0 0.0
      %5632 = vmatpush2.msra.mxu0 0.0
      %5633 = vmatprep.mubr.f32.mxu0 0.0
      %5634 = vmatmul.mubr.f32.gmra.mxu0 %v5567
      %v5635 = vpop.f32.mrf.mxu0
      %v5636 = vadd.f32 0.0, %v5635
      %v5637 = vpop.f32.mrf.mxu0
      %v5638 = vadd.f32 0.0, %v5637
      %5639 = vdwg.mxu0
      %v5640 = vadd.f32 %v5562, %v5636
      %v5641 = vadd.f32 %v5564, %v5638
      %v5642 = vxor.u32 %v5640, 2147483648
      %v5643 = vxor.u32 %v5641, 2147483648
      %v5644 = vmul.f32 %v5642, 1.442695
      %v5645 = vpow.pop %v5644
      %v5646 = vmul.f32 %v5643, 1.442695
      %v5647 = vpow.pop %v5646
      %v5648 = vadd.f32 %v5645, 1.0
      %v5649 = vadd.f32 %v5647, 1.0
      %v5650 = vrcp.pop %v5648
      %v5651 = vmul.f32 1.0, %v5650
      %v5652 = vrcp.pop %v5649
      %v5653 = vmul.f32 1.0, %v5652
      %v5654 = vtanh.pop %v5641
      %v5655 = vmul.f32 %v5651, %v5364
      %5657 = vrot.lane.b32.xlu0 %v5654, 64
      %v5658 = vpop.permute.xlu0 %5657
      %v5660 = vmul.f32 %v5651, %v5658
      %5662 = vrot.lane.b32.xlu0 %v5660, 64
      %v5663 = vpop.permute.xlu0 %5662
      %v5665 = vadd.f32 %v5655, %v5663
      %v5666 = vtanh.pop %v5665
      %5668 = vrot.lane.b32.xlu0 %v5666, 64
      %v5669 = vpop.permute.xlu0 %5668
      %v5671 = vmul.f32 %v5653, %v5669
      %5672 = vst.msk [vmem:[#allocation3 + $0x8] sm:$0x1] %vm3263, %v5671
      %s5673 = scalar_lea.vmem [#allocation2], 18
      %v5674 = vld [vmem:[%s5673] ss:$8 sm:$0x3]
      %v5676 = vsel %vm1612, %v5494, 0
      %5678 = vmatprep.subr.mxu0 0.0
      %5679 = vmatpush1.msra.mxu0 0.0
      %5680 = vmatprep.subr.mxu0 0.0
      %5681 = vmatpush1.msra.mxu0 0.0
      %5682 = vmatprep.subr.mxu0 0.0
      %5683 = vmatpush1.msra.mxu0 0.0
      %5684 = vmatprep.subr.mxu0 0.0
      %5685 = vmatpush1.msra.mxu0 0.0
      %5686 = vmatprep.subr.mxu0 0.0
      %5687 = vmatpush1.msra.mxu0 0.0
      %5688 = vmatprep.subr.mxu0 0.0
      %5689 = vmatpush1.msra.mxu0 0.0
      %5690 = vmatprep.subr.mxu0 0.0
      %5691 = vmatpush1.msra.mxu0 0.0
      %5692 = vmatprep.subr.mxu0 0.0
      %5693 = vmatpush1.msra.mxu0 0.0
      %5694 = vmatprep.subr.mxu0 %v2962
      %5695 = vmatpush1.msra.mxu0 %v2961
      %5696 = vmatprep.subr.mxu0 %v2960
      %5697 = vmatpush1.msra.mxu0 %v2959
      %5698 = vmatprep.subr.mxu0 %v2958
      %5699 = vmatpush1.msra.mxu0 %v2957
      %5700 = vmatprep.subr.mxu0 %v2956
      %5701 = vmatpush1.msra.mxu0 %v2955
      %5702 = vmatprep.subr.mxu0 %v2954
      %5703 = vmatpush1.msra.mxu0 %v2953
      %5704 = vmatprep.subr.mxu0 %v2952
      %5705 = vmatpush1.msra.mxu0 %v2951
      %5706 = vmatprep.subr.mxu0 %v2950
      %5707 = vmatpush1.msra.mxu0 %v2949
      %5708 = vmatprep.subr.mxu0 %v2948
      %5709 = vmatpush1.msra.mxu0 %v2947
      %5710 = vmatprep.subr.mxu0 0.0
      %5711 = vmatpush2.msra.mxu0 0.0
      %5712 = vmatprep.subr.mxu0 0.0
      %5713 = vmatpush2.msra.mxu0 0.0
      %5714 = vmatprep.subr.mxu0 0.0
      %5715 = vmatpush2.msra.mxu0 0.0
      %5716 = vmatprep.subr.mxu0 0.0
      %5717 = vmatpush2.msra.mxu0 0.0
      %5718 = vmatprep.subr.mxu0 0.0
      %5719 = vmatpush2.msra.mxu0 0.0
      %5720 = vmatprep.subr.mxu0 0.0
      %5721 = vmatpush2.msra.mxu0 0.0
      %5722 = vmatprep.subr.mxu0 0.0
      %5723 = vmatpush2.msra.mxu0 0.0
      %5724 = vmatprep.subr.mxu0 0.0
      %5725 = vmatpush2.msra.mxu0 0.0
      %5726 = vmatprep.subr.mxu0 0.0
      %5727 = vmatpush2.msra.mxu0 0.0
      %5728 = vmatprep.subr.mxu0 0.0
      %5729 = vmatpush2.msra.mxu0 0.0
      %5730 = vmatprep.subr.mxu0 0.0
      %5731 = vmatpush2.msra.mxu0 0.0
      %5732 = vmatprep.subr.mxu0 0.0
      %5733 = vmatpush2.msra.mxu0 0.0
      %5734 = vmatprep.subr.mxu0 0.0
      %5735 = vmatpush2.msra.mxu0 0.0
      %5736 = vmatprep.subr.mxu0 0.0
      %5737 = vmatpush2.msra.mxu0 0.0
      %5738 = vmatprep.subr.mxu0 0.0
      %5739 = vmatpush2.msra.mxu0 0.0
      %5740 = vmatprep.subr.mxu0 0.0
      %5741 = vmatpush2.msra.mxu0 0.0
      %5742 = vmatprep.mubr.f32.mxu0 0.0
      %5743 = vmatmul.mubr.f32.gmra.mxu0 %v5676
      %v5744 = vpop.f32.mrf.mxu0
      %v5745 = vadd.f32 0.0, %v5744
      %v5746 = vpop.f32.mrf.mxu0
      %v5747 = vadd.f32 0.0, %v5746
      %5748 = vdwg.mxu0
      %v5751 = vcombine.low %v5745, %v5747
      %v5753 = vunpack.c.l.s4 1966171168
      %v5754 = vunpack.c.0.s8 %v5753
      %v5755 = vlaneseq
      %v5756 = vshrl.u32 %v5755, 7
      %v5757 = vsub.s32 %v5754, %v5756
      %v5758 = vrot.slane %v5751, %v5757
      %v5760 = vunpack.c.l.s4 1966171168
      %v5761 = vunpack.c.0.s8 %v5760
      %v5762 = vlaneseq
      %v5763 = vshrl.u32 %v5762, 7
      %v5764 = vsub.s32 %v5761, %v5763
      %v5765 = vrot.slane %v5758, %v5764
      %v5767 = vadd.f32 %v5674, %v5765
      %v5768 = vxor.u32 %v5767, 2147483648
      %v5769 = vmul.f32 %v5768, 1.442695
      %v5770 = vpow.pop %v5769
      %v5771 = vadd.f32 %v5770, 1.0
      %v5772 = vrcp.pop %v5771
      %v5773 = vmul.f32 1.0, %v5772
      %5775 = vrot.lane.b32.xlu0 %v5767, 64
      %v5776 = vpop.permute.xlu0 %5775
      %v5777 = vrot.slane %v5776, 1
      %v5779 = vtanh.pop %v5777
      %v5780 = vmul.f32 %v5773, %v5485
      %v5781 = vmul.f32 %v5773, %v5779
      %5783 = vrot.lane.b32.xlu0 %v5781, 64
      %v5784 = vpop.permute.xlu0 %5783
      %v5786 = vadd.f32 %v5780, %v5784
      %v5787 = vtanh.pop %v5786
      %v5789 = vrot.slane %v5773, 1
      %5792 = vrot.lane.b32.xlu0 %v5787, 64
      %v5793 = vpop.permute.xlu0 %5792
      %v5795 = vmul.f32 %v5789, %v5793
      %5796 = vmatprep.subr.mxu0 0.0
      %5797 = vmatpush1.msra.mxu0 0.0
      %5798 = vmatprep.subr.mxu0 0.0
      %5799 = vmatpush1.msra.mxu0 0.0
      %5800 = vmatprep.subr.mxu0 0.0
      %5801 = vmatpush1.msra.mxu0 0.0
      %5802 = vmatprep.subr.mxu0 0.0
      %5803 = vmatpush1.msra.mxu0 0.0
      %5804 = vmatprep.subr.mxu0 0.0
      %5805 = vmatpush1.msra.mxu0 0.0
      %5806 = vmatprep.subr.mxu0 0.0
      %5807 = vmatpush1.msra.mxu0 0.0
      %5808 = vmatprep.subr.mxu0 0.0
      %5809 = vmatpush1.msra.mxu0 0.0
      %5810 = vmatprep.subr.mxu0 0.0
      %5811 = vmatpush1.msra.mxu0 0.0
      %5812 = vmatprep.subr.mxu0 %v2996
      %5813 = vmatpush1.msra.mxu0 %v2995
      %5814 = vmatprep.subr.mxu0 %v2994
      %5815 = vmatpush1.msra.mxu0 %v2993
      %5816 = vmatprep.subr.mxu0 %v2992
      %5817 = vmatpush1.msra.mxu0 %v2991
      %5818 = vmatprep.subr.mxu0 %v2990
      %5819 = vmatpush1.msra.mxu0 %v2989
      %5820 = vmatprep.subr.mxu0 %v2988
      %5821 = vmatpush1.msra.mxu0 %v2987
      %5822 = vmatprep.subr.mxu0 %v2986
      %5823 = vmatpush1.msra.mxu0 %v2985
      %5824 = vmatprep.subr.mxu0 %v2984
      %5825 = vmatpush1.msra.mxu0 %v2983
      %5826 = vmatprep.subr.mxu0 %v2982
      %5827 = vmatpush1.msra.mxu0 %v2981
      %5828 = vmatprep.subr.mxu0 0.0
      %5829 = vmatpush2.msra.mxu0 0.0
      %5830 = vmatprep.subr.mxu0 0.0
      %5831 = vmatpush2.msra.mxu0 0.0
      %5832 = vmatprep.subr.mxu0 0.0
      %5833 = vmatpush2.msra.mxu0 0.0
      %5834 = vmatprep.subr.mxu0 0.0
      %5835 = vmatpush2.msra.mxu0 0.0
      %5836 = vmatprep.subr.mxu0 0.0
      %5837 = vmatpush2.msra.mxu0 0.0
      %5838 = vmatprep.subr.mxu0 0.0
      %5839 = vmatpush2.msra.mxu0 0.0
      %5840 = vmatprep.subr.mxu0 0.0
      %5841 = vmatpush2.msra.mxu0 0.0
      %5842 = vmatprep.subr.mxu0 0.0
      %5843 = vmatpush2.msra.mxu0 0.0
      %5844 = vmatprep.subr.mxu0 0.0
      %5845 = vmatpush2.msra.mxu0 0.0
      %5846 = vmatprep.subr.mxu0 0.0
      %5847 = vmatpush2.msra.mxu0 0.0
      %5848 = vmatprep.subr.mxu0 0.0
      %5849 = vmatpush2.msra.mxu0 0.0
      %5850 = vmatprep.subr.mxu0 0.0
      %5851 = vmatpush2.msra.mxu0 0.0
      %5852 = vmatprep.subr.mxu0 0.0
      %5853 = vmatpush2.msra.mxu0 0.0
      %5854 = vmatprep.subr.mxu0 0.0
      %5855 = vmatpush2.msra.mxu0 0.0
      %5856 = vmatprep.subr.mxu0 0.0
      %5857 = vmatpush2.msra.mxu0 0.0
      %5858 = vmatprep.subr.mxu0 0.0
      %5859 = vmatpush2.msra.mxu0 0.0
      %5860 = vmatprep.mubr.f32.mxu0 0.0
      %5861 = vmatmul.mubr.f32.gmra.mxu0 %v5676
      %v5862 = vpop.f32.mrf.mxu0
      %v5863 = vadd.f32 %v3155, %v5862
      %v5864 = vpop.f32.mrf.mxu0
      %v5865 = vadd.f32 %v3159, %v5864
      %5866 = vdwg.mxu0
      %v5868 = vsel %vm1612, %v5671, 0
      %5870 = vmatprep.subr.mxu0 0.0
      %5871 = vmatpush1.msra.mxu0 0.0
      %5872 = vmatprep.subr.mxu0 0.0
      %5873 = vmatpush1.msra.mxu0 0.0
      %5874 = vmatprep.subr.mxu0 0.0
      %5875 = vmatpush1.msra.mxu0 0.0
      %5876 = vmatprep.subr.mxu0 0.0
      %5877 = vmatpush1.msra.mxu0 0.0
      %5878 = vmatprep.subr.mxu0 0.0
      %5879 = vmatpush1.msra.mxu0 0.0
      %5880 = vmatprep.subr.mxu0 0.0
      %5881 = vmatpush1.msra.mxu0 0.0
      %5882 = vmatprep.subr.mxu0 0.0
      %5883 = vmatpush1.msra.mxu0 0.0
      %5884 = vmatprep.subr.mxu0 0.0
      %5885 = vmatpush1.msra.mxu0 0.0
      %5886 = vmatprep.subr.mxu0 %v2979
      %5887 = vmatpush1.msra.mxu0 %v2978
      %5888 = vmatprep.subr.mxu0 %v2977
      %5889 = vmatpush1.msra.mxu0 %v2976
      %5890 = vmatprep.subr.mxu0 %v2975
      %5891 = vmatpush1.msra.mxu0 %v2974
      %5892 = vmatprep.subr.mxu0 %v2973
      %5893 = vmatpush1.msra.mxu0 %v2972
      %5894 = vmatprep.subr.mxu0 %v2971
      %5895 = vmatpush1.msra.mxu0 %v2970
      %5896 = vmatprep.subr.mxu0 %v2969
      %5897 = vmatpush1.msra.mxu0 %v2968
      %5898 = vmatprep.subr.mxu0 %v2967
      %5899 = vmatpush1.msra.mxu0 %v2966
      %5900 = vmatprep.subr.mxu0 %v2965
      %5901 = vmatpush1.msra.mxu0 %v2964
      %5902 = vmatprep.subr.mxu0 0.0
      %5903 = vmatpush2.msra.mxu0 0.0
      %5904 = vmatprep.subr.mxu0 0.0
      %5905 = vmatpush2.msra.mxu0 0.0
      %5906 = vmatprep.subr.mxu0 0.0
      %5907 = vmatpush2.msra.mxu0 0.0
      %5908 = vmatprep.subr.mxu0 0.0
      %5909 = vmatpush2.msra.mxu0 0.0
      %5910 = vmatprep.subr.mxu0 0.0
      %5911 = vmatpush2.msra.mxu0 0.0
      %5912 = vmatprep.subr.mxu0 0.0
      %5913 = vmatpush2.msra.mxu0 0.0
      %5914 = vmatprep.subr.mxu0 0.0
      %5915 = vmatpush2.msra.mxu0 0.0
      %5916 = vmatprep.subr.mxu0 0.0
      %5917 = vmatpush2.msra.mxu0 0.0
      %5918 = vmatprep.subr.mxu0 0.0
      %5919 = vmatpush2.msra.mxu0 0.0
      %5920 = vmatprep.subr.mxu0 0.0
      %5921 = vmatpush2.msra.mxu0 0.0
      %5922 = vmatprep.subr.mxu0 0.0
      %5923 = vmatpush2.msra.mxu0 0.0
      %5924 = vmatprep.subr.mxu0 0.0
      %5925 = vmatpush2.msra.mxu0 0.0
      %5926 = vmatprep.subr.mxu0 0.0
      %5927 = vmatpush2.msra.mxu0 0.0
      %5928 = vmatprep.subr.mxu0 0.0
      %5929 = vmatpush2.msra.mxu0 0.0
      %5930 = vmatprep.subr.mxu0 0.0
      %5931 = vmatpush2.msra.mxu0 0.0
      %5932 = vmatprep.subr.mxu0 0.0
      %5933 = vmatpush2.msra.mxu0 0.0
      %5934 = vmatprep.mubr.f32.mxu0 0.0
      %5935 = vmatmul.mubr.f32.gmra.mxu0 %v5868
      %v5936 = vpop.f32.mrf.mxu0
      %v5937 = vadd.f32 0.0, %v5936
      %v5938 = vpop.f32.mrf.mxu0
      %v5939 = vadd.f32 0.0, %v5938
      %5940 = vdwg.mxu0
      %v5941 = vadd.f32 %v5863, %v5937
      %v5942 = vadd.f32 %v5865, %v5939
      %v5943 = vxor.u32 %v5941, 2147483648
      %v5944 = vxor.u32 %v5942, 2147483648
      %v5945 = vmul.f32 %v5943, 1.442695
      %v5946 = vpow.pop %v5945
      %v5947 = vmul.f32 %v5944, 1.442695
      %v5948 = vpow.pop %v5947
      %v5949 = vadd.f32 %v5946, 1.0
      %v5950 = vadd.f32 %v5948, 1.0
      %v5951 = vrcp.pop %v5949
      %v5952 = vmul.f32 1.0, %v5951
      %v5953 = vrcp.pop %v5950
      %v5954 = vmul.f32 1.0, %v5953
      %v5955 = vtanh.pop %v5942
      %v5956 = vmul.f32 %v5952, %v5665
      %5958 = vrot.lane.b32.xlu0 %v5955, 64
      %v5959 = vpop.permute.xlu0 %5958
      %v5961 = vmul.f32 %v5952, %v5959
      %5963 = vrot.lane.b32.xlu0 %v5961, 64
      %v5964 = vpop.permute.xlu0 %5963
      %v5966 = vadd.f32 %v5956, %v5964
      %v5967 = vtanh.pop %v5966
      %5969 = vrot.lane.b32.xlu0 %v5967, 64
      %v5970 = vpop.permute.xlu0 %5969
      %v5972 = vmul.f32 %v5954, %v5970
      %5973 = vst.msk [vmem:[#allocation3 + $0x9] sm:$0x1] %vm3263, %v5972
      %s5974 = scalar_lea.vmem [#allocation2], 19
      %v5975 = vld [vmem:[%s5974] ss:$8 sm:$0x3]
      %v5977 = vsel %vm1612, %v5795, 0
      %5979 = vmatprep.subr.mxu0 0.0
      %5980 = vmatpush1.msra.mxu0 0.0
      %5981 = vmatprep.subr.mxu0 0.0
      %5982 = vmatpush1.msra.mxu0 0.0
      %5983 = vmatprep.subr.mxu0 0.0
      %5984 = vmatpush1.msra.mxu0 0.0
      %5985 = vmatprep.subr.mxu0 0.0
      %5986 = vmatpush1.msra.mxu0 0.0
      %5987 = vmatprep.subr.mxu0 0.0
      %5988 = vmatpush1.msra.mxu0 0.0
      %5989 = vmatprep.subr.mxu0 0.0
      %5990 = vmatpush1.msra.mxu0 0.0
      %5991 = vmatprep.subr.mxu0 0.0
      %5992 = vmatpush1.msra.mxu0 0.0
      %5993 = vmatprep.subr.mxu0 0.0
      %5994 = vmatpush1.msra.mxu0 0.0
      %5995 = vmatprep.subr.mxu0 %v2962
      %5996 = vmatpush1.msra.mxu0 %v2961
      %5997 = vmatprep.subr.mxu0 %v2960
      %5998 = vmatpush1.msra.mxu0 %v2959
      %5999 = vmatprep.subr.mxu0 %v2958
      %6000 = vmatpush1.msra.mxu0 %v2957
      %6001 = vmatprep.subr.mxu0 %v2956
      %6002 = vmatpush1.msra.mxu0 %v2955
      %6003 = vmatprep.subr.mxu0 %v2954
      %6004 = vmatpush1.msra.mxu0 %v2953
      %6005 = vmatprep.subr.mxu0 %v2952
      %6006 = vmatpush1.msra.mxu0 %v2951
      %6007 = vmatprep.subr.mxu0 %v2950
      %6008 = vmatpush1.msra.mxu0 %v2949
      %6009 = vmatprep.subr.mxu0 %v2948
      %6010 = vmatpush1.msra.mxu0 %v2947
      %6011 = vmatprep.subr.mxu0 0.0
      %6012 = vmatpush2.msra.mxu0 0.0
      %6013 = vmatprep.subr.mxu0 0.0
      %6014 = vmatpush2.msra.mxu0 0.0
      %6015 = vmatprep.subr.mxu0 0.0
      %6016 = vmatpush2.msra.mxu0 0.0
      %6017 = vmatprep.subr.mxu0 0.0
      %6018 = vmatpush2.msra.mxu0 0.0
      %6019 = vmatprep.subr.mxu0 0.0
      %6020 = vmatpush2.msra.mxu0 0.0
      %6021 = vmatprep.subr.mxu0 0.0
      %6022 = vmatpush2.msra.mxu0 0.0
      %6023 = vmatprep.subr.mxu0 0.0
      %6024 = vmatpush2.msra.mxu0 0.0
      %6025 = vmatprep.subr.mxu0 0.0
      %6026 = vmatpush2.msra.mxu0 0.0
      %6027 = vmatprep.subr.mxu0 0.0
      %6028 = vmatpush2.msra.mxu0 0.0
      %6029 = vmatprep.subr.mxu0 0.0
      %6030 = vmatpush2.msra.mxu0 0.0
      %6031 = vmatprep.subr.mxu0 0.0
      %6032 = vmatpush2.msra.mxu0 0.0
      %6033 = vmatprep.subr.mxu0 0.0
      %6034 = vmatpush2.msra.mxu0 0.0
      %6035 = vmatprep.subr.mxu0 0.0
      %6036 = vmatpush2.msra.mxu0 0.0
      %6037 = vmatprep.subr.mxu0 0.0
      %6038 = vmatpush2.msra.mxu0 0.0
      %6039 = vmatprep.subr.mxu0 0.0
      %6040 = vmatpush2.msra.mxu0 0.0
      %6041 = vmatprep.subr.mxu0 0.0
      %6042 = vmatpush2.msra.mxu0 0.0
      %6043 = vmatprep.mubr.f32.mxu0 0.0
      %6044 = vmatmul.mubr.f32.gmra.mxu0 %v5977
      %v6045 = vpop.f32.mrf.mxu0
      %v6046 = vadd.f32 0.0, %v6045
      %v6047 = vpop.f32.mrf.mxu0
      %v6048 = vadd.f32 0.0, %v6047
      %6049 = vdwg.mxu0
      %v6052 = vcombine.low %v6046, %v6048
      %v6054 = vunpack.c.l.s4 1966171168
      %v6055 = vunpack.c.0.s8 %v6054
      %v6056 = vlaneseq
      %v6057 = vshrl.u32 %v6056, 7
      %v6058 = vsub.s32 %v6055, %v6057
      %v6059 = vrot.slane %v6052, %v6058
      %v6061 = vunpack.c.l.s4 1966171168
      %v6062 = vunpack.c.0.s8 %v6061
      %v6063 = vlaneseq
      %v6064 = vshrl.u32 %v6063, 7
      %v6065 = vsub.s32 %v6062, %v6064
      %v6066 = vrot.slane %v6059, %v6065
      %v6068 = vadd.f32 %v5975, %v6066
      %v6069 = vxor.u32 %v6068, 2147483648
      %v6070 = vmul.f32 %v6069, 1.442695
      %v6071 = vpow.pop %v6070
      %v6072 = vadd.f32 %v6071, 1.0
      %v6073 = vrcp.pop %v6072
      %v6074 = vmul.f32 1.0, %v6073
      %6076 = vrot.lane.b32.xlu0 %v6068, 64
      %v6077 = vpop.permute.xlu0 %6076
      %v6078 = vrot.slane %v6077, 1
      %v6080 = vtanh.pop %v6078
      %v6081 = vmul.f32 %v6074, %v5786
      %v6082 = vmul.f32 %v6074, %v6080
      %6084 = vrot.lane.b32.xlu0 %v6082, 64
      %v6085 = vpop.permute.xlu0 %6084
      %v6087 = vadd.f32 %v6081, %v6085
      %v6088 = vtanh.pop %v6087
      %v6090 = vrot.slane %v6074, 1
      %6093 = vrot.lane.b32.xlu0 %v6088, 64
      %v6094 = vpop.permute.xlu0 %6093
      %v6096 = vmul.f32 %v6090, %v6094
      %6097 = vmatprep.subr.mxu0 0.0
      %6098 = vmatpush1.msra.mxu0 0.0
      %6099 = vmatprep.subr.mxu0 0.0
      %6100 = vmatpush1.msra.mxu0 0.0
      %6101 = vmatprep.subr.mxu0 0.0
      %6102 = vmatpush1.msra.mxu0 0.0
      %6103 = vmatprep.subr.mxu0 0.0
      %6104 = vmatpush1.msra.mxu0 0.0
      %6105 = vmatprep.subr.mxu0 0.0
      %6106 = vmatpush1.msra.mxu0 0.0
      %6107 = vmatprep.subr.mxu0 0.0
      %6108 = vmatpush1.msra.mxu0 0.0
      %6109 = vmatprep.subr.mxu0 0.0
      %6110 = vmatpush1.msra.mxu0 0.0
      %6111 = vmatprep.subr.mxu0 0.0
      %6112 = vmatpush1.msra.mxu0 0.0
      %6113 = vmatprep.subr.mxu0 %v2996
      %6114 = vmatpush1.msra.mxu0 %v2995
      %6115 = vmatprep.subr.mxu0 %v2994
      %6116 = vmatpush1.msra.mxu0 %v2993
      %6117 = vmatprep.subr.mxu0 %v2992
      %6118 = vmatpush1.msra.mxu0 %v2991
      %6119 = vmatprep.subr.mxu0 %v2990
      %6120 = vmatpush1.msra.mxu0 %v2989
      %6121 = vmatprep.subr.mxu0 %v2988
      %6122 = vmatpush1.msra.mxu0 %v2987
      %6123 = vmatprep.subr.mxu0 %v2986
      %6124 = vmatpush1.msra.mxu0 %v2985
      %6125 = vmatprep.subr.mxu0 %v2984
      %6126 = vmatpush1.msra.mxu0 %v2983
      %6127 = vmatprep.subr.mxu0 %v2982
      %6128 = vmatpush1.msra.mxu0 %v2981
      %6129 = vmatprep.subr.mxu0 0.0
      %6130 = vmatpush2.msra.mxu0 0.0
      %6131 = vmatprep.subr.mxu0 0.0
      %6132 = vmatpush2.msra.mxu0 0.0
      %6133 = vmatprep.subr.mxu0 0.0
      %6134 = vmatpush2.msra.mxu0 0.0
      %6135 = vmatprep.subr.mxu0 0.0
      %6136 = vmatpush2.msra.mxu0 0.0
      %6137 = vmatprep.subr.mxu0 0.0
      %6138 = vmatpush2.msra.mxu0 0.0
      %6139 = vmatprep.subr.mxu0 0.0
      %6140 = vmatpush2.msra.mxu0 0.0
      %6141 = vmatprep.subr.mxu0 0.0
      %6142 = vmatpush2.msra.mxu0 0.0
      %6143 = vmatprep.subr.mxu0 0.0
      %6144 = vmatpush2.msra.mxu0 0.0
      %6145 = vmatprep.subr.mxu0 0.0
      %6146 = vmatpush2.msra.mxu0 0.0
      %6147 = vmatprep.subr.mxu0 0.0
      %6148 = vmatpush2.msra.mxu0 0.0
      %6149 = vmatprep.subr.mxu0 0.0
      %6150 = vmatpush2.msra.mxu0 0.0
      %6151 = vmatprep.subr.mxu0 0.0
      %6152 = vmatpush2.msra.mxu0 0.0
      %6153 = vmatprep.subr.mxu0 0.0
      %6154 = vmatpush2.msra.mxu0 0.0
      %6155 = vmatprep.subr.mxu0 0.0
      %6156 = vmatpush2.msra.mxu0 0.0
      %6157 = vmatprep.subr.mxu0 0.0
      %6158 = vmatpush2.msra.mxu0 0.0
      %6159 = vmatprep.subr.mxu0 0.0
      %6160 = vmatpush2.msra.mxu0 0.0
      %6161 = vmatprep.mubr.f32.mxu0 0.0
      %6162 = vmatmul.mubr.f32.gmra.mxu0 %v5977
      %v6163 = vpop.f32.mrf.mxu0
      %v6164 = vadd.f32 %v3155, %v6163
      %v6165 = vpop.f32.mrf.mxu0
      %v6166 = vadd.f32 %v3159, %v6165
      %6167 = vdwg.mxu0
      %v6169 = vsel %vm1612, %v5972, 0
      %6171 = vmatprep.subr.mxu0 0.0
      %6172 = vmatpush1.msra.mxu0 0.0
      %6173 = vmatprep.subr.mxu0 0.0
      %6174 = vmatpush1.msra.mxu0 0.0
      %6175 = vmatprep.subr.mxu0 0.0
      %6176 = vmatpush1.msra.mxu0 0.0
      %6177 = vmatprep.subr.mxu0 0.0
      %6178 = vmatpush1.msra.mxu0 0.0
      %6179 = vmatprep.subr.mxu0 0.0
      %6180 = vmatpush1.msra.mxu0 0.0
      %6181 = vmatprep.subr.mxu0 0.0
      %6182 = vmatpush1.msra.mxu0 0.0
      %6183 = vmatprep.subr.mxu0 0.0
      %6184 = vmatpush1.msra.mxu0 0.0
      %6185 = vmatprep.subr.mxu0 0.0
      %6186 = vmatpush1.msra.mxu0 0.0
      %6187 = vmatprep.subr.mxu0 %v2979
      %6188 = vmatpush1.msra.mxu0 %v2978
      %6189 = vmatprep.subr.mxu0 %v2977
      %6190 = vmatpush1.msra.mxu0 %v2976
      %6191 = vmatprep.subr.mxu0 %v2975
      %6192 = vmatpush1.msra.mxu0 %v2974
      %6193 = vmatprep.subr.mxu0 %v2973
      %6194 = vmatpush1.msra.mxu0 %v2972
      %6195 = vmatprep.subr.mxu0 %v2971
      %6196 = vmatpush1.msra.mxu0 %v2970
      %6197 = vmatprep.subr.mxu0 %v2969
      %6198 = vmatpush1.msra.mxu0 %v2968
      %6199 = vmatprep.subr.mxu0 %v2967
      %6200 = vmatpush1.msra.mxu0 %v2966
      %6201 = vmatprep.subr.mxu0 %v2965
      %6202 = vmatpush1.msra.mxu0 %v2964
      %6203 = vmatprep.subr.mxu0 0.0
      %6204 = vmatpush2.msra.mxu0 0.0
      %6205 = vmatprep.subr.mxu0 0.0
      %6206 = vmatpush2.msra.mxu0 0.0
      %6207 = vmatprep.subr.mxu0 0.0
      %6208 = vmatpush2.msra.mxu0 0.0
      %6209 = vmatprep.subr.mxu0 0.0
      %6210 = vmatpush2.msra.mxu0 0.0
      %6211 = vmatprep.subr.mxu0 0.0
      %6212 = vmatpush2.msra.mxu0 0.0
      %6213 = vmatprep.subr.mxu0 0.0
      %6214 = vmatpush2.msra.mxu0 0.0
      %6215 = vmatprep.subr.mxu0 0.0
      %6216 = vmatpush2.msra.mxu0 0.0
      %6217 = vmatprep.subr.mxu0 0.0
      %6218 = vmatpush2.msra.mxu0 0.0
      %6219 = vmatprep.subr.mxu0 0.0
      %6220 = vmatpush2.msra.mxu0 0.0
      %6221 = vmatprep.subr.mxu0 0.0
      %6222 = vmatpush2.msra.mxu0 0.0
      %6223 = vmatprep.subr.mxu0 0.0
      %6224 = vmatpush2.msra.mxu0 0.0
      %6225 = vmatprep.subr.mxu0 0.0
      %6226 = vmatpush2.msra.mxu0 0.0
      %6227 = vmatprep.subr.mxu0 0.0
      %6228 = vmatpush2.msra.mxu0 0.0
      %6229 = vmatprep.subr.mxu0 0.0
      %6230 = vmatpush2.msra.mxu0 0.0
      %6231 = vmatprep.subr.mxu0 0.0
      %6232 = vmatpush2.msra.mxu0 0.0
      %6233 = vmatprep.subr.mxu0 0.0
      %6234 = vmatpush2.msra.mxu0 0.0
      %6235 = vmatprep.mubr.f32.mxu0 0.0
      %6236 = vmatmul.mubr.f32.gmra.mxu0 %v6169
      %v6237 = vpop.f32.mrf.mxu0
      %v6238 = vadd.f32 0.0, %v6237
      %v6239 = vpop.f32.mrf.mxu0
      %v6240 = vadd.f32 0.0, %v6239
      %6241 = vdwg.mxu0
      %v6242 = vadd.f32 %v6164, %v6238
      %v6243 = vadd.f32 %v6166, %v6240
      %v6244 = vxor.u32 %v6242, 2147483648
      %v6245 = vxor.u32 %v6243, 2147483648
      %v6246 = vmul.f32 %v6244, 1.442695
      %v6247 = vpow.pop %v6246
      %v6248 = vmul.f32 %v6245, 1.442695
      %v6249 = vpow.pop %v6248
      %v6250 = vadd.f32 %v6247, 1.0
      %v6251 = vadd.f32 %v6249, 1.0
      %v6252 = vrcp.pop %v6250
      %v6253 = vmul.f32 1.0, %v6252
      %v6254 = vrcp.pop %v6251
      %v6255 = vmul.f32 1.0, %v6254
      %v6256 = vtanh.pop %v6243
      %v6257 = vmul.f32 %v6253, %v5966
      %6259 = vrot.lane.b32.xlu0 %v6256, 64
      %v6260 = vpop.permute.xlu0 %6259
      %v6262 = vmul.f32 %v6253, %v6260
      %6264 = vrot.lane.b32.xlu0 %v6262, 64
      %v6265 = vpop.permute.xlu0 %6264
      %v6267 = vadd.f32 %v6257, %v6265
      %v6268 = vtanh.pop %v6267
      %6270 = vrot.lane.b32.xlu0 %v6268, 64
      %v6271 = vpop.permute.xlu0 %6270
      %v6273 = vmul.f32 %v6255, %v6271
      %6274 = vst.msk [vmem:[#allocation3 + $0xa] sm:$0x1] %vm3263, %v6273
      %s6275 = scalar_lea.vmem [#allocation2], 20
      %v6276 = vld [vmem:[%s6275] ss:$8 sm:$0x3]
      %v6278 = vsel %vm1612, %v6096, 0
      %6280 = vmatprep.subr.mxu0 0.0
      %6281 = vmatpush1.msra.mxu0 0.0
      %6282 = vmatprep.subr.mxu0 0.0
      %6283 = vmatpush1.msra.mxu0 0.0
      %6284 = vmatprep.subr.mxu0 0.0
      %6285 = vmatpush1.msra.mxu0 0.0
      %6286 = vmatprep.subr.mxu0 0.0
      %6287 = vmatpush1.msra.mxu0 0.0
      %6288 = vmatprep.subr.mxu0 0.0
      %6289 = vmatpush1.msra.mxu0 0.0
      %6290 = vmatprep.subr.mxu0 0.0
      %6291 = vmatpush1.msra.mxu0 0.0
      %6292 = vmatprep.subr.mxu0 0.0
      %6293 = vmatpush1.msra.mxu0 0.0
      %6294 = vmatprep.subr.mxu0 0.0
      %6295 = vmatpush1.msra.mxu0 0.0
      %6296 = vmatprep.subr.mxu0 %v2962
      %6297 = vmatpush1.msra.mxu0 %v2961
      %6298 = vmatprep.subr.mxu0 %v2960
      %6299 = vmatpush1.msra.mxu0 %v2959
      %6300 = vmatprep.subr.mxu0 %v2958
      %6301 = vmatpush1.msra.mxu0 %v2957
      %6302 = vmatprep.subr.mxu0 %v2956
      %6303 = vmatpush1.msra.mxu0 %v2955
      %6304 = vmatprep.subr.mxu0 %v2954
      %6305 = vmatpush1.msra.mxu0 %v2953
      %6306 = vmatprep.subr.mxu0 %v2952
      %6307 = vmatpush1.msra.mxu0 %v2951
      %6308 = vmatprep.subr.mxu0 %v2950
      %6309 = vmatpush1.msra.mxu0 %v2949
      %6310 = vmatprep.subr.mxu0 %v2948
      %6311 = vmatpush1.msra.mxu0 %v2947
      %6312 = vmatprep.subr.mxu0 0.0
      %6313 = vmatpush2.msra.mxu0 0.0
      %6314 = vmatprep.subr.mxu0 0.0
      %6315 = vmatpush2.msra.mxu0 0.0
      %6316 = vmatprep.subr.mxu0 0.0
      %6317 = vmatpush2.msra.mxu0 0.0
      %6318 = vmatprep.subr.mxu0 0.0
      %6319 = vmatpush2.msra.mxu0 0.0
      %6320 = vmatprep.subr.mxu0 0.0
      %6321 = vmatpush2.msra.mxu0 0.0
      %6322 = vmatprep.subr.mxu0 0.0
      %6323 = vmatpush2.msra.mxu0 0.0
      %6324 = vmatprep.subr.mxu0 0.0
      %6325 = vmatpush2.msra.mxu0 0.0
      %6326 = vmatprep.subr.mxu0 0.0
      %6327 = vmatpush2.msra.mxu0 0.0
      %6328 = vmatprep.subr.mxu0 0.0
      %6329 = vmatpush2.msra.mxu0 0.0
      %6330 = vmatprep.subr.mxu0 0.0
      %6331 = vmatpush2.msra.mxu0 0.0
      %6332 = vmatprep.subr.mxu0 0.0
      %6333 = vmatpush2.msra.mxu0 0.0
      %6334 = vmatprep.subr.mxu0 0.0
      %6335 = vmatpush2.msra.mxu0 0.0
      %6336 = vmatprep.subr.mxu0 0.0
      %6337 = vmatpush2.msra.mxu0 0.0
      %6338 = vmatprep.subr.mxu0 0.0
      %6339 = vmatpush2.msra.mxu0 0.0
      %6340 = vmatprep.subr.mxu0 0.0
      %6341 = vmatpush2.msra.mxu0 0.0
      %6342 = vmatprep.subr.mxu0 0.0
      %6343 = vmatpush2.msra.mxu0 0.0
      %6344 = vmatprep.mubr.f32.mxu0 0.0
      %6345 = vmatmul.mubr.f32.gmra.mxu0 %v6278
      %v6346 = vpop.f32.mrf.mxu0
      %v6347 = vadd.f32 0.0, %v6346
      %v6348 = vpop.f32.mrf.mxu0
      %v6349 = vadd.f32 0.0, %v6348
      %6350 = vdwg.mxu0
      %v6353 = vcombine.low %v6347, %v6349
      %v6355 = vunpack.c.l.s4 1966171168
      %v6356 = vunpack.c.0.s8 %v6355
      %v6357 = vlaneseq
      %v6358 = vshrl.u32 %v6357, 7
      %v6359 = vsub.s32 %v6356, %v6358
      %v6360 = vrot.slane %v6353, %v6359
      %v6362 = vunpack.c.l.s4 1966171168
      %v6363 = vunpack.c.0.s8 %v6362
      %v6364 = vlaneseq
      %v6365 = vshrl.u32 %v6364, 7
      %v6366 = vsub.s32 %v6363, %v6365
      %v6367 = vrot.slane %v6360, %v6366
      %v6369 = vadd.f32 %v6276, %v6367
      %v6370 = vxor.u32 %v6369, 2147483648
      %v6371 = vmul.f32 %v6370, 1.442695
      %v6372 = vpow.pop %v6371
      %v6373 = vadd.f32 %v6372, 1.0
      %v6374 = vrcp.pop %v6373
      %v6375 = vmul.f32 1.0, %v6374
      %6377 = vrot.lane.b32.xlu0 %v6369, 64
      %v6378 = vpop.permute.xlu0 %6377
      %v6379 = vrot.slane %v6378, 1
      %v6381 = vtanh.pop %v6379
      %v6382 = vmul.f32 %v6375, %v6087
      %v6383 = vmul.f32 %v6375, %v6381
      %6385 = vrot.lane.b32.xlu0 %v6383, 64
      %v6386 = vpop.permute.xlu0 %6385
      %v6388 = vadd.f32 %v6382, %v6386
      %v6389 = vtanh.pop %v6388
      %v6391 = vrot.slane %v6375, 1
      %6394 = vrot.lane.b32.xlu0 %v6389, 64
      %v6395 = vpop.permute.xlu0 %6394
      %v6397 = vmul.f32 %v6391, %v6395
      %6398 = vmatprep.subr.mxu0 0.0
      %6399 = vmatpush1.msra.mxu0 0.0
      %6400 = vmatprep.subr.mxu0 0.0
      %6401 = vmatpush1.msra.mxu0 0.0
      %6402 = vmatprep.subr.mxu0 0.0
      %6403 = vmatpush1.msra.mxu0 0.0
      %6404 = vmatprep.subr.mxu0 0.0
      %6405 = vmatpush1.msra.mxu0 0.0
      %6406 = vmatprep.subr.mxu0 0.0
      %6407 = vmatpush1.msra.mxu0 0.0
      %6408 = vmatprep.subr.mxu0 0.0
      %6409 = vmatpush1.msra.mxu0 0.0
      %6410 = vmatprep.subr.mxu0 0.0
      %6411 = vmatpush1.msra.mxu0 0.0
      %6412 = vmatprep.subr.mxu0 0.0
      %6413 = vmatpush1.msra.mxu0 0.0
      %6414 = vmatprep.subr.mxu0 %v2996
      %6415 = vmatpush1.msra.mxu0 %v2995
      %6416 = vmatprep.subr.mxu0 %v2994
      %6417 = vmatpush1.msra.mxu0 %v2993
      %6418 = vmatprep.subr.mxu0 %v2992
      %6419 = vmatpush1.msra.mxu0 %v2991
      %6420 = vmatprep.subr.mxu0 %v2990
      %6421 = vmatpush1.msra.mxu0 %v2989
      %6422 = vmatprep.subr.mxu0 %v2988
      %6423 = vmatpush1.msra.mxu0 %v2987
      %6424 = vmatprep.subr.mxu0 %v2986
      %6425 = vmatpush1.msra.mxu0 %v2985
      %6426 = vmatprep.subr.mxu0 %v2984
      %6427 = vmatpush1.msra.mxu0 %v2983
      %6428 = vmatprep.subr.mxu0 %v2982
      %6429 = vmatpush1.msra.mxu0 %v2981
      %6430 = vmatprep.subr.mxu0 0.0
      %6431 = vmatpush2.msra.mxu0 0.0
      %6432 = vmatprep.subr.mxu0 0.0
      %6433 = vmatpush2.msra.mxu0 0.0
      %6434 = vmatprep.subr.mxu0 0.0
      %6435 = vmatpush2.msra.mxu0 0.0
      %6436 = vmatprep.subr.mxu0 0.0
      %6437 = vmatpush2.msra.mxu0 0.0
      %6438 = vmatprep.subr.mxu0 0.0
      %6439 = vmatpush2.msra.mxu0 0.0
      %6440 = vmatprep.subr.mxu0 0.0
      %6441 = vmatpush2.msra.mxu0 0.0
      %6442 = vmatprep.subr.mxu0 0.0
      %6443 = vmatpush2.msra.mxu0 0.0
      %6444 = vmatprep.subr.mxu0 0.0
      %6445 = vmatpush2.msra.mxu0 0.0
      %6446 = vmatprep.subr.mxu0 0.0
      %6447 = vmatpush2.msra.mxu0 0.0
      %6448 = vmatprep.subr.mxu0 0.0
      %6449 = vmatpush2.msra.mxu0 0.0
      %6450 = vmatprep.subr.mxu0 0.0
      %6451 = vmatpush2.msra.mxu0 0.0
      %6452 = vmatprep.subr.mxu0 0.0
      %6453 = vmatpush2.msra.mxu0 0.0
      %6454 = vmatprep.subr.mxu0 0.0
      %6455 = vmatpush2.msra.mxu0 0.0
      %6456 = vmatprep.subr.mxu0 0.0
      %6457 = vmatpush2.msra.mxu0 0.0
      %6458 = vmatprep.subr.mxu0 0.0
      %6459 = vmatpush2.msra.mxu0 0.0
      %6460 = vmatprep.subr.mxu0 0.0
      %6461 = vmatpush2.msra.mxu0 0.0
      %6462 = vmatprep.mubr.f32.mxu0 0.0
      %6463 = vmatmul.mubr.f32.gmra.mxu0 %v6278
      %v6464 = vpop.f32.mrf.mxu0
      %v6465 = vadd.f32 %v3155, %v6464
      %v6466 = vpop.f32.mrf.mxu0
      %v6467 = vadd.f32 %v3159, %v6466
      %6468 = vdwg.mxu0
      %v6470 = vsel %vm1612, %v6273, 0
      %6472 = vmatprep.subr.mxu0 0.0
      %6473 = vmatpush1.msra.mxu0 0.0
      %6474 = vmatprep.subr.mxu0 0.0
      %6475 = vmatpush1.msra.mxu0 0.0
      %6476 = vmatprep.subr.mxu0 0.0
      %6477 = vmatpush1.msra.mxu0 0.0
      %6478 = vmatprep.subr.mxu0 0.0
      %6479 = vmatpush1.msra.mxu0 0.0
      %6480 = vmatprep.subr.mxu0 0.0
      %6481 = vmatpush1.msra.mxu0 0.0
      %6482 = vmatprep.subr.mxu0 0.0
      %6483 = vmatpush1.msra.mxu0 0.0
      %6484 = vmatprep.subr.mxu0 0.0
      %6485 = vmatpush1.msra.mxu0 0.0
      %6486 = vmatprep.subr.mxu0 0.0
      %6487 = vmatpush1.msra.mxu0 0.0
      %6488 = vmatprep.subr.mxu0 %v2979
      %6489 = vmatpush1.msra.mxu0 %v2978
      %6490 = vmatprep.subr.mxu0 %v2977
      %6491 = vmatpush1.msra.mxu0 %v2976
      %6492 = vmatprep.subr.mxu0 %v2975
      %6493 = vmatpush1.msra.mxu0 %v2974
      %6494 = vmatprep.subr.mxu0 %v2973
      %6495 = vmatpush1.msra.mxu0 %v2972
      %6496 = vmatprep.subr.mxu0 %v2971
      %6497 = vmatpush1.msra.mxu0 %v2970
      %6498 = vmatprep.subr.mxu0 %v2969
      %6499 = vmatpush1.msra.mxu0 %v2968
      %6500 = vmatprep.subr.mxu0 %v2967
      %6501 = vmatpush1.msra.mxu0 %v2966
      %6502 = vmatprep.subr.mxu0 %v2965
      %6503 = vmatpush1.msra.mxu0 %v2964
      %6504 = vmatprep.subr.mxu0 0.0
      %6505 = vmatpush2.msra.mxu0 0.0
      %6506 = vmatprep.subr.mxu0 0.0
      %6507 = vmatpush2.msra.mxu0 0.0
      %6508 = vmatprep.subr.mxu0 0.0
      %6509 = vmatpush2.msra.mxu0 0.0
      %6510 = vmatprep.subr.mxu0 0.0
      %6511 = vmatpush2.msra.mxu0 0.0
      %6512 = vmatprep.subr.mxu0 0.0
      %6513 = vmatpush2.msra.mxu0 0.0
      %6514 = vmatprep.subr.mxu0 0.0
      %6515 = vmatpush2.msra.mxu0 0.0
      %6516 = vmatprep.subr.mxu0 0.0
      %6517 = vmatpush2.msra.mxu0 0.0
      %6518 = vmatprep.subr.mxu0 0.0
      %6519 = vmatpush2.msra.mxu0 0.0
      %6520 = vmatprep.subr.mxu0 0.0
      %6521 = vmatpush2.msra.mxu0 0.0
      %6522 = vmatprep.subr.mxu0 0.0
      %6523 = vmatpush2.msra.mxu0 0.0
      %6524 = vmatprep.subr.mxu0 0.0
      %6525 = vmatpush2.msra.mxu0 0.0
      %6526 = vmatprep.subr.mxu0 0.0
      %6527 = vmatpush2.msra.mxu0 0.0
      %6528 = vmatprep.subr.mxu0 0.0
      %6529 = vmatpush2.msra.mxu0 0.0
      %6530 = vmatprep.subr.mxu0 0.0
      %6531 = vmatpush2.msra.mxu0 0.0
      %6532 = vmatprep.subr.mxu0 0.0
      %6533 = vmatpush2.msra.mxu0 0.0
      %6534 = vmatprep.subr.mxu0 0.0
      %6535 = vmatpush2.msra.mxu0 0.0
      %6536 = vmatprep.mubr.f32.mxu0 0.0
      %6537 = vmatmul.mubr.f32.gmra.mxu0 %v6470
      %v6538 = vpop.f32.mrf.mxu0
      %v6539 = vadd.f32 0.0, %v6538
      %v6540 = vpop.f32.mrf.mxu0
      %v6541 = vadd.f32 0.0, %v6540
      %6542 = vdwg.mxu0
      %v6543 = vadd.f32 %v6465, %v6539
      %v6544 = vadd.f32 %v6467, %v6541
      %v6545 = vxor.u32 %v6543, 2147483648
      %v6546 = vxor.u32 %v6544, 2147483648
      %v6547 = vmul.f32 %v6545, 1.442695
      %v6548 = vpow.pop %v6547
      %v6549 = vmul.f32 %v6546, 1.442695
      %v6550 = vpow.pop %v6549
      %v6551 = vadd.f32 %v6548, 1.0
      %v6552 = vadd.f32 %v6550, 1.0
      %v6553 = vrcp.pop %v6551
      %v6554 = vmul.f32 1.0, %v6553
      %v6555 = vrcp.pop %v6552
      %v6556 = vmul.f32 1.0, %v6555
      %v6557 = vtanh.pop %v6544
      %v6558 = vmul.f32 %v6554, %v6267
      %6560 = vrot.lane.b32.xlu0 %v6557, 64
      %v6561 = vpop.permute.xlu0 %6560
      %v6563 = vmul.f32 %v6554, %v6561
      %6565 = vrot.lane.b32.xlu0 %v6563, 64
      %v6566 = vpop.permute.xlu0 %6565
      %v6568 = vadd.f32 %v6558, %v6566
      %v6569 = vtanh.pop %v6568
      %6571 = vrot.lane.b32.xlu0 %v6569, 64
      %v6572 = vpop.permute.xlu0 %6571
      %v6574 = vmul.f32 %v6556, %v6572
      %6575 = vst.msk [vmem:[#allocation3 + $0xb] sm:$0x1] %vm3263, %v6574
      %s6576 = scalar_lea.vmem [#allocation2], 21
      %v6577 = vld [vmem:[%s6576] ss:$8 sm:$0x3]
      %v6579 = vsel %vm1612, %v6397, 0
      %6581 = vmatprep.subr.mxu0 0.0
      %6582 = vmatpush1.msra.mxu0 0.0
      %6583 = vmatprep.subr.mxu0 0.0
      %6584 = vmatpush1.msra.mxu0 0.0
      %6585 = vmatprep.subr.mxu0 0.0
      %6586 = vmatpush1.msra.mxu0 0.0
      %6587 = vmatprep.subr.mxu0 0.0
      %6588 = vmatpush1.msra.mxu0 0.0
      %6589 = vmatprep.subr.mxu0 0.0
      %6590 = vmatpush1.msra.mxu0 0.0
      %6591 = vmatprep.subr.mxu0 0.0
      %6592 = vmatpush1.msra.mxu0 0.0
      %6593 = vmatprep.subr.mxu0 0.0
      %6594 = vmatpush1.msra.mxu0 0.0
      %6595 = vmatprep.subr.mxu0 0.0
      %6596 = vmatpush1.msra.mxu0 0.0
      %6597 = vmatprep.subr.mxu0 %v2962
      %6598 = vmatpush1.msra.mxu0 %v2961
      %6599 = vmatprep.subr.mxu0 %v2960
      %6600 = vmatpush1.msra.mxu0 %v2959
      %6601 = vmatprep.subr.mxu0 %v2958
      %6602 = vmatpush1.msra.mxu0 %v2957
      %6603 = vmatprep.subr.mxu0 %v2956
      %6604 = vmatpush1.msra.mxu0 %v2955
      %6605 = vmatprep.subr.mxu0 %v2954
      %6606 = vmatpush1.msra.mxu0 %v2953
      %6607 = vmatprep.subr.mxu0 %v2952
      %6608 = vmatpush1.msra.mxu0 %v2951
      %6609 = vmatprep.subr.mxu0 %v2950
      %6610 = vmatpush1.msra.mxu0 %v2949
      %6611 = vmatprep.subr.mxu0 %v2948
      %6612 = vmatpush1.msra.mxu0 %v2947
      %6613 = vmatprep.subr.mxu0 0.0
      %6614 = vmatpush2.msra.mxu0 0.0
      %6615 = vmatprep.subr.mxu0 0.0
      %6616 = vmatpush2.msra.mxu0 0.0
      %6617 = vmatprep.subr.mxu0 0.0
      %6618 = vmatpush2.msra.mxu0 0.0
      %6619 = vmatprep.subr.mxu0 0.0
      %6620 = vmatpush2.msra.mxu0 0.0
      %6621 = vmatprep.subr.mxu0 0.0
      %6622 = vmatpush2.msra.mxu0 0.0
      %6623 = vmatprep.subr.mxu0 0.0
      %6624 = vmatpush2.msra.mxu0 0.0
      %6625 = vmatprep.subr.mxu0 0.0
      %6626 = vmatpush2.msra.mxu0 0.0
      %6627 = vmatprep.subr.mxu0 0.0
      %6628 = vmatpush2.msra.mxu0 0.0
      %6629 = vmatprep.subr.mxu0 0.0
      %6630 = vmatpush2.msra.mxu0 0.0
      %6631 = vmatprep.subr.mxu0 0.0
      %6632 = vmatpush2.msra.mxu0 0.0
      %6633 = vmatprep.subr.mxu0 0.0
      %6634 = vmatpush2.msra.mxu0 0.0
      %6635 = vmatprep.subr.mxu0 0.0
      %6636 = vmatpush2.msra.mxu0 0.0
      %6637 = vmatprep.subr.mxu0 0.0
      %6638 = vmatpush2.msra.mxu0 0.0
      %6639 = vmatprep.subr.mxu0 0.0
      %6640 = vmatpush2.msra.mxu0 0.0
      %6641 = vmatprep.subr.mxu0 0.0
      %6642 = vmatpush2.msra.mxu0 0.0
      %6643 = vmatprep.subr.mxu0 0.0
      %6644 = vmatpush2.msra.mxu0 0.0
      %6645 = vmatprep.mubr.f32.mxu0 0.0
      %6646 = vmatmul.mubr.f32.gmra.mxu0 %v6579
      %v6647 = vpop.f32.mrf.mxu0
      %v6648 = vadd.f32 0.0, %v6647
      %v6649 = vpop.f32.mrf.mxu0
      %v6650 = vadd.f32 0.0, %v6649
      %6651 = vdwg.mxu0
      %v6654 = vcombine.low %v6648, %v6650
      %v6656 = vunpack.c.l.s4 1966171168
      %v6657 = vunpack.c.0.s8 %v6656
      %v6658 = vlaneseq
      %v6659 = vshrl.u32 %v6658, 7
      %v6660 = vsub.s32 %v6657, %v6659
      %v6661 = vrot.slane %v6654, %v6660
      %v6663 = vunpack.c.l.s4 1966171168
      %v6664 = vunpack.c.0.s8 %v6663
      %v6665 = vlaneseq
      %v6666 = vshrl.u32 %v6665, 7
      %v6667 = vsub.s32 %v6664, %v6666
      %v6668 = vrot.slane %v6661, %v6667
      %v6670 = vadd.f32 %v6577, %v6668
      %v6671 = vxor.u32 %v6670, 2147483648
      %v6672 = vmul.f32 %v6671, 1.442695
      %v6673 = vpow.pop %v6672
      %v6674 = vadd.f32 %v6673, 1.0
      %v6675 = vrcp.pop %v6674
      %v6676 = vmul.f32 1.0, %v6675
      %6678 = vrot.lane.b32.xlu0 %v6670, 64
      %v6679 = vpop.permute.xlu0 %6678
      %v6680 = vrot.slane %v6679, 1
      %v6682 = vtanh.pop %v6680
      %v6683 = vmul.f32 %v6676, %v6388
      %v6684 = vmul.f32 %v6676, %v6682
      %6686 = vrot.lane.b32.xlu0 %v6684, 64
      %v6687 = vpop.permute.xlu0 %6686
      %v6689 = vadd.f32 %v6683, %v6687
      %v6690 = vtanh.pop %v6689
      %v6692 = vrot.slane %v6676, 1
      %6695 = vrot.lane.b32.xlu0 %v6690, 64
      %v6696 = vpop.permute.xlu0 %6695
      %v6698 = vmul.f32 %v6692, %v6696
      %6699 = vmatprep.subr.mxu0 0.0
      %6700 = vmatpush1.msra.mxu0 0.0
      %6701 = vmatprep.subr.mxu0 0.0
      %6702 = vmatpush1.msra.mxu0 0.0
      %6703 = vmatprep.subr.mxu0 0.0
      %6704 = vmatpush1.msra.mxu0 0.0
      %6705 = vmatprep.subr.mxu0 0.0
      %6706 = vmatpush1.msra.mxu0 0.0
      %6707 = vmatprep.subr.mxu0 0.0
      %6708 = vmatpush1.msra.mxu0 0.0
      %6709 = vmatprep.subr.mxu0 0.0
      %6710 = vmatpush1.msra.mxu0 0.0
      %6711 = vmatprep.subr.mxu0 0.0
      %6712 = vmatpush1.msra.mxu0 0.0
      %6713 = vmatprep.subr.mxu0 0.0
      %6714 = vmatpush1.msra.mxu0 0.0
      %6715 = vmatprep.subr.mxu0 %v2996
      %6716 = vmatpush1.msra.mxu0 %v2995
      %6717 = vmatprep.subr.mxu0 %v2994
      %6718 = vmatpush1.msra.mxu0 %v2993
      %6719 = vmatprep.subr.mxu0 %v2992
      %6720 = vmatpush1.msra.mxu0 %v2991
      %6721 = vmatprep.subr.mxu0 %v2990
      %6722 = vmatpush1.msra.mxu0 %v2989
      %6723 = vmatprep.subr.mxu0 %v2988
      %6724 = vmatpush1.msra.mxu0 %v2987
      %6725 = vmatprep.subr.mxu0 %v2986
      %6726 = vmatpush1.msra.mxu0 %v2985
      %6727 = vmatprep.subr.mxu0 %v2984
      %6728 = vmatpush1.msra.mxu0 %v2983
      %6729 = vmatprep.subr.mxu0 %v2982
      %6730 = vmatpush1.msra.mxu0 %v2981
      %6731 = vmatprep.subr.mxu0 0.0
      %6732 = vmatpush2.msra.mxu0 0.0
      %6733 = vmatprep.subr.mxu0 0.0
      %6734 = vmatpush2.msra.mxu0 0.0
      %6735 = vmatprep.subr.mxu0 0.0
      %6736 = vmatpush2.msra.mxu0 0.0
      %6737 = vmatprep.subr.mxu0 0.0
      %6738 = vmatpush2.msra.mxu0 0.0
      %6739 = vmatprep.subr.mxu0 0.0
      %6740 = vmatpush2.msra.mxu0 0.0
      %6741 = vmatprep.subr.mxu0 0.0
      %6742 = vmatpush2.msra.mxu0 0.0
      %6743 = vmatprep.subr.mxu0 0.0
      %6744 = vmatpush2.msra.mxu0 0.0
      %6745 = vmatprep.subr.mxu0 0.0
      %6746 = vmatpush2.msra.mxu0 0.0
      %6747 = vmatprep.subr.mxu0 0.0
      %6748 = vmatpush2.msra.mxu0 0.0
      %6749 = vmatprep.subr.mxu0 0.0
      %6750 = vmatpush2.msra.mxu0 0.0
      %6751 = vmatprep.subr.mxu0 0.0
      %6752 = vmatpush2.msra.mxu0 0.0
      %6753 = vmatprep.subr.mxu0 0.0
      %6754 = vmatpush2.msra.mxu0 0.0
      %6755 = vmatprep.subr.mxu0 0.0
      %6756 = vmatpush2.msra.mxu0 0.0
      %6757 = vmatprep.subr.mxu0 0.0
      %6758 = vmatpush2.msra.mxu0 0.0
      %6759 = vmatprep.subr.mxu0 0.0
      %6760 = vmatpush2.msra.mxu0 0.0
      %6761 = vmatprep.subr.mxu0 0.0
      %6762 = vmatpush2.msra.mxu0 0.0
      %6763 = vmatprep.mubr.f32.mxu0 0.0
      %6764 = vmatmul.mubr.f32.gmra.mxu0 %v6579
      %v6765 = vpop.f32.mrf.mxu0
      %v6766 = vadd.f32 %v3155, %v6765
      %v6767 = vpop.f32.mrf.mxu0
      %v6768 = vadd.f32 %v3159, %v6767
      %6769 = vdwg.mxu0
      %v6771 = vsel %vm1612, %v6574, 0
      %6773 = vmatprep.subr.mxu0 0.0
      %6774 = vmatpush1.msra.mxu0 0.0
      %6775 = vmatprep.subr.mxu0 0.0
      %6776 = vmatpush1.msra.mxu0 0.0
      %6777 = vmatprep.subr.mxu0 0.0
      %6778 = vmatpush1.msra.mxu0 0.0
      %6779 = vmatprep.subr.mxu0 0.0
      %6780 = vmatpush1.msra.mxu0 0.0
      %6781 = vmatprep.subr.mxu0 0.0
      %6782 = vmatpush1.msra.mxu0 0.0
      %6783 = vmatprep.subr.mxu0 0.0
      %6784 = vmatpush1.msra.mxu0 0.0
      %6785 = vmatprep.subr.mxu0 0.0
      %6786 = vmatpush1.msra.mxu0 0.0
      %6787 = vmatprep.subr.mxu0 0.0
      %6788 = vmatpush1.msra.mxu0 0.0
      %6789 = vmatprep.subr.mxu0 %v2979
      %6790 = vmatpush1.msra.mxu0 %v2978
      %6791 = vmatprep.subr.mxu0 %v2977
      %6792 = vmatpush1.msra.mxu0 %v2976
      %6793 = vmatprep.subr.mxu0 %v2975
      %6794 = vmatpush1.msra.mxu0 %v2974
      %6795 = vmatprep.subr.mxu0 %v2973
      %6796 = vmatpush1.msra.mxu0 %v2972
      %6797 = vmatprep.subr.mxu0 %v2971
      %6798 = vmatpush1.msra.mxu0 %v2970
      %6799 = vmatprep.subr.mxu0 %v2969
      %6800 = vmatpush1.msra.mxu0 %v2968
      %6801 = vmatprep.subr.mxu0 %v2967
      %6802 = vmatpush1.msra.mxu0 %v2966
      %6803 = vmatprep.subr.mxu0 %v2965
      %6804 = vmatpush1.msra.mxu0 %v2964
      %6805 = vmatprep.subr.mxu0 0.0
      %6806 = vmatpush2.msra.mxu0 0.0
      %6807 = vmatprep.subr.mxu0 0.0
      %6808 = vmatpush2.msra.mxu0 0.0
      %6809 = vmatprep.subr.mxu0 0.0
      %6810 = vmatpush2.msra.mxu0 0.0
      %6811 = vmatprep.subr.mxu0 0.0
      %6812 = vmatpush2.msra.mxu0 0.0
      %6813 = vmatprep.subr.mxu0 0.0
      %6814 = vmatpush2.msra.mxu0 0.0
      %6815 = vmatprep.subr.mxu0 0.0
      %6816 = vmatpush2.msra.mxu0 0.0
      %6817 = vmatprep.subr.mxu0 0.0
      %6818 = vmatpush2.msra.mxu0 0.0
      %6819 = vmatprep.subr.mxu0 0.0
      %6820 = vmatpush2.msra.mxu0 0.0
      %6821 = vmatprep.subr.mxu0 0.0
      %6822 = vmatpush2.msra.mxu0 0.0
      %6823 = vmatprep.subr.mxu0 0.0
      %6824 = vmatpush2.msra.mxu0 0.0
      %6825 = vmatprep.subr.mxu0 0.0
      %6826 = vmatpush2.msra.mxu0 0.0
      %6827 = vmatprep.subr.mxu0 0.0
      %6828 = vmatpush2.msra.mxu0 0.0
      %6829 = vmatprep.subr.mxu0 0.0
      %6830 = vmatpush2.msra.mxu0 0.0
      %6831 = vmatprep.subr.mxu0 0.0
      %6832 = vmatpush2.msra.mxu0 0.0
      %6833 = vmatprep.subr.mxu0 0.0
      %6834 = vmatpush2.msra.mxu0 0.0
      %6835 = vmatprep.subr.mxu0 0.0
      %6836 = vmatpush2.msra.mxu0 0.0
      %6837 = vmatprep.mubr.f32.mxu0 0.0
      %6838 = vmatmul.mubr.f32.gmra.mxu0 %v6771
      %v6839 = vpop.f32.mrf.mxu0
      %v6840 = vadd.f32 0.0, %v6839
      %v6841 = vpop.f32.mrf.mxu0
      %v6842 = vadd.f32 0.0, %v6841
      %6843 = vdwg.mxu0
      %v6844 = vadd.f32 %v6766, %v6840
      %v6845 = vadd.f32 %v6768, %v6842
      %v6846 = vxor.u32 %v6844, 2147483648
      %v6847 = vxor.u32 %v6845, 2147483648
      %v6848 = vmul.f32 %v6846, 1.442695
      %v6849 = vpow.pop %v6848
      %v6850 = vmul.f32 %v6847, 1.442695
      %v6851 = vpow.pop %v6850
      %v6852 = vadd.f32 %v6849, 1.0
      %v6853 = vadd.f32 %v6851, 1.0
      %v6854 = vrcp.pop %v6852
      %v6855 = vmul.f32 1.0, %v6854
      %v6856 = vrcp.pop %v6853
      %v6857 = vmul.f32 1.0, %v6856
      %v6858 = vtanh.pop %v6845
      %v6859 = vmul.f32 %v6855, %v6568
      %6861 = vrot.lane.b32.xlu0 %v6858, 64
      %v6862 = vpop.permute.xlu0 %6861
      %v6864 = vmul.f32 %v6855, %v6862
      %6866 = vrot.lane.b32.xlu0 %v6864, 64
      %v6867 = vpop.permute.xlu0 %6866
      %v6869 = vadd.f32 %v6859, %v6867
      %v6870 = vtanh.pop %v6869
      %6872 = vrot.lane.b32.xlu0 %v6870, 64
      %v6873 = vpop.permute.xlu0 %6872
      %v6875 = vmul.f32 %v6857, %v6873
      %6876 = vst.msk [vmem:[#allocation3 + $0xc] sm:$0x1] %vm3263, %v6875
      %s6877 = scalar_lea.vmem [#allocation2], 22
      %v6878 = vld [vmem:[%s6877] ss:$8 sm:$0x3]
      %v6880 = vsel %vm1612, %v6698, 0
      %6882 = vmatprep.subr.mxu0 0.0
      %6883 = vmatpush1.msra.mxu0 0.0
      %6884 = vmatprep.subr.mxu0 0.0
      %6885 = vmatpush1.msra.mxu0 0.0
      %6886 = vmatprep.subr.mxu0 0.0
      %6887 = vmatpush1.msra.mxu0 0.0
      %6888 = vmatprep.subr.mxu0 0.0
      %6889 = vmatpush1.msra.mxu0 0.0
      %6890 = vmatprep.subr.mxu0 0.0
      %6891 = vmatpush1.msra.mxu0 0.0
      %6892 = vmatprep.subr.mxu0 0.0
      %6893 = vmatpush1.msra.mxu0 0.0
      %6894 = vmatprep.subr.mxu0 0.0
      %6895 = vmatpush1.msra.mxu0 0.0
      %6896 = vmatprep.subr.mxu0 0.0
      %6897 = vmatpush1.msra.mxu0 0.0
      %6898 = vmatprep.subr.mxu0 %v2962
      %6899 = vmatpush1.msra.mxu0 %v2961
      %6900 = vmatprep.subr.mxu0 %v2960
      %6901 = vmatpush1.msra.mxu0 %v2959
      %6902 = vmatprep.subr.mxu0 %v2958
      %6903 = vmatpush1.msra.mxu0 %v2957
      %6904 = vmatprep.subr.mxu0 %v2956
      %6905 = vmatpush1.msra.mxu0 %v2955
      %6906 = vmatprep.subr.mxu0 %v2954
      %6907 = vmatpush1.msra.mxu0 %v2953
      %6908 = vmatprep.subr.mxu0 %v2952
      %6909 = vmatpush1.msra.mxu0 %v2951
      %6910 = vmatprep.subr.mxu0 %v2950
      %6911 = vmatpush1.msra.mxu0 %v2949
      %6912 = vmatprep.subr.mxu0 %v2948
      %6913 = vmatpush1.msra.mxu0 %v2947
      %6914 = vmatprep.subr.mxu0 0.0
      %6915 = vmatpush2.msra.mxu0 0.0
      %6916 = vmatprep.subr.mxu0 0.0
      %6917 = vmatpush2.msra.mxu0 0.0
      %6918 = vmatprep.subr.mxu0 0.0
      %6919 = vmatpush2.msra.mxu0 0.0
      %6920 = vmatprep.subr.mxu0 0.0
      %6921 = vmatpush2.msra.mxu0 0.0
      %6922 = vmatprep.subr.mxu0 0.0
      %6923 = vmatpush2.msra.mxu0 0.0
      %6924 = vmatprep.subr.mxu0 0.0
      %6925 = vmatpush2.msra.mxu0 0.0
      %6926 = vmatprep.subr.mxu0 0.0
      %6927 = vmatpush2.msra.mxu0 0.0
      %6928 = vmatprep.subr.mxu0 0.0
      %6929 = vmatpush2.msra.mxu0 0.0
      %6930 = vmatprep.subr.mxu0 0.0
      %6931 = vmatpush2.msra.mxu0 0.0
      %6932 = vmatprep.subr.mxu0 0.0
      %6933 = vmatpush2.msra.mxu0 0.0
      %6934 = vmatprep.subr.mxu0 0.0
      %6935 = vmatpush2.msra.mxu0 0.0
      %6936 = vmatprep.subr.mxu0 0.0
      %6937 = vmatpush2.msra.mxu0 0.0
      %6938 = vmatprep.subr.mxu0 0.0
      %6939 = vmatpush2.msra.mxu0 0.0
      %6940 = vmatprep.subr.mxu0 0.0
      %6941 = vmatpush2.msra.mxu0 0.0
      %6942 = vmatprep.subr.mxu0 0.0
      %6943 = vmatpush2.msra.mxu0 0.0
      %6944 = vmatprep.subr.mxu0 0.0
      %6945 = vmatpush2.msra.mxu0 0.0
      %6946 = vmatprep.mubr.f32.mxu0 0.0
      %6947 = vmatmul.mubr.f32.gmra.mxu0 %v6880
      %v6948 = vpop.f32.mrf.mxu0
      %v6949 = vadd.f32 0.0, %v6948
      %v6950 = vpop.f32.mrf.mxu0
      %v6951 = vadd.f32 0.0, %v6950
      %6952 = vdwg.mxu0
      %v6955 = vcombine.low %v6949, %v6951
      %v6957 = vunpack.c.l.s4 1966171168
      %v6958 = vunpack.c.0.s8 %v6957
      %v6959 = vlaneseq
      %v6960 = vshrl.u32 %v6959, 7
      %v6961 = vsub.s32 %v6958, %v6960
      %v6962 = vrot.slane %v6955, %v6961
      %v6964 = vunpack.c.l.s4 1966171168
      %v6965 = vunpack.c.0.s8 %v6964
      %v6966 = vlaneseq
      %v6967 = vshrl.u32 %v6966, 7
      %v6968 = vsub.s32 %v6965, %v6967
      %v6969 = vrot.slane %v6962, %v6968
      %v6971 = vadd.f32 %v6878, %v6969
      %v6972 = vxor.u32 %v6971, 2147483648
      %v6973 = vmul.f32 %v6972, 1.442695
      %v6974 = vpow.pop %v6973
      %v6975 = vadd.f32 %v6974, 1.0
      %v6976 = vrcp.pop %v6975
      %v6977 = vmul.f32 1.0, %v6976
      %6979 = vrot.lane.b32.xlu0 %v6971, 64
      %v6980 = vpop.permute.xlu0 %6979
      %v6981 = vrot.slane %v6980, 1
      %v6983 = vtanh.pop %v6981
      %v6984 = vmul.f32 %v6977, %v6689
      %v6985 = vmul.f32 %v6977, %v6983
      %6987 = vrot.lane.b32.xlu0 %v6985, 64
      %v6988 = vpop.permute.xlu0 %6987
      %v6990 = vadd.f32 %v6984, %v6988
      %v6991 = vtanh.pop %v6990
      %v6993 = vrot.slane %v6977, 1
      %6996 = vrot.lane.b32.xlu0 %v6991, 64
      %v6997 = vpop.permute.xlu0 %6996
      %v6999 = vmul.f32 %v6993, %v6997
      %7000 = vmatprep.subr.mxu0 0.0
      %7001 = vmatpush1.msra.mxu0 0.0
      %7002 = vmatprep.subr.mxu0 0.0
      %7003 = vmatpush1.msra.mxu0 0.0
      %7004 = vmatprep.subr.mxu0 0.0
      %7005 = vmatpush1.msra.mxu0 0.0
      %7006 = vmatprep.subr.mxu0 0.0
      %7007 = vmatpush1.msra.mxu0 0.0
      %7008 = vmatprep.subr.mxu0 0.0
      %7009 = vmatpush1.msra.mxu0 0.0
      %7010 = vmatprep.subr.mxu0 0.0
      %7011 = vmatpush1.msra.mxu0 0.0
      %7012 = vmatprep.subr.mxu0 0.0
      %7013 = vmatpush1.msra.mxu0 0.0
      %7014 = vmatprep.subr.mxu0 0.0
      %7015 = vmatpush1.msra.mxu0 0.0
      %7016 = vmatprep.subr.mxu0 %v2996
      %7017 = vmatpush1.msra.mxu0 %v2995
      %7018 = vmatprep.subr.mxu0 %v2994
      %7019 = vmatpush1.msra.mxu0 %v2993
      %7020 = vmatprep.subr.mxu0 %v2992
      %7021 = vmatpush1.msra.mxu0 %v2991
      %7022 = vmatprep.subr.mxu0 %v2990
      %7023 = vmatpush1.msra.mxu0 %v2989
      %7024 = vmatprep.subr.mxu0 %v2988
      %7025 = vmatpush1.msra.mxu0 %v2987
      %7026 = vmatprep.subr.mxu0 %v2986
      %7027 = vmatpush1.msra.mxu0 %v2985
      %7028 = vmatprep.subr.mxu0 %v2984
      %7029 = vmatpush1.msra.mxu0 %v2983
      %7030 = vmatprep.subr.mxu0 %v2982
      %7031 = vmatpush1.msra.mxu0 %v2981
      %7032 = vmatprep.subr.mxu0 0.0
      %7033 = vmatpush2.msra.mxu0 0.0
      %7034 = vmatprep.subr.mxu0 0.0
      %7035 = vmatpush2.msra.mxu0 0.0
      %7036 = vmatprep.subr.mxu0 0.0
      %7037 = vmatpush2.msra.mxu0 0.0
      %7038 = vmatprep.subr.mxu0 0.0
      %7039 = vmatpush2.msra.mxu0 0.0
      %7040 = vmatprep.subr.mxu0 0.0
      %7041 = vmatpush2.msra.mxu0 0.0
      %7042 = vmatprep.subr.mxu0 0.0
      %7043 = vmatpush2.msra.mxu0 0.0
      %7044 = vmatprep.subr.mxu0 0.0
      %7045 = vmatpush2.msra.mxu0 0.0
      %7046 = vmatprep.subr.mxu0 0.0
      %7047 = vmatpush2.msra.mxu0 0.0
      %7048 = vmatprep.subr.mxu0 0.0
      %7049 = vmatpush2.msra.mxu0 0.0
      %7050 = vmatprep.subr.mxu0 0.0
      %7051 = vmatpush2.msra.mxu0 0.0
      %7052 = vmatprep.subr.mxu0 0.0
      %7053 = vmatpush2.msra.mxu0 0.0
      %7054 = vmatprep.subr.mxu0 0.0
      %7055 = vmatpush2.msra.mxu0 0.0
      %7056 = vmatprep.subr.mxu0 0.0
      %7057 = vmatpush2.msra.mxu0 0.0
      %7058 = vmatprep.subr.mxu0 0.0
      %7059 = vmatpush2.msra.mxu0 0.0
      %7060 = vmatprep.subr.mxu0 0.0
      %7061 = vmatpush2.msra.mxu0 0.0
      %7062 = vmatprep.subr.mxu0 0.0
      %7063 = vmatpush2.msra.mxu0 0.0
      %7064 = vmatprep.mubr.f32.mxu0 0.0
      %7065 = vmatmul.mubr.f32.gmra.mxu0 %v6880
      %v7066 = vpop.f32.mrf.mxu0
      %v7067 = vadd.f32 %v3155, %v7066
      %v7068 = vpop.f32.mrf.mxu0
      %v7069 = vadd.f32 %v3159, %v7068
      %7070 = vdwg.mxu0
      %v7072 = vsel %vm1612, %v6875, 0
      %7074 = vmatprep.subr.mxu0 0.0
      %7075 = vmatpush1.msra.mxu0 0.0
      %7076 = vmatprep.subr.mxu0 0.0
      %7077 = vmatpush1.msra.mxu0 0.0
      %7078 = vmatprep.subr.mxu0 0.0
      %7079 = vmatpush1.msra.mxu0 0.0
      %7080 = vmatprep.subr.mxu0 0.0
      %7081 = vmatpush1.msra.mxu0 0.0
      %7082 = vmatprep.subr.mxu0 0.0
      %7083 = vmatpush1.msra.mxu0 0.0
      %7084 = vmatprep.subr.mxu0 0.0
      %7085 = vmatpush1.msra.mxu0 0.0
      %7086 = vmatprep.subr.mxu0 0.0
      %7087 = vmatpush1.msra.mxu0 0.0
      %7088 = vmatprep.subr.mxu0 0.0
      %7089 = vmatpush1.msra.mxu0 0.0
      %7090 = vmatprep.subr.mxu0 %v2979
      %7091 = vmatpush1.msra.mxu0 %v2978
      %7092 = vmatprep.subr.mxu0 %v2977
      %7093 = vmatpush1.msra.mxu0 %v2976
      %7094 = vmatprep.subr.mxu0 %v2975
      %7095 = vmatpush1.msra.mxu0 %v2974
      %7096 = vmatprep.subr.mxu0 %v2973
      %7097 = vmatpush1.msra.mxu0 %v2972
      %7098 = vmatprep.subr.mxu0 %v2971
      %7099 = vmatpush1.msra.mxu0 %v2970
      %7100 = vmatprep.subr.mxu0 %v2969
      %7101 = vmatpush1.msra.mxu0 %v2968
      %7102 = vmatprep.subr.mxu0 %v2967
      %7103 = vmatpush1.msra.mxu0 %v2966
      %7104 = vmatprep.subr.mxu0 %v2965
      %7105 = vmatpush1.msra.mxu0 %v2964
      %7106 = vmatprep.subr.mxu0 0.0
      %7107 = vmatpush2.msra.mxu0 0.0
      %7108 = vmatprep.subr.mxu0 0.0
      %7109 = vmatpush2.msra.mxu0 0.0
      %7110 = vmatprep.subr.mxu0 0.0
      %7111 = vmatpush2.msra.mxu0 0.0
      %7112 = vmatprep.subr.mxu0 0.0
      %7113 = vmatpush2.msra.mxu0 0.0
      %7114 = vmatprep.subr.mxu0 0.0
      %7115 = vmatpush2.msra.mxu0 0.0
      %7116 = vmatprep.subr.mxu0 0.0
      %7117 = vmatpush2.msra.mxu0 0.0
      %7118 = vmatprep.subr.mxu0 0.0
      %7119 = vmatpush2.msra.mxu0 0.0
      %7120 = vmatprep.subr.mxu0 0.0
      %7121 = vmatpush2.msra.mxu0 0.0
      %7122 = vmatprep.subr.mxu0 0.0
      %7123 = vmatpush2.msra.mxu0 0.0
      %7124 = vmatprep.subr.mxu0 0.0
      %7125 = vmatpush2.msra.mxu0 0.0
      %7126 = vmatprep.subr.mxu0 0.0
      %7127 = vmatpush2.msra.mxu0 0.0
      %7128 = vmatprep.subr.mxu0 0.0
      %7129 = vmatpush2.msra.mxu0 0.0
      %7130 = vmatprep.subr.mxu0 0.0
      %7131 = vmatpush2.msra.mxu0 0.0
      %7132 = vmatprep.subr.mxu0 0.0
      %7133 = vmatpush2.msra.mxu0 0.0
      %7134 = vmatprep.subr.mxu0 0.0
      %7135 = vmatpush2.msra.mxu0 0.0
      %7136 = vmatprep.subr.mxu0 0.0
      %7137 = vmatpush2.msra.mxu0 0.0
      %7138 = vmatprep.mubr.f32.mxu0 0.0
      %7139 = vmatmul.mubr.f32.gmra.mxu0 %v7072
      %v7140 = vpop.f32.mrf.mxu0
      %v7141 = vadd.f32 0.0, %v7140
      %v7142 = vpop.f32.mrf.mxu0
      %v7143 = vadd.f32 0.0, %v7142
      %7144 = vdwg.mxu0
      %v7145 = vadd.f32 %v7067, %v7141
      %v7146 = vadd.f32 %v7069, %v7143
      %v7147 = vxor.u32 %v7145, 2147483648
      %v7148 = vxor.u32 %v7146, 2147483648
      %v7149 = vmul.f32 %v7147, 1.442695
      %v7150 = vpow.pop %v7149
      %v7151 = vmul.f32 %v7148, 1.442695
      %v7152 = vpow.pop %v7151
      %v7153 = vadd.f32 %v7150, 1.0
      %v7154 = vadd.f32 %v7152, 1.0
      %v7155 = vrcp.pop %v7153
      %v7156 = vmul.f32 1.0, %v7155
      %v7157 = vrcp.pop %v7154
      %v7158 = vmul.f32 1.0, %v7157
      %v7159 = vtanh.pop %v7146
      %v7160 = vmul.f32 %v7156, %v6869
      %7162 = vrot.lane.b32.xlu0 %v7159, 64
      %v7163 = vpop.permute.xlu0 %7162
      %v7165 = vmul.f32 %v7156, %v7163
      %7167 = vrot.lane.b32.xlu0 %v7165, 64
      %v7168 = vpop.permute.xlu0 %7167
      %v7170 = vadd.f32 %v7160, %v7168
      %v7171 = vtanh.pop %v7170
      %7173 = vrot.lane.b32.xlu0 %v7171, 64
      %v7174 = vpop.permute.xlu0 %7173
      %v7176 = vmul.f32 %v7158, %v7174
      %7177 = vst.msk [vmem:[#allocation3 + $0xd] sm:$0x1] %vm3263, %v7176
      %s7178 = scalar_lea.vmem [#allocation2], 23
      %v7179 = vld [vmem:[%s7178] ss:$8 sm:$0x3]
      %v7181 = vsel %vm1612, %v6999, 0
      %7183 = vmatprep.subr.mxu0 0.0
      %7184 = vmatpush1.msra.mxu0 0.0
      %7185 = vmatprep.subr.mxu0 0.0
      %7186 = vmatpush1.msra.mxu0 0.0
      %7187 = vmatprep.subr.mxu0 0.0
      %7188 = vmatpush1.msra.mxu0 0.0
      %7189 = vmatprep.subr.mxu0 0.0
      %7190 = vmatpush1.msra.mxu0 0.0
      %7191 = vmatprep.subr.mxu0 0.0
      %7192 = vmatpush1.msra.mxu0 0.0
      %7193 = vmatprep.subr.mxu0 0.0
      %7194 = vmatpush1.msra.mxu0 0.0
      %7195 = vmatprep.subr.mxu0 0.0
      %7196 = vmatpush1.msra.mxu0 0.0
      %7197 = vmatprep.subr.mxu0 0.0
      %7198 = vmatpush1.msra.mxu0 0.0
      %7199 = vmatprep.subr.mxu0 %v2962
      %7200 = vmatpush1.msra.mxu0 %v2961
      %7201 = vmatprep.subr.mxu0 %v2960
      %7202 = vmatpush1.msra.mxu0 %v2959
      %7203 = vmatprep.subr.mxu0 %v2958
      %7204 = vmatpush1.msra.mxu0 %v2957
      %7205 = vmatprep.subr.mxu0 %v2956
      %7206 = vmatpush1.msra.mxu0 %v2955
      %7207 = vmatprep.subr.mxu0 %v2954
      %7208 = vmatpush1.msra.mxu0 %v2953
      %7209 = vmatprep.subr.mxu0 %v2952
      %7210 = vmatpush1.msra.mxu0 %v2951
      %7211 = vmatprep.subr.mxu0 %v2950
      %7212 = vmatpush1.msra.mxu0 %v2949
      %7213 = vmatprep.subr.mxu0 %v2948
      %7214 = vmatpush1.msra.mxu0 %v2947
      %7215 = vmatprep.subr.mxu0 0.0
      %7216 = vmatpush2.msra.mxu0 0.0
      %7217 = vmatprep.subr.mxu0 0.0
      %7218 = vmatpush2.msra.mxu0 0.0
      %7219 = vmatprep.subr.mxu0 0.0
      %7220 = vmatpush2.msra.mxu0 0.0
      %7221 = vmatprep.subr.mxu0 0.0
      %7222 = vmatpush2.msra.mxu0 0.0
      %7223 = vmatprep.subr.mxu0 0.0
      %7224 = vmatpush2.msra.mxu0 0.0
      %7225 = vmatprep.subr.mxu0 0.0
      %7226 = vmatpush2.msra.mxu0 0.0
      %7227 = vmatprep.subr.mxu0 0.0
      %7228 = vmatpush2.msra.mxu0 0.0
      %7229 = vmatprep.subr.mxu0 0.0
      %7230 = vmatpush2.msra.mxu0 0.0
      %7231 = vmatprep.subr.mxu0 0.0
      %7232 = vmatpush2.msra.mxu0 0.0
      %7233 = vmatprep.subr.mxu0 0.0
      %7234 = vmatpush2.msra.mxu0 0.0
      %7235 = vmatprep.subr.mxu0 0.0
      %7236 = vmatpush2.msra.mxu0 0.0
      %7237 = vmatprep.subr.mxu0 0.0
      %7238 = vmatpush2.msra.mxu0 0.0
      %7239 = vmatprep.subr.mxu0 0.0
      %7240 = vmatpush2.msra.mxu0 0.0
      %7241 = vmatprep.subr.mxu0 0.0
      %7242 = vmatpush2.msra.mxu0 0.0
      %7243 = vmatprep.subr.mxu0 0.0
      %7244 = vmatpush2.msra.mxu0 0.0
      %7245 = vmatprep.subr.mxu0 0.0
      %7246 = vmatpush2.msra.mxu0 0.0
      %7247 = vmatprep.mubr.f32.mxu0 0.0
      %7248 = vmatmul.mubr.f32.gmra.mxu0 %v7181
      %v7249 = vpop.f32.mrf.mxu0
      %v7250 = vadd.f32 0.0, %v7249
      %v7251 = vpop.f32.mrf.mxu0
      %v7252 = vadd.f32 0.0, %v7251
      %7253 = vdwg.mxu0
      %v7256 = vcombine.low %v7250, %v7252
      %v7258 = vunpack.c.l.s4 1966171168
      %v7259 = vunpack.c.0.s8 %v7258
      %v7260 = vlaneseq
      %v7261 = vshrl.u32 %v7260, 7
      %v7262 = vsub.s32 %v7259, %v7261
      %v7263 = vrot.slane %v7256, %v7262
      %v7265 = vunpack.c.l.s4 1966171168
      %v7266 = vunpack.c.0.s8 %v7265
      %v7267 = vlaneseq
      %v7268 = vshrl.u32 %v7267, 7
      %v7269 = vsub.s32 %v7266, %v7268
      %v7270 = vrot.slane %v7263, %v7269
      %v7272 = vadd.f32 %v7179, %v7270
      %v7273 = vxor.u32 %v7272, 2147483648
      %v7274 = vmul.f32 %v7273, 1.442695
      %v7275 = vpow.pop %v7274
      %v7276 = vadd.f32 %v7275, 1.0
      %v7277 = vrcp.pop %v7276
      %v7278 = vmul.f32 1.0, %v7277
      %7280 = vrot.lane.b32.xlu0 %v7272, 64
      %v7281 = vpop.permute.xlu0 %7280
      %v7282 = vrot.slane %v7281, 1
      %v7284 = vtanh.pop %v7282
      %v7285 = vmul.f32 %v7278, %v6990
      %v7286 = vmul.f32 %v7278, %v7284
      %7288 = vrot.lane.b32.xlu0 %v7286, 64
      %v7289 = vpop.permute.xlu0 %7288
      %v7291 = vadd.f32 %v7285, %v7289
      %v7292 = vtanh.pop %v7291
      %v7294 = vrot.slane %v7278, 1
      %7297 = vrot.lane.b32.xlu0 %v7292, 64
      %v7298 = vpop.permute.xlu0 %7297
      %v7300 = vmul.f32 %v7294, %v7298
      %7301 = vmatprep.subr.mxu0 0.0
      %7302 = vmatpush1.msra.mxu0 0.0
      %7303 = vmatprep.subr.mxu0 0.0
      %7304 = vmatpush1.msra.mxu0 0.0
      %7305 = vmatprep.subr.mxu0 0.0
      %7306 = vmatpush1.msra.mxu0 0.0
      %7307 = vmatprep.subr.mxu0 0.0
      %7308 = vmatpush1.msra.mxu0 0.0
      %7309 = vmatprep.subr.mxu0 0.0
      %7310 = vmatpush1.msra.mxu0 0.0
      %7311 = vmatprep.subr.mxu0 0.0
      %7312 = vmatpush1.msra.mxu0 0.0
      %7313 = vmatprep.subr.mxu0 0.0
      %7314 = vmatpush1.msra.mxu0 0.0
      %7315 = vmatprep.subr.mxu0 0.0
      %7316 = vmatpush1.msra.mxu0 0.0
      %7317 = vmatprep.subr.mxu0 %v2996
      %7318 = vmatpush1.msra.mxu0 %v2995
      %7319 = vmatprep.subr.mxu0 %v2994
      %7320 = vmatpush1.msra.mxu0 %v2993
      %7321 = vmatprep.subr.mxu0 %v2992
      %7322 = vmatpush1.msra.mxu0 %v2991
      %7323 = vmatprep.subr.mxu0 %v2990
      %7324 = vmatpush1.msra.mxu0 %v2989
      %7325 = vmatprep.subr.mxu0 %v2988
      %7326 = vmatpush1.msra.mxu0 %v2987
      %7327 = vmatprep.subr.mxu0 %v2986
      %7328 = vmatpush1.msra.mxu0 %v2985
      %7329 = vmatprep.subr.mxu0 %v2984
      %7330 = vmatpush1.msra.mxu0 %v2983
      %7331 = vmatprep.subr.mxu0 %v2982
      %7332 = vmatpush1.msra.mxu0 %v2981
      %7333 = vmatprep.subr.mxu0 0.0
      %7334 = vmatpush2.msra.mxu0 0.0
      %7335 = vmatprep.subr.mxu0 0.0
      %7336 = vmatpush2.msra.mxu0 0.0
      %7337 = vmatprep.subr.mxu0 0.0
      %7338 = vmatpush2.msra.mxu0 0.0
      %7339 = vmatprep.subr.mxu0 0.0
      %7340 = vmatpush2.msra.mxu0 0.0
      %7341 = vmatprep.subr.mxu0 0.0
      %7342 = vmatpush2.msra.mxu0 0.0
      %7343 = vmatprep.subr.mxu0 0.0
      %7344 = vmatpush2.msra.mxu0 0.0
      %7345 = vmatprep.subr.mxu0 0.0
      %7346 = vmatpush2.msra.mxu0 0.0
      %7347 = vmatprep.subr.mxu0 0.0
      %7348 = vmatpush2.msra.mxu0 0.0
      %7349 = vmatprep.subr.mxu0 0.0
      %7350 = vmatpush2.msra.mxu0 0.0
      %7351 = vmatprep.subr.mxu0 0.0
      %7352 = vmatpush2.msra.mxu0 0.0
      %7353 = vmatprep.subr.mxu0 0.0
      %7354 = vmatpush2.msra.mxu0 0.0
      %7355 = vmatprep.subr.mxu0 0.0
      %7356 = vmatpush2.msra.mxu0 0.0
      %7357 = vmatprep.subr.mxu0 0.0
      %7358 = vmatpush2.msra.mxu0 0.0
      %7359 = vmatprep.subr.mxu0 0.0
      %7360 = vmatpush2.msra.mxu0 0.0
      %7361 = vmatprep.subr.mxu0 0.0
      %7362 = vmatpush2.msra.mxu0 0.0
      %7363 = vmatprep.subr.mxu0 0.0
      %7364 = vmatpush2.msra.mxu0 0.0
      %7365 = vmatprep.mubr.f32.mxu0 0.0
      %7366 = vmatmul.mubr.f32.gmra.mxu0 %v7181
      %v7367 = vpop.f32.mrf.mxu0
      %v7368 = vadd.f32 %v3155, %v7367
      %v7369 = vpop.f32.mrf.mxu0
      %v7370 = vadd.f32 %v3159, %v7369
      %7371 = vdwg.mxu0
      %v7373 = vsel %vm1612, %v7176, 0
      %7375 = vmatprep.subr.mxu0 0.0
      %7376 = vmatpush1.msra.mxu0 0.0
      %7377 = vmatprep.subr.mxu0 0.0
      %7378 = vmatpush1.msra.mxu0 0.0
      %7379 = vmatprep.subr.mxu0 0.0
      %7380 = vmatpush1.msra.mxu0 0.0
      %7381 = vmatprep.subr.mxu0 0.0
      %7382 = vmatpush1.msra.mxu0 0.0
      %7383 = vmatprep.subr.mxu0 0.0
      %7384 = vmatpush1.msra.mxu0 0.0
      %7385 = vmatprep.subr.mxu0 0.0
      %7386 = vmatpush1.msra.mxu0 0.0
      %7387 = vmatprep.subr.mxu0 0.0
      %7388 = vmatpush1.msra.mxu0 0.0
      %7389 = vmatprep.subr.mxu0 0.0
      %7390 = vmatpush1.msra.mxu0 0.0
      %7391 = vmatprep.subr.mxu0 %v2979
      %7392 = vmatpush1.msra.mxu0 %v2978
      %7393 = vmatprep.subr.mxu0 %v2977
      %7394 = vmatpush1.msra.mxu0 %v2976
      %7395 = vmatprep.subr.mxu0 %v2975
      %7396 = vmatpush1.msra.mxu0 %v2974
      %7397 = vmatprep.subr.mxu0 %v2973
      %7398 = vmatpush1.msra.mxu0 %v2972
      %7399 = vmatprep.subr.mxu0 %v2971
      %7400 = vmatpush1.msra.mxu0 %v2970
      %7401 = vmatprep.subr.mxu0 %v2969
      %7402 = vmatpush1.msra.mxu0 %v2968
      %7403 = vmatprep.subr.mxu0 %v2967
      %7404 = vmatpush1.msra.mxu0 %v2966
      %7405 = vmatprep.subr.mxu0 %v2965
      %7406 = vmatpush1.msra.mxu0 %v2964
      %7407 = vmatprep.subr.mxu0 0.0
      %7408 = vmatpush2.msra.mxu0 0.0
      %7409 = vmatprep.subr.mxu0 0.0
      %7410 = vmatpush2.msra.mxu0 0.0
      %7411 = vmatprep.subr.mxu0 0.0
      %7412 = vmatpush2.msra.mxu0 0.0
      %7413 = vmatprep.subr.mxu0 0.0
      %7414 = vmatpush2.msra.mxu0 0.0
      %7415 = vmatprep.subr.mxu0 0.0
      %7416 = vmatpush2.msra.mxu0 0.0
      %7417 = vmatprep.subr.mxu0 0.0
      %7418 = vmatpush2.msra.mxu0 0.0
      %7419 = vmatprep.subr.mxu0 0.0
      %7420 = vmatpush2.msra.mxu0 0.0
      %7421 = vmatprep.subr.mxu0 0.0
      %7422 = vmatpush2.msra.mxu0 0.0
      %7423 = vmatprep.subr.mxu0 0.0
      %7424 = vmatpush2.msra.mxu0 0.0
      %7425 = vmatprep.subr.mxu0 0.0
      %7426 = vmatpush2.msra.mxu0 0.0
      %7427 = vmatprep.subr.mxu0 0.0
      %7428 = vmatpush2.msra.mxu0 0.0
      %7429 = vmatprep.subr.mxu0 0.0
      %7430 = vmatpush2.msra.mxu0 0.0
      %7431 = vmatprep.subr.mxu0 0.0
      %7432 = vmatpush2.msra.mxu0 0.0
      %7433 = vmatprep.subr.mxu0 0.0
      %7434 = vmatpush2.msra.mxu0 0.0
      %7435 = vmatprep.subr.mxu0 0.0
      %7436 = vmatpush2.msra.mxu0 0.0
      %7437 = vmatprep.subr.mxu0 0.0
      %7438 = vmatpush2.msra.mxu0 0.0
      %7439 = vmatprep.mubr.f32.mxu0 0.0
      %7440 = vmatmul.mubr.f32.gmra.mxu0 %v7373
      %v7441 = vpop.f32.mrf.mxu0
      %v7442 = vadd.f32 0.0, %v7441
      %v7443 = vpop.f32.mrf.mxu0
      %v7444 = vadd.f32 0.0, %v7443
      %7445 = vdwg.mxu0
      %v7446 = vadd.f32 %v7368, %v7442
      %v7447 = vadd.f32 %v7370, %v7444
      %v7448 = vxor.u32 %v7446, 2147483648
      %v7449 = vxor.u32 %v7447, 2147483648
      %v7450 = vmul.f32 %v7448, 1.442695
      %v7451 = vpow.pop %v7450
      %v7452 = vmul.f32 %v7449, 1.442695
      %v7453 = vpow.pop %v7452
      %v7454 = vadd.f32 %v7451, 1.0
      %v7455 = vadd.f32 %v7453, 1.0
      %v7456 = vrcp.pop %v7454
      %v7457 = vmul.f32 1.0, %v7456
      %v7458 = vrcp.pop %v7455
      %v7459 = vmul.f32 1.0, %v7458
      %v7460 = vtanh.pop %v7447
      %v7461 = vmul.f32 %v7457, %v7170
      %7463 = vrot.lane.b32.xlu0 %v7460, 64
      %v7464 = vpop.permute.xlu0 %7463
      %v7466 = vmul.f32 %v7457, %v7464
      %7468 = vrot.lane.b32.xlu0 %v7466, 64
      %v7469 = vpop.permute.xlu0 %7468
      %v7471 = vadd.f32 %v7461, %v7469
      %v7472 = vtanh.pop %v7471
      %7474 = vrot.lane.b32.xlu0 %v7472, 64
      %v7475 = vpop.permute.xlu0 %7474
      %v7477 = vmul.f32 %v7459, %v7475
      %7478 = vst.msk [vmem:[#allocation3 + $0xe] sm:$0x1] %vm3263, %v7477
      %v7480 = vsel %vm1612, %v7300, 0
      %7482 = vmatprep.subr.mxu0 0.0
      %7483 = vmatpush1.msra.mxu0 0.0
      %7484 = vmatprep.subr.mxu0 0.0
      %7485 = vmatpush1.msra.mxu0 0.0
      %7486 = vmatprep.subr.mxu0 0.0
      %7487 = vmatpush1.msra.mxu0 0.0
      %7488 = vmatprep.subr.mxu0 0.0
      %7489 = vmatpush1.msra.mxu0 0.0
      %7490 = vmatprep.subr.mxu0 0.0
      %7491 = vmatpush1.msra.mxu0 0.0
      %7492 = vmatprep.subr.mxu0 0.0
      %7493 = vmatpush1.msra.mxu0 0.0
      %7494 = vmatprep.subr.mxu0 0.0
      %7495 = vmatpush1.msra.mxu0 0.0
      %7496 = vmatprep.subr.mxu0 0.0
      %7497 = vmatpush1.msra.mxu0 0.0
      %7498 = vmatprep.subr.mxu0 %v2996
      %7499 = vmatpush1.msra.mxu0 %v2995
      %7500 = vmatprep.subr.mxu0 %v2994
      %7501 = vmatpush1.msra.mxu0 %v2993
      %7502 = vmatprep.subr.mxu0 %v2992
      %7503 = vmatpush1.msra.mxu0 %v2991
      %7504 = vmatprep.subr.mxu0 %v2990
      %7505 = vmatpush1.msra.mxu0 %v2989
      %7506 = vmatprep.subr.mxu0 %v2988
      %7507 = vmatpush1.msra.mxu0 %v2987
      %7508 = vmatprep.subr.mxu0 %v2986
      %7509 = vmatpush1.msra.mxu0 %v2985
      %7510 = vmatprep.subr.mxu0 %v2984
      %7511 = vmatpush1.msra.mxu0 %v2983
      %7512 = vmatprep.subr.mxu0 %v2982
      %7513 = vmatpush1.msra.mxu0 %v2981
      %7514 = vmatprep.subr.mxu0 0.0
      %7515 = vmatpush2.msra.mxu0 0.0
      %7516 = vmatprep.subr.mxu0 0.0
      %7517 = vmatpush2.msra.mxu0 0.0
      %7518 = vmatprep.subr.mxu0 0.0
      %7519 = vmatpush2.msra.mxu0 0.0
      %7520 = vmatprep.subr.mxu0 0.0
      %7521 = vmatpush2.msra.mxu0 0.0
      %7522 = vmatprep.subr.mxu0 0.0
      %7523 = vmatpush2.msra.mxu0 0.0
      %7524 = vmatprep.subr.mxu0 0.0
      %7525 = vmatpush2.msra.mxu0 0.0
      %7526 = vmatprep.subr.mxu0 0.0
      %7527 = vmatpush2.msra.mxu0 0.0
      %7528 = vmatprep.subr.mxu0 0.0
      %7529 = vmatpush2.msra.mxu0 0.0
      %7530 = vmatprep.subr.mxu0 0.0
      %7531 = vmatpush2.msra.mxu0 0.0
      %7532 = vmatprep.subr.mxu0 0.0
      %7533 = vmatpush2.msra.mxu0 0.0
      %7534 = vmatprep.subr.mxu0 0.0
      %7535 = vmatpush2.msra.mxu0 0.0
      %7536 = vmatprep.subr.mxu0 0.0
      %7537 = vmatpush2.msra.mxu0 0.0
      %7538 = vmatprep.subr.mxu0 0.0
      %7539 = vmatpush2.msra.mxu0 0.0
      %7540 = vmatprep.subr.mxu0 0.0
      %7541 = vmatpush2.msra.mxu0 0.0
      %7542 = vmatprep.subr.mxu0 0.0
      %7543 = vmatpush2.msra.mxu0 0.0
      %7544 = vmatprep.subr.mxu0 0.0
      %7545 = vmatpush2.msra.mxu0 0.0
      %7546 = vmatprep.mubr.f32.mxu0 0.0
      %7547 = vmatmul.mubr.f32.gmra.mxu0 %v7480
      %v7548 = vpop.f32.mrf.mxu0
      %v7549 = vadd.f32 %v3155, %v7548
      %v7550 = vpop.f32.mrf.mxu0
      %v7551 = vadd.f32 %v3159, %v7550
      %7552 = vdwg.mxu0
      %v7554 = vsel %vm1612, %v7477, 0
      %7556 = vmatprep.subr.mxu0 0.0
      %7557 = vmatpush1.msra.mxu0 0.0
      %7558 = vmatprep.subr.mxu0 0.0
      %7559 = vmatpush1.msra.mxu0 0.0
      %7560 = vmatprep.subr.mxu0 0.0
      %7561 = vmatpush1.msra.mxu0 0.0
      %7562 = vmatprep.subr.mxu0 0.0
      %7563 = vmatpush1.msra.mxu0 0.0
      %7564 = vmatprep.subr.mxu0 0.0
      %7565 = vmatpush1.msra.mxu0 0.0
      %7566 = vmatprep.subr.mxu0 0.0
      %7567 = vmatpush1.msra.mxu0 0.0
      %7568 = vmatprep.subr.mxu0 0.0
      %7569 = vmatpush1.msra.mxu0 0.0
      %7570 = vmatprep.subr.mxu0 0.0
      %7571 = vmatpush1.msra.mxu0 0.0
      %7572 = vmatprep.subr.mxu0 %v2979
      %7573 = vmatpush1.msra.mxu0 %v2978
      %7574 = vmatprep.subr.mxu0 %v2977
      %7575 = vmatpush1.msra.mxu0 %v2976
      %7576 = vmatprep.subr.mxu0 %v2975
      %7577 = vmatpush1.msra.mxu0 %v2974
      %7578 = vmatprep.subr.mxu0 %v2973
      %7579 = vmatpush1.msra.mxu0 %v2972
      %7580 = vmatprep.subr.mxu0 %v2971
      %7581 = vmatpush1.msra.mxu0 %v2970
      %7582 = vmatprep.subr.mxu0 %v2969
      %7583 = vmatpush1.msra.mxu0 %v2968
      %7584 = vmatprep.subr.mxu0 %v2967
      %7585 = vmatpush1.msra.mxu0 %v2966
      %7586 = vmatprep.subr.mxu0 %v2965
      %7587 = vmatpush1.msra.mxu0 %v2964
      %7588 = vmatprep.subr.mxu0 0.0
      %7589 = vmatpush2.msra.mxu0 0.0
      %7590 = vmatprep.subr.mxu0 0.0
      %7591 = vmatpush2.msra.mxu0 0.0
      %7592 = vmatprep.subr.mxu0 0.0
      %7593 = vmatpush2.msra.mxu0 0.0
      %7594 = vmatprep.subr.mxu0 0.0
      %7595 = vmatpush2.msra.mxu0 0.0
      %7596 = vmatprep.subr.mxu0 0.0
      %7597 = vmatpush2.msra.mxu0 0.0
      %7598 = vmatprep.subr.mxu0 0.0
      %7599 = vmatpush2.msra.mxu0 0.0
      %7600 = vmatprep.subr.mxu0 0.0
      %7601 = vmatpush2.msra.mxu0 0.0
      %7602 = vmatprep.subr.mxu0 0.0
      %7603 = vmatpush2.msra.mxu0 0.0
      %7604 = vmatprep.subr.mxu0 0.0
      %7605 = vmatpush2.msra.mxu0 0.0
      %7606 = vmatprep.subr.mxu0 0.0
      %7607 = vmatpush2.msra.mxu0 0.0
      %7608 = vmatprep.subr.mxu0 0.0
      %7609 = vmatpush2.msra.mxu0 0.0
      %7610 = vmatprep.subr.mxu0 0.0
      %7611 = vmatpush2.msra.mxu0 0.0
      %7612 = vmatprep.subr.mxu0 0.0
      %7613 = vmatpush2.msra.mxu0 0.0
      %7614 = vmatprep.subr.mxu0 0.0
      %7615 = vmatpush2.msra.mxu0 0.0
      %7616 = vmatprep.subr.mxu0 0.0
      %7617 = vmatpush2.msra.mxu0 0.0
      %7618 = vmatprep.subr.mxu0 0.0
      %7619 = vmatpush2.msra.mxu0 0.0
      %7620 = vmatprep.mubr.f32.mxu0 0.0
      %7621 = vmatmul.mubr.f32.gmra.mxu0 %v7554
      %v7622 = vpop.f32.mrf.mxu0
      %v7623 = vadd.f32 0.0, %v7622
      %v7624 = vpop.f32.mrf.mxu0
      %v7625 = vadd.f32 0.0, %v7624
      %7626 = vdwg.mxu0
      %v7627 = vadd.f32 %v7549, %v7623
      %v7628 = vadd.f32 %v7551, %v7625
      %v7629 = vxor.u32 %v7627, 2147483648
      %v7630 = vxor.u32 %v7628, 2147483648
      %v7631 = vmul.f32 %v7629, 1.442695
      %v7632 = vpow.pop %v7631
      %v7633 = vmul.f32 %v7630, 1.442695
      %v7634 = vpow.pop %v7633
      %v7635 = vadd.f32 %v7632, 1.0
      %v7636 = vadd.f32 %v7634, 1.0
      %v7637 = vrcp.pop %v7635
      %v7638 = vmul.f32 1.0, %v7637
      %v7639 = vrcp.pop %v7636
      %v7640 = vmul.f32 1.0, %v7639
      %v7641 = vtanh.pop %v7628
      %v7642 = vmul.f32 %v7638, %v7471
      %7644 = vrot.lane.b32.xlu0 %v7641, 64
      %v7645 = vpop.permute.xlu0 %7644
      %v7647 = vmul.f32 %v7638, %v7645
      %7649 = vrot.lane.b32.xlu0 %v7647, 64
      %v7650 = vpop.permute.xlu0 %7649
      %v7652 = vadd.f32 %v7642, %v7650
      %v7653 = vtanh.pop %v7652
      %7655 = vrot.lane.b32.xlu0 %v7653, 64
      %v7656 = vpop.permute.xlu0 %7655
      %v7658 = vmul.f32 %v7640, %v7656
      %7659 = vst.msk [vmem:[#allocation3 + $0xf] sm:$0x1] %vm3263, %v7658
      %v7660 = vld [vmem:[#allocation3] sm:$0xff]
      %v7661 = vld [vmem:[#allocation3 + $0x8] sm:$0xff]
      %v7662 = vld [vmem:[%s20] sm:$0xff]
      %v7663 = vld [vmem:[%s20 + $0x8] sm:$0xff]
      %v7664 = vld [vmem:[%s20 + $0x10] sm:$0xff]
      %v7665 = vld [vmem:[%s20 + $0x18] sm:$0xff]
      %v7666 = vld [vmem:[%s20 + $0x20] sm:$0xff]
      %v7667 = vld [vmem:[%s20 + $0x28] sm:$0xff]
      %v7668 = vld [vmem:[%s20 + $0x30] sm:$0xff]
      %v7669 = vld [vmem:[%s20 + $0x38] sm:$0xff]
      %v7670 = vld [vmem:[%s21] sm:$0x1]
      %v7672 = vlaneseq
      %v7673 = vshrl.u32 %v7672, 7
      %v7674 = vsub.s32 0, %v7673
      %v7675 = vrot.slane %v7670, %v7674
      %v7678 = vsel %vm1612, %v7660, 0
      %v7681 = vsel %vm1612, %v7661, 0
      %7683 = vmatprep.subr.mxu0 0.0
      %7684 = vmatpush1.msra.mxu0 0.0
      %7685 = vmatprep.subr.mxu0 0.0
      %7686 = vmatpush1.msra.mxu0 0.0
      %7687 = vmatprep.subr.mxu0 0.0
      %7688 = vmatpush1.msra.mxu0 0.0
      %7689 = vmatprep.subr.mxu0 0.0
      %7690 = vmatpush1.msra.mxu0 0.0
      %7691 = vmatprep.subr.mxu0 0.0
      %7692 = vmatpush1.msra.mxu0 0.0
      %7693 = vmatprep.subr.mxu0 0.0
      %7694 = vmatpush1.msra.mxu0 0.0
      %7695 = vmatprep.subr.mxu0 0.0
      %7696 = vmatpush1.msra.mxu0 0.0
      %7697 = vmatprep.subr.mxu0 0.0
      %7698 = vmatpush1.msra.mxu0 0.0
      %7699 = vmatprep.subr.mxu0 0.0
      %7700 = vmatpush1.msra.mxu0 %v7669
      %7701 = vmatprep.subr.mxu0 0.0
      %7702 = vmatpush1.msra.mxu0 %v7668
      %7703 = vmatprep.subr.mxu0 0.0
      %7704 = vmatpush1.msra.mxu0 %v7667
      %7705 = vmatprep.subr.mxu0 0.0
      %7706 = vmatpush1.msra.mxu0 %v7666
      %7707 = vmatprep.subr.mxu0 0.0
      %7708 = vmatpush1.msra.mxu0 %v7665
      %7709 = vmatprep.subr.mxu0 0.0
      %7710 = vmatpush1.msra.mxu0 %v7664
      %7711 = vmatprep.subr.mxu0 0.0
      %7712 = vmatpush1.msra.mxu0 %v7663
      %7713 = vmatprep.subr.mxu0 0.0
      %7714 = vmatpush1.msra.mxu0 %v7662
      %7715 = vmatprep.subr.mxu0 0.0
      %7716 = vmatpush2.msra.mxu0 0.0
      %7717 = vmatprep.subr.mxu0 0.0
      %7718 = vmatpush2.msra.mxu0 0.0
      %7719 = vmatprep.subr.mxu0 0.0
      %7720 = vmatpush2.msra.mxu0 0.0
      %7721 = vmatprep.subr.mxu0 0.0
      %7722 = vmatpush2.msra.mxu0 0.0
      %7723 = vmatprep.subr.mxu0 0.0
      %7724 = vmatpush2.msra.mxu0 0.0
      %7725 = vmatprep.subr.mxu0 0.0
      %7726 = vmatpush2.msra.mxu0 0.0
      %7727 = vmatprep.subr.mxu0 0.0
      %7728 = vmatpush2.msra.mxu0 0.0
      %7729 = vmatprep.subr.mxu0 0.0
      %7730 = vmatpush2.msra.mxu0 0.0
      %7731 = vmatprep.subr.mxu0 0.0
      %7732 = vmatpush2.msra.mxu0 0.0
      %7733 = vmatprep.subr.mxu0 0.0
      %7734 = vmatpush2.msra.mxu0 0.0
      %7735 = vmatprep.subr.mxu0 0.0
      %7736 = vmatpush2.msra.mxu0 0.0
      %7737 = vmatprep.subr.mxu0 0.0
      %7738 = vmatpush2.msra.mxu0 0.0
      %7739 = vmatprep.subr.mxu0 0.0
      %7740 = vmatpush2.msra.mxu0 0.0
      %7741 = vmatprep.subr.mxu0 0.0
      %7742 = vmatpush2.msra.mxu0 0.0
      %7743 = vmatprep.subr.mxu0 0.0
      %7744 = vmatpush2.msra.mxu0 0.0
      %7745 = vmatprep.subr.mxu0 0.0
      %7746 = vmatpush2.msra.mxu0 0.0
      %7747 = vmatprep.mubr.f32.mxu0 0.0
      %7748 = vmatmul.mubr.f32.gmra.mxu0 %v7678
      %v7749 = vpop.f32.mrf.mxu0
      %v7750 = vadd.f32 %v7675, %v7749
      %v7751 = vpop.f32.mrf.mxu0
      %7752 = vmatprep.mubr.f32.mxu0 0.0
      %7753 = vmatmul.mubr.f32.gmra.mxu0 %v7681
      %v7754 = vpop.f32.mrf.mxu0
      %v7755 = vadd.f32 %v7675, %v7754
      %v7756 = vpop.f32.mrf.mxu0
      %7757 = vdwg.mxu0
      %v7758 = vmul.f32 %v1188, %v7750
      %v7759 = vmul.f32 %v1193, %v7755
      %v7760 = vmul.f32 %v1338, %v7750
      %v7761 = vmul.f32 %v1343, %v7755
      %v7762 = vld [vmem:[%s3] sm:$0xff]
      %v7763 = vld [vmem:[%s3 + $0x8] sm:$0xff]
      %v7764 = vld [vmem:[%s3 + $0x10] sm:$0x1]
      %s7765 = scalar_lea.vmem %s3, 24
      %v7766 = vld [vmem:[%s7765] sm:$0xff]
      %v7767 = vld [vmem:[%s7765 + $0x8] sm:$0xff]
      %v7768 = vld [vmem:[%s7765 + $0x10] sm:$0x1]
      %v7770 = vsel %vm1399, %v7760, 0
      %v7773 = vsel %vm1399, %v7761, 0
      %v7776 = vsel %vm1461, %v7768, 0
      %7778 = vmatprep.subr.mxu0 0.0
      %7779 = vmatpush1.msra.mxu0 0.0
      %7780 = vmatprep.subr.mxu0 0.0
      %7781 = vmatpush1.msra.mxu0 0.0
      %7782 = vmatprep.subr.mxu0 0.0
      %7783 = vmatpush1.msra.mxu0 0.0
      %7784 = vmatprep.subr.mxu0 0.0
      %7785 = vmatpush1.msra.mxu0 0.0
      %7786 = vmatprep.subr.mxu0 0.0
      %7787 = vmatpush1.msra.mxu0 0.0
      %7788 = vmatprep.subr.mxu0 0.0
      %7789 = vmatpush1.msra.mxu0 0.0
      %7790 = vmatprep.subr.mxu0 0.0
      %7791 = vmatpush1.msra.mxu0 0.0
      %7792 = vmatprep.subr.mxu0 0.0
      %7793 = vmatpush1.msra.mxu0 0.0
      %7794 = vmatprep.subr.mxu0 0.0
      %7795 = vmatpush1.msra.mxu0 0.0
      %7796 = vmatprep.subr.mxu0 0.0
      %7797 = vmatpush1.msra.mxu0 0.0
      %7798 = vmatprep.subr.mxu0 0.0
      %7799 = vmatpush1.msra.mxu0 0.0
      %7800 = vmatprep.subr.mxu0 0.0
      %7801 = vmatpush1.msra.mxu0 0.0
      %7802 = vmatprep.subr.mxu0 0.0
      %7803 = vmatpush1.msra.mxu0 0.0
      %7804 = vmatprep.subr.mxu0 0.0
      %7805 = vmatpush1.msra.mxu0 %v7776
      %7806 = vmatprep.subr.mxu0 0.0
      %7807 = vmatpush1.msra.mxu0 %v7767
      %7808 = vmatprep.subr.mxu0 0.0
      %7809 = vmatpush1.msra.mxu0 %v7766
      %7810 = vmatprep.subr.mxu0 0.0
      %7811 = vmatpush2.msra.mxu0 0.0
      %7812 = vmatprep.subr.mxu0 0.0
      %7813 = vmatpush2.msra.mxu0 0.0
      %7814 = vmatprep.subr.mxu0 0.0
      %7815 = vmatpush2.msra.mxu0 0.0
      %7816 = vmatprep.subr.mxu0 0.0
      %7817 = vmatpush2.msra.mxu0 0.0
      %7818 = vmatprep.subr.mxu0 0.0
      %7819 = vmatpush2.msra.mxu0 0.0
      %7820 = vmatprep.subr.mxu0 0.0
      %7821 = vmatpush2.msra.mxu0 0.0
      %7822 = vmatprep.subr.mxu0 0.0
      %7823 = vmatpush2.msra.mxu0 0.0
      %7824 = vmatprep.subr.mxu0 0.0
      %7825 = vmatpush2.msra.mxu0 0.0
      %7826 = vmatprep.subr.mxu0 0.0
      %7827 = vmatpush2.msra.mxu0 0.0
      %7828 = vmatprep.subr.mxu0 0.0
      %7829 = vmatpush2.msra.mxu0 0.0
      %7830 = vmatprep.subr.mxu0 0.0
      %7831 = vmatpush2.msra.mxu0 0.0
      %7832 = vmatprep.subr.mxu0 0.0
      %7833 = vmatpush2.msra.mxu0 0.0
      %7834 = vmatprep.subr.mxu0 0.0
      %7835 = vmatpush2.msra.mxu0 0.0
      %7836 = vmatprep.subr.mxu0 0.0
      %7837 = vmatpush2.msra.mxu0 0.0
      %7838 = vmatprep.subr.mxu0 0.0
      %7839 = vmatpush2.msra.mxu0 0.0
      %7840 = vmatprep.subr.mxu0 0.0
      %7841 = vmatpush2.msra.mxu0 0.0
      %7842 = vmatprep.mubr.f32.mxu0 0.0
      %7843 = vmatmul.mubr.f32.gmra.mxu0 %v7770
      %v7844 = vpop.f32.mrf.mxu0
      %v7845 = vadd.f32 0.0, %v7844
      %v7846 = vpop.f32.mrf.mxu0
      %7847 = vmatprep.mubr.f32.mxu0 0.0
      %7848 = vmatmul.mubr.f32.gmra.mxu0 %v7773
      %v7849 = vpop.f32.mrf.mxu0
      %v7850 = vadd.f32 0.0, %v7849
      %v7851 = vpop.f32.mrf.mxu0
      %7852 = vdwg.mxu0
      %v7854 = vsel %vm1399, %v7758, 0
      %v7857 = vsel %vm1399, %v7759, 0
      %v7860 = vsel %vm1461, %v7764, 0
      %7862 = vmatprep.subr.mxu0 0.0
      %7863 = vmatpush1.msra.mxu0 0.0
      %7864 = vmatprep.subr.mxu0 0.0
      %7865 = vmatpush1.msra.mxu0 0.0
      %7866 = vmatprep.subr.mxu0 0.0
      %7867 = vmatpush1.msra.mxu0 0.0
      %7868 = vmatprep.subr.mxu0 0.0
      %7869 = vmatpush1.msra.mxu0 0.0
      %7870 = vmatprep.subr.mxu0 0.0
      %7871 = vmatpush1.msra.mxu0 0.0
      %7872 = vmatprep.subr.mxu0 0.0
      %7873 = vmatpush1.msra.mxu0 0.0
      %7874 = vmatprep.subr.mxu0 0.0
      %7875 = vmatpush1.msra.mxu0 0.0
      %7876 = vmatprep.subr.mxu0 0.0
      %7877 = vmatpush1.msra.mxu0 0.0
      %7878 = vmatprep.subr.mxu0 0.0
      %7879 = vmatpush1.msra.mxu0 0.0
      %7880 = vmatprep.subr.mxu0 0.0
      %7881 = vmatpush1.msra.mxu0 0.0
      %7882 = vmatprep.subr.mxu0 0.0
      %7883 = vmatpush1.msra.mxu0 0.0
      %7884 = vmatprep.subr.mxu0 0.0
      %7885 = vmatpush1.msra.mxu0 0.0
      %7886 = vmatprep.subr.mxu0 0.0
      %7887 = vmatpush1.msra.mxu0 0.0
      %7888 = vmatprep.subr.mxu0 0.0
      %7889 = vmatpush1.msra.mxu0 %v7860
      %7890 = vmatprep.subr.mxu0 0.0
      %7891 = vmatpush1.msra.mxu0 %v7763
      %7892 = vmatprep.subr.mxu0 0.0
      %7893 = vmatpush1.msra.mxu0 %v7762
      %7894 = vmatprep.subr.mxu0 0.0
      %7895 = vmatpush2.msra.mxu0 0.0
      %7896 = vmatprep.subr.mxu0 0.0
      %7897 = vmatpush2.msra.mxu0 0.0
      %7898 = vmatprep.subr.mxu0 0.0
      %7899 = vmatpush2.msra.mxu0 0.0
      %7900 = vmatprep.subr.mxu0 0.0
      %7901 = vmatpush2.msra.mxu0 0.0
      %7902 = vmatprep.subr.mxu0 0.0
      %7903 = vmatpush2.msra.mxu0 0.0
      %7904 = vmatprep.subr.mxu0 0.0
      %7905 = vmatpush2.msra.mxu0 0.0
      %7906 = vmatprep.subr.mxu0 0.0
      %7907 = vmatpush2.msra.mxu0 0.0
      %7908 = vmatprep.subr.mxu0 0.0
      %7909 = vmatpush2.msra.mxu0 0.0
      %7910 = vmatprep.subr.mxu0 0.0
      %7911 = vmatpush2.msra.mxu0 0.0
      %7912 = vmatprep.subr.mxu0 0.0
      %7913 = vmatpush2.msra.mxu0 0.0
      %7914 = vmatprep.subr.mxu0 0.0
      %7915 = vmatpush2.msra.mxu0 0.0
      %7916 = vmatprep.subr.mxu0 0.0
      %7917 = vmatpush2.msra.mxu0 0.0
      %7918 = vmatprep.subr.mxu0 0.0
      %7919 = vmatpush2.msra.mxu0 0.0
      %7920 = vmatprep.subr.mxu0 0.0
      %7921 = vmatpush2.msra.mxu0 0.0
      %7922 = vmatprep.subr.mxu0 0.0
      %7923 = vmatpush2.msra.mxu0 0.0
      %7924 = vmatprep.subr.mxu0 0.0
      %7925 = vmatpush2.msra.mxu0 0.0
      %7926 = vmatprep.mubr.f32.mxu0 0.0
      %7927 = vmatmul.mubr.f32.gmra.mxu0 %v7854
      %v7928 = vpop.f32.mrf.mxu0
      %v7929 = vadd.f32 %v7845, %v7928
      %v7930 = vpop.f32.mrf.mxu0
      %7931 = vmatprep.mubr.f32.mxu0 0.0
      %7932 = vmatmul.mubr.f32.gmra.mxu0 %v7857
      %v7933 = vpop.f32.mrf.mxu0
      %v7934 = vadd.f32 %v7850, %v7933
      %v7935 = vpop.f32.mrf.mxu0
      %7936 = vdwg.mxu0
      %v7939 = vrot.slane %v7929, 7
      %v7940 = vrot.slane %v7934, 7
      %v7941 = vsel %vm1461, %v7939, %v7940
      %7942 = vrot.lane.b32.xlu0 %v7939, 112
      %v7943 = vpop.permute.xlu0 %7942
      %7944 = vrot.lane.b32.xlu0 %v7941, 112
      %v7945 = vpop.permute.xlu0 %7944
      %7946 = vrot.lane.b32.xlu0 %v7940, 112
      %v7947 = vpop.permute.xlu0 %7946
      %v7951 = vsel %vm1461, 0.0, %v7943
      %v7952 = vadd.f32 %v7929, %v7951
      %v7953 = vadd.f32 %v7934, %v7945
      %v7954 = vadd.f32 %v7947, 0.0
      %v7955 = vld [vmem:[%s4] sm:$0xff]
      %v7956 = vld [vmem:[%s4 + $0x8] sm:$0xff]
      %v7957 = vld [vmem:[%s4 + $0x10] sm:$0x1]
      %v7958 = vmul.f32 %v7952, %v7955
      %v7959 = vmul.f32 %v7953, %v7956
      %v7960 = vmul.f32 %v7954, %v7957
      %7961 = vst.msk [vmem:[%s703] sm:$0xff] %vm717, %v7958
      %7962 = vst.msk [vmem:[%s703 + $0x8] sm:$0xff] %vm717, %v7959
      %vm7963 = vcmask 122880
      %7964 = vst.msk [vmem:[%s703 + $0x10] sm:$0x1] %vm7963, %v7960
      %p7965 = scmp.lt.s32.totalorder %s33, 1
      %s7966 = scalar_select %p7965, %s33, 1
      %s7967 = smul.addr %s7966, 3
      %s7968 = smul.addr %s7967, 8
      %s7969 = scalar_lea.vmem %s22, %s7968
      // Predicated region
      $region109: #{conv_lstm_forward.1} parent=107 // pred_check
        %p7970 = pneg %p523
      $region110: #{conv_lstm_forward.1} parent=107 // pred_check_branch
        %7972 = sbr.rel (%p7970) target = $region112
      $region111: #{conv_lstm_forward.1} parent=107 // pred_region
        _
      $region112: #{conv_lstm_forward.1} parent=107 // pred_fallthru
        _
    $region108: #{conv_lstm_forward.1} parent=5 // pred_fallthru
      _
    %p7973 = scmp.le.s32.totalorder 2, %s28
    // Predicated region
    $region113: #{conv_lstm_forward.1} parent=5 // pred_check
      %p7974 = pneg %p7973
    $region114: #{conv_lstm_forward.1} parent=5 // pred_check_branch
      %7976 = sbr.rel (%p7974) target = $region116
    $region115: #{conv_lstm_forward.1} parent=5 // pred_region
      %s7977 = ssub.s32 %s28, 2
      // Predicated region
      $region117: #{conv_lstm_forward.1} parent=115 // pred_check
        %p7978 = pneg %p529
      $region118: #{conv_lstm_forward.1} parent=115 // pred_check_branch
        %7980 = sbr.rel (%p7978) target = $region120
      $region119: #{conv_lstm_forward.1} parent=115 // pred_region
        %p7981 = scmp.lt.s32.totalorder %s34, 1
        %s7982 = scalar_select %p7981, %s34, 1
        %s7983 = smul.addr %s7982, 3
        %s7984 = smul.addr %s7983, 8
        %s7985 = scalar_lea.vmem %s22, %s7984
      $region120: #{conv_lstm_forward.1} parent=115 // pred_fallthru
        _
    $region116: #{conv_lstm_forward.1} parent=5 // pred_fallthru
      _
  $region6: #{conv_lstm_forward.1} parent=0 // loop_footer
    %s32 = sadd.s32 1, %s28
  $region7: #{conv_lstm_forward.1} parent=0 // loop_footer_branch
    %27 = sbr.rel target = $region3
  $region8: #{conv_lstm_forward.1} parent=0 // loop_exit
    _

</llo_original>
